<compile_context>
chip_gen: v7x
topology: tpu7x:2x2x1
jax: 0.10.0
libtpu: 0.0.40
codegen_flags: <defaults>
</compile_context>

<pallas_src>
import functools
import math

import jax
import jax.numpy as jnp
from jax.experimental import pallas as pl
from jax.experimental.pallas import tpu as pltpu

# ----------------------------- configuration ---------------------------------
BN_EPS = 1e-3          # SyncBatchNorm eps used by the module
C_NUM = 32             # intermediate / query channel count (hard-coded by the module)
NUM_QUERIES = 32       # _pixel_space_mask_batch_norm is BN(32) -> num queries must be 32
NUM_CLASSES = 11       # ctor num_classes (already includes the void class)

VMEM_LIMIT_BYTES = 32 * 1024 * 1024   # explicit scoped-VMEM budget; safe on v5e/v6e/v7x


def bn_scale(gamma=1.0):
    # eval-mode BN with default running stats: y = x * gamma / sqrt(1 + eps) + beta
    return gamma / math.sqrt(1.0 + BN_EPS)


# --------------------------- in-kernel activations ----------------------------
def _erf(z):
    # erf via Abramowitz & Stegun 7.1.26 (|err| <= 1.5e-7 ~ f32 eps), built only from
    # primitives guaranteed to lower in Mosaic (exp/abs/where/poly).  The f32 divide
    # is kept exact (pl.reciprocal(approx=True) would eat into the 1e-3 parity margin).
    a = jnp.abs(z)
    t = 1.0 / (1.0 + 0.3275911 * a)
    poly = t * (0.254829592 + t * (-0.284496736 + t * (1.421413741
               + t * (-1.453152027 + t * 1.061405429))))
    e = 1.0 - poly * jnp.exp(-a * a)
    return jnp.where(z < 0.0, -e, e)


def _gelu(x):
    # exact (erf) GELU == torch.nn.GELU(); erf accurate to ~f32 eps (see _erf).
    return 0.5 * x * (1.0 + _erf(x * 0.7071067811865476))


# ----------------------------- Pallas kernels ---------------------------------
def _dwconv_cls_kernel(xp_ref, w_ref, b_ref, ce_ref, wc_ref, bc_ref,
                       y_ref, cls_ref, *, H, W, D, C):
    """Depthwise 5x5x5 conv (pad=2) + folded BN + GELU, and the query class head.

    xp_ref : (H+4, W+4, (D+4)*C)  channels-last, (depth, channel) flattened to lanes
    w_ref  : (5, 25, D*C)         kd-major taps: w_ref[kd, kw*5+kh]  (BN scale folded)
    b_ref  : (1, D*C)             folded BN shift
    ce_ref : (L, 32)              class embeddings (query-major)
    wc_ref : (32, K), bc_ref (1, K)  class head (void bias folded into bc)
    y_ref  : (H, W, D*C)          GELU(dwconv) output
    cls_ref: (L, K)               class logits
    """
    DC = D * C

    # Tiny class head: once per batch (keeps the S-tiled tail kernel race-free).
    cls_ref[...] = (jnp.dot(ce_ref[...], wc_ref[...],
                            preferred_element_type=jnp.float32) + bc_ref[...])

    w = w_ref[...]                                                   # (5, 25, D*C)
    parts = []
    for kd in range(5):
        lane0 = kd * C
        acc = None
        for kw in range(5):
            # One window load per (kw, kd): the kw sublane offset folds into the load
            # addressing; only the kd*C lane offset needs a shift (25 total, was 125).
            x_wd = xp_ref[:, kw:kw + W, lane0:lane0 + DC]            # (H+4, W, D*C)
            for kh in range(5):
                term = x_wd[kh:kh + H] * w[kd, kw * 5 + kh]
                acc = term if acc is None else acc + term
        parts.append(acc)
    # TODO(synk): once H-tiled at realistic sizes, switch the tap loops to
    #             lax.fori_loop(unroll=5) to bound live ranges.
    y = ((parts[0] + parts[1]) + (parts[2] + parts[3])) + parts[4] + b_ref[...]
    y_ref[...] = _gelu(y)


def _pixel_tail_kernel(pz_ref, w1_ref, b1_ref, w2t_ref, b2t_ref,
                       me_ref, wm_ref, bm_ref, mlst_ref, mlbt_ref,
                       mlog_ref, pn_ref):
    """Pixel-space head + mask logits for one (batch, S-tile); lane-dense outputs.

    pz_ref   : (tS, Cp)            GELU(dwconv) voxel rows
    w1/b1    : (Cp, 32)/(1, 32)    conv1 (+BN folded) -> GELU
    w2t/b2t  : (16, 32)/(16, 1)    last 1x1 conv, pre-transposed (+BN folded)
    me       : (L, 32)             mask embeddings -> mask head wm/bm (32,16)/(1,16)
    mlst/mlbt: (L, 1)              mask-logit BN affine (per query)
    mlog_ref : (L, tS)             mask logits, pre-transposed
    pn_ref   : (16, tS)            L2-normalized pixel feature, pre-transposed
    """
    # mask kernel (32x32x16 matmul; recomputed per tile on purpose -- negligible)
    mk = (jnp.dot(me_ref[...], wm_ref[...], preferred_element_type=jnp.float32)
          + bm_ref[...])                                             # (L, 16)

    # conv1 (1x1) + BN + GELU on voxel rows
    y1 = (jnp.dot(pz_ref[...], w1_ref[...], preferred_element_type=jnp.float32)
          + b1_ref[...])
    y1 = _gelu(y1)                                                   # (tS, 32)

    # last 1x1 conv emitted channel-major via an NT matmul -> (16, tS), no transposes
    y2t = (jax.lax.dot_general(w2t_ref[...], y1, (((1,), (1,)), ((), ())),
                               preferred_element_type=jnp.float32)
           + b2t_ref[...])                                           # (16, tS)

    # F.normalize(p=2, dim=channel): x * rsqrt(max(sum x^2, eps^2)); rsqrt -> EUP.
    ss = jnp.sum(y2t * y2t, axis=0, keepdims=True)                   # (1, tS)
    pnt = y2t * jax.lax.rsqrt(jnp.maximum(ss, 1e-24))                # (16, tS)
    pn_ref[...] = pnt

    # mask logits: einsum('cs,lc->ls') + per-query BN affine; lane-dense store.
    s = jnp.dot(mk, pnt, preferred_element_type=jnp.float32)         # (L, tS)
    mlog_ref[...] = s * mlst_ref[...] + mlbt_ref[...]


# ----------------------------- parameters -------------------------------------
class RNG:
    def __init__(self, seed):
        self._key = jax.random.PRNGKey(seed)

    def next(self):
        self._key, sub = jax.random.split(self._key)
        return sub


def trunc_normal(rng, shape, std):
    return std * jax.random.truncated_normal(rng.next(), -2.0, 2.0, shape, jnp.float32)


def make_predictor_params(seed, in_channel_pixel, num_classes, num_queries=NUM_QUERIES):
    """Parameters with torch-equivalent inits; eval-mode BN folded into weights/shifts."""
    rng = RNG(seed)
    c = C_NUM
    cp = in_channel_pixel
    s = bn_scale(1.0)

    # depthwise 5x5x5 conv (groups=cp, bias=False), xavier_uniform: fan_in=fan_out=125
    bound = math.sqrt(6.0 / (125 + 125))
    dw_w = jax.random.uniform(rng.next(), (125, cp), jnp.float32, -bound, bound) * s
    dw_b = jnp.zeros((1, cp), jnp.float32)

    # conv1: 1x1, he_normal (trunc_normal std=sqrt(2/cp)), BN(gamma=1) folded
    w1 = trunc_normal(rng, (cp, c), math.sqrt(2.0 / cp)) * s
    b1 = jnp.zeros((1, c), jnp.float32)

    # last: 1x1, trunc_normal std=0.01, bias=0, BN(gamma=1) folded
    w2 = trunc_normal(rng, (c, c // 2), 0.01) * s
    b2 = jnp.zeros((1, c // 2), jnp.float32)

    # transformer mask head: 1x1 (1d), he_normal, BN(gamma=1) folded
    wm = trunc_normal(rng, (c, c // 2), math.sqrt(2.0 / c)) * s
    bm = jnp.zeros((1, c // 2), jnp.float32)

    # transformer class head: 1x1 (1d), trunc_normal std=0.01, bias=0, no norm,
    # add_bias_towards_void folded into the bias.
    wc = trunc_normal(rng, (c, num_classes), 0.01)
    void = math.log((num_classes - 1) * 0.9 / (1.0 - 0.9))
    bc = jnp.zeros((1, num_classes), jnp.float32).at[0, -1].set(void)

    # mask-logit BN (gamma=0.1)
    mls = jnp.full((1, num_queries), bn_scale(0.1), jnp.float32)
    mlb = jnp.zeros((1, num_queries), jnp.float32)

    return dict(dw_w=dw_w, dw_b=dw_b, w1=w1, b1=b1, w2=w2, b2=b2,
                wm=wm, bm=bm, wc=wc, bc=bc, mls=mls, mlb=mlb)


# ----------------------------- model forward ----------------------------------
def _choose_s_tile(S, s_tile=None):
    """S-tile: multiple of 128 dividing S (lane-dense stores), or full S."""
    if s_tile is not None and S % s_tile == 0 and (s_tile == S or s_tile % 128 == 0):
        return s_tile
    best = S
    cand = 128
    # default cap 512 suits v5e/v6e (128 MiB VMEM); on v7x (64 MiB) pass ~half via s_tile.
    while cand <= min(S, 512):
        if S % cand == 0:
            best = cand
        cand += 128
    return best


def predictor_forward(params, mask_embeddings, class_embeddings, pixel_feature,
                      s_tile=None):
    """kMaXPredictor.forward (inference-mode BN).

    mask_embeddings, class_embeddings: (B, 32, L)   (PyTorch layout)
    pixel_feature:                     (B, C, H, W, D)
    Returns PyTorch-layout outputs:
      class_logits (B, L, K), mask_logits (B, L, H, W, D), pixel_feature (B, 16, H, W, D)
    """
    B, C, H, W, D = pixel_feature.shape
    L = mask_embeddings.shape[-1]
    c = params['w1'].shape[1]          # 32
    ch = params['w2'].shape[1]         # 16
    K = params['wc'].shape[1]
    S = H * W * D
    DC = D * C
    Hp, Wp, Dp = H + 4, W + 4, D + 4
    tS = _choose_s_tile(S, s_tile)

    # channels-last; pad the 5^3 halo once; flatten (depth, channel) into lanes.
    # TODO(synk): accept channels-last input upstream to drop this XLA relayout.
    x_cl = jnp.transpose(pixel_feature, (0, 2, 3, 4, 1)).astype(jnp.float32)
    xp = jnp.pad(x_cl, ((0, 0), (2, 2), (2, 2), (2, 2), (0, 0))).reshape(B, Hp, Wp, Dp * C)

    me = jnp.transpose(mask_embeddings, (0, 2, 1)).astype(jnp.float32)     # (B, L, 32)
    ce = jnp.transpose(class_embeddings, (0, 2, 1)).astype(jnp.float32)    # (B, L, 32)

    # depthwise weights: torch (kh,kw,kd)-major (125, C) -> kd-major (5, 25, C) with
    # inner index kw*5+kh, then replicated over D to match the (d, c) lane flattening.
    w_kd = jnp.transpose(params['dw_w'].reshape(5, 5, 5, C), (2, 1, 0, 3)).reshape(5, 25, C)
    dw_w = jnp.tile(w_kd, (1, 1, D))                                        # (5, 25, D*C)
    dw_b = jnp.tile(params['dw_b'], (1, D))                                 # (1, D*C)

    # small pre-transposed operands for the channel-major tail
    w2t = params['w2'].T                                                    # (16, 32)
    b2t = params['b2'].T                                                    # (16, 1)
    mlst = params['mls'].T                                                  # (L, 1)
    mlbt = params['mlb'].T                                                  # (L, 1)

    # Kernel A: depthwise 5x5x5 conv + folded BN + GELU, plus the class head.
    y_dw, cls = pl.pallas_call(
        functools.partial(_dwconv_cls_kernel, H=H, W=W, D=D, C=C),
        out_shape=(
            jax.ShapeDtypeStruct((B, H, W, DC), jnp.float32),
            jax.ShapeDtypeStruct((B, L, K), jnp.float32),
        ),
        grid=(B,),
        in_specs=[
            pl.BlockSpec((None, Hp, Wp, Dp * C), lambda b: (b, 0, 0, 0)),
            pl.BlockSpec((5, 25, DC), lambda b: (0, 0, 0)),
            pl.BlockSpec((1, DC), lambda b: (0, 0)),
            pl.BlockSpec((None, L, c), lambda b: (b, 0, 0)),
            pl.BlockSpec((c, K), lambda b: (0, 0)),
            pl.BlockSpec((1, K), lambda b: (0, 0)),
        ],
        out_specs=(
            pl.BlockSpec((None, H, W, DC), lambda b: (b, 0, 0, 0)),
            pl.BlockSpec((None, L, K), lambda b: (b, 0, 0)),
        ),
        compiler_params=pltpu.CompilerParams(
            dimension_semantics=("parallel",),
            vmem_limit_bytes=VMEM_LIMIT_BYTES),
    )(xp, dw_w, dw_b, ce, params['wc'], params['bc'])

    # (B, H, W, D*C) -> (B, S, C): row-major-compatible reshape (free, no data movement).
    pz = y_dw.reshape(B, S, C)

    # Kernel B: pixel head + mask logits, S-tiled, pre-transposed lane-dense outputs.
    mlog_t, pn_t = pl.pallas_call(
        _pixel_tail_kernel,
        out_shape=(
            jax.ShapeDtypeStruct((B, L, S), jnp.float32),
            jax.ShapeDtypeStruct((B, ch, S), jnp.float32),
        ),
        grid=(B, S // tS),
        in_specs=[
            pl.BlockSpec((None, tS, C), lambda b, i: (b, i, 0)),
            pl.BlockSpec((C, c), lambda b, i: (0, 0)),
            pl.BlockSpec((1, c), lambda b, i: (0, 0)),
            pl.BlockSpec((ch, c), lambda b, i: (0, 0)),
            pl.BlockSpec((ch, 1), lambda b, i: (0, 0)),
            pl.BlockSpec((None, L, c), lambda b, i: (b, 0, 0)),
            pl.BlockSpec((c, ch), lambda b, i: (0, 0)),
            pl.BlockSpec((1, ch), lambda b, i: (0, 0)),
            pl.BlockSpec((L, 1), lambda b, i: (0, 0)),
            pl.BlockSpec((L, 1), lambda b, i: (0, 0)),
        ],
        out_specs=(
            pl.BlockSpec((None, L, tS), lambda b, i: (b, 0, i)),
            pl.BlockSpec((None, ch, tS), lambda b, i: (b, 0, i)),
        ),
        compiler_params=pltpu.CompilerParams(
            dimension_semantics=("parallel", "parallel"),
            vmem_limit_bytes=VMEM_LIMIT_BYTES),
    )(pz, params['w1'], params['b1'], w2t, b2t,
      me, params['wm'], params['bm'], mlst, mlbt)

    # PyTorch layouts are now FREE row-major reshapes (no post-kernel transposes).
    return {'class_logits': cls,
            'mask_logits': mlog_t.reshape(B, L, H, W, D),
            'pixel_feature': pn_t.reshape(B, ch, H, W, D)}


# ------------------------ plain-JAX reference (sanity) -------------------------
def reference_forward(params, mask_embeddings, class_embeddings, pixel_feature):
    hp = jax.lax.Precision.HIGHEST
    B, C, H, W, D = pixel_feature.shape
    x = jnp.transpose(pixel_feature, (0, 2, 3, 4, 1)).astype(jnp.float32)
    xp = jnp.pad(x, ((0, 0), (2, 2), (2, 2), (2, 2), (0, 0)))
    acc = jnp.zeros_like(x)
    wdw = params['dw_w']
    for kh in range(5):
        for kw in range(5):
            for kd in range(5):
                tap = (kh * 5 + kw) * 5 + kd
                acc = acc + xp[:, kh:kh + H, kw:kw + W, kd:kd + D, :] * wdw[tap]
    y = jax.nn.gelu(acc + params['dw_b'], approximate=False)
    y = y.reshape(B, H * W * D, C)
    y = jax.nn.gelu(jnp.einsum('bsc,cj->bsj', y, params['w1'], precision=hp)
                    + params['b1'], approximate=False)
    y = jnp.einsum('bsc,cj->bsj', y, params['w2'], precision=hp) + params['b2']
    pn = y / jnp.maximum(jnp.linalg.norm(y, axis=-1, keepdims=True), 1e-12)
    me = jnp.transpose(mask_embeddings, (0, 2, 1)).astype(jnp.float32)
    ce = jnp.transpose(class_embeddings, (0, 2, 1)).astype(jnp.float32)
    mk = jnp.einsum('blc,cj->blj', me, params['wm'], precision=hp) + params['bm']
    cls = jnp.einsum('blc,ck->blk', ce, params['wc'], precision=hp) + params['bc']
    mlog = jnp.einsum('bsc,blc->bsl', pn, mk, precision=hp) * params['mls'] + params['mlb']
    L, ch = mk.shape[1], pn.shape[-1]
    return {'class_logits': cls,
            'mask_logits': mlog.reshape(B, H, W, D, L).transpose(0, 4, 1, 2, 3),
            'pixel_feature': pn.reshape(B, H, W, D, ch).transpose(0, 4, 1, 2, 3)}


# ----------------------------------- main --------------------------------------
if __name__ == "__main__":
    assert NUM_QUERIES == 32, "module hard-codes BN(32) on mask logits -> num queries must be 32"
    B, Cp, H, W, D = 2, 16, 8, 8, 4
    L, K = NUM_QUERIES, NUM_CLASSES

    params = make_predictor_params(seed=0, in_channel_pixel=Cp, num_classes=K)

    key = jax.random.PRNGKey(0)
    k1, k2, k3 = jax.random.split(key, 3)
    mask_embeddings = jax.random.normal(k1, (B, C_NUM, L), jnp.float32)    # PyTorch (B, C, L)
    class_embeddings = jax.random.normal(k2, (B, C_NUM, L), jnp.float32)
    pixel_feature = jax.random.normal(k3, (B, Cp, H, W, D), jnp.float32)   # PyTorch (B, C, H, W, D)

    # s_tile=128 exercises multiple S-tiles per batch at this toy size; at realistic
    # sizes leave the default (<=512 on v5e/v6e; pass ~half on v7x, 64 MiB VMEM).
    run = jax.jit(predictor_forward, static_argnames=('s_tile',))
    out = run(params, mask_embeddings, class_embeddings, pixel_feature, s_tile=128)
    out = jax.block_until_ready(out)

    assert out['class_logits'].shape == (B, L, K)
    assert out['mask_logits'].shape == (B, L, H, W, D)
    assert out['pixel_feature'].shape == (B, C_NUM // 2, H, W, D)
    assert all(bool(jnp.isfinite(v).all()) for v in out.values())

    ref = reference_forward(params, mask_embeddings, class_embeddings, pixel_feature)
    for name in out:
        assert bool(jnp.allclose(out[name], ref[name], atol=2e-3, rtol=2e-3)), name

    print("KERNEL_OK")
</pallas_src>

<mosaic_0001>
module attributes {stable_mosaic.version = 11 : i64} {
  func.func @_pixel_tail_kernel(%arg0: i32, %arg1: i32, %arg2: memref<1x128x16xf32, #tpu.memory_space<vmem>>, %arg3: memref<16x32xf32, #tpu.memory_space<vmem>>, %arg4: memref<1x32xf32, #tpu.memory_space<vmem>>, %arg5: memref<16x32xf32, #tpu.memory_space<vmem>>, %arg6: memref<16x1xf32, #tpu.memory_space<vmem>>, %arg7: memref<1x32x32xf32, #tpu.memory_space<vmem>>, %arg8: memref<32x16xf32, #tpu.memory_space<vmem>>, %arg9: memref<1x16xf32, #tpu.memory_space<vmem>>, %arg10: memref<32x1xf32, #tpu.memory_space<vmem>>, %arg11: memref<32x1xf32, #tpu.memory_space<vmem>>, %arg12: memref<1x32x128xf32, #tpu.memory_space<vmem>>, %arg13: memref<1x16x128xf32, #tpu.memory_space<vmem>>) attributes {dimension_semantics = [#tpu.dimension_semantics<parallel>, #tpu.dimension_semantics<parallel>], iteration_bounds = array<i64: 2, 2>, scalar_prefetch = 0 : i64, scratch_operands = 0 : i64, tpu.core_type = #tpu.core_type<tc>, window_params = [{transform_indices = @transform_0, window_bounds = array<i64: 1, 128, 16>}, {pipeline_mode = #tpu.pipeline_mode<synchronous>, transform_indices = @transform_1, window_bounds = array<i64: 16, 32>}, {pipeline_mode = #tpu.pipeline_mode<synchronous>, transform_indices = @transform_2, window_bounds = array<i64: 1, 32>}, {pipeline_mode = #tpu.pipeline_mode<synchronous>, transform_indices = @transform_3, window_bounds = array<i64: 16, 32>}, {pipeline_mode = #tpu.pipeline_mode<synchronous>, transform_indices = @transform_4, window_bounds = array<i64: 16, 1>}, {transform_indices = @transform_5, window_bounds = array<i64: 1, 32, 32>}, {pipeline_mode = #tpu.pipeline_mode<synchronous>, transform_indices = @transform_6, window_bounds = array<i64: 32, 16>}, {pipeline_mode = #tpu.pipeline_mode<synchronous>, transform_indices = @transform_7, window_bounds = array<i64: 1, 16>}, {pipeline_mode = #tpu.pipeline_mode<synchronous>, transform_indices = @transform_8, window_bounds = array<i64: 32, 1>}, {pipeline_mode = #tpu.pipeline_mode<synchronous>, transform_indices = @transform_9, window_bounds = array<i64: 32, 1>}, {transform_indices = @transform_10, window_bounds = array<i64: 1, 32, 128>}, {transform_indices = @transform_11, window_bounds = array<i64: 1, 16, 128>}]} {
    %c0 = arith.constant 0 : index
    %c0_0 = arith.constant 0 : index
    %c0_1 = arith.constant 0 : index
    %0 = vector.load %arg7[%c0, %c0_0, %c0_1] : memref<1x32x32xf32, #tpu.memory_space<vmem>>, vector<1x32x32xf32>
    %1 = vector.shape_cast %0 : vector<1x32x32xf32> to vector<32x32xf32>
    %c0_2 = arith.constant 0 : index
    %c0_3 = arith.constant 0 : index
    %2 = vector.load %arg8[%c0_2, %c0_3] : memref<32x16xf32, #tpu.memory_space<vmem>>, vector<32x16xf32>
    %cst = arith.constant dense<0.000000e+00> : vector<32x16xf32>
    %3 = tpu.matmul %1, %2, %cst {dimension_numbers = #tpu.dot_dimension_numbers<[1], [0], [0], [1], [0, 0, 1, 1], [], []>} : vector<32x32xf32>, vector<32x16xf32>, vector<32x16xf32> -> vector<32x16xf32>
    %c0_4 = arith.constant 0 : index
    %c0_5 = arith.constant 0 : index
    %4 = vector.load %arg9[%c0_4, %c0_5] : memref<1x16xf32, #tpu.memory_space<vmem>>, vector<1x16xf32>
    %5 = vector.broadcast %4 : vector<1x16xf32> to vector<32x16xf32>
    %6 = arith.addf %3, %5 : vector<32x16xf32>
    %c0_6 = arith.constant 0 : index
    %c0_7 = arith.constant 0 : index
    %c0_8 = arith.constant 0 : index
    %7 = vector.load %arg2[%c0_6, %c0_7, %c0_8] : memref<1x128x16xf32, #tpu.memory_space<vmem>>, vector<1x128x16xf32>
    %8 = vector.shape_cast %7 : vector<1x128x16xf32> to vector<128x16xf32>
    %c0_9 = arith.constant 0 : index
    %c0_10 = arith.constant 0 : index
    %9 = vector.load %arg3[%c0_9, %c0_10] : memref<16x32xf32, #tpu.memory_space<vmem>>, vector<16x32xf32>
    %cst_11 = arith.constant dense<0.000000e+00> : vector<128x32xf32>
    %10 = tpu.matmul %8, %9, %cst_11 {dimension_numbers = #tpu.dot_dimension_numbers<[1], [0], [0], [1], [0, 0, 1, 1], [], []>} : vector<128x16xf32>, vector<16x32xf32>, vector<128x32xf32> -> vector<128x32xf32>
    %c0_12 = arith.constant 0 : index
    %c0_13 = arith.constant 0 : index
    %11 = vector.load %arg4[%c0_12, %c0_13] : memref<1x32xf32, #tpu.memory_space<vmem>>, vector<1x32xf32>
    %12 = vector.broadcast %11 : vector<1x32xf32> to vector<128x32xf32>
    %13 = arith.addf %10, %12 : vector<128x32xf32>
    %cst_14 = arith.constant 5.000000e-01 : f32
    %14 = vector.broadcast %cst_14 : f32 to vector<128x32xf32>
    %15 = arith.mulf %14, %13 : vector<128x32xf32>
    %cst_15 = arith.constant 0.707106769 : f32
    %16 = vector.broadcast %cst_15 : f32 to vector<128x32xf32>
    %17 = arith.mulf %13, %16 : vector<128x32xf32>
    %18 = math.absf %17 : vector<128x32xf32>
    %cst_16 = arith.constant 0.327591091 : f32
    %19 = vector.broadcast %cst_16 : f32 to vector<128x32xf32>
    %20 = arith.mulf %19, %18 : vector<128x32xf32>
    %cst_17 = arith.constant 1.000000e+00 : f32
    %21 = vector.broadcast %cst_17 : f32 to vector<128x32xf32>
    %22 = arith.addf %21, %20 : vector<128x32xf32>
    %cst_18 = arith.constant 1.000000e+00 : f32
    %23 = vector.broadcast %cst_18 : f32 to vector<128x32xf32>
    %24 = arith.divf %23, %22 : vector<128x32xf32>
    %cst_19 = arith.constant 1.06140542 : f32
    %25 = vector.broadcast %cst_19 : f32 to vector<128x32xf32>
    %26 = arith.mulf %24, %25 : vector<128x32xf32>
    %cst_20 = arith.constant -1.45315206 : f32
    %27 = vector.broadcast %cst_20 : f32 to vector<128x32xf32>
    %28 = arith.addf %27, %26 : vector<128x32xf32>
    %29 = arith.mulf %24, %28 : vector<128x32xf32>
    %cst_21 = arith.constant 1.42141378 : f32
    %30 = vector.broadcast %cst_21 : f32 to vector<128x32xf32>
    %31 = arith.addf %30, %29 : vector<128x32xf32>
    %32 = arith.mulf %24, %31 : vector<128x32xf32>
    %cst_22 = arith.constant -0.284496725 : f32
    %33 = vector.broadcast %cst_22 : f32 to vector<128x32xf32>
    %34 = arith.addf %33, %32 : vector<128x32xf32>
    %35 = arith.mulf %24, %34 : vector<128x32xf32>
    %cst_23 = arith.constant 0.254829586 : f32
    %36 = vector.broadcast %cst_23 : f32 to vector<128x32xf32>
    %37 = arith.addf %36, %35 : vector<128x32xf32>
    %38 = arith.mulf %24, %37 : vector<128x32xf32>
    %cst_24 = arith.constant 0.000000e+00 : f32
    %39 = vector.broadcast %cst_24 : f32 to vector<128x32xf32>
    %40 = arith.subf %39, %18 : vector<128x32xf32>
    %41 = arith.mulf %40, %18 : vector<128x32xf32>
    %42 = math.exp %41 : vector<128x32xf32>
    %43 = arith.mulf %38, %42 : vector<128x32xf32>
    %cst_25 = arith.constant 1.000000e+00 : f32
    %44 = vector.broadcast %cst_25 : f32 to vector<128x32xf32>
    %45 = arith.subf %44, %43 : vector<128x32xf32>
    %cst_26 = arith.constant 0.000000e+00 : f32
    %46 = vector.broadcast %cst_26 : f32 to vector<128x32xf32>
    %47 = arith.cmpf olt, %17, %46 : vector<128x32xf32>
    %cst_27 = arith.constant 0.000000e+00 : f32
    %48 = vector.broadcast %cst_27 : f32 to vector<128x32xf32>
    %49 = arith.subf %48, %45 : vector<128x32xf32>
    %50 = arith.select %47, %49, %45 : vector<128x32xi1>, vector<128x32xf32>
    %cst_28 = arith.constant 1.000000e+00 : f32
    %51 = vector.broadcast %cst_28 : f32 to vector<128x32xf32>
    %52 = arith.addf %51, %50 : vector<128x32xf32>
    %53 = arith.mulf %15, %52 : vector<128x32xf32>
    %c0_29 = arith.constant 0 : index
    %c0_30 = arith.constant 0 : index
    %54 = vector.load %arg5[%c0_29, %c0_30] : memref<16x32xf32, #tpu.memory_space<vmem>>, vector<16x32xf32>
    %cst_31 = arith.constant dense<0.000000e+00> : vector<16x128xf32>
    %55 = tpu.matmul %54, %53, %cst_31 {dimension_numbers = #tpu.dot_dimension_numbers<[1], [1], [0], [0], [0, 0, 1, 0], [], []>} : vector<16x32xf32>, vector<128x32xf32>, vector<16x128xf32> -> vector<16x128xf32>
    %c0_32 = arith.constant 0 : index
    %c0_33 = arith.constant 0 : index
    %56 = vector.load %arg6[%c0_32, %c0_33] : memref<16x1xf32, #tpu.memory_space<vmem>>, vector<16x1xf32>
    %57 = vector.broadcast %56 : vector<16x1xf32> to vector<16x128xf32>
    %58 = arith.addf %55, %57 : vector<16x128xf32>
    %59 = arith.mulf %58, %58 : vector<16x128xf32>
    %cst_34 = arith.constant dense<0.000000e+00> : vector<128xf32>
    %60 = vector.multi_reduction <add>, %59, %cst_34 [0] : vector<16x128xf32> to vector<128xf32>
    %61 = vector.shape_cast %60 : vector<128xf32> to vector<1x128xf32>
    %cst_35 = arith.constant 1.000000e-24 : f32
    %62 = vector.broadcast %cst_35 : f32 to vector<1x128xf32>
    %63 = arith.maximumf %61, %62 : vector<1x128xf32>
    %64 = math.rsqrt %63 : vector<1x128xf32>
    %65 = vector.broadcast %64 : vector<1x128xf32> to vector<16x128xf32>
    %66 = arith.mulf %58, %65 : vector<16x128xf32>
    %c0_36 = arith.constant 0 : index
    %c0_37 = arith.constant 0 : index
    %c0_38 = arith.constant 0 : index
    %67 = vector.load %arg13[%c0_36, %c0_37, %c0_38] : memref<1x16x128xf32, #tpu.memory_space<vmem>>, vector<1x16x128xf32>
    %68 = vector.shape_cast %67 : vector<1x16x128xf32> to vector<16x128xf32>
    %69 = vector.shape_cast %66 : vector<16x128xf32> to vector<1x16x128xf32>
    tpu.vector_store %arg13[%c0_36, %c0_37, %c0_38], %69 {strides = array<i32>} : memref<1x16x128xf32, #tpu.memory_space<vmem>>, vector<1x16x128xf32>,
    %cst_39 = arith.constant dense<0.000000e+00> : vector<32x128xf32>
    %70 = tpu.matmul %6, %66, %cst_39 {dimension_numbers = #tpu.dot_dimension_numbers<[1], [0], [0], [1], [0, 0, 1, 1], [], []>} : vector<32x16xf32>, vector<16x128xf32>, vector<32x128xf32> -> vector<32x128xf32>
    %c0_40 = arith.constant 0 : index
    %c0_41 = arith.constant 0 : index
    %71 = vector.load %arg10[%c0_40, %c0_41] : memref<32x1xf32, #tpu.memory_space<vmem>>, vector<32x1xf32>
    %72 = vector.broadcast %71 : vector<32x1xf32> to vector<32x128xf32>
    %73 = arith.mulf %70, %72 : vector<32x128xf32>
    %c0_42 = arith.constant 0 : index
    %c0_43 = arith.constant 0 : index
    %74 = vector.load %arg11[%c0_42, %c0_43] : memref<32x1xf32, #tpu.memory_space<vmem>>, vector<32x1xf32>
    %75 = vector.broadcast %74 : vector<32x1xf32> to vector<32x128xf32>
    %76 = arith.addf %73, %75 : vector<32x128xf32>
    %c0_44 = arith.constant 0 : index
    %c0_45 = arith.constant 0 : index
    %c0_46 = arith.constant 0 : index
    %77 = vector.load %arg12[%c0_44, %c0_45, %c0_46] : memref<1x32x128xf32, #tpu.memory_space<vmem>>, vector<1x32x128xf32>
    %78 = vector.shape_cast %77 : vector<1x32x128xf32> to vector<32x128xf32>
    %79 = vector.shape_cast %76 : vector<32x128xf32> to vector<1x32x128xf32>
    tpu.vector_store %arg12[%c0_44, %c0_45, %c0_46], %79 {strides = array<i32>} : memref<1x32x128xf32, #tpu.memory_space<vmem>>, vector<1x32x128xf32>,
    return
  }
  func.func @transform_0(%arg0: i32, %arg1: i32) -> (i32, i32, i32) {
    %c0_i32 = arith.constant 0 : i32
    %c0_i32_0 = arith.constant 0 : i32
    return %arg0, %arg1, %c0_i32 : i32, i32, i32
  }
  func.func @transform_1(%arg0: i32, %arg1: i32) -> (i32, i32) {
    %c0_i32 = arith.constant 0 : i32
    %c0_i32_0 = arith.constant 0 : i32
    %c0_i32_1 = arith.constant 0 : i32
    return %c0_i32, %c0_i32_0 : i32, i32
  }
  func.func @transform_2(%arg0: i32, %arg1: i32) -> (i32, i32) {
    %c0_i32 = arith.constant 0 : i32
    %c0_i32_0 = arith.constant 0 : i32
    %c0_i32_1 = arith.constant 0 : i32
    return %c0_i32, %c0_i32_0 : i32, i32
  }
  func.func @transform_3(%arg0: i32, %arg1: i32) -> (i32, i32) {
    %c0_i32 = arith.constant 0 : i32
    %c0_i32_0 = arith.constant 0 : i32
    %c0_i32_1 = arith.constant 0 : i32
    return %c0_i32, %c0_i32_0 : i32, i32
  }
  func.func @transform_4(%arg0: i32, %arg1: i32) -> (i32, i32) {
    %c0_i32 = arith.constant 0 : i32
    %c0_i32_0 = arith.constant 0 : i32
    %c0_i32_1 = arith.constant 0 : i32
    return %c0_i32, %c0_i32_0 : i32, i32
  }
  func.func @transform_5(%arg0: i32, %arg1: i32) -> (i32, i32, i32) {
    %c0_i32 = arith.constant 0 : i32
    %c0_i32_0 = arith.constant 0 : i32
    %c0_i32_1 = arith.constant 0 : i32
    return %arg0, %c0_i32, %c0_i32_0 : i32, i32, i32
  }
  func.func @transform_6(%arg0: i32, %arg1: i32) -> (i32, i32) {
    %c0_i32 = arith.constant 0 : i32
    %c0_i32_0 = arith.constant 0 : i32
    %c0_i32_1 = arith.constant 0 : i32
    return %c0_i32, %c0_i32_0 : i32, i32
  }
  func.func @transform_7(%arg0: i32, %arg1: i32) -> (i32, i32) {
    %c0_i32 = arith.constant 0 : i32
    %c0_i32_0 = arith.constant 0 : i32
    %c0_i32_1 = arith.constant 0 : i32
    return %c0_i32, %c0_i32_0 : i32, i32
  }
  func.func @transform_8(%arg0: i32, %arg1: i32) -> (i32, i32) {
    %c0_i32 = arith.constant 0 : i32
    %c0_i32_0 = arith.constant 0 : i32
    %c0_i32_1 = arith.constant 0 : i32
    return %c0_i32, %c0_i32_0 : i32, i32
  }
  func.func @transform_9(%arg0: i32, %arg1: i32) -> (i32, i32) {
    %c0_i32 = arith.constant 0 : i32
    %c0_i32_0 = arith.constant 0 : i32
    %c0_i32_1 = arith.constant 0 : i32
    return %c0_i32, %c0_i32_0 : i32, i32
  }
  func.func @transform_10(%arg0: i32, %arg1: i32) -> (i32, i32, i32) {
    %c0_i32 = arith.constant 0 : i32
    %c0_i32_0 = arith.constant 0 : i32
    return %arg0, %c0_i32, %arg1 : i32, i32, i32
  }
  func.func @transform_11(%arg0: i32, %arg1: i32) -> (i32, i32, i32) {
    %c0_i32 = arith.constant 0 : i32
    %c0_i32_0 = arith.constant 0 : i32
    return %arg0, %c0_i32, %arg1 : i32, i32, i32
  }
}

module attributes {stable_mosaic.version = 11 : i64} {
  func.func @_dwconv_cls_kernel(%arg0: i32, %arg1: memref<1x12x12x128xf32, #tpu.memory_space<vmem>>, %arg2: memref<5x25x64xf32, #tpu.memory_space<vmem>>, %arg3: memref<1x64xf32, #tpu.memory_space<vmem>>, %arg4: memref<1x32x32xf32, #tpu.memory_space<vmem>>, %arg5: memref<32x11xf32, #tpu.memory_space<vmem>>, %arg6: memref<1x11xf32, #tpu.memory_space<vmem>>, %arg7: memref<1x8x8x64xf32, #tpu.memory_space<vmem>>, %arg8: memref<1x32x11xf32, #tpu.memory_space<vmem>>) attributes {dimension_semantics = [#tpu.dimension_semantics<parallel>], iteration_bounds = array<i64: 2>, scalar_prefetch = 0 : i64, scratch_operands = 0 : i64, tpu.core_type = #tpu.core_type<tc>, window_params = [{transform_indices = @transform_0, window_bounds = array<i64: 1, 12, 12, 128>}, {pipeline_mode = #tpu.pipeline_mode<synchronous>, transform_indices = @transform_1, window_bounds = array<i64: 5, 25, 64>}, {pipeline_mode = #tpu.pipeline_mode<synchronous>, transform_indices = @transform_2, window_bounds = array<i64: 1, 64>}, {transform_indices = @transform_3, window_bounds = array<i64: 1, 32, 32>}, {pipeline_mode = #tpu.pipeline_mode<synchronous>, transform_indices = @transform_4, window_bounds = array<i64: 32, 11>}, {pipeline_mode = #tpu.pipeline_mode<synchronous>, transform_indices = @transform_5, window_bounds = array<i64: 1, 11>}, {transform_indices = @transform_6, window_bounds = array<i64: 1, 8, 8, 64>}, {transform_indices = @transform_7, window_bounds = array<i64: 1, 32, 11>}]} {
    %c0 = arith.constant 0 : index
    %c0_0 = arith.constant 0 : index
    %c0_1 = arith.constant 0 : index
    %0 = vector.load %arg4[%c0, %c0_0, %c0_1] : memref<1x32x32xf32, #tpu.memory_space<vmem>>, vector<1x32x32xf32>
    %1 = vector.shape_cast %0 : vector<1x32x32xf32> to vector<32x32xf32>
    %c0_2 = arith.constant 0 : index
    %c0_3 = arith.constant 0 : index
    %2 = vector.load %arg5[%c0_2, %c0_3] : memref<32x11xf32, #tpu.memory_space<vmem>>, vector<32x11xf32>
    %cst = arith.constant dense<0.000000e+00> : vector<32x11xf32>
    %3 = tpu.matmul %1, %2, %cst {dimension_numbers = #tpu.dot_dimension_numbers<[1], [0], [0], [1], [0, 0, 1, 1], [], []>} : vector<32x32xf32>, vector<32x11xf32>, vector<32x11xf32> -> vector<32x11xf32>
    %c0_4 = arith.constant 0 : index
    %c0_5 = arith.constant 0 : index
    %4 = vector.load %arg6[%c0_4, %c0_5] : memref<1x11xf32, #tpu.memory_space<vmem>>, vector<1x11xf32>
    %5 = vector.broadcast %4 : vector<1x11xf32> to vector<32x11xf32>
    %6 = arith.addf %3, %5 : vector<32x11xf32>
    %c0_6 = arith.constant 0 : index
    %c0_7 = arith.constant 0 : index
    %c0_8 = arith.constant 0 : index
    %7 = vector.load %arg8[%c0_6, %c0_7, %c0_8] : memref<1x32x11xf32, #tpu.memory_space<vmem>>, vector<1x32x11xf32>
    %8 = vector.shape_cast %7 : vector<1x32x11xf32> to vector<32x11xf32>
    %9 = vector.shape_cast %6 : vector<32x11xf32> to vector<1x32x11xf32>
    tpu.vector_store %arg8[%c0_6, %c0_7, %c0_8], %9 {strides = array<i32>} : memref<1x32x11xf32, #tpu.memory_space<vmem>>, vector<1x32x11xf32>,
    %c0_9 = arith.constant 0 : index
    %c0_10 = arith.constant 0 : index
    %c0_11 = arith.constant 0 : index
    %10 = vector.load %arg2[%c0_9, %c0_10, %c0_11] : memref<5x25x64xf32, #tpu.memory_space<vmem>>, vector<5x25x64xf32>
    %c0_12 = arith.constant 0 : index
    %c0_13 = arith.constant 0 : index
    %c0_14 = arith.constant 0 : index
    %c0_15 = arith.constant 0 : index
    %11 = vector.load %arg1[%c0_12, %c0_13, %c0_14, %c0_15] : memref<1x12x12x128xf32, #tpu.memory_space<vmem>>, vector<1x12x8x64xf32>
    %12 = vector.shape_cast %11 : vector<1x12x8x64xf32> to vector<12x8x64xf32>
    %13 = vector.extract_strided_slice %12 {offsets = [0, 0, 0], sizes = [8, 8, 64], strides = [1, 1, 1]} : vector<12x8x64xf32> to vector<8x8x64xf32>
    %14 = vector.extract_strided_slice %10 {offsets = [0, 0, 0], sizes = [1, 1, 64], strides = [1, 1, 1]} : vector<5x25x64xf32> to vector<1x1x64xf32>
    %15 = vector.shape_cast %14 : vector<1x1x64xf32> to vector<64xf32>
    %16 = vector.shape_cast %15 : vector<64xf32> to vector<1x1x64xf32>
    %17 = vector.broadcast %16 : vector<1x1x64xf32> to vector<8x8x64xf32>
    %18 = arith.mulf %13, %17 : vector<8x8x64xf32>
    %19 = vector.extract_strided_slice %12 {offsets = [1, 0, 0], sizes = [8, 8, 64], strides = [1, 1, 1]} : vector<12x8x64xf32> to vector<8x8x64xf32>
    %20 = vector.extract_strided_slice %10 {offsets = [0, 1, 0], sizes = [1, 1, 64], strides = [1, 1, 1]} : vector<5x25x64xf32> to vector<1x1x64xf32>
    %21 = vector.shape_cast %20 : vector<1x1x64xf32> to vector<64xf32>
    %22 = vector.shape_cast %21 : vector<64xf32> to vector<1x1x64xf32>
    %23 = vector.broadcast %22 : vector<1x1x64xf32> to vector<8x8x64xf32>
    %24 = arith.mulf %19, %23 : vector<8x8x64xf32>
    %25 = arith.addf %18, %24 : vector<8x8x64xf32>
    %26 = vector.extract_strided_slice %12 {offsets = [2, 0, 0], sizes = [8, 8, 64], strides = [1, 1, 1]} : vector<12x8x64xf32> to vector<8x8x64xf32>
    %27 = vector.extract_strided_slice %10 {offsets = [0, 2, 0], sizes = [1, 1, 64], strides = [1, 1, 1]} : vector<5x25x64xf32> to vector<1x1x64xf32>
    %28 = vector.shape_cast %27 : vector<1x1x64xf32> to vector<64xf32>
    %29 = vector.shape_cast %28 : vector<64xf32> to vector<1x1x64xf32>
    %30 = vector.broadcast %29 : vector<1x1x64xf32> to vector<8x8x64xf32>
    %31 = arith.mulf %26, %30 : vector<8x8x64xf32>
    %32 = arith.addf %25, %31 : vector<8x8x64xf32>
    %33 = vector.extract_strided_slice %12 {offsets = [3, 0, 0], sizes = [8, 8, 64], strides = [1, 1, 1]} : vector<12x8x64xf32> to vector<8x8x64xf32>
    %34 = vector.extract_strided_slice %10 {offsets = [0, 3, 0], sizes = [1, 1, 64], strides = [1, 1, 1]} : vector<5x25x64xf32> to vector<1x1x64xf32>
    %35 = vector.shape_cast %34 : vector<1x1x64xf32> to vector<64xf32>
    %36 = vector.shape_cast %35 : vector<64xf32> to vector<1x1x64xf32>
    %37 = vector.broadcast %36 : vector<1x1x64xf32> to vector<8x8x64xf32>
    %38 = arith.mulf %33, %37 : vector<8x8x64xf32>
    %39 = arith.addf %32, %38 : vector<8x8x64xf32>
    %40 = vector.extract_strided_slice %12 {offsets = [4, 0, 0], sizes = [8, 8, 64], strides = [1, 1, 1]} : vector<12x8x64xf32> to vector<8x8x64xf32>
    %41 = vector.extract_strided_slice %10 {offsets = [0, 4, 0], sizes = [1, 1, 64], strides = [1, 1, 1]} : vector<5x25x64xf32> to vector<1x1x64xf32>
    %42 = vector.shape_cast %41 : vector<1x1x64xf32> to vector<64xf32>
    %43 = vector.shape_cast %42 : vector<64xf32> to vector<1x1x64xf32>
    %44 = vector.broadcast %43 : vector<1x1x64xf32> to vector<8x8x64xf32>
    %45 = arith.mulf %40, %44 : vector<8x8x64xf32>
    %46 = arith.addf %39, %45 : vector<8x8x64xf32>
    %c0_16 = arith.constant 0 : index
    %c0_17 = arith.constant 0 : index
    %c1 = arith.constant 1 : index
    %c0_18 = arith.constant 0 : index
    %47 = vector.load %arg1[%c0_16, %c0_17, %c1, %c0_18] : memref<1x12x12x128xf32, #tpu.memory_space<vmem>>, vector<1x12x8x64xf32>
    %48 = vector.shape_cast %47 : vector<1x12x8x64xf32> to vector<12x8x64xf32>
    %49 = vector.extract_strided_slice %48 {offsets = [0, 0, 0], sizes = [8, 8, 64], strides = [1, 1, 1]} : vector<12x8x64xf32> to vector<8x8x64xf32>
    %50 = vector.extract_strided_slice %10 {offsets = [0, 5, 0], sizes = [1, 1, 64], strides = [1, 1, 1]} : vector<5x25x64xf32> to vector<1x1x64xf32>
    %51 = vector.shape_cast %50 : vector<1x1x64xf32> to vector<64xf32>
    %52 = vector.shape_cast %51 : vector<64xf32> to vector<1x1x64xf32>
    %53 = vector.broadcast %52 : vector<1x1x64xf32> to vector<8x8x64xf32>
    %54 = arith.mulf %49, %53 : vector<8x8x64xf32>
    %55 = arith.addf %46, %54 : vector<8x8x64xf32>
    %56 = vector.extract_strided_slice %48 {offsets = [1, 0, 0], sizes = [8, 8, 64], strides = [1, 1, 1]} : vector<12x8x64xf32> to vector<8x8x64xf32>
    %57 = vector.extract_strided_slice %10 {offsets = [0, 6, 0], sizes = [1, 1, 64], strides = [1, 1, 1]} : vector<5x25x64xf32> to vector<1x1x64xf32>
    %58 = vector.shape_cast %57 : vector<1x1x64xf32> to vector<64xf32>
    %59 = vector.shape_cast %58 : vector<64xf32> to vector<1x1x64xf32>
    %60 = vector.broadcast %59 : vector<1x1x64xf32> to vector<8x8x64xf32>
    %61 = arith.mulf %56, %60 : vector<8x8x64xf32>
    %62 = arith.addf %55, %61 : vector<8x8x64xf32>
    %63 = vector.extract_strided_slice %48 {offsets = [2, 0, 0], sizes = [8, 8, 64], strides = [1, 1, 1]} : vector<12x8x64xf32> to vector<8x8x64xf32>
    %64 = vector.extract_strided_slice %10 {offsets = [0, 7, 0], sizes = [1, 1, 64], strides = [1, 1, 1]} : vector<5x25x64xf32> to vector<1x1x64xf32>
    %65 = vector.shape_cast %64 : vector<1x1x64xf32> to vector<64xf32>
    %66 = vector.shape_cast %65 : vector<64xf32> to vector<1x1x64xf32>
    %67 = vector.broadcast %66 : vector<1x1x64xf32> to vector<8x8x64xf32>
    %68 = arith.mulf %63, %67 : vector<8x8x64xf32>
    %69 = arith.addf %62, %68 : vector<8x8x64xf32>
    %70 = vector.extract_strided_slice %48 {offsets = [3, 0, 0], sizes = [8, 8, 64], strides = [1, 1, 1]} : vector<12x8x64xf32> to vector<8x8x64xf32>
    %71 = vector.extract_strided_slice %10 {offsets = [0, 8, 0], sizes = [1, 1, 64], strides = [1, 1, 1]} : vector<5x25x64xf32> to vector<1x1x64xf32>
    %72 = vector.shape_cast %71 : vector<1x1x64xf32> to vector<64xf32>
    %73 = vector.shape_cast %72 : vector<64xf32> to vector<1x1x64xf32>
    %74 = vector.broadcast %73 : vector<1x1x64xf32> to vector<8x8x64xf32>
    %75 = arith.mulf %70, %74 : vector<8x8x64xf32>
    %76 = arith.addf %69, %75 : vector<8x8x64xf32>
    %77 = vector.extract_strided_slice %48 {offsets = [4, 0, 0], sizes = [8, 8, 64], strides = [1, 1, 1]} : vector<12x8x64xf32> to vector<8x8x64xf32>
    %78 = vector.extract_strided_slice %10 {offsets = [0, 9, 0], sizes = [1, 1, 64], strides = [1, 1, 1]} : vector<5x25x64xf32> to vector<1x1x64xf32>
    %79 = vector.shape_cast %78 : vector<1x1x64xf32> to vector<64xf32>
    %80 = vector.shape_cast %79 : vector<64xf32> to vector<1x1x64xf32>
    %81 = vector.broadcast %80 : vector<1x1x64xf32> to vector<8x8x64xf32>
    %82 = arith.mulf %77, %81 : vector<8x8x64xf32>
    %83 = arith.addf %76, %82 : vector<8x8x64xf32>
    %c0_19 = arith.constant 0 : index
    %c0_20 = arith.constant 0 : index
    %c2 = arith.constant 2 : index
    %c0_21 = arith.constant 0 : index
    %84 = vector.load %arg1[%c0_19, %c0_20, %c2, %c0_21] : memref<1x12x12x128xf32, #tpu.memory_space<vmem>>, vector<1x12x8x64xf32>
    %85 = vector.shape_cast %84 : vector<1x12x8x64xf32> to vector<12x8x64xf32>
    %86 = vector.extract_strided_slice %85 {offsets = [0, 0, 0], sizes = [8, 8, 64], strides = [1, 1, 1]} : vector<12x8x64xf32> to vector<8x8x64xf32>
    %87 = vector.extract_strided_slice %10 {offsets = [0, 10, 0], sizes = [1, 1, 64], strides = [1, 1, 1]} : vector<5x25x64xf32> to vector<1x1x64xf32>
    %88 = vector.shape_cast %87 : vector<1x1x64xf32> to vector<64xf32>
    %89 = vector.shape_cast %88 : vector<64xf32> to vector<1x1x64xf32>
    %90 = vector.broadcast %89 : vector<1x1x64xf32> to vector<8x8x64xf32>
    %91 = arith.mulf %86, %90 : vector<8x8x64xf32>
    %92 = arith.addf %83, %91 : vector<8x8x64xf32>
    %93 = vector.extract_strided_slice %85 {offsets = [1, 0, 0], sizes = [8, 8, 64], strides = [1, 1, 1]} : vector<12x8x64xf32> to vector<8x8x64xf32>
    %94 = vector.extract_strided_slice %10 {offsets = [0, 11, 0], sizes = [1, 1, 64], strides = [1, 1, 1]} : vector<5x25x64xf32> to vector<1x1x64xf32>
    %95 = vector.shape_cast %94 : vector<1x1x64xf32> to vector<64xf32>
    %96 = vector.shape_cast %95 : vector<64xf32> to vector<1x1x64xf32>
    %97 = vector.broadcast %96 : vector<1x1x64xf32> to vector<8x8x64xf32>
    %98 = arith.mulf %93, %97 : vector<8x8x64xf32>
    %99 = arith.addf %92, %98 : vector<8x8x64xf32>
    %100 = vector.extract_strided_slice %85 {offsets = [2, 0, 0], sizes = [8, 8, 64], strides = [1, 1, 1]} : vector<12x8x64xf32> to vector<8x8x64xf32>
    %101 = vector.extract_strided_slice %10 {offsets = [0, 12, 0], sizes = [1, 1, 64], strides = [1, 1, 1]} : vector<5x25x64xf32> to vector<1x1x64xf32>
    %102 = vector.shape_cast %101 : vector<1x1x64xf32> to vector<64xf32>
    %103 = vector.shape_cast %102 : vector<64xf32> to vector<1x1x64xf32>
    %104 = vector.broadcast %103 : vector<1x1x64xf32> to vector<8x8x64xf32>
    %105 = arith.mulf %100, %104 : vector<8x8x64xf32>
    %106 = arith.addf %99, %105 : vector<8x8x64xf32>
    %107 = vector.extract_strided_slice %85 {offsets = [3, 0, 0], sizes = [8, 8, 64], strides = [1, 1, 1]} : vector<12x8x64xf32> to vector<8x8x64xf32>
    %108 = vector.extract_strided_slice %10 {offsets = [0, 13, 0], sizes = [1, 1, 64], strides = [1, 1, 1]} : vector<5x25x64xf32> to vector<1x1x64xf32>
    %109 = vector.shape_cast %108 : vector<1x1x64xf32> to vector<64xf32>
    %110 = vector.shape_cast %109 : vector<64xf32> to vector<1x1x64xf32>
    %111 = vector.broadcast %110 : vector<1x1x64xf32> to vector<8x8x64xf32>
    %112 = arith.mulf %107, %111 : vector<8x8x64xf32>
    %113 = arith.addf %106, %112 : vector<8x8x64xf32>
    %114 = vector.extract_strided_slice %85 {offsets = [4, 0, 0], sizes = [8, 8, 64], strides = [1, 1, 1]} : vector<12x8x64xf32> to vector<8x8x64xf32>
    %115 = vector.extract_strided_slice %10 {offsets = [0, 14, 0], sizes = [1, 1, 64], strides = [1, 1, 1]} : vector<5x25x64xf32> to vector<1x1x64xf32>
    %116 = vector.shape_cast %115 : vector<1x1x64xf32> to vector<64xf32>
    %117 = vector.shape_cast %116 : vector<64xf32> to vector<1x1x64xf32>
    %118 = vector.broadcast %117 : vector<1x1x64xf32> to vector<8x8x64xf32>
    %119 = arith.mulf %114, %118 : vector<8x8x64xf32>
    %120 = arith.addf %113, %119 : vector<8x8x64xf32>
    %c0_22 = arith.constant 0 : index
    %c0_23 = arith.constant 0 : index
    %c3 = arith.constant 3 : index
    %c0_24 = arith.constant 0 : index
    %121 = vector.load %arg1[%c0_22, %c0_23, %c3, %c0_24] : memref<1x12x12x128xf32, #tpu.memory_space<vmem>>, vector<1x12x8x64xf32>
    %122 = vector.shape_cast %121 : vector<1x12x8x64xf32> to vector<12x8x64xf32>
    %123 = vector.extract_strided_slice %122 {offsets = [0, 0, 0], sizes = [8, 8, 64], strides = [1, 1, 1]} : vector<12x8x64xf32> to vector<8x8x64xf32>
    %124 = vector.extract_strided_slice %10 {offsets = [0, 15, 0], sizes = [1, 1, 64], strides = [1, 1, 1]} : vector<5x25x64xf32> to vector<1x1x64xf32>
    %125 = vector.shape_cast %124 : vector<1x1x64xf32> to vector<64xf32>
    %126 = vector.shape_cast %125 : vector<64xf32> to vector<1x1x64xf32>
    %127 = vector.broadcast %126 : vector<1x1x64xf32> to vector<8x8x64xf32>
    %128 = arith.mulf %123, %127 : vector<8x8x64xf32>
    %129 = arith.addf %120, %128 : vector<8x8x64xf32>
    %130 = vector.extract_strided_slice %122 {offsets = [1, 0, 0], sizes = [8, 8, 64], strides = [1, 1, 1]} : vector<12x8x64xf32> to vector<8x8x64xf32>
    %131 = vector.extract_strided_slice %10 {offsets = [0, 16, 0], sizes = [1, 1, 64], strides = [1, 1, 1]} : vector<5x25x64xf32> to vector<1x1x64xf32>
    %132 = vector.shape_cast %131 : vector<1x1x64xf32> to vector<64xf32>
    %133 = vector.shape_cast %132 : vector<64xf32> to vector<1x1x64xf32>
    %134 = vector.broadcast %133 : vector<1x1x64xf32> to vector<8x8x64xf32>
    %135 = arith.mulf %130, %134 : vector<8x8x64xf32>
    %136 = arith.addf %129, %135 : vector<8x8x64xf32>
    %137 = vector.extract_strided_slice %122 {offsets = [2, 0, 0], sizes = [8, 8, 64], strides = [1, 1, 1]} : vector<12x8x64xf32> to vector<8x8x64xf32>
    %138 = vector.extract_strided_slice %10 {offsets = [0, 17, 0], sizes = [1, 1, 64], strides = [1, 1, 1]} : vector<5x25x64xf32> to vector<1x1x64xf32>
    %139 = vector.shape_cast %138 : vector<1x1x64xf32> to vector<64xf32>
    %140 = vector.shape_cast %139 : vector<64xf32> to vector<1x1x64xf32>
    %141 = vector.broadcast %140 : vector<1x1x64xf32> to vector<8x8x64xf32>
    %142 = arith.mulf %137, %141 : vector<8x8x64xf32>
    %143 = arith.addf %136, %142 : vector<8x8x64xf32>
    %144 = vector.extract_strided_slice %122 {offsets = [3, 0, 0], sizes = [8, 8, 64], strides = [1, 1, 1]} : vector<12x8x64xf32> to vector<8x8x64xf32>
    %145 = vector.extract_strided_slice %10 {offsets = [0, 18, 0], sizes = [1, 1, 64], strides = [1, 1, 1]} : vector<5x25x64xf32> to vector<1x1x64xf32>
    %146 = vector.shape_cast %145 : vector<1x1x64xf32> to vector<64xf32>
    %147 = vector.shape_cast %146 : vector<64xf32> to vector<1x1x64xf32>
    %148 = vector.broadcast %147 : vector<1x1x64xf32> to vector<8x8x64xf32>
    %149 = arith.mulf %144, %148 : vector<8x8x64xf32>
    %150 = arith.addf %143, %149 : vector<8x8x64xf32>
    %151 = vector.extract_strided_slice %122 {offsets = [4, 0, 0], sizes = [8, 8, 64], strides = [1, 1, 1]} : vector<12x8x64xf32> to vector<8x8x64xf32>
    %152 = vector.extract_strided_slice %10 {offsets = [0, 19, 0], sizes = [1, 1, 64], strides = [1, 1, 1]} : vector<5x25x64xf32> to vector<1x1x64xf32>
    %153 = vector.shape_cast %152 : vector<1x1x64xf32> to vector<64xf32>
    %154 = vector.shape_cast %153 : vector<64xf32> to vector<1x1x64xf32>
    %155 = vector.broadcast %154 : vector<1x1x64xf32> to vector<8x8x64xf32>
    %156 = arith.mulf %151, %155 : vector<8x8x64xf32>
    %157 = arith.addf %150, %156 : vector<8x8x64xf32>
    %c0_25 = arith.constant 0 : index
    %c0_26 = arith.constant 0 : index
    %c4 = arith.constant 4 : index
    %c0_27 = arith.constant 0 : index
    %158 = vector.load %arg1[%c0_25, %c0_26, %c4, %c0_27] : memref<1x12x12x128xf32, #tpu.memory_space<vmem>>, vector<1x12x8x64xf32>
    %159 = vector.shape_cast %158 : vector<1x12x8x64xf32> to vector<12x8x64xf32>
    %160 = vector.extract_strided_slice %159 {offsets = [0, 0, 0], sizes = [8, 8, 64], strides = [1, 1, 1]} : vector<12x8x64xf32> to vector<8x8x64xf32>
    %161 = vector.extract_strided_slice %10 {offsets = [0, 20, 0], sizes = [1, 1, 64], strides = [1, 1, 1]} : vector<5x25x64xf32> to vector<1x1x64xf32>
    %162 = vector.shape_cast %161 : vector<1x1x64xf32> to vector<64xf32>
    %163 = vector.shape_cast %162 : vector<64xf32> to vector<1x1x64xf32>
    %164 = vector.broadcast %163 : vector<1x1x64xf32> to vector<8x8x64xf32>
    %165 = arith.mulf %160, %164 : vector<8x8x64xf32>
    %166 = arith.addf %157, %165 : vector<8x8x64xf32>
    %167 = vector.extract_strided_slice %159 {offsets = [1, 0, 0], sizes = [8, 8, 64], strides = [1, 1, 1]} : vector<12x8x64xf32> to vector<8x8x64xf32>
    %168 = vector.extract_strided_slice %10 {offsets = [0, 21, 0], sizes = [1, 1, 64], strides = [1, 1, 1]} : vector<5x25x64xf32> to vector<1x1x64xf32>
    %169 = vector.shape_cast %168 : vector<1x1x64xf32> to vector<64xf32>
    %170 = vector.shape_cast %169 : vector<64xf32> to vector<1x1x64xf32>
    %171 = vector.broadcast %170 : vector<1x1x64xf32> to vector<8x8x64xf32>
    %172 = arith.mulf %167, %171 : vector<8x8x64xf32>
    %173 = arith.addf %166, %172 : vector<8x8x64xf32>
    %174 = vector.extract_strided_slice %159 {offsets = [2, 0, 0], sizes = [8, 8, 64], strides = [1, 1, 1]} : vector<12x8x64xf32> to vector<8x8x64xf32>
    %175 = vector.extract_strided_slice %10 {offsets = [0, 22, 0], sizes = [1, 1, 64], strides = [1, 1, 1]} : vector<5x25x64xf32> to vector<1x1x64xf32>
    %176 = vector.shape_cast %175 : vector<1x1x64xf32> to vector<64xf32>
    %177 = vector.shape_cast %176 : vector<64xf32> to vector<1x1x64xf32>
    %178 = vector.broadcast %177 : vector<1x1x64xf32> to vector<8x8x64xf32>
    %179 = arith.mulf %174, %178 : vector<8x8x64xf32>
    %180 = arith.addf %173, %179 : vector<8x8x64xf32>
    %181 = vector.extract_strided_slice %159 {offsets = [3, 0, 0], sizes = [8, 8, 64], strides = [1, 1, 1]} : vector<12x8x64xf32> to vector<8x8x64xf32>
    %182 = vector.extract_strided_slice %10 {offsets = [0, 23, 0], sizes = [1, 1, 64], strides = [1, 1, 1]} : vector<5x25x64xf32> to vector<1x1x64xf32>
    %183 = vector.shape_cast %182 : vector<1x1x64xf32> to vector<64xf32>
    %184 = vector.shape_cast %183 : vector<64xf32> to vector<1x1x64xf32>
    %185 = vector.broadcast %184 : vector<1x1x64xf32> to vector<8x8x64xf32>
    %186 = arith.mulf %181, %185 : vector<8x8x64xf32>
    %187 = arith.addf %180, %186 : vector<8x8x64xf32>
    %188 = vector.extract_strided_slice %159 {offsets = [4, 0, 0], sizes = [8, 8, 64], strides = [1, 1, 1]} : vector<12x8x64xf32> to vector<8x8x64xf32>
    %189 = vector.extract_strided_slice %10 {offsets = [0, 24, 0], sizes = [1, 1, 64], strides = [1, 1, 1]} : vector<5x25x64xf32> to vector<1x1x64xf32>
    %190 = vector.shape_cast %189 : vector<1x1x64xf32> to vector<64xf32>
    %191 = vector.shape_cast %190 : vector<64xf32> to vector<1x1x64xf32>
    %192 = vector.broadcast %191 : vector<1x1x64xf32> to vector<8x8x64xf32>
    %193 = arith.mulf %188, %192 : vector<8x8x64xf32>
    %194 = arith.addf %187, %193 : vector<8x8x64xf32>
    %c0_28 = arith.constant 0 : index
    %c0_29 = arith.constant 0 : index
    %c0_30 = arith.constant 0 : index
    %c16 = arith.constant 16 : index
    %195 = vector.load %arg1[%c0_28, %c0_29, %c0_30, %c16] : memref<1x12x12x128xf32, #tpu.memory_space<vmem>>, vector<1x12x8x64xf32>
    %196 = vector.shape_cast %195 : vector<1x12x8x64xf32> to vector<12x8x64xf32>
    %197 = vector.extract_strided_slice %196 {offsets = [0, 0, 0], sizes = [8, 8, 64], strides = [1, 1, 1]} : vector<12x8x64xf32> to vector<8x8x64xf32>
    %198 = vector.extract_strided_slice %10 {offsets = [1, 0, 0], sizes = [1, 1, 64], strides = [1, 1, 1]} : vector<5x25x64xf32> to vector<1x1x64xf32>
    %199 = vector.shape_cast %198 : vector<1x1x64xf32> to vector<64xf32>
    %200 = vector.shape_cast %199 : vector<64xf32> to vector<1x1x64xf32>
    %201 = vector.broadcast %200 : vector<1x1x64xf32> to vector<8x8x64xf32>
    %202 = arith.mulf %197, %201 : vector<8x8x64xf32>
    %203 = vector.extract_strided_slice %196 {offsets = [1, 0, 0], sizes = [8, 8, 64], strides = [1, 1, 1]} : vector<12x8x64xf32> to vector<8x8x64xf32>
    %204 = vector.extract_strided_slice %10 {offsets = [1, 1, 0], sizes = [1, 1, 64], strides = [1, 1, 1]} : vector<5x25x64xf32> to vector<1x1x64xf32>
    %205 = vector.shape_cast %204 : vector<1x1x64xf32> to vector<64xf32>
    %206 = vector.shape_cast %205 : vector<64xf32> to vector<1x1x64xf32>
    %207 = vector.broadcast %206 : vector<1x1x64xf32> to vector<8x8x64xf32>
    %208 = arith.mulf %203, %207 : vector<8x8x64xf32>
    %209 = arith.addf %202, %208 : vector<8x8x64xf32>
    %210 = vector.extract_strided_slice %196 {offsets = [2, 0, 0], sizes = [8, 8, 64], strides = [1, 1, 1]} : vector<12x8x64xf32> to vector<8x8x64xf32>
    %211 = vector.extract_strided_slice %10 {offsets = [1, 2, 0], sizes = [1, 1, 64], strides = [1, 1, 1]} : vector<5x25x64xf32> to vector<1x1x64xf32>
    %212 = vector.shape_cast %211 : vector<1x1x64xf32> to vector<64xf32>
    %213 = vector.shape_cast %212 : vector<64xf32> to vector<1x1x64xf32>
    %214 = vector.broadcast %213 : vector<1x1x64xf32> to vector<8x8x64xf32>
    %215 = arith.mulf %210, %214 : vector<8x8x64xf32>
    %216 = arith.addf %209, %215 : vector<8x8x64xf32>
    %217 = vector.extract_strided_slice %196 {offsets = [3, 0, 0], sizes = [8, 8, 64], strides = [1, 1, 1]} : vector<12x8x64xf32> to vector<8x8x64xf32>
    %218 = vector.extract_strided_slice %10 {offsets = [1, 3, 0], sizes = [1, 1, 64], strides = [1, 1, 1]} : vector<5x25x64xf32> to vector<1x1x64xf32>
    %219 = vector.shape_cast %218 : vector<1x1x64xf32> to vector<64xf32>
    %220 = vector.shape_cast %219 : vector<64xf32> to vector<1x1x64xf32>
    %221 = vector.broadcast %220 : vector<1x1x64xf32> to vector<8x8x64xf32>
    %222 = arith.mulf %217, %221 : vector<8x8x64xf32>
    %223 = arith.addf %216, %222 : vector<8x8x64xf32>
    %224 = vector.extract_strided_slice %196 {offsets = [4, 0, 0], sizes = [8, 8, 64], strides = [1, 1, 1]} : vector<12x8x64xf32> to vector<8x8x64xf32>
    %225 = vector.extract_strided_slice %10 {offsets = [1, 4, 0], sizes = [1, 1, 64], strides = [1, 1, 1]} : vector<5x25x64xf32> to vector<1x1x64xf32>
    %226 = vector.shape_cast %225 : vector<1x1x64xf32> to vector<64xf32>
    %227 = vector.shape_cast %226 : vector<64xf32> to vector<1x1x64xf32>
    %228 = vector.broadcast %227 : vector<1x1x64xf32> to vector<8x8x64xf32>
    %229 = arith.mulf %224, %228 : vector<8x8x64xf32>
    %230 = arith.addf %223, %229 : vector<8x8x64xf32>
    %c0_31 = arith.constant 0 : index
    %c0_32 = arith.constant 0 : index
    %c1_33 = arith.constant 1 : index
    %c16_34 = arith.constant 16 : index
    %231 = vector.load %arg1[%c0_31, %c0_32, %c1_33, %c16_34] : memref<1x12x12x128xf32, #tpu.memory_space<vmem>>, vector<1x12x8x64xf32>
    %232 = vector.shape_cast %231 : vector<1x12x8x64xf32> to vector<12x8x64xf32>
    %233 = vector.extract_strided_slice %232 {offsets = [0, 0, 0], sizes = [8, 8, 64], strides = [1, 1, 1]} : vector<12x8x64xf32> to vector<8x8x64xf32>
    %234 = vector.extract_strided_slice %10 {offsets = [1, 5, 0], sizes = [1, 1, 64], strides = [1, 1, 1]} : vector<5x25x64xf32> to vector<1x1x64xf32>
    %235 = vector.shape_cast %234 : vector<1x1x64xf32> to vector<64xf32>
    %236 = vector.shape_cast %235 : vector<64xf32> to vector<1x1x64xf32>
    %237 = vector.broadcast %236 : vector<1x1x64xf32> to vector<8x8x64xf32>
    %238 = arith.mulf %233, %237 : vector<8x8x64xf32>
    %239 = arith.addf %230, %238 : vector<8x8x64xf32>
    %240 = vector.extract_strided_slice %232 {offsets = [1, 0, 0], sizes = [8, 8, 64], strides = [1, 1, 1]} : vector<12x8x64xf32> to vector<8x8x64xf32>
    %241 = vector.extract_strided_slice %10 {offsets = [1, 6, 0], sizes = [1, 1, 64], strides = [1, 1, 1]} : vector<5x25x64xf32> to vector<1x1x64xf32>
    %242 = vector.shape_cast %241 : vector<1x1x64xf32> to vector<64xf32>
    %243 = vector.shape_cast %242 : vector<64xf32> to vector<1x1x64xf32>
    %244 = vector.broadcast %243 : vector<1x1x64xf32> to vector<8x8x64xf32>
    %245 = arith.mulf %240, %244 : vector<8x8x64xf32>
    %246 = arith.addf %239, %245 : vector<8x8x64xf32>
    %247 = vector.extract_strided_slice %232 {offsets = [2, 0, 0], sizes = [8, 8, 64], strides = [1, 1, 1]} : vector<12x8x64xf32> to vector<8x8x64xf32>
    %248 = vector.extract_strided_slice %10 {offsets = [1, 7, 0], sizes = [1, 1, 64], strides = [1, 1, 1]} : vector<5x25x64xf32> to vector<1x1x64xf32>
    %249 = vector.shape_cast %248 : vector<1x1x64xf32> to vector<64xf32>
    %250 = vector.shape_cast %249 : vector<64xf32> to vector<1x1x64xf32>
    %251 = vector.broadcast %250 : vector<1x1x64xf32> to vector<8x8x64xf32>
    %252 = arith.mulf %247, %251 : vector<8x8x64xf32>
    %253 = arith.addf %246, %252 : vector<8x8x64xf32>
    %254 = vector.extract_strided_slice %232 {offsets = [3, 0, 0], sizes = [8, 8, 64], strides = [1, 1, 1]} : vector<12x8x64xf32> to vector<8x8x64xf32>
    %255 = vector.extract_strided_slice %10 {offsets = [1, 8, 0], sizes = [1, 1, 64], strides = [1, 1, 1]} : vector<5x25x64xf32> to vector<1x1x64xf32>
    %256 = vector.shape_cast %255 : vector<1x1x64xf32> to vector<64xf32>
    %257 = vector.shape_cast %256 : vector<64xf32> to vector<1x1x64xf32>
    %258 = vector.broadcast %257 : vector<1x1x64xf32> to vector<8x8x64xf32>
    %259 = arith.mulf %254, %258 : vector<8x8x64xf32>
    %260 = arith.addf %253, %259 : vector<8x8x64xf32>
    %261 = vector.extract_strided_slice %232 {offsets = [4, 0, 0], sizes = [8, 8, 64], strides = [1, 1, 1]} : vector<12x8x64xf32> to vector<8x8x64xf32>
    %262 = vector.extract_strided_slice %10 {offsets = [1, 9, 0], sizes = [1, 1, 64], strides = [1, 1, 1]} : vector<5x25x64xf32> to vector<1x1x64xf32>
    %263 = vector.shape_cast %262 : vector<1x1x64xf32> to vector<64xf32>
    %264 = vector.shape_cast %263 : vector<64xf32> to vector<1x1x64xf32>
    %265 = vector.broadcast %264 : vector<1x1x64xf32> to vector<8x8x64xf32>
    %266 = arith.mulf %261, %265 : vector<8x8x64xf32>
    %267 = arith.addf %260, %266 : vector<8x8x64xf32>
    %c0_35 = arith.constant 0 : index
    %c0_36 = arith.constant 0 : index
    %c2_37 = arith.constant 2 : index
    %c16_38 = arith.constant 16 : index
    %268 = vector.load %arg1[%c0_35, %c0_36, %c2_37, %c16_38] : memref<1x12x12x128xf32, #tpu.memory_space<vmem>>, vector<1x12x8x64xf32>
    %269 = vector.shape_cast %268 : vector<1x12x8x64xf32> to vector<12x8x64xf32>
    %270 = vector.extract_strided_slice %269 {offsets = [0, 0, 0], sizes = [8, 8, 64], strides = [1, 1, 1]} : vector<12x8x64xf32> to vector<8x8x64xf32>
    %271 = vector.extract_strided_slice %10 {offsets = [1, 10, 0], sizes = [1, 1, 64], strides = [1, 1, 1]} : vector<5x25x64xf32> to vector<1x1x64xf32>
    %272 = vector.shape_cast %271 : vector<1x1x64xf32> to vector<64xf32>
    %273 = vector.shape_cast %272 : vector<64xf32> to vector<1x1x64xf32>
    %274 = vector.broadcast %273 : vector<1x1x64xf32> to vector<8x8x64xf32>
    %275 = arith.mulf %270, %274 : vector<8x8x64xf32>
    %276 = arith.addf %267, %275 : vector<8x8x64xf32>
    %277 = vector.extract_strided_slice %269 {offsets = [1, 0, 0], sizes = [8, 8, 64], strides = [1, 1, 1]} : vector<12x8x64xf32> to vector<8x8x64xf32>
    %278 = vector.extract_strided_slice %10 {offsets = [1, 11, 0], sizes = [1, 1, 64], strides = [1, 1, 1]} : vector<5x25x64xf32> to vector<1x1x64xf32>
    %279 = vector.shape_cast %278 : vector<1x1x64xf32> to vector<64xf32>
    %280 = vector.shape_cast %279 : vector<64xf32> to vector<1x1x64xf32>
    %281 = vector.broadcast %280 : vector<1x1x64xf32> to vector<8x8x64xf32>
    %282 = arith.mulf %277, %281 : vector<8x8x64xf32>
    %283 = arith.addf %276, %282 : vector<8x8x64xf32>
    %284 = vector.extract_strided_slice %269 {offsets = [2, 0, 0], sizes = [8, 8, 64], strides = [1, 1, 1]} : vector<12x8x64xf32> to vector<8x8x64xf32>
    %285 = vector.extract_strided_slice %10 {offsets = [1, 12, 0], sizes = [1, 1, 64], strides = [1, 1, 1]} : vector<5x25x64xf32> to vector<1x1x64xf32>
    %286 = vector.shape_cast %285 : vector<1x1x64xf32> to vector<64xf32>
    %287 = vector.shape_cast %286 : vector<64xf32> to vector<1x1x64xf32>
    %288 = vector.broadcast %287 : vector<1x1x64xf32> to vector<8x8x64xf32>
    %289 = arith.mulf %284, %288 : vector<8x8x64xf32>
    %290 = arith.addf %283, %289 : vector<8x8x64xf32>
    %291 = vector.extract_strided_slice %269 {offsets = [3, 0, 0], sizes = [8, 8, 64], strides = [1, 1, 1]} : vector<12x8x64xf32> to vector<8x8x64xf32>
    %292 = vector.extract_strided_slice %10 {offsets = [1, 13, 0], sizes = [1, 1, 64], strides = [1, 1, 1]} : vector<5x25x64xf32> to vector<1x1x64xf32>
    %293 = vector.shape_cast %292 : vector<1x1x64xf32> to vector<64xf32>
    %294 = vector.shape_cast %293 : vector<64xf32> to vector<1x1x64xf32>
    %295 = vector.broadcast %294 : vector<1x1x64xf32> to vector<8x8x64xf32>
    %296 = arith.mulf %291, %295 : vector<8x8x64xf32>
    %297 = arith.addf %290, %296 : vector<8x8x64xf32>
    %298 = vector.extract_strided_slice %269 {offsets = [4, 0, 0], sizes = [8, 8, 64], strides = [1, 1, 1]} : vector<12x8x64xf32> to vector<8x8x64xf32>
    %299 = vector.extract_strided_slice %10 {offsets = [1, 14, 0], sizes = [1, 1, 64], strides = [1, 1, 1]} : vector<5x25x64xf32> to vector<1x1x64xf32>
    %300 = vector.shape_cast %299 : vector<1x1x64xf32> to vector<64xf32>
    %301 = vector.shape_cast %300 : vector<64xf32> to vector<1x1x64xf32>
    %302 = vector.broadcast %301 : vector<1x1x64xf32> to vector<8x8x64xf32>
    %303 = arith.mulf %298, %302 : vector<8x8x64xf32>
    %304 = arith.addf %297, %303 : vector<8x8x64xf32>
    %c0_39 = arith.constant 0 : index
    %c0_40 = arith.constant 0 : index
    %c3_41 = arith.constant 3 : index
    %c16_42 = arith.constant 16 : index
    %305 = vector.load %arg1[%c0_39, %c0_40, %c3_41, %c16_42] : memref<1x12x12x128xf32, #tpu.memory_space<vmem>>, vector<1x12x8x64xf32>
    %306 = vector.shape_cast %305 : vector<1x12x8x64xf32> to vector<12x8x64xf32>
    %307 = vector.extract_strided_slice %306 {offsets = [0, 0, 0], sizes = [8, 8, 64], strides = [1, 1, 1]} : vector<12x8x64xf32> to vector<8x8x64xf32>
    %308 = vector.extract_strided_slice %10 {offsets = [1, 15, 0], sizes = [1, 1, 64], strides = [1, 1, 1]} : vector<5x25x64xf32> to vector<1x1x64xf32>
    %309 = vector.shape_cast %308 : vector<1x1x64xf32> to vector<64xf32>
    %310 = vector.shape_cast %309 : vector<64xf32> to vector<1x1x64xf32>
    %311 = vector.broadcast %310 : vector<1x1x64xf32> to vector<8x8x64xf32>
    %312 = arith.mulf %307, %311 : vector<8x8x64xf32>
    %313 = arith.addf %304, %312 : vector<8x8x64xf32>
    %314 = vector.extract_strided_slice %306 {offsets = [1, 0, 0], sizes = [8, 8, 64], strides = [1, 1, 1]} : vector<12x8x64xf32> to vector<8x8x64xf32>
    %315 = vector.extract_strided_slice %10 {offsets = [1, 16, 0], sizes = [1, 1, 64], strides = [1, 1, 1]} : vector<5x25x64xf32> to vector<1x1x64xf32>
    %316 = vector.shape_cast %315 : vector<1x1x64xf32> to vector<64xf32>
    %317 = vector.shape_cast %316 : vector<64xf32> to vector<1x1x64xf32>
    %318 = vector.broadcast %317 : vector<1x1x64xf32> to vector<8x8x64xf32>
    %319 = arith.mulf %314, %318 : vector<8x8x64xf32>
    %320 = arith.addf %313, %319 : vector<8x8x64xf32>
    %321 = vector.extract_strided_slice %306 {offsets = [2, 0, 0], sizes = [8, 8, 64], strides = [1, 1, 1]} : vector<12x8x64xf32> to vector<8x8x64xf32>
    %322 = vector.extract_strided_slice %10 {offsets = [1, 17, 0], sizes = [1, 1, 64], strides = [1, 1, 1]} : vector<5x25x64xf32> to vector<1x1x64xf32>
    %323 = vector.shape_cast %322 : vector<1x1x64xf32> to vector<64xf32>
    %324 = vector.shape_cast %323 : vector<64xf32> to vector<1x1x64xf32>
    %325 = vector.broadcast %324 : vector<1x1x64xf32> to vector<8x8x64xf32>
    %326 = arith.mulf %321, %325 : vector<8x8x64xf32>
    %327 = arith.addf %320, %326 : vector<8x8x64xf32>
    %328 = vector.extract_strided_slice %306 {offsets = [3, 0, 0], sizes = [8, 8, 64], strides = [1, 1, 1]} : vector<12x8x64xf32> to vector<8x8x64xf32>
    %329 = vector.extract_strided_slice %10 {offsets = [1, 18, 0], sizes = [1, 1, 64], strides = [1, 1, 1]} : vector<5x25x64xf32> to vector<1x1x64xf32>
    %330 = vector.shape_cast %329 : vector<1x1x64xf32> to vector<64xf32>
    %331 = vector.shape_cast %330 : vector<64xf32> to vector<1x1x64xf32>
    %332 = vector.broadcast %331 : vector<1x1x64xf32> to vector<8x8x64xf32>
    %333 = arith.mulf %328, %332 : vector<8x8x64xf32>
    %334 = arith.addf %327, %333 : vector<8x8x64xf32>
    %335 = vector.extract_strided_slice %306 {offsets = [4, 0, 0], sizes = [8, 8, 64], strides = [1, 1, 1]} : vector<12x8x64xf32> to vector<8x8x64xf32>
    %336 = vector.extract_strided_slice %10 {offsets = [1, 19, 0], sizes = [1, 1, 64], strides = [1, 1, 1]} : vector<5x25x64xf32> to vector<1x1x64xf32>
    %337 = vector.shape_cast %336 : vector<1x1x64xf32> to vector<64xf32>
    %338 = vector.shape_cast %337 : vector<64xf32> to vector<1x1x64xf32>
    %339 = vector.broadcast %338 : vector<1x1x64xf32> to vector<8x8x64xf32>
    %340 = arith.mulf %335, %339 : vector<8x8x64xf32>
    %341 = arith.addf %334, %340 : vector<8x8x64xf32>
    %c0_43 = arith.constant 0 : index
    %c0_44 = arith.constant 0 : index
    %c4_45 = arith.constant 4 : index
    %c16_46 = arith.constant 16 : index
    %342 = vector.load %arg1[%c0_43, %c0_44, %c4_45, %c16_46] : memref<1x12x12x128xf32, #tpu.memory_space<vmem>>, vector<1x12x8x64xf32>
    %343 = vector.shape_cast %342 : vector<1x12x8x64xf32> to vector<12x8x64xf32>
    %344 = vector.extract_strided_slice %343 {offsets = [0, 0, 0], sizes = [8, 8, 64], strides = [1, 1, 1]} : vector<12x8x64xf32> to vector<8x8x64xf32>
    %345 = vector.extract_strided_slice %10 {offsets = [1, 20, 0], sizes = [1, 1, 64], strides = [1, 1, 1]} : vector<5x25x64xf32> to vector<1x1x64xf32>
    %346 = vector.shape_cast %345 : vector<1x1x64xf32> to vector<64xf32>
    %347 = vector.shape_cast %346 : vector<64xf32> to vector<1x1x64xf32>
    %348 = vector.broadcast %347 : vector<1x1x64xf32> to vector<8x8x64xf32>
    %349 = arith.mulf %344, %348 : vector<8x8x64xf32>
    %350 = arith.addf %341, %349 : vector<8x8x64xf32>
    %351 = vector.extract_strided_slice %343 {offsets = [1, 0, 0], sizes = [8, 8, 64], strides = [1, 1, 1]} : vector<12x8x64xf32> to vector<8x8x64xf32>
    %352 = vector.extract_strided_slice %10 {offsets = [1, 21, 0], sizes = [1, 1, 64], strides = [1, 1, 1]} : vector<5x25x64xf32> to vector<1x1x64xf32>
    %353 = vector.shape_cast %352 : vector<1x1x64xf32> to vector<64xf32>
    %354 = vector.shape_cast %353 : vector<64xf32> to vector<1x1x64xf32>
    %355 = vector.broadcast %354 : vector<1x1x64xf32> to vector<8x8x64xf32>
    %356 = arith.mulf %351, %355 : vector<8x8x64xf32>
    %357 = arith.addf %350, %356 : vector<8x8x64xf32>
    %358 = vector.extract_strided_slice %343 {offsets = [2, 0, 0], sizes = [8, 8, 64], strides = [1, 1, 1]} : vector<12x8x64xf32> to vector<8x8x64xf32>
    %359 = vector.extract_strided_slice %10 {offsets = [1, 22, 0], sizes = [1, 1, 64], strides = [1, 1, 1]} : vector<5x25x64xf32> to vector<1x1x64xf32>
    %360 = vector.shape_cast %359 : vector<1x1x64xf32> to vector<64xf32>
    %361 = vector.shape_cast %360 : vector<64xf32> to vector<1x1x64xf32>
    %362 = vector.broadcast %361 : vector<1x1x64xf32> to vector<8x8x64xf32>
    %363 = arith.mulf %358, %362 : vector<8x8x64xf32>
    %364 = arith.addf %357, %363 : vector<8x8x64xf32>
    %365 = vector.extract_strided_slice %343 {offsets = [3, 0, 0], sizes = [8, 8, 64], strides = [1, 1, 1]} : vector<12x8x64xf32> to vector<8x8x64xf32>
    %366 = vector.extract_strided_slice %10 {offsets = [1, 23, 0], sizes = [1, 1, 64], strides = [1, 1, 1]} : vector<5x25x64xf32> to vector<1x1x64xf32>
    %367 = vector.shape_cast %366 : vector<1x1x64xf32> to vector<64xf32>
    %368 = vector.shape_cast %367 : vector<64xf32> to vector<1x1x64xf32>
    %369 = vector.broadcast %368 : vector<1x1x64xf32> to vector<8x8x64xf32>
    %370 = arith.mulf %365, %369 : vector<8x8x64xf32>
    %371 = arith.addf %364, %370 : vector<8x8x64xf32>
    %372 = vector.extract_strided_slice %343 {offsets = [4, 0, 0], sizes = [8, 8, 64], strides = [1, 1, 1]} : vector<12x8x64xf32> to vector<8x8x64xf32>
    %373 = vector.extract_strided_slice %10 {offsets = [1, 24, 0], sizes = [1, 1, 64], strides = [1, 1, 1]} : vector<5x25x64xf32> to vector<1x1x64xf32>
    %374 = vector.shape_cast %373 : vector<1x1x64xf32> to vector<64xf32>
    %375 = vector.shape_cast %374 : vector<64xf32> to vector<1x1x64xf32>
    %376 = vector.broadcast %375 : vector<1x1x64xf32> to vector<8x8x64xf32>
    %377 = arith.mulf %372, %376 : vector<8x8x64xf32>
    %378 = arith.addf %371, %377 : vector<8x8x64xf32>
    %c0_47 = arith.constant 0 : index
    %c0_48 = arith.constant 0 : index
    %c0_49 = arith.constant 0 : index
    %c32 = arith.constant 32 : index
    %379 = vector.load %arg1[%c0_47, %c0_48, %c0_49, %c32] : memref<1x12x12x128xf32, #tpu.memory_space<vmem>>, vector<1x12x8x64xf32>
    %380 = vector.shape_cast %379 : vector<1x12x8x64xf32> to vector<12x8x64xf32>
    %381 = vector.extract_strided_slice %380 {offsets = [0, 0, 0], sizes = [8, 8, 64], strides = [1, 1, 1]} : vector<12x8x64xf32> to vector<8x8x64xf32>
    %382 = vector.extract_strided_slice %10 {offsets = [2, 0, 0], sizes = [1, 1, 64], strides = [1, 1, 1]} : vector<5x25x64xf32> to vector<1x1x64xf32>
    %383 = vector.shape_cast %382 : vector<1x1x64xf32> to vector<64xf32>
    %384 = vector.shape_cast %383 : vector<64xf32> to vector<1x1x64xf32>
    %385 = vector.broadcast %384 : vector<1x1x64xf32> to vector<8x8x64xf32>
    %386 = arith.mulf %381, %385 : vector<8x8x64xf32>
    %387 = vector.extract_strided_slice %380 {offsets = [1, 0, 0], sizes = [8, 8, 64], strides = [1, 1, 1]} : vector<12x8x64xf32> to vector<8x8x64xf32>
    %388 = vector.extract_strided_slice %10 {offsets = [2, 1, 0], sizes = [1, 1, 64], strides = [1, 1, 1]} : vector<5x25x64xf32> to vector<1x1x64xf32>
    %389 = vector.shape_cast %388 : vector<1x1x64xf32> to vector<64xf32>
    %390 = vector.shape_cast %389 : vector<64xf32> to vector<1x1x64xf32>
    %391 = vector.broadcast %390 : vector<1x1x64xf32> to vector<8x8x64xf32>
    %392 = arith.mulf %387, %391 : vector<8x8x64xf32>
    %393 = arith.addf %386, %392 : vector<8x8x64xf32>
    %394 = vector.extract_strided_slice %380 {offsets = [2, 0, 0], sizes = [8, 8, 64], strides = [1, 1, 1]} : vector<12x8x64xf32> to vector<8x8x64xf32>
    %395 = vector.extract_strided_slice %10 {offsets = [2, 2, 0], sizes = [1, 1, 64], strides = [1, 1, 1]} : vector<5x25x64xf32> to vector<1x1x64xf32>
    %396 = vector.shape_cast %395 : vector<1x1x64xf32> to vector<64xf32>
    %397 = vector.shape_cast %396 : vector<64xf32> to vector<1x1x64xf32>
    %398 = vector.broadcast %397 : vector<1x1x64xf32> to vector<8x8x64xf32>
    %399 = arith.mulf %394, %398 : vector<8x8x64xf32>
    %400 = arith.addf %393, %399 : vector<8x8x64xf32>
    %401 = vector.extract_strided_slice %380 {offsets = [3, 0, 0], sizes = [8, 8, 64], strides = [1, 1, 1]} : vector<12x8x64xf32> to vector<8x8x64xf32>
    %402 = vector.extract_strided_slice %10 {offsets = [2, 3, 0], sizes = [1, 1, 64], strides = [1, 1, 1]} : vector<5x25x64xf32> to vector<1x1x64xf32>
    %403 = vector.shape_cast %402 : vector<1x1x64xf32> to vector<64xf32>
    %404 = vector.shape_cast %403 : vector<64xf32> to vector<1x1x64xf32>
    %405 = vector.broadcast %404 : vector<1x1x64xf32> to vector<8x8x64xf32>
    %406 = arith.mulf %401, %405 : vector<8x8x64xf32>
    %407 = arith.addf %400, %406 : vector<8x8x64xf32>
    %408 = vector.extract_strided_slice %380 {offsets = [4, 0, 0], sizes = [8, 8, 64], strides = [1, 1, 1]} : vector<12x8x64xf32> to vector<8x8x64xf32>
    %409 = vector.extract_strided_slice %10 {offsets = [2, 4, 0], sizes = [1, 1, 64], strides = [1, 1, 1]} : vector<5x25x64xf32> to vector<1x1x64xf32>
    %410 = vector.shape_cast %409 : vector<1x1x64xf32> to vector<64xf32>
    %411 = vector.shape_cast %410 : vector<64xf32> to vector<1x1x64xf32>
    %412 = vector.broadcast %411 : vector<1x1x64xf32> to vector<8x8x64xf32>
    %413 = arith.mulf %408, %412 : vector<8x8x64xf32>
    %414 = arith.addf %407, %413 : vector<8x8x64xf32>
    %c0_50 = arith.constant 0 : index
    %c0_51 = arith.constant 0 : index
    %c1_52 = arith.constant 1 : index
    %c32_53 = arith.constant 32 : index
    %415 = vector.load %arg1[%c0_50, %c0_51, %c1_52, %c32_53] : memref<1x12x12x128xf32, #tpu.memory_space<vmem>>, vector<1x12x8x64xf32>
    %416 = vector.shape_cast %415 : vector<1x12x8x64xf32> to vector<12x8x64xf32>
    %417 = vector.extract_strided_slice %416 {offsets = [0, 0, 0], sizes = [8, 8, 64], strides = [1, 1, 1]} : vector<12x8x64xf32> to vector<8x8x64xf32>
    %418 = vector.extract_strided_slice %10 {offsets = [2, 5, 0], sizes = [1, 1, 64], strides = [1, 1, 1]} : vector<5x25x64xf32> to vector<1x1x64xf32>
    %419 = vector.shape_cast %418 : vector<1x1x64xf32> to vector<64xf32>
    %420 = vector.shape_cast %419 : vector<64xf32> to vector<1x1x64xf32>
    %421 = vector.broadcast %420 : vector<1x1x64xf32> to vector<8x8x64xf32>
    %422 = arith.mulf %417, %421 : vector<8x8x64xf32>
    %423 = arith.addf %414, %422 : vector<8x8x64xf32>
    %424 = vector.extract_strided_slice %416 {offsets = [1, 0, 0], sizes = [8, 8, 64], strides = [1, 1, 1]} : vector<12x8x64xf32> to vector<8x8x64xf32>
    %425 = vector.extract_strided_slice %10 {offsets = [2, 6, 0], sizes = [1, 1, 64], strides = [1, 1, 1]} : vector<5x25x64xf32> to vector<1x1x64xf32>
    %426 = vector.shape_cast %425 : vector<1x1x64xf32> to vector<64xf32>
    %427 = vector.shape_cast %426 : vector<64xf32> to vector<1x1x64xf32>
    %428 = vector.broadcast %427 : vector<1x1x64xf32> to vector<8x8x64xf32>
    %429 = arith.mulf %424, %428 : vector<8x8x64xf32>
    %430 = arith.addf %423, %429 : vector<8x8x64xf32>
    %431 = vector.extract_strided_slice %416 {offsets = [2, 0, 0], sizes = [8, 8, 64], strides = [1, 1, 1]} : vector<12x8x64xf32> to vector<8x8x64xf32>
    %432 = vector.extract_strided_slice %10 {offsets = [2, 7, 0], sizes = [1, 1, 64], strides = [1, 1, 1]} : vector<5x25x64xf32> to vector<1x1x64xf32>
    %433 = vector.shape_cast %432 : vector<1x1x64xf32> to vector<64xf32>
    %434 = vector.shape_cast %433 : vector<64xf32> to vector<1x1x64xf32>
    %435 = vector.broadcast %434 : vector<1x1x64xf32> to vector<8x8x64xf32>
    %436 = arith.mulf %431, %435 : vector<8x8x64xf32>
    %437 = arith.addf %430, %436 : vector<8x8x64xf32>
    %438 = vector.extract_strided_slice %416 {offsets = [3, 0, 0], sizes = [8, 8, 64], strides = [1, 1, 1]} : vector<12x8x64xf32> to vector<8x8x64xf32>
    %439 = vector.extract_strided_slice %10 {offsets = [2, 8, 0], sizes = [1, 1, 64], strides = [1, 1, 1]} : vector<5x25x64xf32> to vector<1x1x64xf32>
    %440 = vector.shape_cast %439 : vector<1x1x64xf32> to vector<64xf32>
    %441 = vector.shape_cast %440 : vector<64xf32> to vector<1x1x64xf32>
    %442 = vector.broadcast %441 : vector<1x1x64xf32> to vector<8x8x64xf32>
    %443 = arith.mulf %438, %442 : vector<8x8x64xf32>
    %444 = arith.addf %437, %443 : vector<8x8x64xf32>
    %445 = vector.extract_strided_slice %416 {offsets = [4, 0, 0], sizes = [8, 8, 64], strides = [1, 1, 1]} : vector<12x8x64xf32> to vector<8x8x64xf32>
    %446 = vector.extract_strided_slice %10 {offsets = [2, 9, 0], sizes = [1, 1, 64], strides = [1, 1, 1]} : vector<5x25x64xf32> to vector<1x1x64xf32>
    %447 = vector.shape_cast %446 : vector<1x1x64xf32> to vector<64xf32>
    %448 = vector.shape_cast %447 : vector<64xf32> to vector<1x1x64xf32>
    %449 = vector.broadcast %448 : vector<1x1x64xf32> to vector<8x8x64xf32>
    %450 = arith.mulf %445, %449 : vector<8x8x64xf32>
    %451 = arith.addf %444, %450 : vector<8x8x64xf32>
    %c0_54 = arith.constant 0 : index
    %c0_55 = arith.constant 0 : index
    %c2_56 = arith.constant 2 : index
    %c32_57 = arith.constant 32 : index
    %452 = vector.load %arg1[%c0_54, %c0_55, %c2_56, %c32_57] : memref<1x12x12x128xf32, #tpu.memory_space<vmem>>, vector<1x12x8x64xf32>
    %453 = vector.shape_cast %452 : vector<1x12x8x64xf32> to vector<12x8x64xf32>
    %454 = vector.extract_strided_slice %453 {offsets = [0, 0, 0], sizes = [8, 8, 64], strides = [1, 1, 1]} : vector<12x8x64xf32> to vector<8x8x64xf32>
    %455 = vector.extract_strided_slice %10 {offsets = [2, 10, 0], sizes = [1, 1, 64], strides = [1, 1, 1]} : vector<5x25x64xf32> to vector<1x1x64xf32>
    %456 = vector.shape_cast %455 : vector<1x1x64xf32> to vector<64xf32>
    %457 = vector.shape_cast %456 : vector<64xf32> to vector<1x1x64xf32>
    %458 = vector.broadcast %457 : vector<1x1x64xf32> to vector<8x8x64xf32>
    %459 = arith.mulf %454, %458 : vector<8x8x64xf32>
    %460 = arith.addf %451, %459 : vector<8x8x64xf32>
    %461 = vector.extract_strided_slice %453 {offsets = [1, 0, 0], sizes = [8, 8, 64], strides = [1, 1, 1]} : vector<12x8x64xf32> to vector<8x8x64xf32>
    %462 = vector.extract_strided_slice %10 {offsets = [2, 11, 0], sizes = [1, 1, 64], strides = [1, 1, 1]} : vector<5x25x64xf32> to vector<1x1x64xf32>
    %463 = vector.shape_cast %462 : vector<1x1x64xf32> to vector<64xf32>
    %464 = vector.shape_cast %463 : vector<64xf32> to vector<1x1x64xf32>
    %465 = vector.broadcast %464 : vector<1x1x64xf32> to vector<8x8x64xf32>
    %466 = arith.mulf %461, %465 : vector<8x8x64xf32>
    %467 = arith.addf %460, %466 : vector<8x8x64xf32>
    %468 = vector.extract_strided_slice %453 {offsets = [2, 0, 0], sizes = [8, 8, 64], strides = [1, 1, 1]} : vector<12x8x64xf32> to vector<8x8x64xf32>
    %469 = vector.extract_strided_slice %10 {offsets = [2, 12, 0], sizes = [1, 1, 64], strides = [1, 1, 1]} : vector<5x25x64xf32> to vector<1x1x64xf32>
    %470 = vector.shape_cast %469 : vector<1x1x64xf32> to vector<64xf32>
    %471 = vector.shape_cast %470 : vector<64xf32> to vector<1x1x64xf32>
    %472 = vector.broadcast %471 : vector<1x1x64xf32> to vector<8x8x64xf32>
    %473 = arith.mulf %468, %472 : vector<8x8x64xf32>
    %474 = arith.addf %467, %473 : vector<8x8x64xf32>
    %475 = vector.extract_strided_slice %453 {offsets = [3, 0, 0], sizes = [8, 8, 64], strides = [1, 1, 1]} : vector<12x8x64xf32> to vector<8x8x64xf32>
    %476 = vector.extract_strided_slice %10 {offsets = [2, 13, 0], sizes = [1, 1, 64], strides = [1, 1, 1]} : vector<5x25x64xf32> to vector<1x1x64xf32>
    %477 = vector.shape_cast %476 : vector<1x1x64xf32> to vector<64xf32>
    %478 = vector.shape_cast %477 : vector<64xf32> to vector<1x1x64xf32>
    %479 = vector.broadcast %478 : vector<1x1x64xf32> to vector<8x8x64xf32>
    %480 = arith.mulf %475, %479 : vector<8x8x64xf32>
    %481 = arith.addf %474, %480 : vector<8x8x64xf32>
    %482 = vector.extract_strided_slice %453 {offsets = [4, 0, 0], sizes = [8, 8, 64], strides = [1, 1, 1]} : vector<12x8x64xf32> to vector<8x8x64xf32>
    %483 = vector.extract_strided_slice %10 {offsets = [2, 14, 0], sizes = [1, 1, 64], strides = [1, 1, 1]} : vector<5x25x64xf32> to vector<1x1x64xf32>
    %484 = vector.shape_cast %483 : vector<1x1x64xf32> to vector<64xf32>
    %485 = vector.shape_cast %484 : vector<64xf32> to vector<1x1x64xf32>
    %486 = vector.broadcast %485 : vector<1x1x64xf32> to vector<8x8x64xf32>
    %487 = arith.mulf %482, %486 : vector<8x8x64xf32>
    %488 = arith.addf %481, %487 : vector<8x8x64xf32>
    %c0_58 = arith.constant 0 : index
    %c0_59 = arith.constant 0 : index
    %c3_60 = arith.constant 3 : index
    %c32_61 = arith.constant 32 : index
    %489 = vector.load %arg1[%c0_58, %c0_59, %c3_60, %c32_61] : memref<1x12x12x128xf32, #tpu.memory_space<vmem>>, vector<1x12x8x64xf32>
    %490 = vector.shape_cast %489 : vector<1x12x8x64xf32> to vector<12x8x64xf32>
    %491 = vector.extract_strided_slice %490 {offsets = [0, 0, 0], sizes = [8, 8, 64], strides = [1, 1, 1]} : vector<12x8x64xf32> to vector<8x8x64xf32>
    %492 = vector.extract_strided_slice %10 {offsets = [2, 15, 0], sizes = [1, 1, 64], strides = [1, 1, 1]} : vector<5x25x64xf32> to vector<1x1x64xf32>
    %493 = vector.shape_cast %492 : vector<1x1x64xf32> to vector<64xf32>
    %494 = vector.shape_cast %493 : vector<64xf32> to vector<1x1x64xf32>
    %495 = vector.broadcast %494 : vector<1x1x64xf32> to vector<8x8x64xf32>
    %496 = arith.mulf %491, %495 : vector<8x8x64xf32>
    %497 = arith.addf %488, %496 : vector<8x8x64xf32>
    %498 = vector.extract_strided_slice %490 {offsets = [1, 0, 0], sizes = [8, 8, 64], strides = [1, 1, 1]} : vector<12x8x64xf32> to vector<8x8x64xf32>
    %499 = vector.extract_strided_slice %10 {offsets = [2, 16, 0], sizes = [1, 1, 64], strides = [1, 1, 1]} : vector<5x25x64xf32> to vector<1x1x64xf32>
    %500 = vector.shape_cast %499 : vector<1x1x64xf32> to vector<64xf32>
    %501 = vector.shape_cast %500 : vector<64xf32> to vector<1x1x64xf32>
    %502 = vector.broadcast %501 : vector<1x1x64xf32> to vector<8x8x64xf32>
    %503 = arith.mulf %498, %502 : vector<8x8x64xf32>
    %504 = arith.addf %497, %503 : vector<8x8x64xf32>
    %505 = vector.extract_strided_slice %490 {offsets = [2, 0, 0], sizes = [8, 8, 64], strides = [1, 1, 1]} : vector<12x8x64xf32> to vector<8x8x64xf32>
    %506 = vector.extract_strided_slice %10 {offsets = [2, 17, 0], sizes = [1, 1, 64], strides = [1, 1, 1]} : vector<5x25x64xf32> to vector<1x1x64xf32>
    %507 = vector.shape_cast %506 : vector<1x1x64xf32> to vector<64xf32>
    %508 = vector.shape_cast %507 : vector<64xf32> to vector<1x1x64xf32>
    %509 = vector.broadcast %508 : vector<1x1x64xf32> to vector<8x8x64xf32>
    %510 = arith.mulf %505, %509 : vector<8x8x64xf32>
    %511 = arith.addf %504, %510 : vector<8x8x64xf32>
    %512 = vector.extract_strided_slice %490 {offsets = [3, 0, 0], sizes = [8, 8, 64], strides = [1, 1, 1]} : vector<12x8x64xf32> to vector<8x8x64xf32>
    %513 = vector.extract_strided_slice %10 {offsets = [2, 18, 0], sizes = [1, 1, 64], strides = [1, 1, 1]} : vector<5x25x64xf32> to vector<1x1x64xf32>
    %514 = vector.shape_cast %513 : vector<1x1x64xf32> to vector<64xf32>
    %515 = vector.shape_cast %514 : vector<64xf32> to vector<1x1x64xf32>
    %516 = vector.broadcast %515 : vector<1x1x64xf32> to vector<8x8x64xf32>
    %517 = arith.mulf %512, %516 : vector<8x8x64xf32>
    %518 = arith.addf %511, %517 : vector<8x8x64xf32>
    %519 = vector.extract_strided_slice %490 {offsets = [4, 0, 0], sizes = [8, 8, 64], strides = [1, 1, 1]} : vector<12x8x64xf32> to vector<8x8x64xf32>
    %520 = vector.extract_strided_slice %10 {offsets = [2, 19, 0], sizes = [1, 1, 64], strides = [1, 1, 1]} : vector<5x25x64xf32> to vector<1x1x64xf32>
    %521 = vector.shape_cast %520 : vector<1x1x64xf32> to vector<64xf32>
    %522 = vector.shape_cast %521 : vector<64xf32> to vector<1x1x64xf32>
    %523 = vector.broadcast %522 : vector<1x1x64xf32> to vector<8x8x64xf32>
    %524 = arith.mulf %519, %523 : vector<8x8x64xf32>
    %525 = arith.addf %518, %524 : vector<8x8x64xf32>
    %c0_62 = arith.constant 0 : index
    %c0_63 = arith.constant 0 : index
    %c4_64 = arith.constant 4 : index
    %c32_65 = arith.constant 32 : index
    %526 = vector.load %arg1[%c0_62, %c0_63, %c4_64, %c32_65] : memref<1x12x12x128xf32, #tpu.memory_space<vmem>>, vector<1x12x8x64xf32>
    %527 = vector.shape_cast %526 : vector<1x12x8x64xf32> to vector<12x8x64xf32>
    %528 = vector.extract_strided_slice %527 {offsets = [0, 0, 0], sizes = [8, 8, 64], strides = [1, 1, 1]} : vector<12x8x64xf32> to vector<8x8x64xf32>
    %529 = vector.extract_strided_slice %10 {offsets = [2, 20, 0], sizes = [1, 1, 64], strides = [1, 1, 1]} : vector<5x25x64xf32> to vector<1x1x64xf32>
    %530 = vector.shape_cast %529 : vector<1x1x64xf32> to vector<64xf32>
    %531 = vector.shape_cast %530 : vector<64xf32> to vector<1x1x64xf32>
    %532 = vector.broadcast %531 : vector<1x1x64xf32> to vector<8x8x64xf32>
    %533 = arith.mulf %528, %532 : vector<8x8x64xf32>
    %534 = arith.addf %525, %533 : vector<8x8x64xf32>
    %535 = vector.extract_strided_slice %527 {offsets = [1, 0, 0], sizes = [8, 8, 64], strides = [1, 1, 1]} : vector<12x8x64xf32> to vector<8x8x64xf32>
    %536 = vector.extract_strided_slice %10 {offsets = [2, 21, 0], sizes = [1, 1, 64], strides = [1, 1, 1]} : vector<5x25x64xf32> to vector<1x1x64xf32>
    %537 = vector.shape_cast %536 : vector<1x1x64xf32> to vector<64xf32>
    %538 = vector.shape_cast %537 : vector<64xf32> to vector<1x1x64xf32>
    %539 = vector.broadcast %538 : vector<1x1x64xf32> to vector<8x8x64xf32>
    %540 = arith.mulf %535, %539 : vector<8x8x64xf32>
    %541 = arith.addf %534, %540 : vector<8x8x64xf32>
    %542 = vector.extract_strided_slice %527 {offsets = [2, 0, 0], sizes = [8, 8, 64], strides = [1, 1, 1]} : vector<12x8x64xf32> to vector<8x8x64xf32>
    %543 = vector.extract_strided_slice %10 {offsets = [2, 22, 0], sizes = [1, 1, 64], strides = [1, 1, 1]} : vector<5x25x64xf32> to vector<1x1x64xf32>
    %544 = vector.shape_cast %543 : vector<1x1x64xf32> to vector<64xf32>
    %545 = vector.shape_cast %544 : vector<64xf32> to vector<1x1x64xf32>
    %546 = vector.broadcast %545 : vector<1x1x64xf32> to vector<8x8x64xf32>
    %547 = arith.mulf %542, %546 : vector<8x8x64xf32>
    %548 = arith.addf %541, %547 : vector<8x8x64xf32>
    %549 = vector.extract_strided_slice %527 {offsets = [3, 0, 0], sizes = [8, 8, 64], strides = [1, 1, 1]} : vector<12x8x64xf32> to vector<8x8x64xf32>
    %550 = vector.extract_strided_slice %10 {offsets = [2, 23, 0], sizes = [1, 1, 64], strides = [1, 1, 1]} : vector<5x25x64xf32> to vector<1x1x64xf32>
    %551 = vector.shape_cast %550 : vector<1x1x64xf32> to vector<64xf32>
    %552 = vector.shape_cast %551 : vector<64xf32> to vector<1x1x64xf32>
    %553 = vector.broadcast %552 : vector<1x1x64xf32> to vector<8x8x64xf32>
    %554 = arith.mulf %549, %553 : vector<8x8x64xf32>
    %555 = arith.addf %548, %554 : vector<8x8x64xf32>
    %556 = vector.extract_strided_slice %527 {offsets = [4, 0, 0], sizes = [8, 8, 64], strides = [1, 1, 1]} : vector<12x8x64xf32> to vector<8x8x64xf32>
    %557 = vector.extract_strided_slice %10 {offsets = [2, 24, 0], sizes = [1, 1, 64], strides = [1, 1, 1]} : vector<5x25x64xf32> to vector<1x1x64xf32>
    %558 = vector.shape_cast %557 : vector<1x1x64xf32> to vector<64xf32>
    %559 = vector.shape_cast %558 : vector<64xf32> to vector<1x1x64xf32>
    %560 = vector.broadcast %559 : vector<1x1x64xf32> to vector<8x8x64xf32>
    %561 = arith.mulf %556, %560 : vector<8x8x64xf32>
    %562 = arith.addf %555, %561 : vector<8x8x64xf32>
    %c0_66 = arith.constant 0 : index
    %c0_67 = arith.constant 0 : index
    %c0_68 = arith.constant 0 : index
    %c48 = arith.constant 48 : index
    %563 = vector.load %arg1[%c0_66, %c0_67, %c0_68, %c48] : memref<1x12x12x128xf32, #tpu.memory_space<vmem>>, vector<1x12x8x64xf32>
    %564 = vector.shape_cast %563 : vector<1x12x8x64xf32> to vector<12x8x64xf32>
    %565 = vector.extract_strided_slice %564 {offsets = [0, 0, 0], sizes = [8, 8, 64], strides = [1, 1, 1]} : vector<12x8x64xf32> to vector<8x8x64xf32>
    %566 = vector.extract_strided_slice %10 {offsets = [3, 0, 0], sizes = [1, 1, 64], strides = [1, 1, 1]} : vector<5x25x64xf32> to vector<1x1x64xf32>
    %567 = vector.shape_cast %566 : vector<1x1x64xf32> to vector<64xf32>
    %568 = vector.shape_cast %567 : vector<64xf32> to vector<1x1x64xf32>
    %569 = vector.broadcast %568 : vector<1x1x64xf32> to vector<8x8x64xf32>
    %570 = arith.mulf %565, %569 : vector<8x8x64xf32>
    %571 = vector.extract_strided_slice %564 {offsets = [1, 0, 0], sizes = [8, 8, 64], strides = [1, 1, 1]} : vector<12x8x64xf32> to vector<8x8x64xf32>
    %572 = vector.extract_strided_slice %10 {offsets = [3, 1, 0], sizes = [1, 1, 64], strides = [1, 1, 1]} : vector<5x25x64xf32> to vector<1x1x64xf32>
    %573 = vector.shape_cast %572 : vector<1x1x64xf32> to vector<64xf32>
    %574 = vector.shape_cast %573 : vector<64xf32> to vector<1x1x64xf32>
    %575 = vector.broadcast %574 : vector<1x1x64xf32> to vector<8x8x64xf32>
    %576 = arith.mulf %571, %575 : vector<8x8x64xf32>
    %577 = arith.addf %570, %576 : vector<8x8x64xf32>
    %578 = vector.extract_strided_slice %564 {offsets = [2, 0, 0], sizes = [8, 8, 64], strides = [1, 1, 1]} : vector<12x8x64xf32> to vector<8x8x64xf32>
    %579 = vector.extract_strided_slice %10 {offsets = [3, 2, 0], sizes = [1, 1, 64], strides = [1, 1, 1]} : vector<5x25x64xf32> to vector<1x1x64xf32>
    %580 = vector.shape_cast %579 : vector<1x1x64xf32> to vector<64xf32>
    %581 = vector.shape_cast %580 : vector<64xf32> to vector<1x1x64xf32>
    %582 = vector.broadcast %581 : vector<1x1x64xf32> to vector<8x8x64xf32>
    %583 = arith.mulf %578, %582 : vector<8x8x64xf32>
    %584 = arith.addf %577, %583 : vector<8x8x64xf32>
    %585 = vector.extract_strided_slice %564 {offsets = [3, 0, 0], sizes = [8, 8, 64], strides = [1, 1, 1]} : vector<12x8x64xf32> to vector<8x8x64xf32>
    %586 = vector.extract_strided_slice %10 {offsets = [3, 3, 0], sizes = [1, 1, 64], strides = [1, 1, 1]} : vector<5x25x64xf32> to vector<1x1x64xf32>
    %587 = vector.shape_cast %586 : vector<1x1x64xf32> to vector<64xf32>
    %588 = vector.shape_cast %587 : vector<64xf32> to vector<1x1x64xf32>
    %589 = vector.broadcast %588 : vector<1x1x64xf32> to vector<8x8x64xf32>
    %590 = arith.mulf %585, %589 : vector<8x8x64xf32>
    %591 = arith.addf %584, %590 : vector<8x8x64xf32>
    %592 = vector.extract_strided_slice %564 {offsets = [4, 0, 0], sizes = [8, 8, 64], strides = [1, 1, 1]} : vector<12x8x64xf32> to vector<8x8x64xf32>
    %593 = vector.extract_strided_slice %10 {offsets = [3, 4, 0], sizes = [1, 1, 64], strides = [1, 1, 1]} : vector<5x25x64xf32> to vector<1x1x64xf32>
    %594 = vector.shape_cast %593 : vector<1x1x64xf32> to vector<64xf32>
    %595 = vector.shape_cast %594 : vector<64xf32> to vector<1x1x64xf32>
    %596 = vector.broadcast %595 : vector<1x1x64xf32> to vector<8x8x64xf32>
    %597 = arith.mulf %592, %596 : vector<8x8x64xf32>
    %598 = arith.addf %591, %597 : vector<8x8x64xf32>
    %c0_69 = arith.constant 0 : index
    %c0_70 = arith.constant 0 : index
    %c1_71 = arith.constant 1 : index
    %c48_72 = arith.constant 48 : index
    %599 = vector.load %arg1[%c0_69, %c0_70, %c1_71, %c48_72] : memref<1x12x12x128xf32, #tpu.memory_space<vmem>>, vector<1x12x8x64xf32>
    %600 = vector.shape_cast %599 : vector<1x12x8x64xf32> to vector<12x8x64xf32>
    %601 = vector.extract_strided_slice %600 {offsets = [0, 0, 0], sizes = [8, 8, 64], strides = [1, 1, 1]} : vector<12x8x64xf32> to vector<8x8x64xf32>
    %602 = vector.extract_strided_slice %10 {offsets = [3, 5, 0], sizes = [1, 1, 64], strides = [1, 1, 1]} : vector<5x25x64xf32> to vector<1x1x64xf32>
    %603 = vector.shape_cast %602 : vector<1x1x64xf32> to vector<64xf32>
    %604 = vector.shape_cast %603 : vector<64xf32> to vector<1x1x64xf32>
    %605 = vector.broadcast %604 : vector<1x1x64xf32> to vector<8x8x64xf32>
    %606 = arith.mulf %601, %605 : vector<8x8x64xf32>
    %607 = arith.addf %598, %606 : vector<8x8x64xf32>
    %608 = vector.extract_strided_slice %600 {offsets = [1, 0, 0], sizes = [8, 8, 64], strides = [1, 1, 1]} : vector<12x8x64xf32> to vector<8x8x64xf32>
    %609 = vector.extract_strided_slice %10 {offsets = [3, 6, 0], sizes = [1, 1, 64], strides = [1, 1, 1]} : vector<5x25x64xf32> to vector<1x1x64xf32>
    %610 = vector.shape_cast %609 : vector<1x1x64xf32> to vector<64xf32>
    %611 = vector.shape_cast %610 : vector<64xf32> to vector<1x1x64xf32>
    %612 = vector.broadcast %611 : vector<1x1x64xf32> to vector<8x8x64xf32>
    %613 = arith.mulf %608, %612 : vector<8x8x64xf32>
    %614 = arith.addf %607, %613 : vector<8x8x64xf32>
    %615 = vector.extract_strided_slice %600 {offsets = [2, 0, 0], sizes = [8, 8, 64], strides = [1, 1, 1]} : vector<12x8x64xf32> to vector<8x8x64xf32>
    %616 = vector.extract_strided_slice %10 {offsets = [3, 7, 0], sizes = [1, 1, 64], strides = [1, 1, 1]} : vector<5x25x64xf32> to vector<1x1x64xf32>
    %617 = vector.shape_cast %616 : vector<1x1x64xf32> to vector<64xf32>
    %618 = vector.shape_cast %617 : vector<64xf32> to vector<1x1x64xf32>
    %619 = vector.broadcast %618 : vector<1x1x64xf32> to vector<8x8x64xf32>
    %620 = arith.mulf %615, %619 : vector<8x8x64xf32>
    %621 = arith.addf %614, %620 : vector<8x8x64xf32>
    %622 = vector.extract_strided_slice %600 {offsets = [3, 0, 0], sizes = [8, 8, 64], strides = [1, 1, 1]} : vector<12x8x64xf32> to vector<8x8x64xf32>
    %623 = vector.extract_strided_slice %10 {offsets = [3, 8, 0], sizes = [1, 1, 64], strides = [1, 1, 1]} : vector<5x25x64xf32> to vector<1x1x64xf32>
    %624 = vector.shape_cast %623 : vector<1x1x64xf32> to vector<64xf32>
    %625 = vector.shape_cast %624 : vector<64xf32> to vector<1x1x64xf32>
    %626 = vector.broadcast %625 : vector<1x1x64xf32> to vector<8x8x64xf32>
    %627 = arith.mulf %622, %626 : vector<8x8x64xf32>
    %628 = arith.addf %621, %627 : vector<8x8x64xf32>
    %629 = vector.extract_strided_slice %600 {offsets = [4, 0, 0], sizes = [8, 8, 64], strides = [1, 1, 1]} : vector<12x8x64xf32> to vector<8x8x64xf32>
    %630 = vector.extract_strided_slice %10 {offsets = [3, 9, 0], sizes = [1, 1, 64], strides = [1, 1, 1]} : vector<5x25x64xf32> to vector<1x1x64xf32>
    %631 = vector.shape_cast %630 : vector<1x1x64xf32> to vector<64xf32>
    %632 = vector.shape_cast %631 : vector<64xf32> to vector<1x1x64xf32>
    %633 = vector.broadcast %632 : vector<1x1x64xf32> to vector<8x8x64xf32>
    %634 = arith.mulf %629, %633 : vector<8x8x64xf32>
    %635 = arith.addf %628, %634 : vector<8x8x64xf32>
    %c0_73 = arith.constant 0 : index
    %c0_74 = arith.constant 0 : index
    %c2_75 = arith.constant 2 : index
    %c48_76 = arith.constant 48 : index
    %636 = vector.load %arg1[%c0_73, %c0_74, %c2_75, %c48_76] : memref<1x12x12x128xf32, #tpu.memory_space<vmem>>, vector<1x12x8x64xf32>
    %637 = vector.shape_cast %636 : vector<1x12x8x64xf32> to vector<12x8x64xf32>
    %638 = vector.extract_strided_slice %637 {offsets = [0, 0, 0], sizes = [8, 8, 64], strides = [1, 1, 1]} : vector<12x8x64xf32> to vector<8x8x64xf32>
    %639 = vector.extract_strided_slice %10 {offsets = [3, 10, 0], sizes = [1, 1, 64], strides = [1, 1, 1]} : vector<5x25x64xf32> to vector<1x1x64xf32>
    %640 = vector.shape_cast %639 : vector<1x1x64xf32> to vector<64xf32>
    %641 = vector.shape_cast %640 : vector<64xf32> to vector<1x1x64xf32>
    %642 = vector.broadcast %641 : vector<1x1x64xf32> to vector<8x8x64xf32>
    %643 = arith.mulf %638, %642 : vector<8x8x64xf32>
    %644 = arith.addf %635, %643 : vector<8x8x64xf32>
    %645 = vector.extract_strided_slice %637 {offsets = [1, 0, 0], sizes = [8, 8, 64], strides = [1, 1, 1]} : vector<12x8x64xf32> to vector<8x8x64xf32>
    %646 = vector.extract_strided_slice %10 {offsets = [3, 11, 0], sizes = [1, 1, 64], strides = [1, 1, 1]} : vector<5x25x64xf32> to vector<1x1x64xf32>
    %647 = vector.shape_cast %646 : vector<1x1x64xf32> to vector<64xf32>
    %648 = vector.shape_cast %647 : vector<64xf32> to vector<1x1x64xf32>
    %649 = vector.broadcast %648 : vector<1x1x64xf32> to vector<8x8x64xf32>
    %650 = arith.mulf %645, %649 : vector<8x8x64xf32>
    %651 = arith.addf %644, %650 : vector<8x8x64xf32>
    %652 = vector.extract_strided_slice %637 {offsets = [2, 0, 0], sizes = [8, 8, 64], strides = [1, 1, 1]} : vector<12x8x64xf32> to vector<8x8x64xf32>
    %653 = vector.extract_strided_slice %10 {offsets = [3, 12, 0], sizes = [1, 1, 64], strides = [1, 1, 1]} : vector<5x25x64xf32> to vector<1x1x64xf32>
    %654 = vector.shape_cast %653 : vector<1x1x64xf32> to vector<64xf32>
    %655 = vector.shape_cast %654 : vector<64xf32> to vector<1x1x64xf32>
    %656 = vector.broadcast %655 : vector<1x1x64xf32> to vector<8x8x64xf32>
    %657 = arith.mulf %652, %656 : vector<8x8x64xf32>
    %658 = arith.addf %651, %657 : vector<8x8x64xf32>
    %659 = vector.extract_strided_slice %637 {offsets = [3, 0, 0], sizes = [8, 8, 64], strides = [1, 1, 1]} : vector<12x8x64xf32> to vector<8x8x64xf32>
    %660 = vector.extract_strided_slice %10 {offsets = [3, 13, 0], sizes = [1, 1, 64], strides = [1, 1, 1]} : vector<5x25x64xf32> to vector<1x1x64xf32>
    %661 = vector.shape_cast %660 : vector<1x1x64xf32> to vector<64xf32>
    %662 = vector.shape_cast %661 : vector<64xf32> to vector<1x1x64xf32>
    %663 = vector.broadcast %662 : vector<1x1x64xf32> to vector<8x8x64xf32>
    %664 = arith.mulf %659, %663 : vector<8x8x64xf32>
    %665 = arith.addf %658, %664 : vector<8x8x64xf32>
    %666 = vector.extract_strided_slice %637 {offsets = [4, 0, 0], sizes = [8, 8, 64], strides = [1, 1, 1]} : vector<12x8x64xf32> to vector<8x8x64xf32>
    %667 = vector.extract_strided_slice %10 {offsets = [3, 14, 0], sizes = [1, 1, 64], strides = [1, 1, 1]} : vector<5x25x64xf32> to vector<1x1x64xf32>
    %668 = vector.shape_cast %667 : vector<1x1x64xf32> to vector<64xf32>
    %669 = vector.shape_cast %668 : vector<64xf32> to vector<1x1x64xf32>
    %670 = vector.broadcast %669 : vector<1x1x64xf32> to vector<8x8x64xf32>
    %671 = arith.mulf %666, %670 : vector<8x8x64xf32>
    %672 = arith.addf %665, %671 : vector<8x8x64xf32>
    %c0_77 = arith.constant 0 : index
    %c0_78 = arith.constant 0 : index
    %c3_79 = arith.constant 3 : index
    %c48_80 = arith.constant 48 : index
    %673 = vector.load %arg1[%c0_77, %c0_78, %c3_79, %c48_80] : memref<1x12x12x128xf32, #tpu.memory_space<vmem>>, vector<1x12x8x64xf32>
    %674 = vector.shape_cast %673 : vector<1x12x8x64xf32> to vector<12x8x64xf32>
    %675 = vector.extract_strided_slice %674 {offsets = [0, 0, 0], sizes = [8, 8, 64], strides = [1, 1, 1]} : vector<12x8x64xf32> to vector<8x8x64xf32>
    %676 = vector.extract_strided_slice %10 {offsets = [3, 15, 0], sizes = [1, 1, 64], strides = [1, 1, 1]} : vector<5x25x64xf32> to vector<1x1x64xf32>
    %677 = vector.shape_cast %676 : vector<1x1x64xf32> to vector<64xf32>
    %678 = vector.shape_cast %677 : vector<64xf32> to vector<1x1x64xf32>
    %679 = vector.broadcast %678 : vector<1x1x64xf32> to vector<8x8x64xf32>
    %680 = arith.mulf %675, %679 : vector<8x8x64xf32>
    %681 = arith.addf %672, %680 : vector<8x8x64xf32>
    %682 = vector.extract_strided_slice %674 {offsets = [1, 0, 0], sizes = [8, 8, 64], strides = [1, 1, 1]} : vector<12x8x64xf32> to vector<8x8x64xf32>
    %683 = vector.extract_strided_slice %10 {offsets = [3, 16, 0], sizes = [1, 1, 64], strides = [1, 1, 1]} : vector<5x25x64xf32> to vector<1x1x64xf32>
    %684 = vector.shape_cast %683 : vector<1x1x64xf32> to vector<64xf32>
    %685 = vector.shape_cast %684 : vector<64xf32> to vector<1x1x64xf32>
    %686 = vector.broadcast %685 : vector<1x1x64xf32> to vector<8x8x64xf32>
    %687 = arith.mulf %682, %686 : vector<8x8x64xf32>
    %688 = arith.addf %681, %687 : vector<8x8x64xf32>
    %689 = vector.extract_strided_slice %674 {offsets = [2, 0, 0], sizes = [8, 8, 64], strides = [1, 1, 1]} : vector<12x8x64xf32> to vector<8x8x64xf32>
    %690 = vector.extract_strided_slice %10 {offsets = [3, 17, 0], sizes = [1, 1, 64], strides = [1, 1, 1]} : vector<5x25x64xf32> to vector<1x1x64xf32>
    %691 = vector.shape_cast %690 : vector<1x1x64xf32> to vector<64xf32>
    %692 = vector.shape_cast %691 : vector<64xf32> to vector<1x1x64xf32>
    %693 = vector.broadcast %692 : vector<1x1x64xf32> to vector<8x8x64xf32>
    %694 = arith.mulf %689, %693 : vector<8x8x64xf32>
    %695 = arith.addf %688, %694 : vector<8x8x64xf32>
    %696 = vector.extract_strided_slice %674 {offsets = [3, 0, 0], sizes = [8, 8, 64], strides = [1, 1, 1]} : vector<12x8x64xf32> to vector<8x8x64xf32>
    %697 = vector.extract_strided_slice %10 {offsets = [3, 18, 0], sizes = [1, 1, 64], strides = [1, 1, 1]} : vector<5x25x64xf32> to vector<1x1x64xf32>
    %698 = vector.shape_cast %697 : vector<1x1x64xf32> to vector<64xf32>
    %699 = vector.shape_cast %698 : vector<64xf32> to vector<1x1x64xf32>
    %700 = vector.broadcast %699 : vector<1x1x64xf32> to vector<8x8x64xf32>
    %701 = arith.mulf %696, %700 : vector<8x8x64xf32>
    %702 = arith.addf %695, %701 : vector<8x8x64xf32>
    %703 = vector.extract_strided_slice %674 {offsets = [4, 0, 0], sizes = [8, 8, 64], strides = [1, 1, 1]} : vector<12x8x64xf32> to vector<8x8x64xf32>
    %704 = vector.extract_strided_slice %10 {offsets = [3, 19, 0], sizes = [1, 1, 64], strides = [1, 1, 1]} : vector<5x25x64xf32> to vector<1x1x64xf32>
    %705 = vector.shape_cast %704 : vector<1x1x64xf32> to vector<64xf32>
    %706 = vector.shape_cast %705 : vector<64xf32> to vector<1x1x64xf32>
    %707 = vector.broadcast %706 : vector<1x1x64xf32> to vector<8x8x64xf32>
    %708 = arith.mulf %703, %707 : vector<8x8x64xf32>
    %709 = arith.addf %702, %708 : vector<8x8x64xf32>
    %c0_81 = arith.constant 0 : index
    %c0_82 = arith.constant 0 : index
    %c4_83 = arith.constant 4 : index
    %c48_84 = arith.constant 48 : index
    %710 = vector.load %arg1[%c0_81, %c0_82, %c4_83, %c48_84] : memref<1x12x12x128xf32, #tpu.memory_space<vmem>>, vector<1x12x8x64xf32>
    %711 = vector.shape_cast %710 : vector<1x12x8x64xf32> to vector<12x8x64xf32>
    %712 = vector.extract_strided_slice %711 {offsets = [0, 0, 0], sizes = [8, 8, 64], strides = [1, 1, 1]} : vector<12x8x64xf32> to vector<8x8x64xf32>
    %713 = vector.extract_strided_slice %10 {offsets = [3, 20, 0], sizes = [1, 1, 64], strides = [1, 1, 1]} : vector<5x25x64xf32> to vector<1x1x64xf32>
    %714 = vector.shape_cast %713 : vector<1x1x64xf32> to vector<64xf32>
    %715 = vector.shape_cast %714 : vector<64xf32> to vector<1x1x64xf32>
    %716 = vector.broadcast %715 : vector<1x1x64xf32> to vector<8x8x64xf32>
    %717 = arith.mulf %712, %716 : vector<8x8x64xf32>
    %718 = arith.addf %709, %717 : vector<8x8x64xf32>
    %719 = vector.extract_strided_slice %711 {offsets = [1, 0, 0], sizes = [8, 8, 64], strides = [1, 1, 1]} : vector<12x8x64xf32> to vector<8x8x64xf32>
    %720 = vector.extract_strided_slice %10 {offsets = [3, 21, 0], sizes = [1, 1, 64], strides = [1, 1, 1]} : vector<5x25x64xf32> to vector<1x1x64xf32>
    %721 = vector.shape_cast %720 : vector<1x1x64xf32> to vector<64xf32>
    %722 = vector.shape_cast %721 : vector<64xf32> to vector<1x1x64xf32>
    %723 = vector.broadcast %722 : vector<1x1x64xf32> to vector<8x8x64xf32>
    %724 = arith.mulf %719, %723 : vector<8x8x64xf32>
    %725 = arith.addf %718, %724 : vector<8x8x64xf32>
    %726 = vector.extract_strided_slice %711 {offsets = [2, 0, 0], sizes = [8, 8, 64], strides = [1, 1, 1]} : vector<12x8x64xf32> to vector<8x8x64xf32>
    %727 = vector.extract_strided_slice %10 {offsets = [3, 22, 0], sizes = [1, 1, 64], strides = [1, 1, 1]} : vector<5x25x64xf32> to vector<1x1x64xf32>
    %728 = vector.shape_cast %727 : vector<1x1x64xf32> to vector<64xf32>
    %729 = vector.shape_cast %728 : vector<64xf32> to vector<1x1x64xf32>
    %730 = vector.broadcast %729 : vector<1x1x64xf32> to vector<8x8x64xf32>
    %731 = arith.mulf %726, %730 : vector<8x8x64xf32>
    %732 = arith.addf %725, %731 : vector<8x8x64xf32>
    %733 = vector.extract_strided_slice %711 {offsets = [3, 0, 0], sizes = [8, 8, 64], strides = [1, 1, 1]} : vector<12x8x64xf32> to vector<8x8x64xf32>
    %734 = vector.extract_strided_slice %10 {offsets = [3, 23, 0], sizes = [1, 1, 64], strides = [1, 1, 1]} : vector<5x25x64xf32> to vector<1x1x64xf32>
    %735 = vector.shape_cast %734 : vector<1x1x64xf32> to vector<64xf32>
    %736 = vector.shape_cast %735 : vector<64xf32> to vector<1x1x64xf32>
    %737 = vector.broadcast %736 : vector<1x1x64xf32> to vector<8x8x64xf32>
    %738 = arith.mulf %733, %737 : vector<8x8x64xf32>
    %739 = arith.addf %732, %738 : vector<8x8x64xf32>
    %740 = vector.extract_strided_slice %711 {offsets = [4, 0, 0], sizes = [8, 8, 64], strides = [1, 1, 1]} : vector<12x8x64xf32> to vector<8x8x64xf32>
    %741 = vector.extract_strided_slice %10 {offsets = [3, 24, 0], sizes = [1, 1, 64], strides = [1, 1, 1]} : vector<5x25x64xf32> to vector<1x1x64xf32>
    %742 = vector.shape_cast %741 : vector<1x1x64xf32> to vector<64xf32>
    %743 = vector.shape_cast %742 : vector<64xf32> to vector<1x1x64xf32>
    %744 = vector.broadcast %743 : vector<1x1x64xf32> to vector<8x8x64xf32>
    %745 = arith.mulf %740, %744 : vector<8x8x64xf32>
    %746 = arith.addf %739, %745 : vector<8x8x64xf32>
    %c0_85 = arith.constant 0 : index
    %c0_86 = arith.constant 0 : index
    %c0_87 = arith.constant 0 : index
    %c64 = arith.constant 64 : index
    %747 = vector.load %arg1[%c0_85, %c0_86, %c0_87, %c64] : memref<1x12x12x128xf32, #tpu.memory_space<vmem>>, vector<1x12x8x64xf32>
    %748 = vector.shape_cast %747 : vector<1x12x8x64xf32> to vector<12x8x64xf32>
    %749 = vector.extract_strided_slice %748 {offsets = [0, 0, 0], sizes = [8, 8, 64], strides = [1, 1, 1]} : vector<12x8x64xf32> to vector<8x8x64xf32>
    %750 = vector.extract_strided_slice %10 {offsets = [4, 0, 0], sizes = [1, 1, 64], strides = [1, 1, 1]} : vector<5x25x64xf32> to vector<1x1x64xf32>
    %751 = vector.shape_cast %750 : vector<1x1x64xf32> to vector<64xf32>
    %752 = vector.shape_cast %751 : vector<64xf32> to vector<1x1x64xf32>
    %753 = vector.broadcast %752 : vector<1x1x64xf32> to vector<8x8x64xf32>
    %754 = arith.mulf %749, %753 : vector<8x8x64xf32>
    %755 = vector.extract_strided_slice %748 {offsets = [1, 0, 0], sizes = [8, 8, 64], strides = [1, 1, 1]} : vector<12x8x64xf32> to vector<8x8x64xf32>
    %756 = vector.extract_strided_slice %10 {offsets = [4, 1, 0], sizes = [1, 1, 64], strides = [1, 1, 1]} : vector<5x25x64xf32> to vector<1x1x64xf32>
    %757 = vector.shape_cast %756 : vector<1x1x64xf32> to vector<64xf32>
    %758 = vector.shape_cast %757 : vector<64xf32> to vector<1x1x64xf32>
    %759 = vector.broadcast %758 : vector<1x1x64xf32> to vector<8x8x64xf32>
    %760 = arith.mulf %755, %759 : vector<8x8x64xf32>
    %761 = arith.addf %754, %760 : vector<8x8x64xf32>
    %762 = vector.extract_strided_slice %748 {offsets = [2, 0, 0], sizes = [8, 8, 64], strides = [1, 1, 1]} : vector<12x8x64xf32> to vector<8x8x64xf32>
    %763 = vector.extract_strided_slice %10 {offsets = [4, 2, 0], sizes = [1, 1, 64], strides = [1, 1, 1]} : vector<5x25x64xf32> to vector<1x1x64xf32>
    %764 = vector.shape_cast %763 : vector<1x1x64xf32> to vector<64xf32>
    %765 = vector.shape_cast %764 : vector<64xf32> to vector<1x1x64xf32>
    %766 = vector.broadcast %765 : vector<1x1x64xf32> to vector<8x8x64xf32>
    %767 = arith.mulf %762, %766 : vector<8x8x64xf32>
    %768 = arith.addf %761, %767 : vector<8x8x64xf32>
    %769 = vector.extract_strided_slice %748 {offsets = [3, 0, 0], sizes = [8, 8, 64], strides = [1, 1, 1]} : vector<12x8x64xf32> to vector<8x8x64xf32>
    %770 = vector.extract_strided_slice %10 {offsets = [4, 3, 0], sizes = [1, 1, 64], strides = [1, 1, 1]} : vector<5x25x64xf32> to vector<1x1x64xf32>
    %771 = vector.shape_cast %770 : vector<1x1x64xf32> to vector<64xf32>
    %772 = vector.shape_cast %771 : vector<64xf32> to vector<1x1x64xf32>
    %773 = vector.broadcast %772 : vector<1x1x64xf32> to vector<8x8x64xf32>
    %774 = arith.mulf %769, %773 : vector<8x8x64xf32>
    %775 = arith.addf %768, %774 : vector<8x8x64xf32>
    %776 = vector.extract_strided_slice %748 {offsets = [4, 0, 0], sizes = [8, 8, 64], strides = [1, 1, 1]} : vector<12x8x64xf32> to vector<8x8x64xf32>
    %777 = vector.extract_strided_slice %10 {offsets = [4, 4, 0], sizes = [1, 1, 64], strides = [1, 1, 1]} : vector<5x25x64xf32> to vector<1x1x64xf32>
    %778 = vector.shape_cast %777 : vector<1x1x64xf32> to vector<64xf32>
    %779 = vector.shape_cast %778 : vector<64xf32> to vector<1x1x64xf32>
    %780 = vector.broadcast %779 : vector<1x1x64xf32> to vector<8x8x64xf32>
    %781 = arith.mulf %776, %780 : vector<8x8x64xf32>
    %782 = arith.addf %775, %781 : vector<8x8x64xf32>
    %c0_88 = arith.constant 0 : index
    %c0_89 = arith.constant 0 : index
    %c1_90 = arith.constant 1 : index
    %c64_91 = arith.constant 64 : index
    %783 = vector.load %arg1[%c0_88, %c0_89, %c1_90, %c64_91] : memref<1x12x12x128xf32, #tpu.memory_space<vmem>>, vector<1x12x8x64xf32>
    %784 = vector.shape_cast %783 : vector<1x12x8x64xf32> to vector<12x8x64xf32>
    %785 = vector.extract_strided_slice %784 {offsets = [0, 0, 0], sizes = [8, 8, 64], strides = [1, 1, 1]} : vector<12x8x64xf32> to vector<8x8x64xf32>
    %786 = vector.extract_strided_slice %10 {offsets = [4, 5, 0], sizes = [1, 1, 64], strides = [1, 1, 1]} : vector<5x25x64xf32> to vector<1x1x64xf32>
    %787 = vector.shape_cast %786 : vector<1x1x64xf32> to vector<64xf32>
    %788 = vector.shape_cast %787 : vector<64xf32> to vector<1x1x64xf32>
    %789 = vector.broadcast %788 : vector<1x1x64xf32> to vector<8x8x64xf32>
    %790 = arith.mulf %785, %789 : vector<8x8x64xf32>
    %791 = arith.addf %782, %790 : vector<8x8x64xf32>
    %792 = vector.extract_strided_slice %784 {offsets = [1, 0, 0], sizes = [8, 8, 64], strides = [1, 1, 1]} : vector<12x8x64xf32> to vector<8x8x64xf32>
    %793 = vector.extract_strided_slice %10 {offsets = [4, 6, 0], sizes = [1, 1, 64], strides = [1, 1, 1]} : vector<5x25x64xf32> to vector<1x1x64xf32>
    %794 = vector.shape_cast %793 : vector<1x1x64xf32> to vector<64xf32>
    %795 = vector.shape_cast %794 : vector<64xf32> to vector<1x1x64xf32>
    %796 = vector.broadcast %795 : vector<1x1x64xf32> to vector<8x8x64xf32>
    %797 = arith.mulf %792, %796 : vector<8x8x64xf32>
    %798 = arith.addf %791, %797 : vector<8x8x64xf32>
    %799 = vector.extract_strided_slice %784 {offsets = [2, 0, 0], sizes = [8, 8, 64], strides = [1, 1, 1]} : vector<12x8x64xf32> to vector<8x8x64xf32>
    %800 = vector.extract_strided_slice %10 {offsets = [4, 7, 0], sizes = [1, 1, 64], strides = [1, 1, 1]} : vector<5x25x64xf32> to vector<1x1x64xf32>
    %801 = vector.shape_cast %800 : vector<1x1x64xf32> to vector<64xf32>
    %802 = vector.shape_cast %801 : vector<64xf32> to vector<1x1x64xf32>
    %803 = vector.broadcast %802 : vector<1x1x64xf32> to vector<8x8x64xf32>
    %804 = arith.mulf %799, %803 : vector<8x8x64xf32>
    %805 = arith.addf %798, %804 : vector<8x8x64xf32>
    %806 = vector.extract_strided_slice %784 {offsets = [3, 0, 0], sizes = [8, 8, 64], strides = [1, 1, 1]} : vector<12x8x64xf32> to vector<8x8x64xf32>
    %807 = vector.extract_strided_slice %10 {offsets = [4, 8, 0], sizes = [1, 1, 64], strides = [1, 1, 1]} : vector<5x25x64xf32> to vector<1x1x64xf32>
    %808 = vector.shape_cast %807 : vector<1x1x64xf32> to vector<64xf32>
    %809 = vector.shape_cast %808 : vector<64xf32> to vector<1x1x64xf32>
    %810 = vector.broadcast %809 : vector<1x1x64xf32> to vector<8x8x64xf32>
    %811 = arith.mulf %806, %810 : vector<8x8x64xf32>
    %812 = arith.addf %805, %811 : vector<8x8x64xf32>
    %813 = vector.extract_strided_slice %784 {offsets = [4, 0, 0], sizes = [8, 8, 64], strides = [1, 1, 1]} : vector<12x8x64xf32> to vector<8x8x64xf32>
    %814 = vector.extract_strided_slice %10 {offsets = [4, 9, 0], sizes = [1, 1, 64], strides = [1, 1, 1]} : vector<5x25x64xf32> to vector<1x1x64xf32>
    %815 = vector.shape_cast %814 : vector<1x1x64xf32> to vector<64xf32>
    %816 = vector.shape_cast %815 : vector<64xf32> to vector<1x1x64xf32>
    %817 = vector.broadcast %816 : vector<1x1x64xf32> to vector<8x8x64xf32>
    %818 = arith.mulf %813, %817 : vector<8x8x64xf32>
    %819 = arith.addf %812, %818 : vector<8x8x64xf32>
    %c0_92 = arith.constant 0 : index
    %c0_93 = arith.constant 0 : index
    %c2_94 = arith.constant 2 : index
    %c64_95 = arith.constant 64 : index
    %820 = vector.load %arg1[%c0_92, %c0_93, %c2_94, %c64_95] : memref<1x12x12x128xf32, #tpu.memory_space<vmem>>, vector<1x12x8x64xf32>
    %821 = vector.shape_cast %820 : vector<1x12x8x64xf32> to vector<12x8x64xf32>
    %822 = vector.extract_strided_slice %821 {offsets = [0, 0, 0], sizes = [8, 8, 64], strides = [1, 1, 1]} : vector<12x8x64xf32> to vector<8x8x64xf32>
    %823 = vector.extract_strided_slice %10 {offsets = [4, 10, 0], sizes = [1, 1, 64], strides = [1, 1, 1]} : vector<5x25x64xf32> to vector<1x1x64xf32>
    %824 = vector.shape_cast %823 : vector<1x1x64xf32> to vector<64xf32>
    %825 = vector.shape_cast %824 : vector<64xf32> to vector<1x1x64xf32>
    %826 = vector.broadcast %825 : vector<1x1x64xf32> to vector<8x8x64xf32>
    %827 = arith.mulf %822, %826 : vector<8x8x64xf32>
    %828 = arith.addf %819, %827 : vector<8x8x64xf32>
    %829 = vector.extract_strided_slice %821 {offsets = [1, 0, 0], sizes = [8, 8, 64], strides = [1, 1, 1]} : vector<12x8x64xf32> to vector<8x8x64xf32>
    %830 = vector.extract_strided_slice %10 {offsets = [4, 11, 0], sizes = [1, 1, 64], strides = [1, 1, 1]} : vector<5x25x64xf32> to vector<1x1x64xf32>
    %831 = vector.shape_cast %830 : vector<1x1x64xf32> to vector<64xf32>
    %832 = vector.shape_cast %831 : vector<64xf32> to vector<1x1x64xf32>
    %833 = vector.broadcast %832 : vector<1x1x64xf32> to vector<8x8x64xf32>
    %834 = arith.mulf %829, %833 : vector<8x8x64xf32>
    %835 = arith.addf %828, %834 : vector<8x8x64xf32>
    %836 = vector.extract_strided_slice %821 {offsets = [2, 0, 0], sizes = [8, 8, 64], strides = [1, 1, 1]} : vector<12x8x64xf32> to vector<8x8x64xf32>
    %837 = vector.extract_strided_slice %10 {offsets = [4, 12, 0], sizes = [1, 1, 64], strides = [1, 1, 1]} : vector<5x25x64xf32> to vector<1x1x64xf32>
    %838 = vector.shape_cast %837 : vector<1x1x64xf32> to vector<64xf32>
    %839 = vector.shape_cast %838 : vector<64xf32> to vector<1x1x64xf32>
    %840 = vector.broadcast %839 : vector<1x1x64xf32> to vector<8x8x64xf32>
    %841 = arith.mulf %836, %840 : vector<8x8x64xf32>
    %842 = arith.addf %835, %841 : vector<8x8x64xf32>
    %843 = vector.extract_strided_slice %821 {offsets = [3, 0, 0], sizes = [8, 8, 64], strides = [1, 1, 1]} : vector<12x8x64xf32> to vector<8x8x64xf32>
    %844 = vector.extract_strided_slice %10 {offsets = [4, 13, 0], sizes = [1, 1, 64], strides = [1, 1, 1]} : vector<5x25x64xf32> to vector<1x1x64xf32>
    %845 = vector.shape_cast %844 : vector<1x1x64xf32> to vector<64xf32>
    %846 = vector.shape_cast %845 : vector<64xf32> to vector<1x1x64xf32>
    %847 = vector.broadcast %846 : vector<1x1x64xf32> to vector<8x8x64xf32>
    %848 = arith.mulf %843, %847 : vector<8x8x64xf32>
    %849 = arith.addf %842, %848 : vector<8x8x64xf32>
    %850 = vector.extract_strided_slice %821 {offsets = [4, 0, 0], sizes = [8, 8, 64], strides = [1, 1, 1]} : vector<12x8x64xf32> to vector<8x8x64xf32>
    %851 = vector.extract_strided_slice %10 {offsets = [4, 14, 0], sizes = [1, 1, 64], strides = [1, 1, 1]} : vector<5x25x64xf32> to vector<1x1x64xf32>
    %852 = vector.shape_cast %851 : vector<1x1x64xf32> to vector<64xf32>
    %853 = vector.shape_cast %852 : vector<64xf32> to vector<1x1x64xf32>
    %854 = vector.broadcast %853 : vector<1x1x64xf32> to vector<8x8x64xf32>
    %855 = arith.mulf %850, %854 : vector<8x8x64xf32>
    %856 = arith.addf %849, %855 : vector<8x8x64xf32>
    %c0_96 = arith.constant 0 : index
    %c0_97 = arith.constant 0 : index
    %c3_98 = arith.constant 3 : index
    %c64_99 = arith.constant 64 : index
    %857 = vector.load %arg1[%c0_96, %c0_97, %c3_98, %c64_99] : memref<1x12x12x128xf32, #tpu.memory_space<vmem>>, vector<1x12x8x64xf32>
    %858 = vector.shape_cast %857 : vector<1x12x8x64xf32> to vector<12x8x64xf32>
    %859 = vector.extract_strided_slice %858 {offsets = [0, 0, 0], sizes = [8, 8, 64], strides = [1, 1, 1]} : vector<12x8x64xf32> to vector<8x8x64xf32>
    %860 = vector.extract_strided_slice %10 {offsets = [4, 15, 0], sizes = [1, 1, 64], strides = [1, 1, 1]} : vector<5x25x64xf32> to vector<1x1x64xf32>
    %861 = vector.shape_cast %860 : vector<1x1x64xf32> to vector<64xf32>
    %862 = vector.shape_cast %861 : vector<64xf32> to vector<1x1x64xf32>
    %863 = vector.broadcast %862 : vector<1x1x64xf32> to vector<8x8x64xf32>
    %864 = arith.mulf %859, %863 : vector<8x8x64xf32>
    %865 = arith.addf %856, %864 : vector<8x8x64xf32>
    %866 = vector.extract_strided_slice %858 {offsets = [1, 0, 0], sizes = [8, 8, 64], strides = [1, 1, 1]} : vector<12x8x64xf32> to vector<8x8x64xf32>
    %867 = vector.extract_strided_slice %10 {offsets = [4, 16, 0], sizes = [1, 1, 64], strides = [1, 1, 1]} : vector<5x25x64xf32> to vector<1x1x64xf32>
    %868 = vector.shape_cast %867 : vector<1x1x64xf32> to vector<64xf32>
    %869 = vector.shape_cast %868 : vector<64xf32> to vector<1x1x64xf32>
    %870 = vector.broadcast %869 : vector<1x1x64xf32> to vector<8x8x64xf32>
    %871 = arith.mulf %866, %870 : vector<8x8x64xf32>
    %872 = arith.addf %865, %871 : vector<8x8x64xf32>
    %873 = vector.extract_strided_slice %858 {offsets = [2, 0, 0], sizes = [8, 8, 64], strides = [1, 1, 1]} : vector<12x8x64xf32> to vector<8x8x64xf32>
    %874 = vector.extract_strided_slice %10 {offsets = [4, 17, 0], sizes = [1, 1, 64], strides = [1, 1, 1]} : vector<5x25x64xf32> to vector<1x1x64xf32>
    %875 = vector.shape_cast %874 : vector<1x1x64xf32> to vector<64xf32>
    %876 = vector.shape_cast %875 : vector<64xf32> to vector<1x1x64xf32>
    %877 = vector.broadcast %876 : vector<1x1x64xf32> to vector<8x8x64xf32>
    %878 = arith.mulf %873, %877 : vector<8x8x64xf32>
    %879 = arith.addf %872, %878 : vector<8x8x64xf32>
    %880 = vector.extract_strided_slice %858 {offsets = [3, 0, 0], sizes = [8, 8, 64], strides = [1, 1, 1]} : vector<12x8x64xf32> to vector<8x8x64xf32>
    %881 = vector.extract_strided_slice %10 {offsets = [4, 18, 0], sizes = [1, 1, 64], strides = [1, 1, 1]} : vector<5x25x64xf32> to vector<1x1x64xf32>
    %882 = vector.shape_cast %881 : vector<1x1x64xf32> to vector<64xf32>
    %883 = vector.shape_cast %882 : vector<64xf32> to vector<1x1x64xf32>
    %884 = vector.broadcast %883 : vector<1x1x64xf32> to vector<8x8x64xf32>
    %885 = arith.mulf %880, %884 : vector<8x8x64xf32>
    %886 = arith.addf %879, %885 : vector<8x8x64xf32>
    %887 = vector.extract_strided_slice %858 {offsets = [4, 0, 0], sizes = [8, 8, 64], strides = [1, 1, 1]} : vector<12x8x64xf32> to vector<8x8x64xf32>
    %888 = vector.extract_strided_slice %10 {offsets = [4, 19, 0], sizes = [1, 1, 64], strides = [1, 1, 1]} : vector<5x25x64xf32> to vector<1x1x64xf32>
    %889 = vector.shape_cast %888 : vector<1x1x64xf32> to vector<64xf32>
    %890 = vector.shape_cast %889 : vector<64xf32> to vector<1x1x64xf32>
    %891 = vector.broadcast %890 : vector<1x1x64xf32> to vector<8x8x64xf32>
    %892 = arith.mulf %887, %891 : vector<8x8x64xf32>
    %893 = arith.addf %886, %892 : vector<8x8x64xf32>
    %c0_100 = arith.constant 0 : index
    %c0_101 = arith.constant 0 : index
    %c4_102 = arith.constant 4 : index
    %c64_103 = arith.constant 64 : index
    %894 = vector.load %arg1[%c0_100, %c0_101, %c4_102, %c64_103] : memref<1x12x12x128xf32, #tpu.memory_space<vmem>>, vector<1x12x8x64xf32>
    %895 = vector.shape_cast %894 : vector<1x12x8x64xf32> to vector<12x8x64xf32>
    %896 = vector.extract_strided_slice %895 {offsets = [0, 0, 0], sizes = [8, 8, 64], strides = [1, 1, 1]} : vector<12x8x64xf32> to vector<8x8x64xf32>
    %897 = vector.extract_strided_slice %10 {offsets = [4, 20, 0], sizes = [1, 1, 64], strides = [1, 1, 1]} : vector<5x25x64xf32> to vector<1x1x64xf32>
    %898 = vector.shape_cast %897 : vector<1x1x64xf32> to vector<64xf32>
    %899 = vector.shape_cast %898 : vector<64xf32> to vector<1x1x64xf32>
    %900 = vector.broadcast %899 : vector<1x1x64xf32> to vector<8x8x64xf32>
    %901 = arith.mulf %896, %900 : vector<8x8x64xf32>
    %902 = arith.addf %893, %901 : vector<8x8x64xf32>
    %903 = vector.extract_strided_slice %895 {offsets = [1, 0, 0], sizes = [8, 8, 64], strides = [1, 1, 1]} : vector<12x8x64xf32> to vector<8x8x64xf32>
    %904 = vector.extract_strided_slice %10 {offsets = [4, 21, 0], sizes = [1, 1, 64], strides = [1, 1, 1]} : vector<5x25x64xf32> to vector<1x1x64xf32>
    %905 = vector.shape_cast %904 : vector<1x1x64xf32> to vector<64xf32>
    %906 = vector.shape_cast %905 : vector<64xf32> to vector<1x1x64xf32>
    %907 = vector.broadcast %906 : vector<1x1x64xf32> to vector<8x8x64xf32>
    %908 = arith.mulf %903, %907 : vector<8x8x64xf32>
    %909 = arith.addf %902, %908 : vector<8x8x64xf32>
    %910 = vector.extract_strided_slice %895 {offsets = [2, 0, 0], sizes = [8, 8, 64], strides = [1, 1, 1]} : vector<12x8x64xf32> to vector<8x8x64xf32>
    %911 = vector.extract_strided_slice %10 {offsets = [4, 22, 0], sizes = [1, 1, 64], strides = [1, 1, 1]} : vector<5x25x64xf32> to vector<1x1x64xf32>
    %912 = vector.shape_cast %911 : vector<1x1x64xf32> to vector<64xf32>
    %913 = vector.shape_cast %912 : vector<64xf32> to vector<1x1x64xf32>
    %914 = vector.broadcast %913 : vector<1x1x64xf32> to vector<8x8x64xf32>
    %915 = arith.mulf %910, %914 : vector<8x8x64xf32>
    %916 = arith.addf %909, %915 : vector<8x8x64xf32>
    %917 = vector.extract_strided_slice %895 {offsets = [3, 0, 0], sizes = [8, 8, 64], strides = [1, 1, 1]} : vector<12x8x64xf32> to vector<8x8x64xf32>
    %918 = vector.extract_strided_slice %10 {offsets = [4, 23, 0], sizes = [1, 1, 64], strides = [1, 1, 1]} : vector<5x25x64xf32> to vector<1x1x64xf32>
    %919 = vector.shape_cast %918 : vector<1x1x64xf32> to vector<64xf32>
    %920 = vector.shape_cast %919 : vector<64xf32> to vector<1x1x64xf32>
    %921 = vector.broadcast %920 : vector<1x1x64xf32> to vector<8x8x64xf32>
    %922 = arith.mulf %917, %921 : vector<8x8x64xf32>
    %923 = arith.addf %916, %922 : vector<8x8x64xf32>
    %924 = vector.extract_strided_slice %895 {offsets = [4, 0, 0], sizes = [8, 8, 64], strides = [1, 1, 1]} : vector<12x8x64xf32> to vector<8x8x64xf32>
    %925 = vector.extract_strided_slice %10 {offsets = [4, 24, 0], sizes = [1, 1, 64], strides = [1, 1, 1]} : vector<5x25x64xf32> to vector<1x1x64xf32>
    %926 = vector.shape_cast %925 : vector<1x1x64xf32> to vector<64xf32>
    %927 = vector.shape_cast %926 : vector<64xf32> to vector<1x1x64xf32>
    %928 = vector.broadcast %927 : vector<1x1x64xf32> to vector<8x8x64xf32>
    %929 = arith.mulf %924, %928 : vector<8x8x64xf32>
    %930 = arith.addf %923, %929 : vector<8x8x64xf32>
    %931 = arith.addf %194, %378 : vector<8x8x64xf32>
    %932 = arith.addf %562, %746 : vector<8x8x64xf32>
    %933 = arith.addf %931, %932 : vector<8x8x64xf32>
    %934 = arith.addf %933, %930 : vector<8x8x64xf32>
    %c0_104 = arith.constant 0 : index
    %c0_105 = arith.constant 0 : index
    %935 = vector.load %arg3[%c0_104, %c0_105] : memref<1x64xf32, #tpu.memory_space<vmem>>, vector<1x64xf32>
    %936 = vector.shape_cast %935 : vector<1x64xf32> to vector<1x1x64xf32>
    %937 = vector.broadcast %936 : vector<1x1x64xf32> to vector<8x8x64xf32>
    %938 = arith.addf %934, %937 : vector<8x8x64xf32>
    %cst_106 = arith.constant 5.000000e-01 : f32
    %939 = vector.broadcast %cst_106 : f32 to vector<8x8x64xf32>
    %940 = arith.mulf %939, %938 : vector<8x8x64xf32>
    %cst_107 = arith.constant 0.707106769 : f32
    %941 = vector.broadcast %cst_107 : f32 to vector<8x8x64xf32>
    %942 = arith.mulf %938, %941 : vector<8x8x64xf32>
    %943 = math.absf %942 : vector<8x8x64xf32>
    %cst_108 = arith.constant 0.327591091 : f32
    %944 = vector.broadcast %cst_108 : f32 to vector<8x8x64xf32>
    %945 = arith.mulf %944, %943 : vector<8x8x64xf32>
    %cst_109 = arith.constant 1.000000e+00 : f32
    %946 = vector.broadcast %cst_109 : f32 to vector<8x8x64xf32>
    %947 = arith.addf %946, %945 : vector<8x8x64xf32>
    %cst_110 = arith.constant 1.000000e+00 : f32
    %948 = vector.broadcast %cst_110 : f32 to vector<8x8x64xf32>
    %949 = arith.divf %948, %947 : vector<8x8x64xf32>
    %cst_111 = arith.constant 1.06140542 : f32
    %950 = vector.broadcast %cst_111 : f32 to vector<8x8x64xf32>
    %951 = arith.mulf %949, %950 : vector<8x8x64xf32>
    %cst_112 = arith.constant -1.45315206 : f32
    %952 = vector.broadcast %cst_112 : f32 to vector<8x8x64xf32>
    %953 = arith.addf %952, %951 : vector<8x8x64xf32>
    %954 = arith.mulf %949, %953 : vector<8x8x64xf32>
    %cst_113 = arith.constant 1.42141378 : f32
    %955 = vector.broadcast %cst_113 : f32 to vector<8x8x64xf32>
    %956 = arith.addf %955, %954 : vector<8x8x64xf32>
    %957 = arith.mulf %949, %956 : vector<8x8x64xf32>
    %cst_114 = arith.constant -0.284496725 : f32
    %958 = vector.broadcast %cst_114 : f32 to vector<8x8x64xf32>
    %959 = arith.addf %958, %957 : vector<8x8x64xf32>
    %960 = arith.mulf %949, %959 : vector<8x8x64xf32>
    %cst_115 = arith.constant 0.254829586 : f32
    %961 = vector.broadcast %cst_115 : f32 to vector<8x8x64xf32>
    %962 = arith.addf %961, %960 : vector<8x8x64xf32>
    %963 = arith.mulf %949, %962 : vector<8x8x64xf32>
    %cst_116 = arith.constant 0.000000e+00 : f32
    %964 = vector.broadcast %cst_116 : f32 to vector<8x8x64xf32>
    %965 = arith.subf %964, %943 : vector<8x8x64xf32>
    %966 = arith.mulf %965, %943 : vector<8x8x64xf32>
    %967 = math.exp %966 : vector<8x8x64xf32>
    %968 = arith.mulf %963, %967 : vector<8x8x64xf32>
    %cst_117 = arith.constant 1.000000e+00 : f32
    %969 = vector.broadcast %cst_117 : f32 to vector<8x8x64xf32>
    %970 = arith.subf %969, %968 : vector<8x8x64xf32>
    %cst_118 = arith.constant 0.000000e+00 : f32
    %971 = vector.broadcast %cst_118 : f32 to vector<8x8x64xf32>
    %972 = arith.cmpf olt, %942, %971 : vector<8x8x64xf32>
    %cst_119 = arith.constant 0.000000e+00 : f32
    %973 = vector.broadcast %cst_119 : f32 to vector<8x8x64xf32>
    %974 = arith.subf %973, %970 : vector<8x8x64xf32>
    %975 = arith.select %972, %974, %970 : vector<8x8x64xi1>, vector<8x8x64xf32>
    %cst_120 = arith.constant 1.000000e+00 : f32
    %976 = vector.broadcast %cst_120 : f32 to vector<8x8x64xf32>
    %977 = arith.addf %976, %975 : vector<8x8x64xf32>
    %978 = arith.mulf %940, %977 : vector<8x8x64xf32>
    %c0_121 = arith.constant 0 : index
    %c0_122 = arith.constant 0 : index
    %c0_123 = arith.constant 0 : index
    %c0_124 = arith.constant 0 : index
    %979 = vector.load %arg7[%c0_121, %c0_122, %c0_123, %c0_124] : memref<1x8x8x64xf32, #tpu.memory_space<vmem>>, vector<1x8x8x64xf32>
    %980 = vector.shape_cast %979 : vector<1x8x8x64xf32> to vector<8x8x64xf32>
    %981 = vector.shape_cast %978 : vector<8x8x64xf32> to vector<1x8x8x64xf32>
    tpu.vector_store %arg7[%c0_121, %c0_122, %c0_123, %c0_124], %981 {strides = array<i32>} : memref<1x8x8x64xf32, #tpu.memory_space<vmem>>, vector<1x8x8x64xf32>,
    return
  }
  func.func @transform_0(%arg0: i32) -> (i32, i32, i32, i32) {
    %c0_i32 = arith.constant 0 : i32
    %c0_i32_0 = arith.constant 0 : i32
    %c0_i32_1 = arith.constant 0 : i32
    %c0_i32_2 = arith.constant 0 : i32
    return %arg0, %c0_i32, %c0_i32_0, %c0_i32_1 : i32, i32, i32, i32
  }
  func.func @transform_1(%arg0: i32) -> (i32, i32, i32) {
    %c0_i32 = arith.constant 0 : i32
    %c0_i32_0 = arith.constant 0 : i32
    %c0_i32_1 = arith.constant 0 : i32
    %c0_i32_2 = arith.constant 0 : i32
    return %c0_i32, %c0_i32_0, %c0_i32_1 : i32, i32, i32
  }
  func.func @transform_2(%arg0: i32) -> (i32, i32) {
    %c0_i32 = arith.constant 0 : i32
    %c0_i32_0 = arith.constant 0 : i32
    %c0_i32_1 = arith.constant 0 : i32
    return %c0_i32, %c0_i32_0 : i32, i32
  }
  func.func @transform_3(%arg0: i32) -> (i32, i32, i32) {
    %c0_i32 = arith.constant 0 : i32
    %c0_i32_0 = arith.constant 0 : i32
    %c0_i32_1 = arith.constant 0 : i32
    return %arg0, %c0_i32, %c0_i32_0 : i32, i32, i32
  }
  func.func @transform_4(%arg0: i32) -> (i32, i32) {
    %c0_i32 = arith.constant 0 : i32
    %c0_i32_0 = arith.constant 0 : i32
    %c0_i32_1 = arith.constant 0 : i32
    return %c0_i32, %c0_i32_0 : i32, i32
  }
  func.func @transform_5(%arg0: i32) -> (i32, i32) {
    %c0_i32 = arith.constant 0 : i32
    %c0_i32_0 = arith.constant 0 : i32
    %c0_i32_1 = arith.constant 0 : i32
    return %c0_i32, %c0_i32_0 : i32, i32
  }
  func.func @transform_6(%arg0: i32) -> (i32, i32, i32, i32) {
    %c0_i32 = arith.constant 0 : i32
    %c0_i32_0 = arith.constant 0 : i32
    %c0_i32_1 = arith.constant 0 : i32
    %c0_i32_2 = arith.constant 0 : i32
    return %arg0, %c0_i32, %c0_i32_0, %c0_i32_1 : i32, i32, i32, i32
  }
  func.func @transform_7(%arg0: i32) -> (i32, i32, i32) {
    %c0_i32 = arith.constant 0 : i32
    %c0_i32_0 = arith.constant 0 : i32
    %c0_i32_1 = arith.constant 0 : i32
    return %arg0, %c0_i32, %c0_i32_0 : i32, i32, i32
  }
}

</mosaic_0001>

<llo_original>
// kernel: predictor_forward.3
$region0: #{predictor_forward.3}
  #allocation0 [shape = 'u32[]', space=smem, size = 0x4, offset = 0x4, fixed_abs, tag = 'smem constant byte address 0x4 - core index']
  #allocation1 [shape = 'u32[144,128]{1,0:T(1,128)}', space=vmem, size = 0x12000, scoped, tag = 'internal scratch']
  %s0 = inlined_call_operand.vmem [shape: f32[2,256,16], index: 0, kind: input, shape index: {}]
  %s1 = inlined_call_operand.vmem [shape: f32[16,32], index: 1, kind: input, shape index: {}]
  %s2 = inlined_call_operand.vmem [shape: f32[1,32], index: 2, kind: input, shape index: {}]
  %s3 = inlined_call_operand.vmem [shape: f32[16,32], index: 3, kind: input, shape index: {}]
  %s4 = inlined_call_operand.vmem [shape: f32[16,1], index: 4, kind: input, shape index: {}]
  %s5 = inlined_call_operand.vmem [shape: f32[2,32,32], index: 5, kind: input, shape index: {}]
  %s6 = inlined_call_operand.vmem [shape: f32[32,16], index: 6, kind: input, shape index: {}]
  %s7 = inlined_call_operand.vmem [shape: f32[1,16], index: 7, kind: input, shape index: {}]
  %s8 = inlined_call_operand.vmem [shape: f32[32,1], index: 8, kind: input, shape index: {}]
  %s9 = inlined_call_operand.vmem [shape: f32[32,1], index: 9, kind: input, shape index: {}]
  %s10 = inlined_call_operand.vmem [shape: f32[2,32,256], index: 10, kind: output, shape index: {0}]
  %s11 = inlined_call_operand.vmem [shape: f32[2,16,256], index: 11, kind: output, shape index: {1}]
  %12 = xla_tuple %s10, %s11
  %s13 = sld [smem:[#allocation0]]
  $region149: #{predictor_forward.3} parent=0
    _
  %s15 = ssub.s32 1, %s13
  %s16 = scalar_select 0, %s15, %s13
  $region1: #{predictor_forward.3} parent=0
    #allocation2 [shape = 'u8[32768]{0}', space=vmem, size = 0x8000, scoped, tag = 'output window, operand 0']
    #allocation3 [shape = 'u8[16384]{0}', space=vmem, size = 0x4000, scoped, tag = 'output window, operand 1']
    loop: start=0, step=1, limit=6
    $region2: #{predictor_forward.3} parent=1 // loop_pre_header
      _
    $region3: #{predictor_forward.3} parent=1 // loop_header
      %s18 = sphi 0, %s22
      %p19 = scmp.ge.s32.totalorder %s18, 6
      %s25 = sphi 0, %s37
      %s26 = sphi 0, %s33
      %s27 = sphi 0, %s25
      %s28 = sphi 0, %s26
      %s29 = sphi 0, %s27
      %s30 = sphi 0, %s28
      %s42 = sphi 0, %s44
      %s45 = sphi 0, %s42
      %s46 = sphi 0, %s45
      %s62 = sphi 0, %s46
      %s66 = sphi 0, %s66
      %s68 = sphi 0, %s66
      %s69 = sphi 0, %s68
      %s83 = sphi 0, %s69
      %s87 = sphi 0, %s87
      %s89 = sphi 0, %s87
      %s90 = sphi 0, %s89
      %s104 = sphi 0, %s90
      %s108 = sphi 0, %s108
      %s110 = sphi 0, %s108
      %s111 = sphi 0, %s110
      %s125 = sphi 0, %s111
      %s129 = sphi 0, %s129
      %s131 = sphi 0, %s129
      %s132 = sphi 0, %s131
      %s146 = sphi 0, %s132
      %s152 = sphi 0, %s154
      %s155 = sphi 0, %s152
      %s156 = sphi 0, %s155
      %s172 = sphi 0, %s156
      %s176 = sphi 0, %s176
      %s178 = sphi 0, %s176
      %s179 = sphi 0, %s178
      %s193 = sphi 0, %s179
      %s197 = sphi 0, %s197
      %s199 = sphi 0, %s197
      %s200 = sphi 0, %s199
      %s214 = sphi 0, %s200
      %s218 = sphi 0, %s218
      %s220 = sphi 0, %s218
      %s221 = sphi 0, %s220
      %s235 = sphi 0, %s221
      %s239 = sphi 0, %s239
      %s241 = sphi 0, %s239
      %s242 = sphi 0, %s241
      %s256 = sphi 0, %s242
      %s264 = sphi 0, %s266
      %s267 = sphi 0, %s264
      %s268 = sphi 0, %s267
      %s284 = sphi 0, %s268
      %s292 = sphi 0, %s294
      %s295 = sphi 0, %s292
      %s296 = sphi 0, %s295
      %s312 = sphi 0, %s296
    $region4: #{predictor_forward.3} parent=1 // loop_header_branch
      %21 = sbr.rel (%p19) target = $region8
    $region5: #{predictor_forward.3} parent=1 // loop_body
      %s23 = ssub.s32 %s18, 1
      %s24 = ssub.s32 %s18, 2
      %s31 = sadd.s32 1, %s26
      %p32 = scmp.ge.s32.totalorder %s31, 2
      %s33 = scalar_select %p32, 0, %s31
      %s34 = sadd.s32 1, %s25
      %s35 = scalar_select %p32, %s34, %s25
      %p36 = scmp.ge.s32.totalorder %s35, 2
      %s37 = scalar_select %p36, 0, %s35
      %s38 = ssub.s32 %s25, %s37
      %s39 = ssub.s32 %s26, %s33
      %s40 = sor.u32 %s38, %s39
      %p41 = scmp.eq.s32.totalorder %s40, 0
      %s43 = sadd.s32 %s42, 1
      %s44 = scalar_select %p41, %s42, %s43
      %p47 = pneg %p41
      %p48 = scmp.eq.s32.totalorder %s18, 3
      %p49 = por %p47, %p48
      %p50 = scmp.ne.s32.totalorder %s42, %s45
      %p51 = scmp.eq.s32.totalorder %s18, 0
      %p52 = por %p50, %p51
      %p53 = scmp.ne.s32.totalorder %s42, %s45
      %p54 = scmp.eq.s32.totalorder %s23, 3
      %p55 = por %p53, %p54
      %p56 = scmp.ne.s32.totalorder %s45, %s46
      %p57 = scmp.eq.s32.totalorder %s23, 0
      %p58 = por %p56, %p57
      %p59 = scmp.ne.s32.totalorder %s45, %s46
      %p60 = scmp.eq.s32.totalorder %s24, 3
      %p61 = por %p59, %p60
      %p63 = scmp.ne.s32.totalorder %s46, %s62
      %p64 = scmp.eq.s32.totalorder %s24, 0
      %p65 = por %p63, %p64
      %s67 = sadd.s32 %s66, 1
      %p70 = scmp.eq.s32.totalorder %s18, 3
      %p71 = scmp.ne.s32.totalorder %s66, %s68
      %p72 = scmp.eq.s32.totalorder %s18, 0
      %p73 = por %p71, %p72
      %p74 = scmp.ne.s32.totalorder %s66, %s68
      %p75 = scmp.eq.s32.totalorder %s23, 3
      %p76 = por %p74, %p75
      %p77 = scmp.ne.s32.totalorder %s68, %s69
      %p78 = scmp.eq.s32.totalorder %s23, 0
      %p79 = por %p77, %p78
      %p80 = scmp.ne.s32.totalorder %s68, %s69
      %p81 = scmp.eq.s32.totalorder %s24, 3
      %p82 = por %p80, %p81
      %p84 = scmp.ne.s32.totalorder %s69, %s83
      %p85 = scmp.eq.s32.totalorder %s24, 0
      %p86 = por %p84, %p85
      %s88 = sadd.s32 %s87, 1
      %p91 = scmp.eq.s32.totalorder %s18, 3
      %p92 = scmp.ne.s32.totalorder %s87, %s89
      %p93 = scmp.eq.s32.totalorder %s18, 0
      %p94 = por %p92, %p93
      %p95 = scmp.ne.s32.totalorder %s87, %s89
      %p96 = scmp.eq.s32.totalorder %s23, 3
      %p97 = por %p95, %p96
      %p98 = scmp.ne.s32.totalorder %s89, %s90
      %p99 = scmp.eq.s32.totalorder %s23, 0
      %p100 = por %p98, %p99
      %p101 = scmp.ne.s32.totalorder %s89, %s90
      %p102 = scmp.eq.s32.totalorder %s24, 3
      %p103 = por %p101, %p102
      %p105 = scmp.ne.s32.totalorder %s90, %s104
      %p106 = scmp.eq.s32.totalorder %s24, 0
      %p107 = por %p105, %p106
      %s109 = sadd.s32 %s108, 1
      %p112 = scmp.eq.s32.totalorder %s18, 3
      %p113 = scmp.ne.s32.totalorder %s108, %s110
      %p114 = scmp.eq.s32.totalorder %s18, 0
      %p115 = por %p113, %p114
      %p116 = scmp.ne.s32.totalorder %s108, %s110
      %p117 = scmp.eq.s32.totalorder %s23, 3
      %p118 = por %p116, %p117
      %p119 = scmp.ne.s32.totalorder %s110, %s111
      %p120 = scmp.eq.s32.totalorder %s23, 0
      %p121 = por %p119, %p120
      %p122 = scmp.ne.s32.totalorder %s110, %s111
      %p123 = scmp.eq.s32.totalorder %s24, 3
      %p124 = por %p122, %p123
      %p126 = scmp.ne.s32.totalorder %s111, %s125
      %p127 = scmp.eq.s32.totalorder %s24, 0
      %p128 = por %p126, %p127
      %s130 = sadd.s32 %s129, 1
      %p133 = scmp.eq.s32.totalorder %s18, 3
      %p134 = scmp.ne.s32.totalorder %s129, %s131
      %p135 = scmp.eq.s32.totalorder %s18, 0
      %p136 = por %p134, %p135
      %p137 = scmp.ne.s32.totalorder %s129, %s131
      %p138 = scmp.eq.s32.totalorder %s23, 3
      %p139 = por %p137, %p138
      %p140 = scmp.ne.s32.totalorder %s131, %s132
      %p141 = scmp.eq.s32.totalorder %s23, 0
      %p142 = por %p140, %p141
      %p143 = scmp.ne.s32.totalorder %s131, %s132
      %p144 = scmp.eq.s32.totalorder %s24, 3
      %p145 = por %p143, %p144
      %p147 = scmp.ne.s32.totalorder %s132, %s146
      %p148 = scmp.eq.s32.totalorder %s24, 0
      %p149 = por %p147, %p148
      %s150 = ssub.s32 %s25, %s37
      %p151 = scmp.eq.s32.totalorder %s150, 0
      %s153 = sadd.s32 %s152, 1
      %s154 = scalar_select %p151, %s152, %s153
      %p157 = pneg %p151
      %p158 = scmp.eq.s32.totalorder %s18, 3
      %p159 = por %p157, %p158
      %p160 = scmp.ne.s32.totalorder %s152, %s155
      %p161 = scmp.eq.s32.totalorder %s18, 0
      %p162 = por %p160, %p161
      %p163 = scmp.ne.s32.totalorder %s152, %s155
      %p164 = scmp.eq.s32.totalorder %s23, 3
      %p165 = por %p163, %p164
      %p166 = scmp.ne.s32.totalorder %s155, %s156
      %p167 = scmp.eq.s32.totalorder %s23, 0
      %p168 = por %p166, %p167
      %p169 = scmp.ne.s32.totalorder %s155, %s156
      %p170 = scmp.eq.s32.totalorder %s24, 3
      %p171 = por %p169, %p170
      %p173 = scmp.ne.s32.totalorder %s156, %s172
      %p174 = scmp.eq.s32.totalorder %s24, 0
      %p175 = por %p173, %p174
      %s177 = sadd.s32 %s176, 1
      %p180 = scmp.eq.s32.totalorder %s18, 3
      %p181 = scmp.ne.s32.totalorder %s176, %s178
      %p182 = scmp.eq.s32.totalorder %s18, 0
      %p183 = por %p181, %p182
      %p184 = scmp.ne.s32.totalorder %s176, %s178
      %p185 = scmp.eq.s32.totalorder %s23, 3
      %p186 = por %p184, %p185
      %p187 = scmp.ne.s32.totalorder %s178, %s179
      %p188 = scmp.eq.s32.totalorder %s23, 0
      %p189 = por %p187, %p188
      %p190 = scmp.ne.s32.totalorder %s178, %s179
      %p191 = scmp.eq.s32.totalorder %s24, 3
      %p192 = por %p190, %p191
      %p194 = scmp.ne.s32.totalorder %s179, %s193
      %p195 = scmp.eq.s32.totalorder %s24, 0
      %p196 = por %p194, %p195
      %s198 = sadd.s32 %s197, 1
      %p201 = scmp.eq.s32.totalorder %s18, 3
      %p202 = scmp.ne.s32.totalorder %s197, %s199
      %p203 = scmp.eq.s32.totalorder %s18, 0
      %p204 = por %p202, %p203
      %p205 = scmp.ne.s32.totalorder %s197, %s199
      %p206 = scmp.eq.s32.totalorder %s23, 3
      %p207 = por %p205, %p206
      %p208 = scmp.ne.s32.totalorder %s199, %s200
      %p209 = scmp.eq.s32.totalorder %s23, 0
      %p210 = por %p208, %p209
      %p211 = scmp.ne.s32.totalorder %s199, %s200
      %p212 = scmp.eq.s32.totalorder %s24, 3
      %p213 = por %p211, %p212
      %p215 = scmp.ne.s32.totalorder %s200, %s214
      %p216 = scmp.eq.s32.totalorder %s24, 0
      %p217 = por %p215, %p216
      %s219 = sadd.s32 %s218, 1
      %p222 = scmp.eq.s32.totalorder %s18, 3
      %p223 = scmp.ne.s32.totalorder %s218, %s220
      %p224 = scmp.eq.s32.totalorder %s18, 0
      %p225 = por %p223, %p224
      %p226 = scmp.ne.s32.totalorder %s218, %s220
      %p227 = scmp.eq.s32.totalorder %s23, 3
      %p228 = por %p226, %p227
      %p229 = scmp.ne.s32.totalorder %s220, %s221
      %p230 = scmp.eq.s32.totalorder %s23, 0
      %p231 = por %p229, %p230
      %p232 = scmp.ne.s32.totalorder %s220, %s221
      %p233 = scmp.eq.s32.totalorder %s24, 3
      %p234 = por %p232, %p233
      %p236 = scmp.ne.s32.totalorder %s221, %s235
      %p237 = scmp.eq.s32.totalorder %s24, 0
      %p238 = por %p236, %p237
      %s240 = sadd.s32 %s239, 1
      %p243 = scmp.eq.s32.totalorder %s18, 3
      %p244 = scmp.ne.s32.totalorder %s239, %s241
      %p245 = scmp.eq.s32.totalorder %s18, 0
      %p246 = por %p244, %p245
      %p247 = scmp.ne.s32.totalorder %s239, %s241
      %p248 = scmp.eq.s32.totalorder %s23, 3
      %p249 = por %p247, %p248
      %p250 = scmp.ne.s32.totalorder %s241, %s242
      %p251 = scmp.eq.s32.totalorder %s23, 0
      %p252 = por %p250, %p251
      %p253 = scmp.ne.s32.totalorder %s241, %s242
      %p254 = scmp.eq.s32.totalorder %s24, 3
      %p255 = por %p253, %p254
      %p257 = scmp.ne.s32.totalorder %s242, %s256
      %p258 = scmp.eq.s32.totalorder %s24, 0
      %p259 = por %p257, %p258
      %s260 = ssub.s32 %s25, %s37
      %s261 = ssub.s32 %s26, %s33
      %s262 = sor.u32 %s260, %s261
      %p263 = scmp.eq.s32.totalorder %s262, 0
      %s265 = sadd.s32 %s264, 1
      %s266 = scalar_select %p263, %s264, %s265
      %p269 = pneg %p263
      %p270 = scmp.eq.s32.totalorder %s18, 3
      %p271 = por %p269, %p270
      %p272 = scmp.ne.s32.totalorder %s264, %s267
      %p273 = scmp.eq.s32.totalorder %s18, 0
      %p274 = por %p272, %p273
      %p275 = scmp.ne.s32.totalorder %s264, %s267
      %p276 = scmp.eq.s32.totalorder %s23, 3
      %p277 = por %p275, %p276
      %p278 = scmp.ne.s32.totalorder %s267, %s268
      %p279 = scmp.eq.s32.totalorder %s23, 0
      %p280 = por %p278, %p279
      %p281 = scmp.ne.s32.totalorder %s267, %s268
      %p282 = scmp.eq.s32.totalorder %s24, 3
      %p283 = por %p281, %p282
      %p285 = scmp.ne.s32.totalorder %s268, %s284
      %p286 = scmp.eq.s32.totalorder %s24, 0
      %p287 = por %p285, %p286
      %s288 = ssub.s32 %s25, %s37
      %s289 = ssub.s32 %s26, %s33
      %s290 = sor.u32 %s288, %s289
      %p291 = scmp.eq.s32.totalorder %s290, 0
      %s293 = sadd.s32 %s292, 1
      %s294 = scalar_select %p291, %s292, %s293
      %p297 = pneg %p291
      %p298 = scmp.eq.s32.totalorder %s18, 3
      %p299 = por %p297, %p298
      %p300 = scmp.ne.s32.totalorder %s292, %s295
      %p301 = scmp.eq.s32.totalorder %s18, 0
      %p302 = por %p300, %p301
      %p303 = scmp.ne.s32.totalorder %s292, %s295
      %p304 = scmp.eq.s32.totalorder %s23, 3
      %p305 = por %p303, %p304
      %p306 = scmp.ne.s32.totalorder %s295, %s296
      %p307 = scmp.eq.s32.totalorder %s23, 0
      %p308 = por %p306, %p307
      %p309 = scmp.ne.s32.totalorder %s295, %s296
      %p310 = scmp.eq.s32.totalorder %s24, 3
      %p311 = por %p309, %p310
      %p313 = scmp.ne.s32.totalorder %s296, %s312
      %p314 = scmp.eq.s32.totalorder %s24, 0
      %p315 = por %p313, %p314
      %p316 = scmp.le.s32.totalorder 1, %s18
      %p317 = scmp.lt.s32.totalorder %s18, 5
      %p318 = pnand %p316, %p317
      %p319 = pneg %p318
      // Predicated region
      $region9: #{predictor_forward.3} parent=5 // pred_check
        _
      $region10: #{predictor_forward.3} parent=5 // pred_check_branch
        %321 = sbr.rel (%p318) target = $region12
      $region11: #{predictor_forward.3} parent=5 // pred_region
        %s322 = ssub.s32 %s18, 1
        // Predicated region
        $region13: #{predictor_forward.3} parent=11 // pred_check
          %p323 = pneg %p79
        $region14: #{predictor_forward.3} parent=11 // pred_check_branch
          %325 = sbr.rel (%p323) target = $region16
        $region15: #{predictor_forward.3} parent=11 // pred_region
          _
        $region16: #{predictor_forward.3} parent=11 // pred_fallthru
          _
        // Predicated region
        $region17: #{predictor_forward.3} parent=11 // pred_check
          %p326 = pneg %p100
        $region18: #{predictor_forward.3} parent=11 // pred_check_branch
          %328 = sbr.rel (%p326) target = $region20
        $region19: #{predictor_forward.3} parent=11 // pred_region
          _
        $region20: #{predictor_forward.3} parent=11 // pred_fallthru
          _
        // Predicated region
        $region21: #{predictor_forward.3} parent=11 // pred_check
          %p329 = pneg %p121
        $region22: #{predictor_forward.3} parent=11 // pred_check_branch
          %331 = sbr.rel (%p329) target = $region24
        $region23: #{predictor_forward.3} parent=11 // pred_region
          _
        $region24: #{predictor_forward.3} parent=11 // pred_fallthru
          _
        // Predicated region
        $region25: #{predictor_forward.3} parent=11 // pred_check
          %p332 = pneg %p142
        $region26: #{predictor_forward.3} parent=11 // pred_check_branch
          %334 = sbr.rel (%p332) target = $region28
        $region27: #{predictor_forward.3} parent=11 // pred_region
          _
        $region28: #{predictor_forward.3} parent=11 // pred_fallthru
          _
        // Predicated region
        $region29: #{predictor_forward.3} parent=11 // pred_check
          %p335 = pneg %p189
        $region30: #{predictor_forward.3} parent=11 // pred_check_branch
          %337 = sbr.rel (%p335) target = $region32
        $region31: #{predictor_forward.3} parent=11 // pred_region
          _
        $region32: #{predictor_forward.3} parent=11 // pred_fallthru
          _
        // Predicated region
        $region33: #{predictor_forward.3} parent=11 // pred_check
          %p338 = pneg %p210
        $region34: #{predictor_forward.3} parent=11 // pred_check_branch
          %340 = sbr.rel (%p338) target = $region36
        $region35: #{predictor_forward.3} parent=11 // pred_region
          _
        $region36: #{predictor_forward.3} parent=11 // pred_fallthru
          _
        // Predicated region
        $region37: #{predictor_forward.3} parent=11 // pred_check
          %p341 = pneg %p231
        $region38: #{predictor_forward.3} parent=11 // pred_check_branch
          %343 = sbr.rel (%p341) target = $region40
        $region39: #{predictor_forward.3} parent=11 // pred_region
          _
        $region40: #{predictor_forward.3} parent=11 // pred_fallthru
          _
        // Predicated region
        $region41: #{predictor_forward.3} parent=11 // pred_check
          %p344 = pneg %p252
        $region42: #{predictor_forward.3} parent=11 // pred_check_branch
          %346 = sbr.rel (%p344) target = $region44
        $region43: #{predictor_forward.3} parent=11 // pred_region
          _
        $region44: #{predictor_forward.3} parent=11 // pred_fallthru
          _
      $region12: #{predictor_forward.3} parent=5 // pred_fallthru
        _
      %p347 = scmp.lt.s32.totalorder %s18, 4
      // Predicated region
      $region45: #{predictor_forward.3} parent=5 // pred_check
        %p348 = pneg %p347
      $region46: #{predictor_forward.3} parent=5 // pred_check_branch
        %350 = sbr.rel (%p348) target = $region48
      $region47: #{predictor_forward.3} parent=5 // pred_region
        // Predicated region
        $region49: #{predictor_forward.3} parent=47 // pred_check
          %p351 = pneg %p52
        $region50: #{predictor_forward.3} parent=47 // pred_check_branch
          %353 = sbr.rel (%p351) target = $region52
        $region51: #{predictor_forward.3} parent=47 // pred_region
          %s354 = smul.u32 16, %s26
          %p355 = scmp.lt.s32.totalorder %s25, 1
          %s356 = scalar_select %p355, %s25, 1
          %p357 = scmp.lt.s32.totalorder %s354, 31
          %s358 = scalar_select %p357, %s354, 31
          %s359 = smul.addr %s356, 32
          %s360 = sadd.s32 %s358, %s359
          %s361 = smul.addr %s360, 8
          %s362 = scalar_lea.vmem %s0, %s361
          %s363 = smul.u32 16, %s26
        $region52: #{predictor_forward.3} parent=47 // pred_fallthru
          _
        // Predicated region
        $region53: #{predictor_forward.3} parent=47 // pred_check
          %p364 = pneg %p162
        $region54: #{predictor_forward.3} parent=47 // pred_check_branch
          %366 = sbr.rel (%p364) target = $region56
        $region55: #{predictor_forward.3} parent=47 // pred_region
          %p367 = scmp.lt.s32.totalorder %s25, 1
          %s368 = scalar_select %p367, %s25, 1
          %s369 = smul.addr %s368, 4
          %s370 = smul.addr %s369, 8
          %s371 = scalar_lea.vmem %s5, %s370
        $region56: #{predictor_forward.3} parent=47 // pred_fallthru
          _
      $region48: #{predictor_forward.3} parent=5 // pred_fallthru
        _
      %p372 = scmp.le.s32.totalorder 1, %s18
      %p373 = scmp.lt.s32.totalorder %s18, 5
      %p374 = pnand %p372, %p373
      %p375 = pneg %p374
      // Predicated region
      $region57: #{predictor_forward.3} parent=5 // pred_check
        _
      $region58: #{predictor_forward.3} parent=5 // pred_check_branch
        %377 = sbr.rel (%p374) target = $region60
      $region59: #{predictor_forward.3} parent=5 // pred_region
        %s378 = ssub.s32 %s18, 1
        %s379 = smul.u32 16, %s28
        %p380 = scmp.lt.s32.totalorder %s27, 1
        %s381 = scalar_select %p380, %s27, 1
        %p382 = scmp.lt.s32.totalorder %s379, 31
        %s383 = scalar_select %p382, %s379, 31
        %s384 = smul.addr %s381, 32
        %s385 = sadd.s32 %s383, %s384
        %s386 = smul.addr %s385, 8
        %s387 = scalar_lea.vmem %s0, %s386
        %p388 = pneg %p58
        %p389 = pneg %p55
        %p390 = pneg %p79
        %p391 = pneg %p76
        %p392 = pneg %p100
        %p393 = pneg %p97
        %p394 = pneg %p121
        %p395 = pneg %p118
        %p396 = pneg %p142
        %p397 = pneg %p139
        %p398 = scmp.lt.s32.totalorder %s27, 1
        %s399 = scalar_select %p398, %s27, 1
        %s400 = smul.addr %s399, 4
        %s401 = smul.addr %s400, 8
        %s402 = scalar_lea.vmem %s5, %s401
        %p403 = pneg %p168
        %p404 = pneg %p165
        %p405 = pneg %p189
        %p406 = pneg %p186
        %p407 = pneg %p210
        %p408 = pneg %p207
        %p409 = pneg %p231
        %p410 = pneg %p228
        %p411 = pneg %p252
        %p412 = pneg %p249
        %p413 = pneg %p280
        %p414 = pneg %p277
        %s415 = sand.u32 %s267, 1
        %s416 = sand.u32 %s267, 1
        %s417 = smul.addr %s416, 32
        %s418 = scalar_lea.vmem [#allocation2], %s417
        %p419 = pneg %p308
        %p420 = pneg %p305
        %s421 = sand.u32 %s295, 1
        %s422 = sand.u32 %s295, 1
        %s423 = smul.addr %s422, 16
        %s424 = scalar_lea.vmem [#allocation3], %s423
        %s425 = smul.u32 16, %s28
        %p426 = scmp.lt.s32.totalorder %s27, 1
        %s427 = scalar_select %p426, %s27, 1
        %p428 = scmp.lt.s32.totalorder %s425, 31
        %s429 = scalar_select %p428, %s425, 31
        %s430 = smul.addr %s427, 32
        %s431 = sadd.s32 %s429, %s430
        %s432 = smul.addr %s431, 8
        %s433 = scalar_lea.vmem %s0, %s432
        %s434 = smul.u32 16, %s28
        %p435 = scmp.lt.s32.totalorder %s27, 1
        %s436 = scalar_select %p435, %s27, 1
        %s437 = smul.addr %s436, 4
        %s438 = smul.addr %s437, 8
        %s439 = scalar_lea.vmem %s5, %s438
        %v440 = vld [vmem:[%s439] sm:$0xff]
        %v441 = vld [vmem:[%s439 + $0x8] sm:$0xff]
        %v442 = vld [vmem:[%s439 + $0x10] sm:$0xff]
        %v443 = vld [vmem:[%s439 + $0x18] sm:$0xff]
        %v444 = vld [vmem:[%s6] sm:$0xff]
        %v445 = vld [vmem:[%s6 + $0x8] sm:$0xff]
        %v446 = vld [vmem:[%s6 + $0x10] sm:$0xff]
        %v447 = vld [vmem:[%s6 + $0x18] sm:$0xff]
        %v448 = vld [vmem:[%s7] sm:$0x1]
        %v450 = vlaneseq
        %v451 = vshrl.u32 %v450, 7
        %v452 = vsub.s32 0, %v451
        %v453 = vrot.slane %v448, %v452
        %vm455 = vcmask 261120
        %v457 = vsel %vm455, %v440, 0
        %v460 = vsel %vm455, %v441, 0
        %v463 = vsel %vm455, %v442, 0
        %v466 = vsel %vm455, %v443, 0
        %468 = vmatprep.subr.mxu0 0.0
        %469 = vmatpush1.msra.mxu0 %v444
        %470 = vmatprep.subr.mxu0 0.0
        %471 = vmatpush1.msra.mxu0 %v445
        %472 = vmatprep.subr.mxu0 0.0
        %473 = vmatpush1.msra.mxu0 %v446
        %474 = vmatprep.subr.mxu0 0.0
        %475 = vmatpush1.msra.mxu0 %v447
        %476 = vmatprep.subr.mxu0 0.0
        %477 = vmatpush1.msra.mxu0 0.0
        %478 = vmatprep.subr.mxu0 0.0
        %479 = vmatpush1.msra.mxu0 0.0
        %480 = vmatprep.subr.mxu0 0.0
        %481 = vmatpush1.msra.mxu0 0.0
        %482 = vmatprep.subr.mxu0 0.0
        %483 = vmatpush1.msra.mxu0 0.0
        %484 = vmatprep.subr.mxu0 0.0
        %485 = vmatpush1.msra.mxu0 0.0
        %486 = vmatprep.subr.mxu0 0.0
        %487 = vmatpush1.msra.mxu0 0.0
        %488 = vmatprep.subr.mxu0 0.0
        %489 = vmatpush1.msra.mxu0 0.0
        %490 = vmatprep.subr.mxu0 0.0
        %491 = vmatpush1.msra.mxu0 0.0
        %492 = vmatprep.subr.mxu0 0.0
        %493 = vmatpush1.msra.mxu0 0.0
        %494 = vmatprep.subr.mxu0 0.0
        %495 = vmatpush1.msra.mxu0 0.0
        %496 = vmatprep.subr.mxu0 0.0
        %497 = vmatpush1.msra.mxu0 0.0
        %498 = vmatprep.subr.mxu0 0.0
        %499 = vmatpush1.msra.mxu0 0.0
        %500 = vmatprep.subr.mxu0 0.0
        %501 = vmatpush1.msra.mxu0 0.0
        %502 = vmatprep.subr.mxu0 0.0
        %503 = vmatpush1.msra.mxu0 0.0
        %504 = vmatprep.subr.mxu0 0.0
        %505 = vmatpush1.msra.mxu0 0.0
        %506 = vmatprep.subr.mxu0 0.0
        %507 = vmatpush1.msra.mxu0 0.0
        %508 = vmatprep.subr.mxu0 0.0
        %509 = vmatpush1.msra.mxu0 0.0
        %510 = vmatprep.subr.mxu0 0.0
        %511 = vmatpush1.msra.mxu0 0.0
        %512 = vmatprep.subr.mxu0 0.0
        %513 = vmatpush1.msra.mxu0 0.0
        %514 = vmatprep.subr.mxu0 0.0
        %515 = vmatpush1.msra.mxu0 0.0
        %516 = vmatprep.subr.mxu0 0.0
        %517 = vmatpush1.msra.mxu0 0.0
        %518 = vmatprep.subr.mxu0 0.0
        %519 = vmatpush1.msra.mxu0 0.0
        %520 = vmatprep.subr.mxu0 0.0
        %521 = vmatpush1.msra.mxu0 0.0
        %522 = vmatprep.subr.mxu0 0.0
        %523 = vmatpush1.msra.mxu0 0.0
        %524 = vmatprep.subr.mxu0 0.0
        %525 = vmatpush1.msra.mxu0 0.0
        %526 = vmatprep.subr.mxu0 0.0
        %527 = vmatpush1.msra.mxu0 0.0
        %528 = vmatprep.subr.mxu0 0.0
        %529 = vmatpush1.msra.mxu0 0.0
        %530 = vmatprep.subr.mxu0 0.0
        %531 = vmatpush1.msra.mxu0 0.0
        %532 = vmatprep.mubr.f32.mxu0 0.0
        %533 = vmatmul.mubr.f32.gmra.mrb[0].mxu0 %v457
        %v534 = vpop.f32.mrb[0].mxu0
        %v535 = vadd.f32 %v453, %v534
        %v536 = vpop.f32.mrb[0].mxu0
        %537 = vmatprep.mubr.f32.mxu0 0.0
        %538 = vmatmul.mubr.f32.gmra.mrb[0].mxu0 %v460
        %v539 = vpop.f32.mrb[0].mxu0
        %v540 = vadd.f32 %v453, %v539
        %v541 = vpop.f32.mrb[0].mxu0
        %542 = vmatprep.mubr.f32.mxu0 0.0
        %543 = vmatmul.mubr.f32.gmra.mrb[0].mxu0 %v463
        %v544 = vpop.f32.mrb[0].mxu0
        %v545 = vadd.f32 %v453, %v544
        %v546 = vpop.f32.mrb[0].mxu0
        %547 = vmatprep.mubr.f32.mxu0 0.0
        %548 = vmatmul.mubr.f32.gmra.mrb[0].mxu0 %v466
        %v549 = vpop.f32.mrb[0].mxu0
        %v550 = vadd.f32 %v453, %v549
        %v551 = vpop.f32.mrb[0].mxu0
        %552 = vdwg.mxu0
        %v553 = vld [vmem:[%s433] sm:$0xff]
        %v554 = vld [vmem:[%s433 + $0x8] sm:$0xff]
        %v555 = vld [vmem:[%s433 + $0x10] sm:$0xff]
        %v556 = vld [vmem:[%s433 + $0x18] sm:$0xff]
        %v557 = vld [vmem:[%s433 + $0x20] sm:$0xff]
        %v558 = vld [vmem:[%s433 + $0x28] sm:$0xff]
        %v559 = vld [vmem:[%s433 + $0x30] sm:$0xff]
        %v560 = vld [vmem:[%s433 + $0x38] sm:$0xff]
        %v561 = vld [vmem:[%s433 + $0x40] sm:$0xff]
        %v562 = vld [vmem:[%s433 + $0x48] sm:$0xff]
        %v563 = vld [vmem:[%s433 + $0x50] sm:$0xff]
        %v564 = vld [vmem:[%s433 + $0x58] sm:$0xff]
        %v565 = vld [vmem:[%s433 + $0x60] sm:$0xff]
        %v566 = vld [vmem:[%s433 + $0x68] sm:$0xff]
        %v567 = vld [vmem:[%s433 + $0x70] sm:$0xff]
        %v568 = vld [vmem:[%s433 + $0x78] sm:$0xff]
        %v569 = vld [vmem:[%s1] sm:$0xff]
        %v570 = vld [vmem:[%s1 + $0x8] sm:$0xff]
        %v571 = vld [vmem:[%s2] sm:$0x1]
        %v573 = vlaneseq
        %v574 = vshrl.u32 %v573, 7
        %v575 = vsub.s32 0, %v574
        %v576 = vrot.slane %v571, %v575
        %vm578 = vcmask 130048
        %v580 = vsel %vm578, %v553, 0
        %v583 = vsel %vm578, %v554, 0
        %v586 = vsel %vm578, %v555, 0
        %v589 = vsel %vm578, %v556, 0
        %v592 = vsel %vm578, %v557, 0
        %v595 = vsel %vm578, %v558, 0
        %v598 = vsel %vm578, %v559, 0
        %v601 = vsel %vm578, %v560, 0
        %v604 = vsel %vm578, %v561, 0
        %v607 = vsel %vm578, %v562, 0
        %v610 = vsel %vm578, %v563, 0
        %v613 = vsel %vm578, %v564, 0
        %v616 = vsel %vm578, %v565, 0
        %v619 = vsel %vm578, %v566, 0
        %v622 = vsel %vm578, %v567, 0
        %v625 = vsel %vm578, %v568, 0
        %627 = vmatprep.subr.mxu0 0.0
        %628 = vmatpush1.msra.mxu0 %v569
        %629 = vmatprep.subr.mxu0 0.0
        %630 = vmatpush1.msra.mxu0 %v570
        %631 = vmatprep.subr.mxu0 0.0
        %632 = vmatpush1.msra.mxu0 0.0
        %633 = vmatprep.subr.mxu0 0.0
        %634 = vmatpush1.msra.mxu0 0.0
        %635 = vmatprep.subr.mxu0 0.0
        %636 = vmatpush1.msra.mxu0 0.0
        %637 = vmatprep.subr.mxu0 0.0
        %638 = vmatpush1.msra.mxu0 0.0
        %639 = vmatprep.subr.mxu0 0.0
        %640 = vmatpush1.msra.mxu0 0.0
        %641 = vmatprep.subr.mxu0 0.0
        %642 = vmatpush1.msra.mxu0 0.0
        %643 = vmatprep.subr.mxu0 0.0
        %644 = vmatpush1.msra.mxu0 0.0
        %645 = vmatprep.subr.mxu0 0.0
        %646 = vmatpush1.msra.mxu0 0.0
        %647 = vmatprep.subr.mxu0 0.0
        %648 = vmatpush1.msra.mxu0 0.0
        %649 = vmatprep.subr.mxu0 0.0
        %650 = vmatpush1.msra.mxu0 0.0
        %651 = vmatprep.subr.mxu0 0.0
        %652 = vmatpush1.msra.mxu0 0.0
        %653 = vmatprep.subr.mxu0 0.0
        %654 = vmatpush1.msra.mxu0 0.0
        %655 = vmatprep.subr.mxu0 0.0
        %656 = vmatpush1.msra.mxu0 0.0
        %657 = vmatprep.subr.mxu0 0.0
        %658 = vmatpush1.msra.mxu0 0.0
        %659 = vmatprep.subr.mxu0 0.0
        %660 = vmatpush1.msra.mxu0 0.0
        %661 = vmatprep.subr.mxu0 0.0
        %662 = vmatpush1.msra.mxu0 0.0
        %663 = vmatprep.subr.mxu0 0.0
        %664 = vmatpush1.msra.mxu0 0.0
        %665 = vmatprep.subr.mxu0 0.0
        %666 = vmatpush1.msra.mxu0 0.0
        %667 = vmatprep.subr.mxu0 0.0
        %668 = vmatpush1.msra.mxu0 0.0
        %669 = vmatprep.subr.mxu0 0.0
        %670 = vmatpush1.msra.mxu0 0.0
        %671 = vmatprep.subr.mxu0 0.0
        %672 = vmatpush1.msra.mxu0 0.0
        %673 = vmatprep.subr.mxu0 0.0
        %674 = vmatpush1.msra.mxu0 0.0
        %675 = vmatprep.subr.mxu0 0.0
        %676 = vmatpush1.msra.mxu0 0.0
        %677 = vmatprep.subr.mxu0 0.0
        %678 = vmatpush1.msra.mxu0 0.0
        %679 = vmatprep.subr.mxu0 0.0
        %680 = vmatpush1.msra.mxu0 0.0
        %681 = vmatprep.subr.mxu0 0.0
        %682 = vmatpush1.msra.mxu0 0.0
        %683 = vmatprep.subr.mxu0 0.0
        %684 = vmatpush1.msra.mxu0 0.0
        %685 = vmatprep.subr.mxu0 0.0
        %686 = vmatpush1.msra.mxu0 0.0
        %687 = vmatprep.subr.mxu0 0.0
        %688 = vmatpush1.msra.mxu0 0.0
        %689 = vmatprep.subr.mxu0 0.0
        %690 = vmatpush1.msra.mxu0 0.0
        %691 = vmatprep.mubr.f32.mxu0 0.0
        %692 = vmatmul.mubr.f32.gmra.mrb[0].mxu0 %v580
        %v693 = vpop.f32.mrb[0].mxu0
        %v694 = vadd.f32 %v576, %v693
        %v695 = vpop.f32.mrb[0].mxu0
        %696 = vmatprep.mubr.f32.mxu0 0.0
        %697 = vmatmul.mubr.f32.gmra.mrb[0].mxu0 %v583
        %v698 = vpop.f32.mrb[0].mxu0
        %v699 = vadd.f32 %v576, %v698
        %v700 = vpop.f32.mrb[0].mxu0
        %701 = vmatprep.mubr.f32.mxu0 0.0
        %702 = vmatmul.mubr.f32.gmra.mrb[0].mxu0 %v586
        %v703 = vpop.f32.mrb[0].mxu0
        %v704 = vadd.f32 %v576, %v703
        %v705 = vpop.f32.mrb[0].mxu0
        %706 = vmatprep.mubr.f32.mxu0 0.0
        %707 = vmatmul.mubr.f32.gmra.mrb[0].mxu0 %v589
        %v708 = vpop.f32.mrb[0].mxu0
        %v709 = vadd.f32 %v576, %v708
        %v710 = vpop.f32.mrb[0].mxu0
        %711 = vmatprep.mubr.f32.mxu0 0.0
        %712 = vmatmul.mubr.f32.gmra.mrb[0].mxu0 %v592
        %v713 = vpop.f32.mrb[0].mxu0
        %v714 = vadd.f32 %v576, %v713
        %v715 = vpop.f32.mrb[0].mxu0
        %716 = vmatprep.mubr.f32.mxu0 0.0
        %717 = vmatmul.mubr.f32.gmra.mrb[0].mxu0 %v595
        %v718 = vpop.f32.mrb[0].mxu0
        %v719 = vadd.f32 %v576, %v718
        %v720 = vpop.f32.mrb[0].mxu0
        %721 = vmatprep.mubr.f32.mxu0 0.0
        %722 = vmatmul.mubr.f32.gmra.mrb[0].mxu0 %v598
        %v723 = vpop.f32.mrb[0].mxu0
        %v724 = vadd.f32 %v576, %v723
        %v725 = vpop.f32.mrb[0].mxu0
        %726 = vmatprep.mubr.f32.mxu0 0.0
        %727 = vmatmul.mubr.f32.gmra.mrb[0].mxu0 %v601
        %v728 = vpop.f32.mrb[0].mxu0
        %v729 = vadd.f32 %v576, %v728
        %v730 = vpop.f32.mrb[0].mxu0
        %731 = vmatprep.mubr.f32.mxu0 0.0
        %732 = vmatmul.mubr.f32.gmra.mrb[0].mxu0 %v604
        %v733 = vpop.f32.mrb[0].mxu0
        %v734 = vadd.f32 %v576, %v733
        %v735 = vpop.f32.mrb[0].mxu0
        %736 = vmatprep.mubr.f32.mxu0 0.0
        %737 = vmatmul.mubr.f32.gmra.mrb[0].mxu0 %v607
        %v738 = vpop.f32.mrb[0].mxu0
        %v739 = vadd.f32 %v576, %v738
        %v740 = vpop.f32.mrb[0].mxu0
        %741 = vmatprep.mubr.f32.mxu0 0.0
        %742 = vmatmul.mubr.f32.gmra.mrb[0].mxu0 %v610
        %v743 = vpop.f32.mrb[0].mxu0
        %v744 = vadd.f32 %v576, %v743
        %v745 = vpop.f32.mrb[0].mxu0
        %746 = vmatprep.mubr.f32.mxu0 0.0
        %747 = vmatmul.mubr.f32.gmra.mrb[0].mxu0 %v613
        %v748 = vpop.f32.mrb[0].mxu0
        %v749 = vadd.f32 %v576, %v748
        %v750 = vpop.f32.mrb[0].mxu0
        %751 = vmatprep.mubr.f32.mxu0 0.0
        %752 = vmatmul.mubr.f32.gmra.mrb[0].mxu0 %v616
        %v753 = vpop.f32.mrb[0].mxu0
        %v754 = vadd.f32 %v576, %v753
        %v755 = vpop.f32.mrb[0].mxu0
        %756 = vmatprep.mubr.f32.mxu0 0.0
        %757 = vmatmul.mubr.f32.gmra.mrb[0].mxu0 %v619
        %v758 = vpop.f32.mrb[0].mxu0
        %v759 = vadd.f32 %v576, %v758
        %v760 = vpop.f32.mrb[0].mxu0
        %761 = vmatprep.mubr.f32.mxu0 0.0
        %762 = vmatmul.mubr.f32.gmra.mrb[0].mxu0 %v622
        %v763 = vpop.f32.mrb[0].mxu0
        %v764 = vadd.f32 %v576, %v763
        %v765 = vpop.f32.mrb[0].mxu0
        %766 = vmatprep.mubr.f32.mxu0 0.0
        %767 = vmatmul.mubr.f32.gmra.mrb[0].mxu0 %v625
        %v768 = vpop.f32.mrb[0].mxu0
        %v769 = vadd.f32 %v576, %v768
        %v770 = vpop.f32.mrb[0].mxu0
        %771 = vdwg.mxu0
        %v772 = vmul.f32 %v694, 0.5
        %v773 = vmul.f32 %v699, 0.5
        %v774 = vmul.f32 %v704, 0.5
        %v775 = vmul.f32 %v709, 0.5
        %v776 = vmul.f32 %v714, 0.5
        %v777 = vmul.f32 %v719, 0.5
        %v778 = vmul.f32 %v724, 0.5
        %v779 = vmul.f32 %v729, 0.5
        %v780 = vmul.f32 %v734, 0.5
        %v781 = vmul.f32 %v739, 0.5
        %v782 = vmul.f32 %v744, 0.5
        %v783 = vmul.f32 %v749, 0.5
        %v784 = vmul.f32 %v754, 0.5
        %v785 = vmul.f32 %v759, 0.5
        %v786 = vmul.f32 %v764, 0.5
        %v787 = vmul.f32 %v769, 0.5
        %v788 = vmul.f32 %v694, 0.70710677
        %v789 = vmul.f32 %v699, 0.70710677
        %v790 = vmul.f32 %v704, 0.70710677
        %v791 = vmul.f32 %v709, 0.70710677
        %v792 = vmul.f32 %v714, 0.70710677
        %v793 = vmul.f32 %v719, 0.70710677
        %v794 = vmul.f32 %v724, 0.70710677
        %v795 = vmul.f32 %v729, 0.70710677
        %v796 = vmul.f32 %v734, 0.70710677
        %v797 = vmul.f32 %v739, 0.70710677
        %v798 = vmul.f32 %v744, 0.70710677
        %v799 = vmul.f32 %v749, 0.70710677
        %v800 = vmul.f32 %v754, 0.70710677
        %v801 = vmul.f32 %v759, 0.70710677
        %v802 = vmul.f32 %v764, 0.70710677
        %v803 = vmul.f32 %v769, 0.70710677
        %v804 = vand.u32 2147483647, %v788
        %v805 = vand.u32 2147483647, %v789
        %v806 = vand.u32 2147483647, %v790
        %v807 = vand.u32 2147483647, %v791
        %v808 = vand.u32 2147483647, %v792
        %v809 = vand.u32 2147483647, %v793
        %v810 = vand.u32 2147483647, %v794
        %v811 = vand.u32 2147483647, %v795
        %v812 = vand.u32 2147483647, %v796
        %v813 = vand.u32 2147483647, %v797
        %v814 = vand.u32 2147483647, %v798
        %v815 = vand.u32 2147483647, %v799
        %v816 = vand.u32 2147483647, %v800
        %v817 = vand.u32 2147483647, %v801
        %v818 = vand.u32 2147483647, %v802
        %v819 = vand.u32 2147483647, %v803
        %v820 = vmul.f32 %v804, 0.3275911
        %v821 = vmul.f32 %v805, 0.3275911
        %v822 = vmul.f32 %v806, 0.3275911
        %v823 = vmul.f32 %v807, 0.3275911
        %v824 = vmul.f32 %v808, 0.3275911
        %v825 = vmul.f32 %v809, 0.3275911
        %v826 = vmul.f32 %v810, 0.3275911
        %v827 = vmul.f32 %v811, 0.3275911
        %v828 = vmul.f32 %v812, 0.3275911
        %v829 = vmul.f32 %v813, 0.3275911
        %v830 = vmul.f32 %v814, 0.3275911
        %v831 = vmul.f32 %v815, 0.3275911
        %v832 = vmul.f32 %v816, 0.3275911
        %v833 = vmul.f32 %v817, 0.3275911
        %v834 = vmul.f32 %v818, 0.3275911
        %v835 = vmul.f32 %v819, 0.3275911
        %v836 = vadd.f32 %v820, 1.0
        %v837 = vadd.f32 %v821, 1.0
        %v838 = vadd.f32 %v822, 1.0
        %v839 = vadd.f32 %v823, 1.0
        %v840 = vadd.f32 %v824, 1.0
        %v841 = vadd.f32 %v825, 1.0
        %v842 = vadd.f32 %v826, 1.0
        %v843 = vadd.f32 %v827, 1.0
        %v844 = vadd.f32 %v828, 1.0
        %v845 = vadd.f32 %v829, 1.0
        %v846 = vadd.f32 %v830, 1.0
        %v847 = vadd.f32 %v831, 1.0
        %v848 = vadd.f32 %v832, 1.0
        %v849 = vadd.f32 %v833, 1.0
        %v850 = vadd.f32 %v834, 1.0
        %v851 = vadd.f32 %v835, 1.0
        %v852 = vrcp.pop %v836
        %v853 = vmul.f32 1.0, %v852
        %v854 = vrcp.pop %v837
        %v855 = vmul.f32 1.0, %v854
        %v856 = vrcp.pop %v838
        %v857 = vmul.f32 1.0, %v856
        %v858 = vrcp.pop %v839
        %v859 = vmul.f32 1.0, %v858
        %v860 = vrcp.pop %v840
        %v861 = vmul.f32 1.0, %v860
        %v862 = vrcp.pop %v841
        %v863 = vmul.f32 1.0, %v862
        %v864 = vrcp.pop %v842
        %v865 = vmul.f32 1.0, %v864
        %v866 = vrcp.pop %v843
        %v867 = vmul.f32 1.0, %v866
        %v868 = vrcp.pop %v844
        %v869 = vmul.f32 1.0, %v868
        %v870 = vrcp.pop %v845
        %v871 = vmul.f32 1.0, %v870
        %v872 = vrcp.pop %v846
        %v873 = vmul.f32 1.0, %v872
        %v874 = vrcp.pop %v847
        %v875 = vmul.f32 1.0, %v874
        %v876 = vrcp.pop %v848
        %v877 = vmul.f32 1.0, %v876
        %v878 = vrcp.pop %v849
        %v879 = vmul.f32 1.0, %v878
        %v880 = vrcp.pop %v850
        %v881 = vmul.f32 1.0, %v880
        %v882 = vrcp.pop %v851
        %v883 = vmul.f32 1.0, %v882
        %v884 = vmul.f32 %v853, 1.0614054
        %v885 = vmul.f32 %v855, 1.0614054
        %v886 = vmul.f32 %v857, 1.0614054
        %v887 = vmul.f32 %v859, 1.0614054
        %v888 = vmul.f32 %v861, 1.0614054
        %v889 = vmul.f32 %v863, 1.0614054
        %v890 = vmul.f32 %v865, 1.0614054
        %v891 = vmul.f32 %v867, 1.0614054
        %v892 = vmul.f32 %v869, 1.0614054
        %v893 = vmul.f32 %v871, 1.0614054
        %v894 = vmul.f32 %v873, 1.0614054
        %v895 = vmul.f32 %v875, 1.0614054
        %v896 = vmul.f32 %v877, 1.0614054
        %v897 = vmul.f32 %v879, 1.0614054
        %v898 = vmul.f32 %v881, 1.0614054
        %v899 = vmul.f32 %v883, 1.0614054
        %v900 = vadd.f32 %v884, -1.4531521
        %v901 = vadd.f32 %v885, -1.4531521
        %v902 = vadd.f32 %v886, -1.4531521
        %v903 = vadd.f32 %v887, -1.4531521
        %v904 = vadd.f32 %v888, -1.4531521
        %v905 = vadd.f32 %v889, -1.4531521
        %v906 = vadd.f32 %v890, -1.4531521
        %v907 = vadd.f32 %v891, -1.4531521
        %v908 = vadd.f32 %v892, -1.4531521
        %v909 = vadd.f32 %v893, -1.4531521
        %v910 = vadd.f32 %v894, -1.4531521
        %v911 = vadd.f32 %v895, -1.4531521
        %v912 = vadd.f32 %v896, -1.4531521
        %v913 = vadd.f32 %v897, -1.4531521
        %v914 = vadd.f32 %v898, -1.4531521
        %v915 = vadd.f32 %v899, -1.4531521
        %v916 = vmul.f32 %v853, %v900
        %v917 = vmul.f32 %v855, %v901
        %v918 = vmul.f32 %v857, %v902
        %v919 = vmul.f32 %v859, %v903
        %v920 = vmul.f32 %v861, %v904
        %v921 = vmul.f32 %v863, %v905
        %v922 = vmul.f32 %v865, %v906
        %v923 = vmul.f32 %v867, %v907
        %v924 = vmul.f32 %v869, %v908
        %v925 = vmul.f32 %v871, %v909
        %v926 = vmul.f32 %v873, %v910
        %v927 = vmul.f32 %v875, %v911
        %v928 = vmul.f32 %v877, %v912
        %v929 = vmul.f32 %v879, %v913
        %v930 = vmul.f32 %v881, %v914
        %v931 = vmul.f32 %v883, %v915
        %v932 = vadd.f32 %v916, 1.4214138
        %v933 = vadd.f32 %v917, 1.4214138
        %v934 = vadd.f32 %v918, 1.4214138
        %v935 = vadd.f32 %v919, 1.4214138
        %v936 = vadd.f32 %v920, 1.4214138
        %v937 = vadd.f32 %v921, 1.4214138
        %v938 = vadd.f32 %v922, 1.4214138
        %v939 = vadd.f32 %v923, 1.4214138
        %v940 = vadd.f32 %v924, 1.4214138
        %v941 = vadd.f32 %v925, 1.4214138
        %v942 = vadd.f32 %v926, 1.4214138
        %v943 = vadd.f32 %v927, 1.4214138
        %v944 = vadd.f32 %v928, 1.4214138
        %v945 = vadd.f32 %v929, 1.4214138
        %v946 = vadd.f32 %v930, 1.4214138
        %v947 = vadd.f32 %v931, 1.4214138
        %v948 = vmul.f32 %v853, %v932
        %v949 = vmul.f32 %v855, %v933
        %v950 = vmul.f32 %v857, %v934
        %v951 = vmul.f32 %v859, %v935
        %v952 = vmul.f32 %v861, %v936
        %v953 = vmul.f32 %v863, %v937
        %v954 = vmul.f32 %v865, %v938
        %v955 = vmul.f32 %v867, %v939
        %v956 = vmul.f32 %v869, %v940
        %v957 = vmul.f32 %v871, %v941
        %v958 = vmul.f32 %v873, %v942
        %v959 = vmul.f32 %v875, %v943
        %v960 = vmul.f32 %v877, %v944
        %v961 = vmul.f32 %v879, %v945
        %v962 = vmul.f32 %v881, %v946
        %v963 = vmul.f32 %v883, %v947
        %v964 = vadd.f32 %v948, -0.28449672
        %v965 = vadd.f32 %v949, -0.28449672
        %v966 = vadd.f32 %v950, -0.28449672
        %v967 = vadd.f32 %v951, -0.28449672
        %v968 = vadd.f32 %v952, -0.28449672
        %v969 = vadd.f32 %v953, -0.28449672
        %v970 = vadd.f32 %v954, -0.28449672
        %v971 = vadd.f32 %v955, -0.28449672
        %v972 = vadd.f32 %v956, -0.28449672
        %v973 = vadd.f32 %v957, -0.28449672
        %v974 = vadd.f32 %v958, -0.28449672
        %v975 = vadd.f32 %v959, -0.28449672
        %v976 = vadd.f32 %v960, -0.28449672
        %v977 = vadd.f32 %v961, -0.28449672
        %v978 = vadd.f32 %v962, -0.28449672
        %v979 = vadd.f32 %v963, -0.28449672
        %v980 = vmul.f32 %v853, %v964
        %v981 = vmul.f32 %v855, %v965
        %v982 = vmul.f32 %v857, %v966
        %v983 = vmul.f32 %v859, %v967
        %v984 = vmul.f32 %v861, %v968
        %v985 = vmul.f32 %v863, %v969
        %v986 = vmul.f32 %v865, %v970
        %v987 = vmul.f32 %v867, %v971
        %v988 = vmul.f32 %v869, %v972
        %v989 = vmul.f32 %v871, %v973
        %v990 = vmul.f32 %v873, %v974
        %v991 = vmul.f32 %v875, %v975
        %v992 = vmul.f32 %v877, %v976
        %v993 = vmul.f32 %v879, %v977
        %v994 = vmul.f32 %v881, %v978
        %v995 = vmul.f32 %v883, %v979
        %v996 = vadd.f32 %v980, 0.2548296
        %v997 = vadd.f32 %v981, 0.2548296
        %v998 = vadd.f32 %v982, 0.2548296
        %v999 = vadd.f32 %v983, 0.2548296
        %v1000 = vadd.f32 %v984, 0.2548296
        %v1001 = vadd.f32 %v985, 0.2548296
        %v1002 = vadd.f32 %v986, 0.2548296
        %v1003 = vadd.f32 %v987, 0.2548296
        %v1004 = vadd.f32 %v988, 0.2548296
        %v1005 = vadd.f32 %v989, 0.2548296
        %v1006 = vadd.f32 %v990, 0.2548296
        %v1007 = vadd.f32 %v991, 0.2548296
        %v1008 = vadd.f32 %v992, 0.2548296
        %v1009 = vadd.f32 %v993, 0.2548296
        %v1010 = vadd.f32 %v994, 0.2548296
        %v1011 = vadd.f32 %v995, 0.2548296
        %v1012 = vmul.f32 %v853, %v996
        %v1013 = vmul.f32 %v855, %v997
        %v1014 = vmul.f32 %v857, %v998
        %v1015 = vmul.f32 %v859, %v999
        %v1016 = vmul.f32 %v861, %v1000
        %v1017 = vmul.f32 %v863, %v1001
        %v1018 = vmul.f32 %v865, %v1002
        %v1019 = vmul.f32 %v867, %v1003
        %v1020 = vmul.f32 %v869, %v1004
        %v1021 = vmul.f32 %v871, %v1005
        %v1022 = vmul.f32 %v873, %v1006
        %v1023 = vmul.f32 %v875, %v1007
        %v1024 = vmul.f32 %v877, %v1008
        %v1025 = vmul.f32 %v879, %v1009
        %v1026 = vmul.f32 %v881, %v1010
        %v1027 = vmul.f32 %v883, %v1011
        %v1028 = vsub.f32 0.0, %v804
        %v1029 = vsub.f32 0.0, %v805
        %v1030 = vsub.f32 0.0, %v806
        %v1031 = vsub.f32 0.0, %v807
        %v1032 = vsub.f32 0.0, %v808
        %v1033 = vsub.f32 0.0, %v809
        %v1034 = vsub.f32 0.0, %v810
        %v1035 = vsub.f32 0.0, %v811
        %v1036 = vsub.f32 0.0, %v812
        %v1037 = vsub.f32 0.0, %v813
        %v1038 = vsub.f32 0.0, %v814
        %v1039 = vsub.f32 0.0, %v815
        %v1040 = vsub.f32 0.0, %v816
        %v1041 = vsub.f32 0.0, %v817
        %v1042 = vsub.f32 0.0, %v818
        %v1043 = vsub.f32 0.0, %v819
        %v1044 = vmul.f32 %v1028, %v804
        %v1045 = vmul.f32 %v1029, %v805
        %v1046 = vmul.f32 %v1030, %v806
        %v1047 = vmul.f32 %v1031, %v807
        %v1048 = vmul.f32 %v1032, %v808
        %v1049 = vmul.f32 %v1033, %v809
        %v1050 = vmul.f32 %v1034, %v810
        %v1051 = vmul.f32 %v1035, %v811
        %v1052 = vmul.f32 %v1036, %v812
        %v1053 = vmul.f32 %v1037, %v813
        %v1054 = vmul.f32 %v1038, %v814
        %v1055 = vmul.f32 %v1039, %v815
        %v1056 = vmul.f32 %v1040, %v816
        %v1057 = vmul.f32 %v1041, %v817
        %v1058 = vmul.f32 %v1042, %v818
        %v1059 = vmul.f32 %v1043, %v819
        %v1060 = vmul.f32 %v1044, 1.442695
        %v1061 = vpow.pop %v1060
        %v1062 = vmul.f32 %v1045, 1.442695
        %v1063 = vpow.pop %v1062
        %v1064 = vmul.f32 %v1046, 1.442695
        %v1065 = vpow.pop %v1064
        %v1066 = vmul.f32 %v1047, 1.442695
        %v1067 = vpow.pop %v1066
        %v1068 = vmul.f32 %v1048, 1.442695
        %v1069 = vpow.pop %v1068
        %v1070 = vmul.f32 %v1049, 1.442695
        %v1071 = vpow.pop %v1070
        %v1072 = vmul.f32 %v1050, 1.442695
        %v1073 = vpow.pop %v1072
        %v1074 = vmul.f32 %v1051, 1.442695
        %v1075 = vpow.pop %v1074
        %v1076 = vmul.f32 %v1052, 1.442695
        %v1077 = vpow.pop %v1076
        %v1078 = vmul.f32 %v1053, 1.442695
        %v1079 = vpow.pop %v1078
        %v1080 = vmul.f32 %v1054, 1.442695
        %v1081 = vpow.pop %v1080
        %v1082 = vmul.f32 %v1055, 1.442695
        %v1083 = vpow.pop %v1082
        %v1084 = vmul.f32 %v1056, 1.442695
        %v1085 = vpow.pop %v1084
        %v1086 = vmul.f32 %v1057, 1.442695
        %v1087 = vpow.pop %v1086
        %v1088 = vmul.f32 %v1058, 1.442695
        %v1089 = vpow.pop %v1088
        %v1090 = vmul.f32 %v1059, 1.442695
        %v1091 = vpow.pop %v1090
        %v1092 = vmul.f32 %v1012, %v1061
        %v1093 = vmul.f32 %v1013, %v1063
        %v1094 = vmul.f32 %v1014, %v1065
        %v1095 = vmul.f32 %v1015, %v1067
        %v1096 = vmul.f32 %v1016, %v1069
        %v1097 = vmul.f32 %v1017, %v1071
        %v1098 = vmul.f32 %v1018, %v1073
        %v1099 = vmul.f32 %v1019, %v1075
        %v1100 = vmul.f32 %v1020, %v1077
        %v1101 = vmul.f32 %v1021, %v1079
        %v1102 = vmul.f32 %v1022, %v1081
        %v1103 = vmul.f32 %v1023, %v1083
        %v1104 = vmul.f32 %v1024, %v1085
        %v1105 = vmul.f32 %v1025, %v1087
        %v1106 = vmul.f32 %v1026, %v1089
        %v1107 = vmul.f32 %v1027, %v1091
        %v1108 = vsub.f32 1.0, %v1092
        %v1109 = vsub.f32 1.0, %v1093
        %v1110 = vsub.f32 1.0, %v1094
        %v1111 = vsub.f32 1.0, %v1095
        %v1112 = vsub.f32 1.0, %v1096
        %v1113 = vsub.f32 1.0, %v1097
        %v1114 = vsub.f32 1.0, %v1098
        %v1115 = vsub.f32 1.0, %v1099
        %v1116 = vsub.f32 1.0, %v1100
        %v1117 = vsub.f32 1.0, %v1101
        %v1118 = vsub.f32 1.0, %v1102
        %v1119 = vsub.f32 1.0, %v1103
        %v1120 = vsub.f32 1.0, %v1104
        %v1121 = vsub.f32 1.0, %v1105
        %v1122 = vsub.f32 1.0, %v1106
        %v1123 = vsub.f32 1.0, %v1107
        %vm1124 = vcmp.lt.f32.partialorder %v788, 0.0
        %vm1125 = vcmp.lt.f32.partialorder %v789, 0.0
        %vm1126 = vcmp.lt.f32.partialorder %v790, 0.0
        %vm1127 = vcmp.lt.f32.partialorder %v791, 0.0
        %vm1128 = vcmp.lt.f32.partialorder %v792, 0.0
        %vm1129 = vcmp.lt.f32.partialorder %v793, 0.0
        %vm1130 = vcmp.lt.f32.partialorder %v794, 0.0
        %vm1131 = vcmp.lt.f32.partialorder %v795, 0.0
        %vm1132 = vcmp.lt.f32.partialorder %v796, 0.0
        %vm1133 = vcmp.lt.f32.partialorder %v797, 0.0
        %vm1134 = vcmp.lt.f32.partialorder %v798, 0.0
        %vm1135 = vcmp.lt.f32.partialorder %v799, 0.0
        %vm1136 = vcmp.lt.f32.partialorder %v800, 0.0
        %vm1137 = vcmp.lt.f32.partialorder %v801, 0.0
        %vm1138 = vcmp.lt.f32.partialorder %v802, 0.0
        %vm1139 = vcmp.lt.f32.partialorder %v803, 0.0
        %v1140 = vsub.f32 0.0, %v1108
        %v1141 = vsub.f32 0.0, %v1109
        %v1142 = vsub.f32 0.0, %v1110
        %v1143 = vsub.f32 0.0, %v1111
        %v1144 = vsub.f32 0.0, %v1112
        %v1145 = vsub.f32 0.0, %v1113
        %v1146 = vsub.f32 0.0, %v1114
        %v1147 = vsub.f32 0.0, %v1115
        %v1148 = vsub.f32 0.0, %v1116
        %v1149 = vsub.f32 0.0, %v1117
        %v1150 = vsub.f32 0.0, %v1118
        %v1151 = vsub.f32 0.0, %v1119
        %v1152 = vsub.f32 0.0, %v1120
        %v1153 = vsub.f32 0.0, %v1121
        %v1154 = vsub.f32 0.0, %v1122
        %v1155 = vsub.f32 0.0, %v1123
        %v1156 = vsel %vm1124, %v1140, %v1108
        %v1157 = vsel %vm1125, %v1141, %v1109
        %v1158 = vsel %vm1126, %v1142, %v1110
        %v1159 = vsel %vm1127, %v1143, %v1111
        %v1160 = vsel %vm1128, %v1144, %v1112
        %v1161 = vsel %vm1129, %v1145, %v1113
        %v1162 = vsel %vm1130, %v1146, %v1114
        %v1163 = vsel %vm1131, %v1147, %v1115
        %v1164 = vsel %vm1132, %v1148, %v1116
        %v1165 = vsel %vm1133, %v1149, %v1117
        %v1166 = vsel %vm1134, %v1150, %v1118
        %v1167 = vsel %vm1135, %v1151, %v1119
        %v1168 = vsel %vm1136, %v1152, %v1120
        %v1169 = vsel %vm1137, %v1153, %v1121
        %v1170 = vsel %vm1138, %v1154, %v1122
        %v1171 = vsel %vm1139, %v1155, %v1123
        %v1172 = vadd.f32 %v1156, 1.0
        %v1173 = vadd.f32 %v1157, 1.0
        %v1174 = vadd.f32 %v1158, 1.0
        %v1175 = vadd.f32 %v1159, 1.0
        %v1176 = vadd.f32 %v1160, 1.0
        %v1177 = vadd.f32 %v1161, 1.0
        %v1178 = vadd.f32 %v1162, 1.0
        %v1179 = vadd.f32 %v1163, 1.0
        %v1180 = vadd.f32 %v1164, 1.0
        %v1181 = vadd.f32 %v1165, 1.0
        %v1182 = vadd.f32 %v1166, 1.0
        %v1183 = vadd.f32 %v1167, 1.0
        %v1184 = vadd.f32 %v1168, 1.0
        %v1185 = vadd.f32 %v1169, 1.0
        %v1186 = vadd.f32 %v1170, 1.0
        %v1187 = vadd.f32 %v1171, 1.0
        %v1188 = vmul.f32 %v772, %v1172
        %v1189 = vmul.f32 %v773, %v1173
        %v1190 = vmul.f32 %v774, %v1174
        %v1191 = vmul.f32 %v775, %v1175
        %v1192 = vmul.f32 %v776, %v1176
        %v1193 = vmul.f32 %v777, %v1177
        %v1194 = vmul.f32 %v778, %v1178
        %v1195 = vmul.f32 %v779, %v1179
        %v1196 = vmul.f32 %v780, %v1180
        %v1197 = vmul.f32 %v781, %v1181
        %v1198 = vmul.f32 %v782, %v1182
        %v1199 = vmul.f32 %v783, %v1183
        %v1200 = vmul.f32 %v784, %v1184
        %v1201 = vmul.f32 %v785, %v1185
        %v1202 = vmul.f32 %v786, %v1186
        %v1203 = vmul.f32 %v787, %v1187
        %v1204 = vld [vmem:[%s3] sm:$0xff]
        %v1205 = vld [vmem:[%s3 + $0x8] sm:$0xff]
        %v1206 = vld [vmem:[%s4] sm:$0xff]
        %v1207 = vld [vmem:[%s4 + $0x8] sm:$0xff]
        %1209 = vset.pattern.permute.xlu0 0
        %1210 = vperm.xlu0 %1209, %v1206
        %v1211 = vpop.permute.xlu0 %1210
        %1214 = vset.pattern.permute.xlu0 0
        %1215 = vperm.xlu0 %1214, %v1207
        %v1216 = vpop.permute.xlu0 %1215
        %v1219 = vsel %vm455, %v1204, 0
        %v1222 = vsel %vm455, %v1205, 0
        %v1225 = vsel %vm455, %v1188, 0
        %v1228 = vsel %vm455, %v1189, 0
        %v1231 = vsel %vm455, %v1190, 0
        %v1234 = vsel %vm455, %v1191, 0
        %v1237 = vsel %vm455, %v1192, 0
        %v1240 = vsel %vm455, %v1193, 0
        %v1243 = vsel %vm455, %v1194, 0
        %v1246 = vsel %vm455, %v1195, 0
        %v1249 = vsel %vm455, %v1196, 0
        %v1252 = vsel %vm455, %v1197, 0
        %v1255 = vsel %vm455, %v1198, 0
        %v1258 = vsel %vm455, %v1199, 0
        %v1261 = vsel %vm455, %v1200, 0
        %v1264 = vsel %vm455, %v1201, 0
        %v1267 = vsel %vm455, %v1202, 0
        %v1270 = vsel %vm455, %v1203, 0
        %1272 = vmatprep.subr.mxu0 0.0
        %1273 = vmatpush1.xpose.msra.mxu0 %v1225
        %1274 = vmatprep.subr.mxu0 0.0
        %1275 = vmatpush1.xpose.msra.mxu0 %v1228
        %1276 = vmatprep.subr.mxu0 0.0
        %1277 = vmatpush1.xpose.msra.mxu0 %v1231
        %1278 = vmatprep.subr.mxu0 0.0
        %1279 = vmatpush1.xpose.msra.mxu0 %v1234
        %1280 = vmatprep.subr.mxu0 0.0
        %1281 = vmatpush1.xpose.msra.mxu0 %v1237
        %1282 = vmatprep.subr.mxu0 0.0
        %1283 = vmatpush1.xpose.msra.mxu0 %v1240
        %1284 = vmatprep.subr.mxu0 0.0
        %1285 = vmatpush1.xpose.msra.mxu0 %v1243
        %1286 = vmatprep.subr.mxu0 0.0
        %1287 = vmatpush1.xpose.msra.mxu0 %v1246
        %1288 = vmatprep.subr.mxu0 0.0
        %1289 = vmatpush1.xpose.msra.mxu0 %v1249
        %1290 = vmatprep.subr.mxu0 0.0
        %1291 = vmatpush1.xpose.msra.mxu0 %v1252
        %1292 = vmatprep.subr.mxu0 0.0
        %1293 = vmatpush1.xpose.msra.mxu0 %v1255
        %1294 = vmatprep.subr.mxu0 0.0
        %1295 = vmatpush1.xpose.msra.mxu0 %v1258
        %1296 = vmatprep.subr.mxu0 0.0
        %1297 = vmatpush1.xpose.msra.mxu0 %v1261
        %1298 = vmatprep.subr.mxu0 0.0
        %1299 = vmatpush1.xpose.msra.mxu0 %v1264
        %1300 = vmatprep.subr.mxu0 0.0
        %1301 = vmatpush1.xpose.msra.mxu0 %v1267
        %1302 = vmatprep.subr.mxu0 0.0
        %1303 = vmatpush1.xpose.msra.mxu0 %v1270
        %1304 = vmatprep.subr.mxu0 0.0
        %1305 = vmatpush1.xpose.msra.mxu0 0.0
        %1306 = vmatprep.subr.mxu0 0.0
        %1307 = vmatpush1.xpose.msra.mxu0 0.0
        %1308 = vmatprep.subr.mxu0 0.0
        %1309 = vmatpush1.xpose.msra.mxu0 0.0
        %1310 = vmatprep.subr.mxu0 0.0
        %1311 = vmatpush1.xpose.msra.mxu0 0.0
        %1312 = vmatprep.subr.mxu0 0.0
        %1313 = vmatpush1.xpose.msra.mxu0 0.0
        %1314 = vmatprep.subr.mxu0 0.0
        %1315 = vmatpush1.xpose.msra.mxu0 0.0
        %1316 = vmatprep.subr.mxu0 0.0
        %1317 = vmatpush1.xpose.msra.mxu0 0.0
        %1318 = vmatprep.subr.mxu0 0.0
        %1319 = vmatpush1.xpose.msra.mxu0 0.0
        %1320 = vmatprep.subr.mxu0 0.0
        %1321 = vmatpush1.xpose.msra.mxu0 0.0
        %1322 = vmatprep.subr.mxu0 0.0
        %1323 = vmatpush1.xpose.msra.mxu0 0.0
        %1324 = vmatprep.subr.mxu0 0.0
        %1325 = vmatpush1.xpose.msra.mxu0 0.0
        %1326 = vmatprep.subr.mxu0 0.0
        %1327 = vmatpush1.xpose.msra.mxu0 0.0
        %1328 = vmatprep.subr.mxu0 0.0
        %1329 = vmatpush1.xpose.msra.mxu0 0.0
        %1330 = vmatprep.subr.mxu0 0.0
        %1331 = vmatpush1.xpose.msra.mxu0 0.0
        %1332 = vmatprep.subr.mxu0 0.0
        %1333 = vmatpush1.xpose.msra.mxu0 0.0
        %1334 = vmatprep.subr.mxu0 0.0
        %1335 = vmatpush1.xpose.msra.mxu0 0.0
        %1336 = vmatprep.mubr.f32.mxu0 0.0
        %1337 = vmatmul.mubr.f32.gmra.mrb[0].mxu0 %v1219
        %v1338 = vpop.f32.mrb[0].mxu0
        %v1339 = vadd.f32 %v1211, %v1338
        %v1340 = vpop.f32.mrb[0].mxu0
        %1341 = vmatprep.mubr.f32.mxu0 0.0
        %1342 = vmatmul.mubr.f32.gmra.mrb[0].mxu0 %v1222
        %v1343 = vpop.f32.mrb[0].mxu0
        %v1344 = vadd.f32 %v1216, %v1343
        %v1345 = vpop.f32.mrb[0].mxu0
        %1346 = vdwg.mxu0
        %v1347 = vmul.f32 %v1339, %v1339
        %v1348 = vmul.f32 %v1344, %v1344
        %v1349 = vadd.f32 %v1347, %v1348
        %v1350 = vrot.slane %v1349, 4
        %v1351 = vadd.f32 %v1349, %v1350
        %v1352 = vrot.slane %v1351, 2
        %v1353 = vadd.f32 %v1351, %v1352
        %v1354 = vrot.slane %v1353, 1
        %v1355 = vadd.f32 %v1353, %v1354
        %v1356 = vmax.f32 %v1355, 1e-24
        %v1357 = vrsqrt.pop %v1356
        %v1358 = vmul.f32 %v1339, %v1357
        %v1359 = vmul.f32 %v1344, %v1357
        %1360 = vst [vmem:[%s424] sm:$0xff] %v1358
        %1361 = vst [vmem:[%s424 + $0x8] sm:$0xff] %v1359
        %v1363 = vsel %vm578, %v535, 0
        %v1366 = vsel %vm578, %v540, 0
        %v1369 = vsel %vm578, %v545, 0
        %v1372 = vsel %vm578, %v550, 0
        %1374 = vmatprep.subr.mxu0 0.0
        %1375 = vmatpush1.msra.mxu0 %v1358
        %1376 = vmatprep.subr.mxu0 0.0
        %1377 = vmatpush1.msra.mxu0 %v1359
        %1378 = vmatprep.subr.mxu0 0.0
        %1379 = vmatpush1.msra.mxu0 0.0
        %1380 = vmatprep.subr.mxu0 0.0
        %1381 = vmatpush1.msra.mxu0 0.0
        %1382 = vmatprep.subr.mxu0 0.0
        %1383 = vmatpush1.msra.mxu0 0.0
        %1384 = vmatprep.subr.mxu0 0.0
        %1385 = vmatpush1.msra.mxu0 0.0
        %1386 = vmatprep.subr.mxu0 0.0
        %1387 = vmatpush1.msra.mxu0 0.0
        %1388 = vmatprep.subr.mxu0 0.0
        %1389 = vmatpush1.msra.mxu0 0.0
        %1390 = vmatprep.subr.mxu0 0.0
        %1391 = vmatpush1.msra.mxu0 0.0
        %1392 = vmatprep.subr.mxu0 0.0
        %1393 = vmatpush1.msra.mxu0 0.0
        %1394 = vmatprep.subr.mxu0 0.0
        %1395 = vmatpush1.msra.mxu0 0.0
        %1396 = vmatprep.subr.mxu0 0.0
        %1397 = vmatpush1.msra.mxu0 0.0
        %1398 = vmatprep.subr.mxu0 0.0
        %1399 = vmatpush1.msra.mxu0 0.0
        %1400 = vmatprep.subr.mxu0 0.0
        %1401 = vmatpush1.msra.mxu0 0.0
        %1402 = vmatprep.subr.mxu0 0.0
        %1403 = vmatpush1.msra.mxu0 0.0
        %1404 = vmatprep.subr.mxu0 0.0
        %1405 = vmatpush1.msra.mxu0 0.0
        %1406 = vmatprep.subr.mxu0 0.0
        %1407 = vmatpush1.msra.mxu0 0.0
        %1408 = vmatprep.subr.mxu0 0.0
        %1409 = vmatpush1.msra.mxu0 0.0
        %1410 = vmatprep.subr.mxu0 0.0
        %1411 = vmatpush1.msra.mxu0 0.0
        %1412 = vmatprep.subr.mxu0 0.0
        %1413 = vmatpush1.msra.mxu0 0.0
        %1414 = vmatprep.subr.mxu0 0.0
        %1415 = vmatpush1.msra.mxu0 0.0
        %1416 = vmatprep.subr.mxu0 0.0
        %1417 = vmatpush1.msra.mxu0 0.0
        %1418 = vmatprep.subr.mxu0 0.0
        %1419 = vmatpush1.msra.mxu0 0.0
        %1420 = vmatprep.subr.mxu0 0.0
        %1421 = vmatpush1.msra.mxu0 0.0
        %1422 = vmatprep.subr.mxu0 0.0
        %1423 = vmatpush1.msra.mxu0 0.0
        %1424 = vmatprep.subr.mxu0 0.0
        %1425 = vmatpush1.msra.mxu0 0.0
        %1426 = vmatprep.subr.mxu0 0.0
        %1427 = vmatpush1.msra.mxu0 0.0
        %1428 = vmatprep.subr.mxu0 0.0
        %1429 = vmatpush1.msra.mxu0 0.0
        %1430 = vmatprep.subr.mxu0 0.0
        %1431 = vmatpush1.msra.mxu0 0.0
        %1432 = vmatprep.subr.mxu0 0.0
        %1433 = vmatpush1.msra.mxu0 0.0
        %1434 = vmatprep.subr.mxu0 0.0
        %1435 = vmatpush1.msra.mxu0 0.0
        %1436 = vmatprep.subr.mxu0 0.0
        %1437 = vmatpush1.msra.mxu0 0.0
        %1438 = vmatprep.mubr.f32.mxu0 0.0
        %1439 = vmatmul.mubr.f32.gmra.mrb[0].mxu0 %v1363
        %v1440 = vpop.f32.mrb[0].mxu0
        %v1441 = vadd.f32 0.0, %v1440
        %v1442 = vpop.f32.mrb[0].mxu0
        %1443 = vmatprep.mubr.f32.mxu0 0.0
        %1444 = vmatmul.mubr.f32.gmra.mrb[0].mxu0 %v1366
        %v1445 = vpop.f32.mrb[0].mxu0
        %v1446 = vadd.f32 0.0, %v1445
        %v1447 = vpop.f32.mrb[0].mxu0
        %1448 = vmatprep.mubr.f32.mxu0 0.0
        %1449 = vmatmul.mubr.f32.gmra.mrb[0].mxu0 %v1369
        %v1450 = vpop.f32.mrb[0].mxu0
        %v1451 = vadd.f32 0.0, %v1450
        %v1452 = vpop.f32.mrb[0].mxu0
        %1453 = vmatprep.mubr.f32.mxu0 0.0
        %1454 = vmatmul.mubr.f32.gmra.mrb[0].mxu0 %v1372
        %v1455 = vpop.f32.mrb[0].mxu0
        %v1456 = vadd.f32 0.0, %v1455
        %v1457 = vpop.f32.mrb[0].mxu0
        %1458 = vdwg.mxu0
        %v1459 = vld [vmem:[%s8] sm:$0xff]
        %v1460 = vld [vmem:[%s8 + $0x8] sm:$0xff]
        %v1461 = vld [vmem:[%s8 + $0x10] sm:$0xff]
        %v1462 = vld [vmem:[%s8 + $0x18] sm:$0xff]
        %1464 = vset.pattern.permute.xlu0 0
        %1465 = vperm.xlu0 %1464, %v1459
        %v1466 = vpop.permute.xlu0 %1465
        %1469 = vset.pattern.permute.xlu0 0
        %1470 = vperm.xlu0 %1469, %v1460
        %v1471 = vpop.permute.xlu0 %1470
        %1474 = vset.pattern.permute.xlu0 0
        %1475 = vperm.xlu0 %1474, %v1461
        %v1476 = vpop.permute.xlu0 %1475
        %1479 = vset.pattern.permute.xlu0 0
        %1480 = vperm.xlu0 %1479, %v1462
        %v1481 = vpop.permute.xlu0 %1480
        %v1483 = vmul.f32 %v1441, %v1466
        %v1484 = vmul.f32 %v1446, %v1471
        %v1485 = vmul.f32 %v1451, %v1476
        %v1486 = vmul.f32 %v1456, %v1481
        %v1487 = vld [vmem:[%s9] sm:$0xff]
        %v1488 = vld [vmem:[%s9 + $0x8] sm:$0xff]
        %v1489 = vld [vmem:[%s9 + $0x10] sm:$0xff]
        %v1490 = vld [vmem:[%s9 + $0x18] sm:$0xff]
        %1492 = vset.pattern.permute.xlu0 0
        %1493 = vperm.xlu0 %1492, %v1487
        %v1494 = vpop.permute.xlu0 %1493
        %1497 = vset.pattern.permute.xlu0 0
        %1498 = vperm.xlu0 %1497, %v1488
        %v1499 = vpop.permute.xlu0 %1498
        %1502 = vset.pattern.permute.xlu0 0
        %1503 = vperm.xlu0 %1502, %v1489
        %v1504 = vpop.permute.xlu0 %1503
        %1507 = vset.pattern.permute.xlu0 0
        %1508 = vperm.xlu0 %1507, %v1490
        %v1509 = vpop.permute.xlu0 %1508
        %v1511 = vadd.f32 %v1483, %v1494
        %v1512 = vadd.f32 %v1484, %v1499
        %v1513 = vadd.f32 %v1485, %v1504
        %v1514 = vadd.f32 %v1486, %v1509
        %1515 = vst [vmem:[%s418] sm:$0xff] %v1511
        %1516 = vst [vmem:[%s418 + $0x8] sm:$0xff] %v1512
        %1517 = vst [vmem:[%s418 + $0x10] sm:$0xff] %v1513
        %1518 = vst [vmem:[%s418 + $0x18] sm:$0xff] %v1514
        %s1519 = sand.u32 %s267, 1
        %s1520 = sand.u32 %s267, 1
        %s1521 = smul.addr %s1520, 32
        %s1522 = scalar_lea.vmem [#allocation2], %s1521
        %s1523 = sand.u32 %s295, 1
        %s1524 = sand.u32 %s295, 1
        %s1525 = smul.addr %s1524, 16
        %s1526 = scalar_lea.vmem [#allocation3], %s1525
        // Predicated region
        $region61: #{predictor_forward.3} parent=59 // pred_check
          %p1527 = pneg %p277
        $region62: #{predictor_forward.3} parent=59 // pred_check_branch
          %1529 = sbr.rel (%p1527) target = $region64
        $region63: #{predictor_forward.3} parent=59 // pred_region
          %s1530 = smul.addr %s27, 8
          %s1531 = sadd.s32 %s28, %s1530
          %s1532 = smul.addr %s1531, 8
          %s1533 = scalar_lea.vmem %s10, %s1532
          // Predicated region
          $region65: #{predictor_forward.3} parent=63 // pred_check
            _
          $region66: #{predictor_forward.3} parent=63 // pred_check_branch
            %1535 = sbr.rel (0) target = $region68
          $region67: #{predictor_forward.3} parent=63 // pred_region
            // Predicated region
            $region69: #{predictor_forward.3} parent=67 // pred_check
              _
            $region70: #{predictor_forward.3} parent=67 // pred_check_branch
              %1537 = sbr.rel (0) target = $region72
            $region71: #{predictor_forward.3} parent=67 // pred_region
              // Predicated region
              $region84: #{predictor_forward.3} parent=71 // pred_check
                _
              $region85: #{predictor_forward.3} parent=71 // pred_check_branch
                %1558 = sbr.rel (0) target = $region87
              $region86: #{predictor_forward.3} parent=71 // pred_region
                loop: start=0, step=1, limit=1
                $region88: #{predictor_forward.3} parent=86 // loop_pre_header
                  _
                $region89: #{predictor_forward.3} parent=86 // loop_header
                  %s1560 = sphi 0, %s1564
                  %p1561 = scmp.ge.s32.totalorder %s1560, 1
                  %s1565 = sphi %s1522, %s1522
                  %s1566 = sphi %s1533, %s1533
                $region90: #{predictor_forward.3} parent=86 // loop_header_branch
                  %1563 = sbr.rel (%p1561) target = $region94
                $region91: #{predictor_forward.3} parent=86 // loop_body
                  %v1567 = vld [vmem:[%s1565] sm:$0xff]
                  %1568 = vst [vmem:[%s1566] sm:$0xff] %v1567
                  %v1569 = vld [vmem:[%s1565 + $0x8] sm:$0xff]
                  %1570 = vst [vmem:[%s1566 + $0x10] sm:$0xff] %v1569
                  %v1571 = vld [vmem:[%s1565 + $0x10] sm:$0xff]
                  %1572 = vst [vmem:[%s1566 + $0x20] sm:$0xff] %v1571
                  %v1573 = vld [vmem:[%s1565 + $0x18] sm:$0xff]
                  %1574 = vst [vmem:[%s1566 + $0x30] sm:$0xff] %v1573
                $region92: #{predictor_forward.3} parent=86 // loop_footer
                  %s1564 = sadd.s32 1, %s1560
                $region93: #{predictor_forward.3} parent=86 // loop_footer_branch
                  %1559 = sbr.rel target = $region89
                $region94: #{predictor_forward.3} parent=86 // loop_exit
                  _
              $region87: #{predictor_forward.3} parent=71 // pred_fallthru
                _
              // Predicated region
              $region95: #{predictor_forward.3} parent=71 // pred_check
                _
              $region96: #{predictor_forward.3} parent=71 // pred_check_branch
                %1576 = sbr.rel target = $region98
              $region97: #{predictor_forward.3} parent=71 // pred_region
                _
              $region98: #{predictor_forward.3} parent=71 // pred_fallthru
                _
            $region72: #{predictor_forward.3} parent=67 // pred_fallthru
              _
            // Predicated region
            $region73: #{predictor_forward.3} parent=67 // pred_check
              _
            $region74: #{predictor_forward.3} parent=67 // pred_check_branch
              %1539 = sbr.rel target = $region76
            $region75: #{predictor_forward.3} parent=67 // pred_region
              loop: start=0, step=1, limit=1
              $region77: #{predictor_forward.3} parent=75 // loop_pre_header
                _
              $region78: #{predictor_forward.3} parent=75 // loop_header
                %s1542 = sphi 0, %s1546
                %p1543 = scmp.ge.s32.totalorder %s1542, 1
                %s1547 = sphi %s1522, %s1522
                %s1548 = sphi %s1533, %s1533
              $region79: #{predictor_forward.3} parent=75 // loop_header_branch
                %1545 = sbr.rel (%p1543) target = $region83
              $region80: #{predictor_forward.3} parent=75 // loop_body
                %v1549 = vld [vmem:[%s1547] sm:$0xff]
                %1550 = vst [vmem:[%s1548] sm:$0xff] %v1549
                %v1551 = vld [vmem:[%s1547 + $0x8] sm:$0xff]
                %1552 = vst [vmem:[%s1548 + $0x10] sm:$0xff] %v1551
                %v1553 = vld [vmem:[%s1547 + $0x10] sm:$0xff]
                %1554 = vst [vmem:[%s1548 + $0x20] sm:$0xff] %v1553
                %v1555 = vld [vmem:[%s1547 + $0x18] sm:$0xff]
                %1556 = vst [vmem:[%s1548 + $0x30] sm:$0xff] %v1555
              $region81: #{predictor_forward.3} parent=75 // loop_footer
                %s1546 = sadd.s32 1, %s1542
              $region82: #{predictor_forward.3} parent=75 // loop_footer_branch
                %1541 = sbr.rel target = $region78
              $region83: #{predictor_forward.3} parent=75 // loop_exit
                _
            $region76: #{predictor_forward.3} parent=67 // pred_fallthru
              _
          $region68: #{predictor_forward.3} parent=63 // pred_fallthru
            _
          %1577 = vnop
        $region64: #{predictor_forward.3} parent=59 // pred_fallthru
          _
        // Predicated region
        $region99: #{predictor_forward.3} parent=59 // pred_check
          %p1578 = pneg %p305
        $region100: #{predictor_forward.3} parent=59 // pred_check_branch
          %1580 = sbr.rel (%p1578) target = $region102
        $region101: #{predictor_forward.3} parent=59 // pred_region
          %s1581 = smul.addr %s27, 4
          %s1582 = sadd.s32 %s28, %s1581
          %s1583 = smul.addr %s1582, 8
          %s1584 = scalar_lea.vmem %s11, %s1583
          // Predicated region
          $region103: #{predictor_forward.3} parent=101 // pred_check
            _
          $region104: #{predictor_forward.3} parent=101 // pred_check_branch
            %1586 = sbr.rel (0) target = $region106
          $region105: #{predictor_forward.3} parent=101 // pred_region
            // Predicated region
            $region107: #{predictor_forward.3} parent=105 // pred_check
              _
            $region108: #{predictor_forward.3} parent=105 // pred_check_branch
              %1588 = sbr.rel (0) target = $region110
            $region109: #{predictor_forward.3} parent=105 // pred_region
              // Predicated region
              $region122: #{predictor_forward.3} parent=109 // pred_check
                _
              $region123: #{predictor_forward.3} parent=109 // pred_check_branch
                %1605 = sbr.rel (0) target = $region125
              $region124: #{predictor_forward.3} parent=109 // pred_region
                loop: start=0, step=1, limit=1
                $region126: #{predictor_forward.3} parent=124 // loop_pre_header
                  _
                $region127: #{predictor_forward.3} parent=124 // loop_header
                  %s1607 = sphi 0, %s1611
                  %p1608 = scmp.ge.s32.totalorder %s1607, 1
                  %s1612 = sphi %s1526, %s1526
                  %s1613 = sphi %s1584, %s1584
                $region128: #{predictor_forward.3} parent=124 // loop_header_branch
                  %1610 = sbr.rel (%p1608) target = $region132
                $region129: #{predictor_forward.3} parent=124 // loop_body
                  %v1614 = vld [vmem:[%s1612] sm:$0xff]
                  %1615 = vst [vmem:[%s1613] sm:$0xff] %v1614
                  %v1616 = vld [vmem:[%s1612 + $0x8] sm:$0xff]
                  %1617 = vst [vmem:[%s1613 + $0x10] sm:$0xff] %v1616
                $region130: #{predictor_forward.3} parent=124 // loop_footer
                  %s1611 = sadd.s32 1, %s1607
                $region131: #{predictor_forward.3} parent=124 // loop_footer_branch
                  %1606 = sbr.rel target = $region127
                $region132: #{predictor_forward.3} parent=124 // loop_exit
                  _
              $region125: #{predictor_forward.3} parent=109 // pred_fallthru
                _
              // Predicated region
              $region133: #{predictor_forward.3} parent=109 // pred_check
                _
              $region134: #{predictor_forward.3} parent=109 // pred_check_branch
                %1619 = sbr.rel target = $region136
              $region135: #{predictor_forward.3} parent=109 // pred_region
                _
              $region136: #{predictor_forward.3} parent=109 // pred_fallthru
                _
            $region110: #{predictor_forward.3} parent=105 // pred_fallthru
              _
            // Predicated region
            $region111: #{predictor_forward.3} parent=105 // pred_check
              _
            $region112: #{predictor_forward.3} parent=105 // pred_check_branch
              %1590 = sbr.rel target = $region114
            $region113: #{predictor_forward.3} parent=105 // pred_region
              loop: start=0, step=1, limit=1
              $region115: #{predictor_forward.3} parent=113 // loop_pre_header
                _
              $region116: #{predictor_forward.3} parent=113 // loop_header
                %s1593 = sphi 0, %s1597
                %p1594 = scmp.ge.s32.totalorder %s1593, 1
                %s1598 = sphi %s1526, %s1526
                %s1599 = sphi %s1584, %s1584
              $region117: #{predictor_forward.3} parent=113 // loop_header_branch
                %1596 = sbr.rel (%p1594) target = $region121
              $region118: #{predictor_forward.3} parent=113 // loop_body
                %v1600 = vld [vmem:[%s1598] sm:$0xff]
                %1601 = vst [vmem:[%s1599] sm:$0xff] %v1600
                %v1602 = vld [vmem:[%s1598 + $0x8] sm:$0xff]
                %1603 = vst [vmem:[%s1599 + $0x10] sm:$0xff] %v1602
              $region119: #{predictor_forward.3} parent=113 // loop_footer
                %s1597 = sadd.s32 1, %s1593
              $region120: #{predictor_forward.3} parent=113 // loop_footer_branch
                %1592 = sbr.rel target = $region116
              $region121: #{predictor_forward.3} parent=113 // loop_exit
                _
            $region114: #{predictor_forward.3} parent=105 // pred_fallthru
              _
          $region106: #{predictor_forward.3} parent=101 // pred_fallthru
            _
          %1620 = vnop
        $region102: #{predictor_forward.3} parent=59 // pred_fallthru
          _
      $region60: #{predictor_forward.3} parent=5 // pred_fallthru
        _
      %p1621 = scmp.le.s32.totalorder 2, %s18
      // Predicated region
      $region137: #{predictor_forward.3} parent=5 // pred_check
        %p1622 = pneg %p1621
      $region138: #{predictor_forward.3} parent=5 // pred_check_branch
        %1624 = sbr.rel (%p1622) target = $region140
      $region139: #{predictor_forward.3} parent=5 // pred_region
        %s1625 = ssub.s32 %s18, 2
        // Predicated region
        $region141: #{predictor_forward.3} parent=139 // pred_check
          %p1626 = pneg %p283
        $region142: #{predictor_forward.3} parent=139 // pred_check_branch
          %1628 = sbr.rel (%p1626) target = $region144
        $region143: #{predictor_forward.3} parent=139 // pred_region
          %s1629 = sand.u32 %s268, 1
          %s1630 = sand.u32 %s268, 1
          %s1631 = smul.addr %s1630, 32
          %s1632 = scalar_lea.vmem [#allocation2], %s1631
        $region144: #{predictor_forward.3} parent=139 // pred_fallthru
          _
        // Predicated region
        $region145: #{predictor_forward.3} parent=139 // pred_check
          %p1633 = pneg %p311
        $region146: #{predictor_forward.3} parent=139 // pred_check_branch
          %1635 = sbr.rel (%p1633) target = $region148
        $region147: #{predictor_forward.3} parent=139 // pred_region
          %s1636 = sand.u32 %s296, 1
          %s1637 = sand.u32 %s296, 1
          %s1638 = smul.addr %s1637, 16
          %s1639 = scalar_lea.vmem [#allocation3], %s1638
        $region148: #{predictor_forward.3} parent=139 // pred_fallthru
          _
      $region140: #{predictor_forward.3} parent=5 // pred_fallthru
        _
    $region6: #{predictor_forward.3} parent=1 // loop_footer
      %s22 = sadd.s32 1, %s18
    $region7: #{predictor_forward.3} parent=1 // loop_footer_branch
      %17 = sbr.rel target = $region3
    $region8: #{predictor_forward.3} parent=1 // loop_exit
      _

// kernel: predictor_forward.2
$region0: #{predictor_forward.2}
  #allocation0 [shape = 'u32[]', space=smem, size = 0x4, offset = 0x4, fixed_abs, tag = 'smem constant byte address 0x4 - core index']
  #allocation1 [shape = 'u32[144,128]{1,0:T(1,128)}', space=vmem, size = 0x12000, scoped, tag = 'internal scratch']
  %s0 = inlined_call_operand.vmem [shape: f32[2,12,12,128], index: 0, kind: input, shape index: {}]
  %s1 = inlined_call_operand.vmem [shape: f32[5,25,64], index: 1, kind: input, shape index: {}]
  %s2 = inlined_call_operand.vmem [shape: f32[1,64], index: 2, kind: input, shape index: {}]
  %s3 = inlined_call_operand.vmem [shape: f32[2,32,32], index: 3, kind: input, shape index: {}]
  %s4 = inlined_call_operand.vmem [shape: f32[32,11], index: 4, kind: input, shape index: {}]
  %s5 = inlined_call_operand.vmem [shape: f32[1,11], index: 5, kind: input, shape index: {}]
  %s6 = inlined_call_operand.vmem [shape: f32[2,8,8,64], index: 6, kind: output, shape index: {0}]
  %s7 = inlined_call_operand.vmem [shape: f32[2,32,11], index: 7, kind: output, shape index: {1}]
  %8 = xla_tuple %s6, %s7
  %s9 = sld [smem:[#allocation0]]
  $region65: #{predictor_forward.2} parent=0
    _
  %s11 = ssub.s32 1, %s9
  %s12 = scalar_select 0, %s11, %s9
  loop: start=0, step=1, limit=4
  $region2: #{predictor_forward.2} parent=0 // loop_pre_header
    _
  $region3: #{predictor_forward.2} parent=0 // loop_header
    %s14 = sphi 0, %s18
    %p15 = scmp.ge.s32.totalorder %s14, 4
    %s24 = sphi 0, %s26
    %s27 = sphi 0, %s24
    %s28 = sphi 0, %s27
    %s44 = sphi 0, %s28
    %s48 = sphi 0, %s48
    %s50 = sphi 0, %s48
    %s51 = sphi 0, %s50
    %s65 = sphi 0, %s51
    %s69 = sphi 0, %s69
    %s71 = sphi 0, %s69
    %s72 = sphi 0, %s71
    %s86 = sphi 0, %s72
    %s92 = sphi 0, %s94
    %s95 = sphi 0, %s92
    %s96 = sphi 0, %s95
    %s112 = sphi 0, %s96
    %s116 = sphi 0, %s116
    %s118 = sphi 0, %s116
    %s119 = sphi 0, %s118
    %s133 = sphi 0, %s119
    %s137 = sphi 0, %s137
    %s139 = sphi 0, %s137
    %s140 = sphi 0, %s139
    %s154 = sphi 0, %s140
    %s160 = sphi 0, %s162
    %s163 = sphi 0, %s160
    %s164 = sphi 0, %s163
    %s180 = sphi 0, %s164
    %s186 = sphi 0, %s188
    %s189 = sphi 0, %s186
    %s190 = sphi 0, %s189
    %s206 = sphi 0, %s190
  $region4: #{predictor_forward.2} parent=0 // loop_header_branch
    %17 = sbr.rel (%p15) target = $region8
  $region5: #{predictor_forward.2} parent=0 // loop_body
    %s19 = ssub.s32 %s14, 1
    %s20 = ssub.s32 %s14, 2
    %s21 = sadd.s32 %s14, 1
    %s22 = ssub.s32 %s14, %s21
    %p23 = scmp.eq.s32.totalorder %s22, 0
    %s25 = sadd.s32 %s24, 1
    %s26 = scalar_select %p23, %s24, %s25
    %p29 = pneg %p23
    %p30 = scmp.eq.s32.totalorder %s14, 1
    %p31 = por %p29, %p30
    %p32 = scmp.ne.s32.totalorder %s24, %s27
    %p33 = scmp.eq.s32.totalorder %s14, 0
    %p34 = por %p32, %p33
    %p35 = scmp.ne.s32.totalorder %s24, %s27
    %p36 = scmp.eq.s32.totalorder %s19, 1
    %p37 = por %p35, %p36
    %p38 = scmp.ne.s32.totalorder %s27, %s28
    %p39 = scmp.eq.s32.totalorder %s19, 0
    %p40 = por %p38, %p39
    %p41 = scmp.ne.s32.totalorder %s27, %s28
    %p42 = scmp.eq.s32.totalorder %s20, 1
    %p43 = por %p41, %p42
    %p45 = scmp.ne.s32.totalorder %s28, %s44
    %p46 = scmp.eq.s32.totalorder %s20, 0
    %p47 = por %p45, %p46
    %s49 = sadd.s32 %s48, 1
    %p52 = scmp.eq.s32.totalorder %s14, 1
    %p53 = scmp.ne.s32.totalorder %s48, %s50
    %p54 = scmp.eq.s32.totalorder %s14, 0
    %p55 = por %p53, %p54
    %p56 = scmp.ne.s32.totalorder %s48, %s50
    %p57 = scmp.eq.s32.totalorder %s19, 1
    %p58 = por %p56, %p57
    %p59 = scmp.ne.s32.totalorder %s50, %s51
    %p60 = scmp.eq.s32.totalorder %s19, 0
    %p61 = por %p59, %p60
    %p62 = scmp.ne.s32.totalorder %s50, %s51
    %p63 = scmp.eq.s32.totalorder %s20, 1
    %p64 = por %p62, %p63
    %p66 = scmp.ne.s32.totalorder %s51, %s65
    %p67 = scmp.eq.s32.totalorder %s20, 0
    %p68 = por %p66, %p67
    %s70 = sadd.s32 %s69, 1
    %p73 = scmp.eq.s32.totalorder %s14, 1
    %p74 = scmp.ne.s32.totalorder %s69, %s71
    %p75 = scmp.eq.s32.totalorder %s14, 0
    %p76 = por %p74, %p75
    %p77 = scmp.ne.s32.totalorder %s69, %s71
    %p78 = scmp.eq.s32.totalorder %s19, 1
    %p79 = por %p77, %p78
    %p80 = scmp.ne.s32.totalorder %s71, %s72
    %p81 = scmp.eq.s32.totalorder %s19, 0
    %p82 = por %p80, %p81
    %p83 = scmp.ne.s32.totalorder %s71, %s72
    %p84 = scmp.eq.s32.totalorder %s20, 1
    %p85 = por %p83, %p84
    %p87 = scmp.ne.s32.totalorder %s72, %s86
    %p88 = scmp.eq.s32.totalorder %s20, 0
    %p89 = por %p87, %p88
    %s90 = ssub.s32 %s14, %s21
    %p91 = scmp.eq.s32.totalorder %s90, 0
    %s93 = sadd.s32 %s92, 1
    %s94 = scalar_select %p91, %s92, %s93
    %p97 = pneg %p91
    %p98 = scmp.eq.s32.totalorder %s14, 1
    %p99 = por %p97, %p98
    %p100 = scmp.ne.s32.totalorder %s92, %s95
    %p101 = scmp.eq.s32.totalorder %s14, 0
    %p102 = por %p100, %p101
    %p103 = scmp.ne.s32.totalorder %s92, %s95
    %p104 = scmp.eq.s32.totalorder %s19, 1
    %p105 = por %p103, %p104
    %p106 = scmp.ne.s32.totalorder %s95, %s96
    %p107 = scmp.eq.s32.totalorder %s19, 0
    %p108 = por %p106, %p107
    %p109 = scmp.ne.s32.totalorder %s95, %s96
    %p110 = scmp.eq.s32.totalorder %s20, 1
    %p111 = por %p109, %p110
    %p113 = scmp.ne.s32.totalorder %s96, %s112
    %p114 = scmp.eq.s32.totalorder %s20, 0
    %p115 = por %p113, %p114
    %s117 = sadd.s32 %s116, 1
    %p120 = scmp.eq.s32.totalorder %s14, 1
    %p121 = scmp.ne.s32.totalorder %s116, %s118
    %p122 = scmp.eq.s32.totalorder %s14, 0
    %p123 = por %p121, %p122
    %p124 = scmp.ne.s32.totalorder %s116, %s118
    %p125 = scmp.eq.s32.totalorder %s19, 1
    %p126 = por %p124, %p125
    %p127 = scmp.ne.s32.totalorder %s118, %s119
    %p128 = scmp.eq.s32.totalorder %s19, 0
    %p129 = por %p127, %p128
    %p130 = scmp.ne.s32.totalorder %s118, %s119
    %p131 = scmp.eq.s32.totalorder %s20, 1
    %p132 = por %p130, %p131
    %p134 = scmp.ne.s32.totalorder %s119, %s133
    %p135 = scmp.eq.s32.totalorder %s20, 0
    %p136 = por %p134, %p135
    %s138 = sadd.s32 %s137, 1
    %p141 = scmp.eq.s32.totalorder %s14, 1
    %p142 = scmp.ne.s32.totalorder %s137, %s139
    %p143 = scmp.eq.s32.totalorder %s14, 0
    %p144 = por %p142, %p143
    %p145 = scmp.ne.s32.totalorder %s137, %s139
    %p146 = scmp.eq.s32.totalorder %s19, 1
    %p147 = por %p145, %p146
    %p148 = scmp.ne.s32.totalorder %s139, %s140
    %p149 = scmp.eq.s32.totalorder %s19, 0
    %p150 = por %p148, %p149
    %p151 = scmp.ne.s32.totalorder %s139, %s140
    %p152 = scmp.eq.s32.totalorder %s20, 1
    %p153 = por %p151, %p152
    %p155 = scmp.ne.s32.totalorder %s140, %s154
    %p156 = scmp.eq.s32.totalorder %s20, 0
    %p157 = por %p155, %p156
    %s158 = ssub.s32 %s14, %s21
    %p159 = scmp.eq.s32.totalorder %s158, 0
    %s161 = sadd.s32 %s160, 1
    %s162 = scalar_select %p159, %s160, %s161
    %p165 = pneg %p159
    %p166 = scmp.eq.s32.totalorder %s14, 1
    %p167 = por %p165, %p166
    %p168 = scmp.ne.s32.totalorder %s160, %s163
    %p169 = scmp.eq.s32.totalorder %s14, 0
    %p170 = por %p168, %p169
    %p171 = scmp.ne.s32.totalorder %s160, %s163
    %p172 = scmp.eq.s32.totalorder %s19, 1
    %p173 = por %p171, %p172
    %p174 = scmp.ne.s32.totalorder %s163, %s164
    %p175 = scmp.eq.s32.totalorder %s19, 0
    %p176 = por %p174, %p175
    %p177 = scmp.ne.s32.totalorder %s163, %s164
    %p178 = scmp.eq.s32.totalorder %s20, 1
    %p179 = por %p177, %p178
    %p181 = scmp.ne.s32.totalorder %s164, %s180
    %p182 = scmp.eq.s32.totalorder %s20, 0
    %p183 = por %p181, %p182
    %s184 = ssub.s32 %s14, %s21
    %p185 = scmp.eq.s32.totalorder %s184, 0
    %s187 = sadd.s32 %s186, 1
    %s188 = scalar_select %p185, %s186, %s187
    %p191 = pneg %p185
    %p192 = scmp.eq.s32.totalorder %s14, 1
    %p193 = por %p191, %p192
    %p194 = scmp.ne.s32.totalorder %s186, %s189
    %p195 = scmp.eq.s32.totalorder %s14, 0
    %p196 = por %p194, %p195
    %p197 = scmp.ne.s32.totalorder %s186, %s189
    %p198 = scmp.eq.s32.totalorder %s19, 1
    %p199 = por %p197, %p198
    %p200 = scmp.ne.s32.totalorder %s189, %s190
    %p201 = scmp.eq.s32.totalorder %s19, 0
    %p202 = por %p200, %p201
    %p203 = scmp.ne.s32.totalorder %s189, %s190
    %p204 = scmp.eq.s32.totalorder %s20, 1
    %p205 = por %p203, %p204
    %p207 = scmp.ne.s32.totalorder %s190, %s206
    %p208 = scmp.eq.s32.totalorder %s20, 0
    %p209 = por %p207, %p208
    %p210 = scmp.le.s32.totalorder 1, %s14
    %p211 = scmp.lt.s32.totalorder %s14, 3
    %p212 = pnand %p210, %p211
    %p213 = pneg %p212
    // Predicated region
    $region9: #{predictor_forward.2} parent=5 // pred_check
      _
    $region10: #{predictor_forward.2} parent=5 // pred_check_branch
      %215 = sbr.rel (%p212) target = $region12
    $region11: #{predictor_forward.2} parent=5 // pred_region
      %s216 = ssub.s32 %s14, 1
      // Predicated region
      $region13: #{predictor_forward.2} parent=11 // pred_check
        %p217 = pneg %p61
      $region14: #{predictor_forward.2} parent=11 // pred_check_branch
        %219 = sbr.rel (%p217) target = $region16
      $region15: #{predictor_forward.2} parent=11 // pred_region
        _
      $region16: #{predictor_forward.2} parent=11 // pred_fallthru
        _
      // Predicated region
      $region17: #{predictor_forward.2} parent=11 // pred_check
        %p220 = pneg %p82
      $region18: #{predictor_forward.2} parent=11 // pred_check_branch
        %222 = sbr.rel (%p220) target = $region20
      $region19: #{predictor_forward.2} parent=11 // pred_region
        _
      $region20: #{predictor_forward.2} parent=11 // pred_fallthru
        _
      // Predicated region
      $region21: #{predictor_forward.2} parent=11 // pred_check
        %p223 = pneg %p129
      $region22: #{predictor_forward.2} parent=11 // pred_check_branch
        %225 = sbr.rel (%p223) target = $region24
      $region23: #{predictor_forward.2} parent=11 // pred_region
        _
      $region24: #{predictor_forward.2} parent=11 // pred_fallthru
        _
      // Predicated region
      $region25: #{predictor_forward.2} parent=11 // pred_check
        %p226 = pneg %p150
      $region26: #{predictor_forward.2} parent=11 // pred_check_branch
        %228 = sbr.rel (%p226) target = $region28
      $region27: #{predictor_forward.2} parent=11 // pred_region
        _
      $region28: #{predictor_forward.2} parent=11 // pred_fallthru
        _
    $region12: #{predictor_forward.2} parent=5 // pred_fallthru
      _
    %p229 = scmp.lt.s32.totalorder %s14, 2
    // Predicated region
    $region29: #{predictor_forward.2} parent=5 // pred_check
      %p230 = pneg %p229
    $region30: #{predictor_forward.2} parent=5 // pred_check_branch
      %232 = sbr.rel (%p230) target = $region32
    $region31: #{predictor_forward.2} parent=5 // pred_region
      // Predicated region
      $region33: #{predictor_forward.2} parent=31 // pred_check
        %p233 = pneg %p34
      $region34: #{predictor_forward.2} parent=31 // pred_check_branch
        %235 = sbr.rel (%p233) target = $region36
      $region35: #{predictor_forward.2} parent=31 // pred_region
        %p236 = scmp.lt.s32.totalorder %s14, 1
        %s237 = scalar_select %p236, %s14, 1
        %s238 = smul.addr %s237, 24
        %s239 = smul.addr %s238, 8
        %s240 = scalar_lea.vmem %s0, %s239
      $region36: #{predictor_forward.2} parent=31 // pred_fallthru
        _
      // Predicated region
      $region37: #{predictor_forward.2} parent=31 // pred_check
        %p241 = pneg %p102
      $region38: #{predictor_forward.2} parent=31 // pred_check_branch
        %243 = sbr.rel (%p241) target = $region40
      $region39: #{predictor_forward.2} parent=31 // pred_region
        %p244 = scmp.lt.s32.totalorder %s14, 1
        %s245 = scalar_select %p244, %s14, 1
        %s246 = smul.addr %s245, 4
        %s247 = smul.addr %s246, 8
        %s248 = scalar_lea.vmem %s3, %s247
      $region40: #{predictor_forward.2} parent=31 // pred_fallthru
        _
    $region32: #{predictor_forward.2} parent=5 // pred_fallthru
      _
    %p249 = scmp.le.s32.totalorder 1, %s14
    %p250 = scmp.lt.s32.totalorder %s14, 3
    %p251 = pnand %p249, %p250
    %p252 = pneg %p251
    // Predicated region
    $region41: #{predictor_forward.2} parent=5 // pred_check
      _
    $region42: #{predictor_forward.2} parent=5 // pred_check_branch
      %254 = sbr.rel (%p251) target = $region44
    $region43: #{predictor_forward.2} parent=5 // pred_region
      %s255 = ssub.s32 %s14, 1
      %p256 = scmp.lt.s32.totalorder %s19, 1
      %s257 = scalar_select %p256, %s19, 1
      %s258 = smul.addr %s257, 24
      %s259 = smul.addr %s258, 8
      %s260 = scalar_lea.vmem %s0, %s259
      %p261 = pneg %p40
      %p262 = pneg %p37
      %p263 = pneg %p61
      %p264 = pneg %p58
      %p265 = pneg %p82
      %p266 = pneg %p79
      %p267 = scmp.lt.s32.totalorder %s19, 1
      %s268 = scalar_select %p267, %s19, 1
      %s269 = smul.addr %s268, 4
      %s270 = smul.addr %s269, 8
      %s271 = scalar_lea.vmem %s3, %s270
      %p272 = pneg %p108
      %p273 = pneg %p105
      %p274 = pneg %p129
      %p275 = pneg %p126
      %p276 = pneg %p150
      %p277 = pneg %p147
      %p278 = pneg %p176
      %p279 = pneg %p173
      %p280 = scmp.lt.s32.totalorder %s19, 1
      %s281 = scalar_select %p280, %s19, 1
      %s282 = smul.addr %s281, 8
      %s283 = smul.addr %s282, 8
      %s284 = scalar_lea.vmem %s6, %s283
      %p285 = pneg %p202
      %p286 = pneg %p199
      %p287 = scmp.lt.s32.totalorder %s19, 1
      %s288 = scalar_select %p287, %s19, 1
      %s289 = smul.addr %s288, 4
      %s290 = smul.addr %s289, 8
      %s291 = scalar_lea.vmem %s7, %s290
      %p292 = scmp.lt.s32.totalorder %s19, 1
      %s293 = scalar_select %p292, %s19, 1
      %s294 = smul.addr %s293, 24
      %s295 = smul.addr %s294, 8
      %s296 = scalar_lea.vmem %s0, %s295
      %p297 = scmp.lt.s32.totalorder %s19, 1
      %s298 = scalar_select %p297, %s19, 1
      %s299 = smul.addr %s298, 4
      %s300 = smul.addr %s299, 8
      %s301 = scalar_lea.vmem %s3, %s300
      %p302 = scmp.lt.s32.totalorder %s19, 1
      %s303 = scalar_select %p302, %s19, 1
      %s304 = smul.addr %s303, 8
      %s305 = smul.addr %s304, 8
      %s306 = scalar_lea.vmem %s6, %s305
      %p307 = scmp.lt.s32.totalorder %s19, 1
      %s308 = scalar_select %p307, %s19, 1
      %s309 = smul.addr %s308, 4
      %s310 = smul.addr %s309, 8
      %s311 = scalar_lea.vmem %s7, %s310
      %v312 = vld [vmem:[%s301] sm:$0xff]
      %v313 = vld [vmem:[%s301 + $0x8] sm:$0xff]
      %v314 = vld [vmem:[%s301 + $0x10] sm:$0xff]
      %v315 = vld [vmem:[%s301 + $0x18] sm:$0xff]
      %v316 = vld [vmem:[%s4] sm:$0xff]
      %v317 = vld [vmem:[%s4 + $0x8] sm:$0xff]
      %v318 = vld [vmem:[%s4 + $0x10] sm:$0xff]
      %v319 = vld [vmem:[%s4 + $0x18] sm:$0xff]
      %v320 = vld [vmem:[%s5] sm:$0x1]
      %v322 = vlaneseq
      %v323 = vshrl.u32 %v322, 7
      %v324 = vsub.s32 0, %v323
      %v325 = vrot.slane %v320, %v324
      %vm327 = vcmask 261120
      %v329 = vsel %vm327, %v312, 0
      %v332 = vsel %vm327, %v313, 0
      %v335 = vsel %vm327, %v314, 0
      %v338 = vsel %vm327, %v315, 0
      %340 = vmatprep.subr.mxu0 0.0
      %341 = vmatpush1.msra.mxu0 %v316
      %342 = vmatprep.subr.mxu0 0.0
      %343 = vmatpush1.msra.mxu0 %v317
      %344 = vmatprep.subr.mxu0 0.0
      %345 = vmatpush1.msra.mxu0 %v318
      %346 = vmatprep.subr.mxu0 0.0
      %347 = vmatpush1.msra.mxu0 %v319
      %348 = vmatprep.subr.mxu0 0.0
      %349 = vmatpush1.msra.mxu0 0.0
      %350 = vmatprep.subr.mxu0 0.0
      %351 = vmatpush1.msra.mxu0 0.0
      %352 = vmatprep.subr.mxu0 0.0
      %353 = vmatpush1.msra.mxu0 0.0
      %354 = vmatprep.subr.mxu0 0.0
      %355 = vmatpush1.msra.mxu0 0.0
      %356 = vmatprep.subr.mxu0 0.0
      %357 = vmatpush1.msra.mxu0 0.0
      %358 = vmatprep.subr.mxu0 0.0
      %359 = vmatpush1.msra.mxu0 0.0
      %360 = vmatprep.subr.mxu0 0.0
      %361 = vmatpush1.msra.mxu0 0.0
      %362 = vmatprep.subr.mxu0 0.0
      %363 = vmatpush1.msra.mxu0 0.0
      %364 = vmatprep.subr.mxu0 0.0
      %365 = vmatpush1.msra.mxu0 0.0
      %366 = vmatprep.subr.mxu0 0.0
      %367 = vmatpush1.msra.mxu0 0.0
      %368 = vmatprep.subr.mxu0 0.0
      %369 = vmatpush1.msra.mxu0 0.0
      %370 = vmatprep.subr.mxu0 0.0
      %371 = vmatpush1.msra.mxu0 0.0
      %372 = vmatprep.subr.mxu0 0.0
      %373 = vmatpush1.msra.mxu0 0.0
      %374 = vmatprep.subr.mxu0 0.0
      %375 = vmatpush1.msra.mxu0 0.0
      %376 = vmatprep.subr.mxu0 0.0
      %377 = vmatpush1.msra.mxu0 0.0
      %378 = vmatprep.subr.mxu0 0.0
      %379 = vmatpush1.msra.mxu0 0.0
      %380 = vmatprep.subr.mxu0 0.0
      %381 = vmatpush1.msra.mxu0 0.0
      %382 = vmatprep.subr.mxu0 0.0
      %383 = vmatpush1.msra.mxu0 0.0
      %384 = vmatprep.subr.mxu0 0.0
      %385 = vmatpush1.msra.mxu0 0.0
      %386 = vmatprep.subr.mxu0 0.0
      %387 = vmatpush1.msra.mxu0 0.0
      %388 = vmatprep.subr.mxu0 0.0
      %389 = vmatpush1.msra.mxu0 0.0
      %390 = vmatprep.subr.mxu0 0.0
      %391 = vmatpush1.msra.mxu0 0.0
      %392 = vmatprep.subr.mxu0 0.0
      %393 = vmatpush1.msra.mxu0 0.0
      %394 = vmatprep.subr.mxu0 0.0
      %395 = vmatpush1.msra.mxu0 0.0
      %396 = vmatprep.subr.mxu0 0.0
      %397 = vmatpush1.msra.mxu0 0.0
      %398 = vmatprep.subr.mxu0 0.0
      %399 = vmatpush1.msra.mxu0 0.0
      %400 = vmatprep.subr.mxu0 0.0
      %401 = vmatpush1.msra.mxu0 0.0
      %402 = vmatprep.subr.mxu0 0.0
      %403 = vmatpush1.msra.mxu0 0.0
      %404 = vmatprep.mubr.f32.mxu0 0.0
      %405 = vmatmul.mubr.f32.gmra.mrb[0].mxu0 %v329
      %v406 = vpop.f32.mrb[0].mxu0
      %v407 = vadd.f32 %v325, %v406
      %v408 = vpop.f32.mrb[0].mxu0
      %409 = vmatprep.mubr.f32.mxu0 0.0
      %410 = vmatmul.mubr.f32.gmra.mrb[0].mxu0 %v332
      %v411 = vpop.f32.mrb[0].mxu0
      %v412 = vadd.f32 %v325, %v411
      %v413 = vpop.f32.mrb[0].mxu0
      %414 = vmatprep.mubr.f32.mxu0 0.0
      %415 = vmatmul.mubr.f32.gmra.mrb[0].mxu0 %v335
      %v416 = vpop.f32.mrb[0].mxu0
      %v417 = vadd.f32 %v325, %v416
      %v418 = vpop.f32.mrb[0].mxu0
      %419 = vmatprep.mubr.f32.mxu0 0.0
      %420 = vmatmul.mubr.f32.gmra.mrb[0].mxu0 %v338
      %v421 = vpop.f32.mrb[0].mxu0
      %v422 = vadd.f32 %v325, %v421
      %v423 = vpop.f32.mrb[0].mxu0
      %424 = vdwg.mxu0
      %vm425 = vcmask 89088
      %426 = vst.msk [vmem:[%s311] sm:$0xff] %vm425, %v407
      %427 = vst.msk [vmem:[%s311 + $0x8] sm:$0xff] %vm425, %v412
      %428 = vst.msk [vmem:[%s311 + $0x10] sm:$0xff] %vm425, %v417
      %429 = vst.msk [vmem:[%s311 + $0x18] sm:$0xff] %vm425, %v422
      %v430 = vld [vmem:[%s1] sm:$0xff]
      %v431 = vld [vmem:[%s1 + $0x8] sm:$0xff]
      %v432 = vld [vmem:[%s1 + $0x10] sm:$0xff]
      %v433 = vld [vmem:[%s1 + $0x18] sm:$0x1]
      %v434 = vld [vmem:[%s1 + $0x20] sm:$0xff]
      %v435 = vld [vmem:[%s1 + $0x28] sm:$0xff]
      %v436 = vld [vmem:[%s1 + $0x30] sm:$0xff]
      %v437 = vld [vmem:[%s1 + $0x38] sm:$0x1]
      %v438 = vld [vmem:[%s1 + $0x40] sm:$0xff]
      %v439 = vld [vmem:[%s1 + $0x48] sm:$0xff]
      %v440 = vld [vmem:[%s1 + $0x50] sm:$0xff]
      %v441 = vld [vmem:[%s1 + $0x58] sm:$0x1]
      %v442 = vld [vmem:[%s1 + $0x60] sm:$0xff]
      %v443 = vld [vmem:[%s1 + $0x68] sm:$0xff]
      %v444 = vld [vmem:[%s1 + $0x70] sm:$0xff]
      %v445 = vld [vmem:[%s1 + $0x78] sm:$0x1]
      %v446 = vld [vmem:[%s1 + $0x80] sm:$0xff]
      %v447 = vld [vmem:[%s1 + $0x88] sm:$0xff]
      %v448 = vld [vmem:[%s1 + $0x90] sm:$0xff]
      %v449 = vld [vmem:[%s1 + $0x98] sm:$0x1]
      %v450 = vld [vmem:[%s296] sm:$0xff]
      %v451 = vld [vmem:[%s296 + $0x10] sm:$0xff]
      %v452 = vld [vmem:[%s296 + $0x20] sm:$0xff]
      %v453 = vld [vmem:[%s296 + $0x30] sm:$0xff]
      %v454 = vld [vmem:[%s296 + $0x40] sm:$0xff]
      %v455 = vld [vmem:[%s296 + $0x50] sm:$0xff]
      %v456 = vld [vmem:[%s296 + $0x60] sm:$0xff]
      %v457 = vld [vmem:[%s296 + $0x70] sm:$0xff]
      %v458 = vld [vmem:[%s296 + $0x80] sm:$0xff]
      %v459 = vld [vmem:[%s296 + $0x90] sm:$0xff]
      %v460 = vld [vmem:[%s296 + $0xa0] sm:$0xff]
      %v461 = vld [vmem:[%s296 + $0xb0] sm:$0xff]
      %v462 = vlaneseq
      %v463 = vshrl.u32 %v462, 7
      %v464 = vsub.s32 0, %v463
      %v465 = vrot.slane %v430, %v464
      %v466 = vmul.f32 %v450, %v465
      %v467 = vmul.f32 %v451, %v465
      %v468 = vmul.f32 %v452, %v465
      %v469 = vmul.f32 %v453, %v465
      %v470 = vmul.f32 %v454, %v465
      %v471 = vmul.f32 %v455, %v465
      %v472 = vmul.f32 %v456, %v465
      %v473 = vmul.f32 %v457, %v465
      %v474 = vlaneseq
      %v475 = vshrl.u32 %v474, 7
      %v476 = vsub.s32 1, %v475
      %v477 = vrot.slane %v430, %v476
      %v478 = vmul.f32 %v451, %v477
      %v479 = vmul.f32 %v452, %v477
      %v480 = vmul.f32 %v453, %v477
      %v481 = vmul.f32 %v454, %v477
      %v482 = vmul.f32 %v455, %v477
      %v483 = vmul.f32 %v456, %v477
      %v484 = vmul.f32 %v457, %v477
      %v485 = vmul.f32 %v458, %v477
      %v486 = vadd.f32 %v466, %v478
      %v487 = vadd.f32 %v467, %v479
      %v488 = vadd.f32 %v468, %v480
      %v489 = vadd.f32 %v469, %v481
      %v490 = vadd.f32 %v470, %v482
      %v491 = vadd.f32 %v471, %v483
      %v492 = vadd.f32 %v472, %v484
      %v493 = vadd.f32 %v473, %v485
      %v494 = vlaneseq
      %v495 = vshrl.u32 %v494, 7
      %v496 = vsub.s32 2, %v495
      %v497 = vrot.slane %v430, %v496
      %v498 = vmul.f32 %v452, %v497
      %v499 = vmul.f32 %v453, %v497
      %v500 = vmul.f32 %v454, %v497
      %v501 = vmul.f32 %v455, %v497
      %v502 = vmul.f32 %v456, %v497
      %v503 = vmul.f32 %v457, %v497
      %v504 = vmul.f32 %v458, %v497
      %v505 = vmul.f32 %v459, %v497
      %v506 = vadd.f32 %v486, %v498
      %v507 = vadd.f32 %v487, %v499
      %v508 = vadd.f32 %v488, %v500
      %v509 = vadd.f32 %v489, %v501
      %v510 = vadd.f32 %v490, %v502
      %v511 = vadd.f32 %v491, %v503
      %v512 = vadd.f32 %v492, %v504
      %v513 = vadd.f32 %v493, %v505
      %v514 = vlaneseq
      %v515 = vshrl.u32 %v514, 7
      %v516 = vsub.s32 3, %v515
      %v517 = vrot.slane %v430, %v516
      %v518 = vmul.f32 %v453, %v517
      %v519 = vmul.f32 %v454, %v517
      %v520 = vmul.f32 %v455, %v517
      %v521 = vmul.f32 %v456, %v517
      %v522 = vmul.f32 %v457, %v517
      %v523 = vmul.f32 %v458, %v517
      %v524 = vmul.f32 %v459, %v517
      %v525 = vmul.f32 %v460, %v517
      %v526 = vadd.f32 %v506, %v518
      %v527 = vadd.f32 %v507, %v519
      %v528 = vadd.f32 %v508, %v520
      %v529 = vadd.f32 %v509, %v521
      %v530 = vadd.f32 %v510, %v522
      %v531 = vadd.f32 %v511, %v523
      %v532 = vadd.f32 %v512, %v524
      %v533 = vadd.f32 %v513, %v525
      %v534 = vlaneseq
      %v535 = vshrl.u32 %v534, 7
      %v536 = vsub.s32 4, %v535
      %v537 = vrot.slane %v430, %v536
      %v538 = vmul.f32 %v454, %v537
      %v539 = vmul.f32 %v455, %v537
      %v540 = vmul.f32 %v456, %v537
      %v541 = vmul.f32 %v457, %v537
      %v542 = vmul.f32 %v458, %v537
      %v543 = vmul.f32 %v459, %v537
      %v544 = vmul.f32 %v460, %v537
      %v545 = vmul.f32 %v461, %v537
      %v546 = vadd.f32 %v526, %v538
      %v547 = vadd.f32 %v527, %v539
      %v548 = vadd.f32 %v528, %v540
      %v549 = vadd.f32 %v529, %v541
      %v550 = vadd.f32 %v530, %v542
      %v551 = vadd.f32 %v531, %v543
      %v552 = vadd.f32 %v532, %v544
      %v553 = vadd.f32 %v533, %v545
      %v554 = vld [vmem:[%s296 + $0x1] sm:$0xff]
      %v555 = vld [vmem:[%s296 + $0x11] sm:$0xff]
      %v556 = vld [vmem:[%s296 + $0x21] sm:$0xff]
      %v557 = vld [vmem:[%s296 + $0x31] sm:$0xff]
      %v558 = vld [vmem:[%s296 + $0x41] sm:$0xff]
      %v559 = vld [vmem:[%s296 + $0x51] sm:$0xff]
      %v560 = vld [vmem:[%s296 + $0x61] sm:$0xff]
      %v561 = vld [vmem:[%s296 + $0x71] sm:$0xff]
      %v562 = vld [vmem:[%s296 + $0x81] sm:$0xff]
      %v563 = vld [vmem:[%s296 + $0x91] sm:$0xff]
      %v564 = vld [vmem:[%s296 + $0xa1] sm:$0xff]
      %v565 = vld [vmem:[%s296 + $0xb1] sm:$0xff]
      %v566 = vlaneseq
      %v567 = vshrl.u32 %v566, 7
      %v568 = vsub.s32 5, %v567
      %v569 = vrot.slane %v430, %v568
      %v570 = vmul.f32 %v554, %v569
      %v571 = vmul.f32 %v555, %v569
      %v572 = vmul.f32 %v556, %v569
      %v573 = vmul.f32 %v557, %v569
      %v574 = vmul.f32 %v558, %v569
      %v575 = vmul.f32 %v559, %v569
      %v576 = vmul.f32 %v560, %v569
      %v577 = vmul.f32 %v561, %v569
      %v578 = vadd.f32 %v546, %v570
      %v579 = vadd.f32 %v547, %v571
      %v580 = vadd.f32 %v548, %v572
      %v581 = vadd.f32 %v549, %v573
      %v582 = vadd.f32 %v550, %v574
      %v583 = vadd.f32 %v551, %v575
      %v584 = vadd.f32 %v552, %v576
      %v585 = vadd.f32 %v553, %v577
      %v586 = vlaneseq
      %v587 = vshrl.u32 %v586, 7
      %v588 = vsub.s32 6, %v587
      %v589 = vrot.slane %v430, %v588
      %v590 = vmul.f32 %v555, %v589
      %v591 = vmul.f32 %v556, %v589
      %v592 = vmul.f32 %v557, %v589
      %v593 = vmul.f32 %v558, %v589
      %v594 = vmul.f32 %v559, %v589
      %v595 = vmul.f32 %v560, %v589
      %v596 = vmul.f32 %v561, %v589
      %v597 = vmul.f32 %v562, %v589
      %v598 = vadd.f32 %v578, %v590
      %v599 = vadd.f32 %v579, %v591
      %v600 = vadd.f32 %v580, %v592
      %v601 = vadd.f32 %v581, %v593
      %v602 = vadd.f32 %v582, %v594
      %v603 = vadd.f32 %v583, %v595
      %v604 = vadd.f32 %v584, %v596
      %v605 = vadd.f32 %v585, %v597
      %v606 = vlaneseq
      %v607 = vshrl.u32 %v606, 7
      %v608 = vsub.s32 7, %v607
      %v609 = vrot.slane %v430, %v608
      %v610 = vmul.f32 %v556, %v609
      %v611 = vmul.f32 %v557, %v609
      %v612 = vmul.f32 %v558, %v609
      %v613 = vmul.f32 %v559, %v609
      %v614 = vmul.f32 %v560, %v609
      %v615 = vmul.f32 %v561, %v609
      %v616 = vmul.f32 %v562, %v609
      %v617 = vmul.f32 %v563, %v609
      %v618 = vadd.f32 %v598, %v610
      %v619 = vadd.f32 %v599, %v611
      %v620 = vadd.f32 %v600, %v612
      %v621 = vadd.f32 %v601, %v613
      %v622 = vadd.f32 %v602, %v614
      %v623 = vadd.f32 %v603, %v615
      %v624 = vadd.f32 %v604, %v616
      %v625 = vadd.f32 %v605, %v617
      %v626 = vlaneseq
      %v627 = vshrl.u32 %v626, 7
      %v628 = vsub.s32 0, %v627
      %v629 = vrot.slane %v431, %v628
      %v630 = vmul.f32 %v557, %v629
      %v631 = vmul.f32 %v558, %v629
      %v632 = vmul.f32 %v559, %v629
      %v633 = vmul.f32 %v560, %v629
      %v634 = vmul.f32 %v561, %v629
      %v635 = vmul.f32 %v562, %v629
      %v636 = vmul.f32 %v563, %v629
      %v637 = vmul.f32 %v564, %v629
      %v638 = vadd.f32 %v618, %v630
      %v639 = vadd.f32 %v619, %v631
      %v640 = vadd.f32 %v620, %v632
      %v641 = vadd.f32 %v621, %v633
      %v642 = vadd.f32 %v622, %v634
      %v643 = vadd.f32 %v623, %v635
      %v644 = vadd.f32 %v624, %v636
      %v645 = vadd.f32 %v625, %v637
      %v646 = vlaneseq
      %v647 = vshrl.u32 %v646, 7
      %v648 = vsub.s32 1, %v647
      %v649 = vrot.slane %v431, %v648
      %v650 = vmul.f32 %v558, %v649
      %v651 = vmul.f32 %v559, %v649
      %v652 = vmul.f32 %v560, %v649
      %v653 = vmul.f32 %v561, %v649
      %v654 = vmul.f32 %v562, %v649
      %v655 = vmul.f32 %v563, %v649
      %v656 = vmul.f32 %v564, %v649
      %v657 = vmul.f32 %v565, %v649
      %v658 = vadd.f32 %v638, %v650
      %v659 = vadd.f32 %v639, %v651
      %v660 = vadd.f32 %v640, %v652
      %v661 = vadd.f32 %v641, %v653
      %v662 = vadd.f32 %v642, %v654
      %v663 = vadd.f32 %v643, %v655
      %v664 = vadd.f32 %v644, %v656
      %v665 = vadd.f32 %v645, %v657
      %v666 = vld [vmem:[%s296 + $0x2] sm:$0xff]
      %v667 = vld [vmem:[%s296 + $0x12] sm:$0xff]
      %v668 = vld [vmem:[%s296 + $0x22] sm:$0xff]
      %v669 = vld [vmem:[%s296 + $0x32] sm:$0xff]
      %v670 = vld [vmem:[%s296 + $0x42] sm:$0xff]
      %v671 = vld [vmem:[%s296 + $0x52] sm:$0xff]
      %v672 = vld [vmem:[%s296 + $0x62] sm:$0xff]
      %v673 = vld [vmem:[%s296 + $0x72] sm:$0xff]
      %v674 = vld [vmem:[%s296 + $0x82] sm:$0xff]
      %v675 = vld [vmem:[%s296 + $0x92] sm:$0xff]
      %v676 = vld [vmem:[%s296 + $0xa2] sm:$0xff]
      %v677 = vld [vmem:[%s296 + $0xb2] sm:$0xff]
      %v678 = vlaneseq
      %v679 = vshrl.u32 %v678, 7
      %v680 = vsub.s32 2, %v679
      %v681 = vrot.slane %v431, %v680
      %v682 = vmul.f32 %v666, %v681
      %v683 = vmul.f32 %v667, %v681
      %v684 = vmul.f32 %v668, %v681
      %v685 = vmul.f32 %v669, %v681
      %v686 = vmul.f32 %v670, %v681
      %v687 = vmul.f32 %v671, %v681
      %v688 = vmul.f32 %v672, %v681
      %v689 = vmul.f32 %v673, %v681
      %v690 = vadd.f32 %v658, %v682
      %v691 = vadd.f32 %v659, %v683
      %v692 = vadd.f32 %v660, %v684
      %v693 = vadd.f32 %v661, %v685
      %v694 = vadd.f32 %v662, %v686
      %v695 = vadd.f32 %v663, %v687
      %v696 = vadd.f32 %v664, %v688
      %v697 = vadd.f32 %v665, %v689
      %v698 = vlaneseq
      %v699 = vshrl.u32 %v698, 7
      %v700 = vsub.s32 3, %v699
      %v701 = vrot.slane %v431, %v700
      %v702 = vmul.f32 %v667, %v701
      %v703 = vmul.f32 %v668, %v701
      %v704 = vmul.f32 %v669, %v701
      %v705 = vmul.f32 %v670, %v701
      %v706 = vmul.f32 %v671, %v701
      %v707 = vmul.f32 %v672, %v701
      %v708 = vmul.f32 %v673, %v701
      %v709 = vmul.f32 %v674, %v701
      %v710 = vadd.f32 %v690, %v702
      %v711 = vadd.f32 %v691, %v703
      %v712 = vadd.f32 %v692, %v704
      %v713 = vadd.f32 %v693, %v705
      %v714 = vadd.f32 %v694, %v706
      %v715 = vadd.f32 %v695, %v707
      %v716 = vadd.f32 %v696, %v708
      %v717 = vadd.f32 %v697, %v709
      %v718 = vlaneseq
      %v719 = vshrl.u32 %v718, 7
      %v720 = vsub.s32 4, %v719
      %v721 = vrot.slane %v431, %v720
      %v722 = vmul.f32 %v668, %v721
      %v723 = vmul.f32 %v669, %v721
      %v724 = vmul.f32 %v670, %v721
      %v725 = vmul.f32 %v671, %v721
      %v726 = vmul.f32 %v672, %v721
      %v727 = vmul.f32 %v673, %v721
      %v728 = vmul.f32 %v674, %v721
      %v729 = vmul.f32 %v675, %v721
      %v730 = vadd.f32 %v710, %v722
      %v731 = vadd.f32 %v711, %v723
      %v732 = vadd.f32 %v712, %v724
      %v733 = vadd.f32 %v713, %v725
      %v734 = vadd.f32 %v714, %v726
      %v735 = vadd.f32 %v715, %v727
      %v736 = vadd.f32 %v716, %v728
      %v737 = vadd.f32 %v717, %v729
      %v738 = vlaneseq
      %v739 = vshrl.u32 %v738, 7
      %v740 = vsub.s32 5, %v739
      %v741 = vrot.slane %v431, %v740
      %v742 = vmul.f32 %v669, %v741
      %v743 = vmul.f32 %v670, %v741
      %v744 = vmul.f32 %v671, %v741
      %v745 = vmul.f32 %v672, %v741
      %v746 = vmul.f32 %v673, %v741
      %v747 = vmul.f32 %v674, %v741
      %v748 = vmul.f32 %v675, %v741
      %v749 = vmul.f32 %v676, %v741
      %v750 = vadd.f32 %v730, %v742
      %v751 = vadd.f32 %v731, %v743
      %v752 = vadd.f32 %v732, %v744
      %v753 = vadd.f32 %v733, %v745
      %v754 = vadd.f32 %v734, %v746
      %v755 = vadd.f32 %v735, %v747
      %v756 = vadd.f32 %v736, %v748
      %v757 = vadd.f32 %v737, %v749
      %v758 = vlaneseq
      %v759 = vshrl.u32 %v758, 7
      %v760 = vsub.s32 6, %v759
      %v761 = vrot.slane %v431, %v760
      %v762 = vmul.f32 %v670, %v761
      %v763 = vmul.f32 %v671, %v761
      %v764 = vmul.f32 %v672, %v761
      %v765 = vmul.f32 %v673, %v761
      %v766 = vmul.f32 %v674, %v761
      %v767 = vmul.f32 %v675, %v761
      %v768 = vmul.f32 %v676, %v761
      %v769 = vmul.f32 %v677, %v761
      %v770 = vadd.f32 %v750, %v762
      %v771 = vadd.f32 %v751, %v763
      %v772 = vadd.f32 %v752, %v764
      %v773 = vadd.f32 %v753, %v765
      %v774 = vadd.f32 %v754, %v766
      %v775 = vadd.f32 %v755, %v767
      %v776 = vadd.f32 %v756, %v768
      %v777 = vadd.f32 %v757, %v769
      %v778 = vld [vmem:[%s296 + $0x3] sm:$0xff]
      %v779 = vld [vmem:[%s296 + $0x13] sm:$0xff]
      %v780 = vld [vmem:[%s296 + $0x23] sm:$0xff]
      %v781 = vld [vmem:[%s296 + $0x33] sm:$0xff]
      %v782 = vld [vmem:[%s296 + $0x43] sm:$0xff]
      %v783 = vld [vmem:[%s296 + $0x53] sm:$0xff]
      %v784 = vld [vmem:[%s296 + $0x63] sm:$0xff]
      %v785 = vld [vmem:[%s296 + $0x73] sm:$0xff]
      %v786 = vld [vmem:[%s296 + $0x83] sm:$0xff]
      %v787 = vld [vmem:[%s296 + $0x93] sm:$0xff]
      %v788 = vld [vmem:[%s296 + $0xa3] sm:$0xff]
      %v789 = vld [vmem:[%s296 + $0xb3] sm:$0xff]
      %v790 = vlaneseq
      %v791 = vshrl.u32 %v790, 7
      %v792 = vsub.s32 7, %v791
      %v793 = vrot.slane %v431, %v792
      %v794 = vmul.f32 %v778, %v793
      %v795 = vmul.f32 %v779, %v793
      %v796 = vmul.f32 %v780, %v793
      %v797 = vmul.f32 %v781, %v793
      %v798 = vmul.f32 %v782, %v793
      %v799 = vmul.f32 %v783, %v793
      %v800 = vmul.f32 %v784, %v793
      %v801 = vmul.f32 %v785, %v793
      %v802 = vadd.f32 %v770, %v794
      %v803 = vadd.f32 %v771, %v795
      %v804 = vadd.f32 %v772, %v796
      %v805 = vadd.f32 %v773, %v797
      %v806 = vadd.f32 %v774, %v798
      %v807 = vadd.f32 %v775, %v799
      %v808 = vadd.f32 %v776, %v800
      %v809 = vadd.f32 %v777, %v801
      %v810 = vlaneseq
      %v811 = vshrl.u32 %v810, 7
      %v812 = vsub.s32 0, %v811
      %v813 = vrot.slane %v432, %v812
      %v814 = vmul.f32 %v779, %v813
      %v815 = vmul.f32 %v780, %v813
      %v816 = vmul.f32 %v781, %v813
      %v817 = vmul.f32 %v782, %v813
      %v818 = vmul.f32 %v783, %v813
      %v819 = vmul.f32 %v784, %v813
      %v820 = vmul.f32 %v785, %v813
      %v821 = vmul.f32 %v786, %v813
      %v822 = vadd.f32 %v802, %v814
      %v823 = vadd.f32 %v803, %v815
      %v824 = vadd.f32 %v804, %v816
      %v825 = vadd.f32 %v805, %v817
      %v826 = vadd.f32 %v806, %v818
      %v827 = vadd.f32 %v807, %v819
      %v828 = vadd.f32 %v808, %v820
      %v829 = vadd.f32 %v809, %v821
      %v830 = vlaneseq
      %v831 = vshrl.u32 %v830, 7
      %v832 = vsub.s32 1, %v831
      %v833 = vrot.slane %v432, %v832
      %v834 = vmul.f32 %v780, %v833
      %v835 = vmul.f32 %v781, %v833
      %v836 = vmul.f32 %v782, %v833
      %v837 = vmul.f32 %v783, %v833
      %v838 = vmul.f32 %v784, %v833
      %v839 = vmul.f32 %v785, %v833
      %v840 = vmul.f32 %v786, %v833
      %v841 = vmul.f32 %v787, %v833
      %v842 = vadd.f32 %v822, %v834
      %v843 = vadd.f32 %v823, %v835
      %v844 = vadd.f32 %v824, %v836
      %v845 = vadd.f32 %v825, %v837
      %v846 = vadd.f32 %v826, %v838
      %v847 = vadd.f32 %v827, %v839
      %v848 = vadd.f32 %v828, %v840
      %v849 = vadd.f32 %v829, %v841
      %v850 = vlaneseq
      %v851 = vshrl.u32 %v850, 7
      %v852 = vsub.s32 2, %v851
      %v853 = vrot.slane %v432, %v852
      %v854 = vmul.f32 %v781, %v853
      %v855 = vmul.f32 %v782, %v853
      %v856 = vmul.f32 %v783, %v853
      %v857 = vmul.f32 %v784, %v853
      %v858 = vmul.f32 %v785, %v853
      %v859 = vmul.f32 %v786, %v853
      %v860 = vmul.f32 %v787, %v853
      %v861 = vmul.f32 %v788, %v853
      %v862 = vadd.f32 %v842, %v854
      %v863 = vadd.f32 %v843, %v855
      %v864 = vadd.f32 %v844, %v856
      %v865 = vadd.f32 %v845, %v857
      %v866 = vadd.f32 %v846, %v858
      %v867 = vadd.f32 %v847, %v859
      %v868 = vadd.f32 %v848, %v860
      %v869 = vadd.f32 %v849, %v861
      %v870 = vlaneseq
      %v871 = vshrl.u32 %v870, 7
      %v872 = vsub.s32 3, %v871
      %v873 = vrot.slane %v432, %v872
      %v874 = vmul.f32 %v782, %v873
      %v875 = vmul.f32 %v783, %v873
      %v876 = vmul.f32 %v784, %v873
      %v877 = vmul.f32 %v785, %v873
      %v878 = vmul.f32 %v786, %v873
      %v879 = vmul.f32 %v787, %v873
      %v880 = vmul.f32 %v788, %v873
      %v881 = vmul.f32 %v789, %v873
      %v882 = vadd.f32 %v862, %v874
      %v883 = vadd.f32 %v863, %v875
      %v884 = vadd.f32 %v864, %v876
      %v885 = vadd.f32 %v865, %v877
      %v886 = vadd.f32 %v866, %v878
      %v887 = vadd.f32 %v867, %v879
      %v888 = vadd.f32 %v868, %v880
      %v889 = vadd.f32 %v869, %v881
      %v890 = vld [vmem:[%s296 + $0x4] sm:$0xff]
      %v891 = vld [vmem:[%s296 + $0x14] sm:$0xff]
      %v892 = vld [vmem:[%s296 + $0x24] sm:$0xff]
      %v893 = vld [vmem:[%s296 + $0x34] sm:$0xff]
      %v894 = vld [vmem:[%s296 + $0x44] sm:$0xff]
      %v895 = vld [vmem:[%s296 + $0x54] sm:$0xff]
      %v896 = vld [vmem:[%s296 + $0x64] sm:$0xff]
      %v897 = vld [vmem:[%s296 + $0x74] sm:$0xff]
      %v898 = vld [vmem:[%s296 + $0x84] sm:$0xff]
      %v899 = vld [vmem:[%s296 + $0x94] sm:$0xff]
      %v900 = vld [vmem:[%s296 + $0xa4] sm:$0xff]
      %v901 = vld [vmem:[%s296 + $0xb4] sm:$0xff]
      %v902 = vlaneseq
      %v903 = vshrl.u32 %v902, 7
      %v904 = vsub.s32 4, %v903
      %v905 = vrot.slane %v432, %v904
      %v906 = vmul.f32 %v890, %v905
      %v907 = vmul.f32 %v891, %v905
      %v908 = vmul.f32 %v892, %v905
      %v909 = vmul.f32 %v893, %v905
      %v910 = vmul.f32 %v894, %v905
      %v911 = vmul.f32 %v895, %v905
      %v912 = vmul.f32 %v896, %v905
      %v913 = vmul.f32 %v897, %v905
      %v914 = vadd.f32 %v882, %v906
      %v915 = vadd.f32 %v883, %v907
      %v916 = vadd.f32 %v884, %v908
      %v917 = vadd.f32 %v885, %v909
      %v918 = vadd.f32 %v886, %v910
      %v919 = vadd.f32 %v887, %v911
      %v920 = vadd.f32 %v888, %v912
      %v921 = vadd.f32 %v889, %v913
      %v922 = vlaneseq
      %v923 = vshrl.u32 %v922, 7
      %v924 = vsub.s32 5, %v923
      %v925 = vrot.slane %v432, %v924
      %v926 = vmul.f32 %v891, %v925
      %v927 = vmul.f32 %v892, %v925
      %v928 = vmul.f32 %v893, %v925
      %v929 = vmul.f32 %v894, %v925
      %v930 = vmul.f32 %v895, %v925
      %v931 = vmul.f32 %v896, %v925
      %v932 = vmul.f32 %v897, %v925
      %v933 = vmul.f32 %v898, %v925
      %v934 = vadd.f32 %v914, %v926
      %v935 = vadd.f32 %v915, %v927
      %v936 = vadd.f32 %v916, %v928
      %v937 = vadd.f32 %v917, %v929
      %v938 = vadd.f32 %v918, %v930
      %v939 = vadd.f32 %v919, %v931
      %v940 = vadd.f32 %v920, %v932
      %v941 = vadd.f32 %v921, %v933
      %v942 = vlaneseq
      %v943 = vshrl.u32 %v942, 7
      %v944 = vsub.s32 6, %v943
      %v945 = vrot.slane %v432, %v944
      %v946 = vmul.f32 %v892, %v945
      %v947 = vmul.f32 %v893, %v945
      %v948 = vmul.f32 %v894, %v945
      %v949 = vmul.f32 %v895, %v945
      %v950 = vmul.f32 %v896, %v945
      %v951 = vmul.f32 %v897, %v945
      %v952 = vmul.f32 %v898, %v945
      %v953 = vmul.f32 %v899, %v945
      %v954 = vadd.f32 %v934, %v946
      %v955 = vadd.f32 %v935, %v947
      %v956 = vadd.f32 %v936, %v948
      %v957 = vadd.f32 %v937, %v949
      %v958 = vadd.f32 %v938, %v950
      %v959 = vadd.f32 %v939, %v951
      %v960 = vadd.f32 %v940, %v952
      %v961 = vadd.f32 %v941, %v953
      %v962 = vlaneseq
      %v963 = vshrl.u32 %v962, 7
      %v964 = vsub.s32 7, %v963
      %v965 = vrot.slane %v432, %v964
      %v966 = vmul.f32 %v893, %v965
      %v967 = vmul.f32 %v894, %v965
      %v968 = vmul.f32 %v895, %v965
      %v969 = vmul.f32 %v896, %v965
      %v970 = vmul.f32 %v897, %v965
      %v971 = vmul.f32 %v898, %v965
      %v972 = vmul.f32 %v899, %v965
      %v973 = vmul.f32 %v900, %v965
      %v974 = vadd.f32 %v954, %v966
      %v975 = vadd.f32 %v955, %v967
      %v976 = vadd.f32 %v956, %v968
      %v977 = vadd.f32 %v957, %v969
      %v978 = vadd.f32 %v958, %v970
      %v979 = vadd.f32 %v959, %v971
      %v980 = vadd.f32 %v960, %v972
      %v981 = vadd.f32 %v961, %v973
      %v982 = vlaneseq
      %v983 = vshrl.u32 %v982, 7
      %v984 = vsub.s32 0, %v983
      %v985 = vrot.slane %v433, %v984
      %v986 = vmul.f32 %v894, %v985
      %v987 = vmul.f32 %v895, %v985
      %v988 = vmul.f32 %v896, %v985
      %v989 = vmul.f32 %v897, %v985
      %v990 = vmul.f32 %v898, %v985
      %v991 = vmul.f32 %v899, %v985
      %v992 = vmul.f32 %v900, %v985
      %v993 = vmul.f32 %v901, %v985
      %v994 = vadd.f32 %v974, %v986
      %v995 = vadd.f32 %v975, %v987
      %v996 = vadd.f32 %v976, %v988
      %v997 = vadd.f32 %v977, %v989
      %v998 = vadd.f32 %v978, %v990
      %v999 = vadd.f32 %v979, %v991
      %v1000 = vadd.f32 %v980, %v992
      %v1001 = vadd.f32 %v981, %v993
      %v1002 = vlaneseq
      %v1003 = vshrl.u32 %v1002, 7
      %v1004 = vsub.s32 0, %v1003
      %v1005 = vrot.slane %v434, %v1004
      %1007 = vrot.lane.b32.xlu0 %v1005, 16
      %v1008 = vpop.permute.xlu0 %1007
      %v1010 = vmul.f32 %v450, %v1008
      %v1011 = vmul.f32 %v451, %v1008
      %v1012 = vmul.f32 %v452, %v1008
      %v1013 = vmul.f32 %v453, %v1008
      %v1014 = vmul.f32 %v454, %v1008
      %v1015 = vmul.f32 %v455, %v1008
      %v1016 = vmul.f32 %v456, %v1008
      %v1017 = vmul.f32 %v457, %v1008
      %v1018 = vlaneseq
      %v1019 = vshrl.u32 %v1018, 7
      %v1020 = vsub.s32 1, %v1019
      %v1021 = vrot.slane %v434, %v1020
      %1023 = vrot.lane.b32.xlu0 %v1021, 16
      %v1024 = vpop.permute.xlu0 %1023
      %v1026 = vmul.f32 %v451, %v1024
      %v1027 = vmul.f32 %v452, %v1024
      %v1028 = vmul.f32 %v453, %v1024
      %v1029 = vmul.f32 %v454, %v1024
      %v1030 = vmul.f32 %v455, %v1024
      %v1031 = vmul.f32 %v456, %v1024
      %v1032 = vmul.f32 %v457, %v1024
      %v1033 = vmul.f32 %v458, %v1024
      %v1034 = vadd.f32 %v1010, %v1026
      %v1035 = vadd.f32 %v1011, %v1027
      %v1036 = vadd.f32 %v1012, %v1028
      %v1037 = vadd.f32 %v1013, %v1029
      %v1038 = vadd.f32 %v1014, %v1030
      %v1039 = vadd.f32 %v1015, %v1031
      %v1040 = vadd.f32 %v1016, %v1032
      %v1041 = vadd.f32 %v1017, %v1033
      %v1042 = vlaneseq
      %v1043 = vshrl.u32 %v1042, 7
      %v1044 = vsub.s32 2, %v1043
      %v1045 = vrot.slane %v434, %v1044
      %1047 = vrot.lane.b32.xlu0 %v1045, 16
      %v1048 = vpop.permute.xlu0 %1047
      %v1050 = vmul.f32 %v452, %v1048
      %v1051 = vmul.f32 %v453, %v1048
      %v1052 = vmul.f32 %v454, %v1048
      %v1053 = vmul.f32 %v455, %v1048
      %v1054 = vmul.f32 %v456, %v1048
      %v1055 = vmul.f32 %v457, %v1048
      %v1056 = vmul.f32 %v458, %v1048
      %v1057 = vmul.f32 %v459, %v1048
      %v1058 = vadd.f32 %v1034, %v1050
      %v1059 = vadd.f32 %v1035, %v1051
      %v1060 = vadd.f32 %v1036, %v1052
      %v1061 = vadd.f32 %v1037, %v1053
      %v1062 = vadd.f32 %v1038, %v1054
      %v1063 = vadd.f32 %v1039, %v1055
      %v1064 = vadd.f32 %v1040, %v1056
      %v1065 = vadd.f32 %v1041, %v1057
      %v1066 = vlaneseq
      %v1067 = vshrl.u32 %v1066, 7
      %v1068 = vsub.s32 3, %v1067
      %v1069 = vrot.slane %v434, %v1068
      %1071 = vrot.lane.b32.xlu0 %v1069, 16
      %v1072 = vpop.permute.xlu0 %1071
      %v1074 = vmul.f32 %v453, %v1072
      %v1075 = vmul.f32 %v454, %v1072
      %v1076 = vmul.f32 %v455, %v1072
      %v1077 = vmul.f32 %v456, %v1072
      %v1078 = vmul.f32 %v457, %v1072
      %v1079 = vmul.f32 %v458, %v1072
      %v1080 = vmul.f32 %v459, %v1072
      %v1081 = vmul.f32 %v460, %v1072
      %v1082 = vadd.f32 %v1058, %v1074
      %v1083 = vadd.f32 %v1059, %v1075
      %v1084 = vadd.f32 %v1060, %v1076
      %v1085 = vadd.f32 %v1061, %v1077
      %v1086 = vadd.f32 %v1062, %v1078
      %v1087 = vadd.f32 %v1063, %v1079
      %v1088 = vadd.f32 %v1064, %v1080
      %v1089 = vadd.f32 %v1065, %v1081
      %v1090 = vlaneseq
      %v1091 = vshrl.u32 %v1090, 7
      %v1092 = vsub.s32 4, %v1091
      %v1093 = vrot.slane %v434, %v1092
      %1095 = vrot.lane.b32.xlu0 %v1093, 16
      %v1096 = vpop.permute.xlu0 %1095
      %v1098 = vmul.f32 %v454, %v1096
      %v1099 = vmul.f32 %v455, %v1096
      %v1100 = vmul.f32 %v456, %v1096
      %v1101 = vmul.f32 %v457, %v1096
      %v1102 = vmul.f32 %v458, %v1096
      %v1103 = vmul.f32 %v459, %v1096
      %v1104 = vmul.f32 %v460, %v1096
      %v1105 = vmul.f32 %v461, %v1096
      %v1106 = vadd.f32 %v1082, %v1098
      %v1107 = vadd.f32 %v1083, %v1099
      %v1108 = vadd.f32 %v1084, %v1100
      %v1109 = vadd.f32 %v1085, %v1101
      %v1110 = vadd.f32 %v1086, %v1102
      %v1111 = vadd.f32 %v1087, %v1103
      %v1112 = vadd.f32 %v1088, %v1104
      %v1113 = vadd.f32 %v1089, %v1105
      %v1114 = vlaneseq
      %v1115 = vshrl.u32 %v1114, 7
      %v1116 = vsub.s32 5, %v1115
      %v1117 = vrot.slane %v434, %v1116
      %1119 = vrot.lane.b32.xlu0 %v1117, 16
      %v1120 = vpop.permute.xlu0 %1119
      %v1122 = vmul.f32 %v554, %v1120
      %v1123 = vmul.f32 %v555, %v1120
      %v1124 = vmul.f32 %v556, %v1120
      %v1125 = vmul.f32 %v557, %v1120
      %v1126 = vmul.f32 %v558, %v1120
      %v1127 = vmul.f32 %v559, %v1120
      %v1128 = vmul.f32 %v560, %v1120
      %v1129 = vmul.f32 %v561, %v1120
      %v1130 = vadd.f32 %v1106, %v1122
      %v1131 = vadd.f32 %v1107, %v1123
      %v1132 = vadd.f32 %v1108, %v1124
      %v1133 = vadd.f32 %v1109, %v1125
      %v1134 = vadd.f32 %v1110, %v1126
      %v1135 = vadd.f32 %v1111, %v1127
      %v1136 = vadd.f32 %v1112, %v1128
      %v1137 = vadd.f32 %v1113, %v1129
      %v1138 = vlaneseq
      %v1139 = vshrl.u32 %v1138, 7
      %v1140 = vsub.s32 6, %v1139
      %v1141 = vrot.slane %v434, %v1140
      %1143 = vrot.lane.b32.xlu0 %v1141, 16
      %v1144 = vpop.permute.xlu0 %1143
      %v1146 = vmul.f32 %v555, %v1144
      %v1147 = vmul.f32 %v556, %v1144
      %v1148 = vmul.f32 %v557, %v1144
      %v1149 = vmul.f32 %v558, %v1144
      %v1150 = vmul.f32 %v559, %v1144
      %v1151 = vmul.f32 %v560, %v1144
      %v1152 = vmul.f32 %v561, %v1144
      %v1153 = vmul.f32 %v562, %v1144
      %v1154 = vadd.f32 %v1130, %v1146
      %v1155 = vadd.f32 %v1131, %v1147
      %v1156 = vadd.f32 %v1132, %v1148
      %v1157 = vadd.f32 %v1133, %v1149
      %v1158 = vadd.f32 %v1134, %v1150
      %v1159 = vadd.f32 %v1135, %v1151
      %v1160 = vadd.f32 %v1136, %v1152
      %v1161 = vadd.f32 %v1137, %v1153
      %v1162 = vlaneseq
      %v1163 = vshrl.u32 %v1162, 7
      %v1164 = vsub.s32 7, %v1163
      %v1165 = vrot.slane %v434, %v1164
      %1167 = vrot.lane.b32.xlu0 %v1165, 16
      %v1168 = vpop.permute.xlu0 %1167
      %v1170 = vmul.f32 %v556, %v1168
      %v1171 = vmul.f32 %v557, %v1168
      %v1172 = vmul.f32 %v558, %v1168
      %v1173 = vmul.f32 %v559, %v1168
      %v1174 = vmul.f32 %v560, %v1168
      %v1175 = vmul.f32 %v561, %v1168
      %v1176 = vmul.f32 %v562, %v1168
      %v1177 = vmul.f32 %v563, %v1168
      %v1178 = vadd.f32 %v1154, %v1170
      %v1179 = vadd.f32 %v1155, %v1171
      %v1180 = vadd.f32 %v1156, %v1172
      %v1181 = vadd.f32 %v1157, %v1173
      %v1182 = vadd.f32 %v1158, %v1174
      %v1183 = vadd.f32 %v1159, %v1175
      %v1184 = vadd.f32 %v1160, %v1176
      %v1185 = vadd.f32 %v1161, %v1177
      %v1186 = vlaneseq
      %v1187 = vshrl.u32 %v1186, 7
      %v1188 = vsub.s32 0, %v1187
      %v1189 = vrot.slane %v435, %v1188
      %1191 = vrot.lane.b32.xlu0 %v1189, 16
      %v1192 = vpop.permute.xlu0 %1191
      %v1194 = vmul.f32 %v557, %v1192
      %v1195 = vmul.f32 %v558, %v1192
      %v1196 = vmul.f32 %v559, %v1192
      %v1197 = vmul.f32 %v560, %v1192
      %v1198 = vmul.f32 %v561, %v1192
      %v1199 = vmul.f32 %v562, %v1192
      %v1200 = vmul.f32 %v563, %v1192
      %v1201 = vmul.f32 %v564, %v1192
      %v1202 = vadd.f32 %v1178, %v1194
      %v1203 = vadd.f32 %v1179, %v1195
      %v1204 = vadd.f32 %v1180, %v1196
      %v1205 = vadd.f32 %v1181, %v1197
      %v1206 = vadd.f32 %v1182, %v1198
      %v1207 = vadd.f32 %v1183, %v1199
      %v1208 = vadd.f32 %v1184, %v1200
      %v1209 = vadd.f32 %v1185, %v1201
      %v1210 = vlaneseq
      %v1211 = vshrl.u32 %v1210, 7
      %v1212 = vsub.s32 1, %v1211
      %v1213 = vrot.slane %v435, %v1212
      %1215 = vrot.lane.b32.xlu0 %v1213, 16
      %v1216 = vpop.permute.xlu0 %1215
      %v1218 = vmul.f32 %v558, %v1216
      %v1219 = vmul.f32 %v559, %v1216
      %v1220 = vmul.f32 %v560, %v1216
      %v1221 = vmul.f32 %v561, %v1216
      %v1222 = vmul.f32 %v562, %v1216
      %v1223 = vmul.f32 %v563, %v1216
      %v1224 = vmul.f32 %v564, %v1216
      %v1225 = vmul.f32 %v565, %v1216
      %v1226 = vadd.f32 %v1202, %v1218
      %v1227 = vadd.f32 %v1203, %v1219
      %v1228 = vadd.f32 %v1204, %v1220
      %v1229 = vadd.f32 %v1205, %v1221
      %v1230 = vadd.f32 %v1206, %v1222
      %v1231 = vadd.f32 %v1207, %v1223
      %v1232 = vadd.f32 %v1208, %v1224
      %v1233 = vadd.f32 %v1209, %v1225
      %v1234 = vlaneseq
      %v1235 = vshrl.u32 %v1234, 7
      %v1236 = vsub.s32 2, %v1235
      %v1237 = vrot.slane %v435, %v1236
      %1239 = vrot.lane.b32.xlu0 %v1237, 16
      %v1240 = vpop.permute.xlu0 %1239
      %v1242 = vmul.f32 %v666, %v1240
      %v1243 = vmul.f32 %v667, %v1240
      %v1244 = vmul.f32 %v668, %v1240
      %v1245 = vmul.f32 %v669, %v1240
      %v1246 = vmul.f32 %v670, %v1240
      %v1247 = vmul.f32 %v671, %v1240
      %v1248 = vmul.f32 %v672, %v1240
      %v1249 = vmul.f32 %v673, %v1240
      %v1250 = vadd.f32 %v1226, %v1242
      %v1251 = vadd.f32 %v1227, %v1243
      %v1252 = vadd.f32 %v1228, %v1244
      %v1253 = vadd.f32 %v1229, %v1245
      %v1254 = vadd.f32 %v1230, %v1246
      %v1255 = vadd.f32 %v1231, %v1247
      %v1256 = vadd.f32 %v1232, %v1248
      %v1257 = vadd.f32 %v1233, %v1249
      %v1258 = vlaneseq
      %v1259 = vshrl.u32 %v1258, 7
      %v1260 = vsub.s32 3, %v1259
      %v1261 = vrot.slane %v435, %v1260
      %1263 = vrot.lane.b32.xlu0 %v1261, 16
      %v1264 = vpop.permute.xlu0 %1263
      %v1266 = vmul.f32 %v667, %v1264
      %v1267 = vmul.f32 %v668, %v1264
      %v1268 = vmul.f32 %v669, %v1264
      %v1269 = vmul.f32 %v670, %v1264
      %v1270 = vmul.f32 %v671, %v1264
      %v1271 = vmul.f32 %v672, %v1264
      %v1272 = vmul.f32 %v673, %v1264
      %v1273 = vmul.f32 %v674, %v1264
      %v1274 = vadd.f32 %v1250, %v1266
      %v1275 = vadd.f32 %v1251, %v1267
      %v1276 = vadd.f32 %v1252, %v1268
      %v1277 = vadd.f32 %v1253, %v1269
      %v1278 = vadd.f32 %v1254, %v1270
      %v1279 = vadd.f32 %v1255, %v1271
      %v1280 = vadd.f32 %v1256, %v1272
      %v1281 = vadd.f32 %v1257, %v1273
      %v1282 = vlaneseq
      %v1283 = vshrl.u32 %v1282, 7
      %v1284 = vsub.s32 4, %v1283
      %v1285 = vrot.slane %v435, %v1284
      %1287 = vrot.lane.b32.xlu0 %v1285, 16
      %v1288 = vpop.permute.xlu0 %1287
      %v1290 = vmul.f32 %v668, %v1288
      %v1291 = vmul.f32 %v669, %v1288
      %v1292 = vmul.f32 %v670, %v1288
      %v1293 = vmul.f32 %v671, %v1288
      %v1294 = vmul.f32 %v672, %v1288
      %v1295 = vmul.f32 %v673, %v1288
      %v1296 = vmul.f32 %v674, %v1288
      %v1297 = vmul.f32 %v675, %v1288
      %v1298 = vadd.f32 %v1274, %v1290
      %v1299 = vadd.f32 %v1275, %v1291
      %v1300 = vadd.f32 %v1276, %v1292
      %v1301 = vadd.f32 %v1277, %v1293
      %v1302 = vadd.f32 %v1278, %v1294
      %v1303 = vadd.f32 %v1279, %v1295
      %v1304 = vadd.f32 %v1280, %v1296
      %v1305 = vadd.f32 %v1281, %v1297
      %v1306 = vlaneseq
      %v1307 = vshrl.u32 %v1306, 7
      %v1308 = vsub.s32 5, %v1307
      %v1309 = vrot.slane %v435, %v1308
      %1311 = vrot.lane.b32.xlu0 %v1309, 16
      %v1312 = vpop.permute.xlu0 %1311
      %v1314 = vmul.f32 %v669, %v1312
      %v1315 = vmul.f32 %v670, %v1312
      %v1316 = vmul.f32 %v671, %v1312
      %v1317 = vmul.f32 %v672, %v1312
      %v1318 = vmul.f32 %v673, %v1312
      %v1319 = vmul.f32 %v674, %v1312
      %v1320 = vmul.f32 %v675, %v1312
      %v1321 = vmul.f32 %v676, %v1312
      %v1322 = vadd.f32 %v1298, %v1314
      %v1323 = vadd.f32 %v1299, %v1315
      %v1324 = vadd.f32 %v1300, %v1316
      %v1325 = vadd.f32 %v1301, %v1317
      %v1326 = vadd.f32 %v1302, %v1318
      %v1327 = vadd.f32 %v1303, %v1319
      %v1328 = vadd.f32 %v1304, %v1320
      %v1329 = vadd.f32 %v1305, %v1321
      %v1330 = vlaneseq
      %v1331 = vshrl.u32 %v1330, 7
      %v1332 = vsub.s32 6, %v1331
      %v1333 = vrot.slane %v435, %v1332
      %1335 = vrot.lane.b32.xlu0 %v1333, 16
      %v1336 = vpop.permute.xlu0 %1335
      %v1338 = vmul.f32 %v670, %v1336
      %v1339 = vmul.f32 %v671, %v1336
      %v1340 = vmul.f32 %v672, %v1336
      %v1341 = vmul.f32 %v673, %v1336
      %v1342 = vmul.f32 %v674, %v1336
      %v1343 = vmul.f32 %v675, %v1336
      %v1344 = vmul.f32 %v676, %v1336
      %v1345 = vmul.f32 %v677, %v1336
      %v1346 = vadd.f32 %v1322, %v1338
      %v1347 = vadd.f32 %v1323, %v1339
      %v1348 = vadd.f32 %v1324, %v1340
      %v1349 = vadd.f32 %v1325, %v1341
      %v1350 = vadd.f32 %v1326, %v1342
      %v1351 = vadd.f32 %v1327, %v1343
      %v1352 = vadd.f32 %v1328, %v1344
      %v1353 = vadd.f32 %v1329, %v1345
      %v1354 = vlaneseq
      %v1355 = vshrl.u32 %v1354, 7
      %v1356 = vsub.s32 7, %v1355
      %v1357 = vrot.slane %v435, %v1356
      %1359 = vrot.lane.b32.xlu0 %v1357, 16
      %v1360 = vpop.permute.xlu0 %1359
      %v1362 = vmul.f32 %v778, %v1360
      %v1363 = vmul.f32 %v779, %v1360
      %v1364 = vmul.f32 %v780, %v1360
      %v1365 = vmul.f32 %v781, %v1360
      %v1366 = vmul.f32 %v782, %v1360
      %v1367 = vmul.f32 %v783, %v1360
      %v1368 = vmul.f32 %v784, %v1360
      %v1369 = vmul.f32 %v785, %v1360
      %v1370 = vadd.f32 %v1346, %v1362
      %v1371 = vadd.f32 %v1347, %v1363
      %v1372 = vadd.f32 %v1348, %v1364
      %v1373 = vadd.f32 %v1349, %v1365
      %v1374 = vadd.f32 %v1350, %v1366
      %v1375 = vadd.f32 %v1351, %v1367
      %v1376 = vadd.f32 %v1352, %v1368
      %v1377 = vadd.f32 %v1353, %v1369
      %v1378 = vlaneseq
      %v1379 = vshrl.u32 %v1378, 7
      %v1380 = vsub.s32 0, %v1379
      %v1381 = vrot.slane %v436, %v1380
      %1383 = vrot.lane.b32.xlu0 %v1381, 16
      %v1384 = vpop.permute.xlu0 %1383
      %v1386 = vmul.f32 %v779, %v1384
      %v1387 = vmul.f32 %v780, %v1384
      %v1388 = vmul.f32 %v781, %v1384
      %v1389 = vmul.f32 %v782, %v1384
      %v1390 = vmul.f32 %v783, %v1384
      %v1391 = vmul.f32 %v784, %v1384
      %v1392 = vmul.f32 %v785, %v1384
      %v1393 = vmul.f32 %v786, %v1384
      %v1394 = vadd.f32 %v1370, %v1386
      %v1395 = vadd.f32 %v1371, %v1387
      %v1396 = vadd.f32 %v1372, %v1388
      %v1397 = vadd.f32 %v1373, %v1389
      %v1398 = vadd.f32 %v1374, %v1390
      %v1399 = vadd.f32 %v1375, %v1391
      %v1400 = vadd.f32 %v1376, %v1392
      %v1401 = vadd.f32 %v1377, %v1393
      %v1402 = vlaneseq
      %v1403 = vshrl.u32 %v1402, 7
      %v1404 = vsub.s32 1, %v1403
      %v1405 = vrot.slane %v436, %v1404
      %1407 = vrot.lane.b32.xlu0 %v1405, 16
      %v1408 = vpop.permute.xlu0 %1407
      %v1410 = vmul.f32 %v780, %v1408
      %v1411 = vmul.f32 %v781, %v1408
      %v1412 = vmul.f32 %v782, %v1408
      %v1413 = vmul.f32 %v783, %v1408
      %v1414 = vmul.f32 %v784, %v1408
      %v1415 = vmul.f32 %v785, %v1408
      %v1416 = vmul.f32 %v786, %v1408
      %v1417 = vmul.f32 %v787, %v1408
      %v1418 = vadd.f32 %v1394, %v1410
      %v1419 = vadd.f32 %v1395, %v1411
      %v1420 = vadd.f32 %v1396, %v1412
      %v1421 = vadd.f32 %v1397, %v1413
      %v1422 = vadd.f32 %v1398, %v1414
      %v1423 = vadd.f32 %v1399, %v1415
      %v1424 = vadd.f32 %v1400, %v1416
      %v1425 = vadd.f32 %v1401, %v1417
      %v1426 = vlaneseq
      %v1427 = vshrl.u32 %v1426, 7
      %v1428 = vsub.s32 2, %v1427
      %v1429 = vrot.slane %v436, %v1428
      %1431 = vrot.lane.b32.xlu0 %v1429, 16
      %v1432 = vpop.permute.xlu0 %1431
      %v1434 = vmul.f32 %v781, %v1432
      %v1435 = vmul.f32 %v782, %v1432
      %v1436 = vmul.f32 %v783, %v1432
      %v1437 = vmul.f32 %v784, %v1432
      %v1438 = vmul.f32 %v785, %v1432
      %v1439 = vmul.f32 %v786, %v1432
      %v1440 = vmul.f32 %v787, %v1432
      %v1441 = vmul.f32 %v788, %v1432
      %v1442 = vadd.f32 %v1418, %v1434
      %v1443 = vadd.f32 %v1419, %v1435
      %v1444 = vadd.f32 %v1420, %v1436
      %v1445 = vadd.f32 %v1421, %v1437
      %v1446 = vadd.f32 %v1422, %v1438
      %v1447 = vadd.f32 %v1423, %v1439
      %v1448 = vadd.f32 %v1424, %v1440
      %v1449 = vadd.f32 %v1425, %v1441
      %v1450 = vlaneseq
      %v1451 = vshrl.u32 %v1450, 7
      %v1452 = vsub.s32 3, %v1451
      %v1453 = vrot.slane %v436, %v1452
      %1455 = vrot.lane.b32.xlu0 %v1453, 16
      %v1456 = vpop.permute.xlu0 %1455
      %v1458 = vmul.f32 %v782, %v1456
      %v1459 = vmul.f32 %v783, %v1456
      %v1460 = vmul.f32 %v784, %v1456
      %v1461 = vmul.f32 %v785, %v1456
      %v1462 = vmul.f32 %v786, %v1456
      %v1463 = vmul.f32 %v787, %v1456
      %v1464 = vmul.f32 %v788, %v1456
      %v1465 = vmul.f32 %v789, %v1456
      %v1466 = vadd.f32 %v1442, %v1458
      %v1467 = vadd.f32 %v1443, %v1459
      %v1468 = vadd.f32 %v1444, %v1460
      %v1469 = vadd.f32 %v1445, %v1461
      %v1470 = vadd.f32 %v1446, %v1462
      %v1471 = vadd.f32 %v1447, %v1463
      %v1472 = vadd.f32 %v1448, %v1464
      %v1473 = vadd.f32 %v1449, %v1465
      %v1474 = vlaneseq
      %v1475 = vshrl.u32 %v1474, 7
      %v1476 = vsub.s32 4, %v1475
      %v1477 = vrot.slane %v436, %v1476
      %1479 = vrot.lane.b32.xlu0 %v1477, 16
      %v1480 = vpop.permute.xlu0 %1479
      %v1482 = vmul.f32 %v890, %v1480
      %v1483 = vmul.f32 %v891, %v1480
      %v1484 = vmul.f32 %v892, %v1480
      %v1485 = vmul.f32 %v893, %v1480
      %v1486 = vmul.f32 %v894, %v1480
      %v1487 = vmul.f32 %v895, %v1480
      %v1488 = vmul.f32 %v896, %v1480
      %v1489 = vmul.f32 %v897, %v1480
      %v1490 = vadd.f32 %v1466, %v1482
      %v1491 = vadd.f32 %v1467, %v1483
      %v1492 = vadd.f32 %v1468, %v1484
      %v1493 = vadd.f32 %v1469, %v1485
      %v1494 = vadd.f32 %v1470, %v1486
      %v1495 = vadd.f32 %v1471, %v1487
      %v1496 = vadd.f32 %v1472, %v1488
      %v1497 = vadd.f32 %v1473, %v1489
      %v1498 = vlaneseq
      %v1499 = vshrl.u32 %v1498, 7
      %v1500 = vsub.s32 5, %v1499
      %v1501 = vrot.slane %v436, %v1500
      %1503 = vrot.lane.b32.xlu0 %v1501, 16
      %v1504 = vpop.permute.xlu0 %1503
      %v1506 = vmul.f32 %v891, %v1504
      %v1507 = vmul.f32 %v892, %v1504
      %v1508 = vmul.f32 %v893, %v1504
      %v1509 = vmul.f32 %v894, %v1504
      %v1510 = vmul.f32 %v895, %v1504
      %v1511 = vmul.f32 %v896, %v1504
      %v1512 = vmul.f32 %v897, %v1504
      %v1513 = vmul.f32 %v898, %v1504
      %v1514 = vadd.f32 %v1490, %v1506
      %v1515 = vadd.f32 %v1491, %v1507
      %v1516 = vadd.f32 %v1492, %v1508
      %v1517 = vadd.f32 %v1493, %v1509
      %v1518 = vadd.f32 %v1494, %v1510
      %v1519 = vadd.f32 %v1495, %v1511
      %v1520 = vadd.f32 %v1496, %v1512
      %v1521 = vadd.f32 %v1497, %v1513
      %v1522 = vlaneseq
      %v1523 = vshrl.u32 %v1522, 7
      %v1524 = vsub.s32 6, %v1523
      %v1525 = vrot.slane %v436, %v1524
      %1527 = vrot.lane.b32.xlu0 %v1525, 16
      %v1528 = vpop.permute.xlu0 %1527
      %v1530 = vmul.f32 %v892, %v1528
      %v1531 = vmul.f32 %v893, %v1528
      %v1532 = vmul.f32 %v894, %v1528
      %v1533 = vmul.f32 %v895, %v1528
      %v1534 = vmul.f32 %v896, %v1528
      %v1535 = vmul.f32 %v897, %v1528
      %v1536 = vmul.f32 %v898, %v1528
      %v1537 = vmul.f32 %v899, %v1528
      %v1538 = vadd.f32 %v1514, %v1530
      %v1539 = vadd.f32 %v1515, %v1531
      %v1540 = vadd.f32 %v1516, %v1532
      %v1541 = vadd.f32 %v1517, %v1533
      %v1542 = vadd.f32 %v1518, %v1534
      %v1543 = vadd.f32 %v1519, %v1535
      %v1544 = vadd.f32 %v1520, %v1536
      %v1545 = vadd.f32 %v1521, %v1537
      %v1546 = vlaneseq
      %v1547 = vshrl.u32 %v1546, 7
      %v1548 = vsub.s32 7, %v1547
      %v1549 = vrot.slane %v436, %v1548
      %1551 = vrot.lane.b32.xlu0 %v1549, 16
      %v1552 = vpop.permute.xlu0 %1551
      %v1554 = vmul.f32 %v893, %v1552
      %v1555 = vmul.f32 %v894, %v1552
      %v1556 = vmul.f32 %v895, %v1552
      %v1557 = vmul.f32 %v896, %v1552
      %v1558 = vmul.f32 %v897, %v1552
      %v1559 = vmul.f32 %v898, %v1552
      %v1560 = vmul.f32 %v899, %v1552
      %v1561 = vmul.f32 %v900, %v1552
      %v1562 = vadd.f32 %v1538, %v1554
      %v1563 = vadd.f32 %v1539, %v1555
      %v1564 = vadd.f32 %v1540, %v1556
      %v1565 = vadd.f32 %v1541, %v1557
      %v1566 = vadd.f32 %v1542, %v1558
      %v1567 = vadd.f32 %v1543, %v1559
      %v1568 = vadd.f32 %v1544, %v1560
      %v1569 = vadd.f32 %v1545, %v1561
      %v1570 = vlaneseq
      %v1571 = vshrl.u32 %v1570, 7
      %v1572 = vsub.s32 0, %v1571
      %v1573 = vrot.slane %v437, %v1572
      %1575 = vrot.lane.b32.xlu0 %v1573, 16
      %v1576 = vpop.permute.xlu0 %1575
      %v1578 = vmul.f32 %v894, %v1576
      %v1579 = vmul.f32 %v895, %v1576
      %v1580 = vmul.f32 %v896, %v1576
      %v1581 = vmul.f32 %v897, %v1576
      %v1582 = vmul.f32 %v898, %v1576
      %v1583 = vmul.f32 %v899, %v1576
      %v1584 = vmul.f32 %v900, %v1576
      %v1585 = vmul.f32 %v901, %v1576
      %v1586 = vadd.f32 %v1562, %v1578
      %v1587 = vadd.f32 %v1563, %v1579
      %v1588 = vadd.f32 %v1564, %v1580
      %v1589 = vadd.f32 %v1565, %v1581
      %v1590 = vadd.f32 %v1566, %v1582
      %v1591 = vadd.f32 %v1567, %v1583
      %v1592 = vadd.f32 %v1568, %v1584
      %v1593 = vadd.f32 %v1569, %v1585
      %v1594 = vlaneseq
      %v1595 = vshrl.u32 %v1594, 7
      %v1596 = vsub.s32 0, %v1595
      %v1597 = vrot.slane %v438, %v1596
      %1599 = vrot.lane.b32.xlu0 %v1597, 32
      %v1600 = vpop.permute.xlu0 %1599
      %v1602 = vmul.f32 %v450, %v1600
      %v1603 = vmul.f32 %v451, %v1600
      %v1604 = vmul.f32 %v452, %v1600
      %v1605 = vmul.f32 %v453, %v1600
      %v1606 = vmul.f32 %v454, %v1600
      %v1607 = vmul.f32 %v455, %v1600
      %v1608 = vmul.f32 %v456, %v1600
      %v1609 = vmul.f32 %v457, %v1600
      %v1610 = vlaneseq
      %v1611 = vshrl.u32 %v1610, 7
      %v1612 = vsub.s32 1, %v1611
      %v1613 = vrot.slane %v438, %v1612
      %1615 = vrot.lane.b32.xlu0 %v1613, 32
      %v1616 = vpop.permute.xlu0 %1615
      %v1618 = vmul.f32 %v451, %v1616
      %v1619 = vmul.f32 %v452, %v1616
      %v1620 = vmul.f32 %v453, %v1616
      %v1621 = vmul.f32 %v454, %v1616
      %v1622 = vmul.f32 %v455, %v1616
      %v1623 = vmul.f32 %v456, %v1616
      %v1624 = vmul.f32 %v457, %v1616
      %v1625 = vmul.f32 %v458, %v1616
      %v1626 = vadd.f32 %v1602, %v1618
      %v1627 = vadd.f32 %v1603, %v1619
      %v1628 = vadd.f32 %v1604, %v1620
      %v1629 = vadd.f32 %v1605, %v1621
      %v1630 = vadd.f32 %v1606, %v1622
      %v1631 = vadd.f32 %v1607, %v1623
      %v1632 = vadd.f32 %v1608, %v1624
      %v1633 = vadd.f32 %v1609, %v1625
      %v1634 = vlaneseq
      %v1635 = vshrl.u32 %v1634, 7
      %v1636 = vsub.s32 2, %v1635
      %v1637 = vrot.slane %v438, %v1636
      %1639 = vrot.lane.b32.xlu0 %v1637, 32
      %v1640 = vpop.permute.xlu0 %1639
      %v1642 = vmul.f32 %v452, %v1640
      %v1643 = vmul.f32 %v453, %v1640
      %v1644 = vmul.f32 %v454, %v1640
      %v1645 = vmul.f32 %v455, %v1640
      %v1646 = vmul.f32 %v456, %v1640
      %v1647 = vmul.f32 %v457, %v1640
      %v1648 = vmul.f32 %v458, %v1640
      %v1649 = vmul.f32 %v459, %v1640
      %v1650 = vadd.f32 %v1626, %v1642
      %v1651 = vadd.f32 %v1627, %v1643
      %v1652 = vadd.f32 %v1628, %v1644
      %v1653 = vadd.f32 %v1629, %v1645
      %v1654 = vadd.f32 %v1630, %v1646
      %v1655 = vadd.f32 %v1631, %v1647
      %v1656 = vadd.f32 %v1632, %v1648
      %v1657 = vadd.f32 %v1633, %v1649
      %v1658 = vlaneseq
      %v1659 = vshrl.u32 %v1658, 7
      %v1660 = vsub.s32 3, %v1659
      %v1661 = vrot.slane %v438, %v1660
      %1663 = vrot.lane.b32.xlu0 %v1661, 32
      %v1664 = vpop.permute.xlu0 %1663
      %v1666 = vmul.f32 %v453, %v1664
      %v1667 = vmul.f32 %v454, %v1664
      %v1668 = vmul.f32 %v455, %v1664
      %v1669 = vmul.f32 %v456, %v1664
      %v1670 = vmul.f32 %v457, %v1664
      %v1671 = vmul.f32 %v458, %v1664
      %v1672 = vmul.f32 %v459, %v1664
      %v1673 = vmul.f32 %v460, %v1664
      %v1674 = vadd.f32 %v1650, %v1666
      %v1675 = vadd.f32 %v1651, %v1667
      %v1676 = vadd.f32 %v1652, %v1668
      %v1677 = vadd.f32 %v1653, %v1669
      %v1678 = vadd.f32 %v1654, %v1670
      %v1679 = vadd.f32 %v1655, %v1671
      %v1680 = vadd.f32 %v1656, %v1672
      %v1681 = vadd.f32 %v1657, %v1673
      %v1682 = vlaneseq
      %v1683 = vshrl.u32 %v1682, 7
      %v1684 = vsub.s32 4, %v1683
      %v1685 = vrot.slane %v438, %v1684
      %1687 = vrot.lane.b32.xlu0 %v1685, 32
      %v1688 = vpop.permute.xlu0 %1687
      %v1690 = vmul.f32 %v454, %v1688
      %v1691 = vmul.f32 %v455, %v1688
      %v1692 = vmul.f32 %v456, %v1688
      %v1693 = vmul.f32 %v457, %v1688
      %v1694 = vmul.f32 %v458, %v1688
      %v1695 = vmul.f32 %v459, %v1688
      %v1696 = vmul.f32 %v460, %v1688
      %v1697 = vmul.f32 %v461, %v1688
      %v1698 = vadd.f32 %v1674, %v1690
      %v1699 = vadd.f32 %v1675, %v1691
      %v1700 = vadd.f32 %v1676, %v1692
      %v1701 = vadd.f32 %v1677, %v1693
      %v1702 = vadd.f32 %v1678, %v1694
      %v1703 = vadd.f32 %v1679, %v1695
      %v1704 = vadd.f32 %v1680, %v1696
      %v1705 = vadd.f32 %v1681, %v1697
      %v1706 = vlaneseq
      %v1707 = vshrl.u32 %v1706, 7
      %v1708 = vsub.s32 5, %v1707
      %v1709 = vrot.slane %v438, %v1708
      %1711 = vrot.lane.b32.xlu0 %v1709, 32
      %v1712 = vpop.permute.xlu0 %1711
      %v1714 = vmul.f32 %v554, %v1712
      %v1715 = vmul.f32 %v555, %v1712
      %v1716 = vmul.f32 %v556, %v1712
      %v1717 = vmul.f32 %v557, %v1712
      %v1718 = vmul.f32 %v558, %v1712
      %v1719 = vmul.f32 %v559, %v1712
      %v1720 = vmul.f32 %v560, %v1712
      %v1721 = vmul.f32 %v561, %v1712
      %v1722 = vadd.f32 %v1698, %v1714
      %v1723 = vadd.f32 %v1699, %v1715
      %v1724 = vadd.f32 %v1700, %v1716
      %v1725 = vadd.f32 %v1701, %v1717
      %v1726 = vadd.f32 %v1702, %v1718
      %v1727 = vadd.f32 %v1703, %v1719
      %v1728 = vadd.f32 %v1704, %v1720
      %v1729 = vadd.f32 %v1705, %v1721
      %v1730 = vlaneseq
      %v1731 = vshrl.u32 %v1730, 7
      %v1732 = vsub.s32 6, %v1731
      %v1733 = vrot.slane %v438, %v1732
      %1735 = vrot.lane.b32.xlu0 %v1733, 32
      %v1736 = vpop.permute.xlu0 %1735
      %v1738 = vmul.f32 %v555, %v1736
      %v1739 = vmul.f32 %v556, %v1736
      %v1740 = vmul.f32 %v557, %v1736
      %v1741 = vmul.f32 %v558, %v1736
      %v1742 = vmul.f32 %v559, %v1736
      %v1743 = vmul.f32 %v560, %v1736
      %v1744 = vmul.f32 %v561, %v1736
      %v1745 = vmul.f32 %v562, %v1736
      %v1746 = vadd.f32 %v1722, %v1738
      %v1747 = vadd.f32 %v1723, %v1739
      %v1748 = vadd.f32 %v1724, %v1740
      %v1749 = vadd.f32 %v1725, %v1741
      %v1750 = vadd.f32 %v1726, %v1742
      %v1751 = vadd.f32 %v1727, %v1743
      %v1752 = vadd.f32 %v1728, %v1744
      %v1753 = vadd.f32 %v1729, %v1745
      %v1754 = vlaneseq
      %v1755 = vshrl.u32 %v1754, 7
      %v1756 = vsub.s32 7, %v1755
      %v1757 = vrot.slane %v438, %v1756
      %1759 = vrot.lane.b32.xlu0 %v1757, 32
      %v1760 = vpop.permute.xlu0 %1759
      %v1762 = vmul.f32 %v556, %v1760
      %v1763 = vmul.f32 %v557, %v1760
      %v1764 = vmul.f32 %v558, %v1760
      %v1765 = vmul.f32 %v559, %v1760
      %v1766 = vmul.f32 %v560, %v1760
      %v1767 = vmul.f32 %v561, %v1760
      %v1768 = vmul.f32 %v562, %v1760
      %v1769 = vmul.f32 %v563, %v1760
      %v1770 = vadd.f32 %v1746, %v1762
      %v1771 = vadd.f32 %v1747, %v1763
      %v1772 = vadd.f32 %v1748, %v1764
      %v1773 = vadd.f32 %v1749, %v1765
      %v1774 = vadd.f32 %v1750, %v1766
      %v1775 = vadd.f32 %v1751, %v1767
      %v1776 = vadd.f32 %v1752, %v1768
      %v1777 = vadd.f32 %v1753, %v1769
      %v1778 = vlaneseq
      %v1779 = vshrl.u32 %v1778, 7
      %v1780 = vsub.s32 0, %v1779
      %v1781 = vrot.slane %v439, %v1780
      %1783 = vrot.lane.b32.xlu0 %v1781, 32
      %v1784 = vpop.permute.xlu0 %1783
      %v1786 = vmul.f32 %v557, %v1784
      %v1787 = vmul.f32 %v558, %v1784
      %v1788 = vmul.f32 %v559, %v1784
      %v1789 = vmul.f32 %v560, %v1784
      %v1790 = vmul.f32 %v561, %v1784
      %v1791 = vmul.f32 %v562, %v1784
      %v1792 = vmul.f32 %v563, %v1784
      %v1793 = vmul.f32 %v564, %v1784
      %v1794 = vadd.f32 %v1770, %v1786
      %v1795 = vadd.f32 %v1771, %v1787
      %v1796 = vadd.f32 %v1772, %v1788
      %v1797 = vadd.f32 %v1773, %v1789
      %v1798 = vadd.f32 %v1774, %v1790
      %v1799 = vadd.f32 %v1775, %v1791
      %v1800 = vadd.f32 %v1776, %v1792
      %v1801 = vadd.f32 %v1777, %v1793
      %v1802 = vlaneseq
      %v1803 = vshrl.u32 %v1802, 7
      %v1804 = vsub.s32 1, %v1803
      %v1805 = vrot.slane %v439, %v1804
      %1807 = vrot.lane.b32.xlu0 %v1805, 32
      %v1808 = vpop.permute.xlu0 %1807
      %v1810 = vmul.f32 %v558, %v1808
      %v1811 = vmul.f32 %v559, %v1808
      %v1812 = vmul.f32 %v560, %v1808
      %v1813 = vmul.f32 %v561, %v1808
      %v1814 = vmul.f32 %v562, %v1808
      %v1815 = vmul.f32 %v563, %v1808
      %v1816 = vmul.f32 %v564, %v1808
      %v1817 = vmul.f32 %v565, %v1808
      %v1818 = vadd.f32 %v1794, %v1810
      %v1819 = vadd.f32 %v1795, %v1811
      %v1820 = vadd.f32 %v1796, %v1812
      %v1821 = vadd.f32 %v1797, %v1813
      %v1822 = vadd.f32 %v1798, %v1814
      %v1823 = vadd.f32 %v1799, %v1815
      %v1824 = vadd.f32 %v1800, %v1816
      %v1825 = vadd.f32 %v1801, %v1817
      %v1826 = vlaneseq
      %v1827 = vshrl.u32 %v1826, 7
      %v1828 = vsub.s32 2, %v1827
      %v1829 = vrot.slane %v439, %v1828
      %1831 = vrot.lane.b32.xlu0 %v1829, 32
      %v1832 = vpop.permute.xlu0 %1831
      %v1834 = vmul.f32 %v666, %v1832
      %v1835 = vmul.f32 %v667, %v1832
      %v1836 = vmul.f32 %v668, %v1832
      %v1837 = vmul.f32 %v669, %v1832
      %v1838 = vmul.f32 %v670, %v1832
      %v1839 = vmul.f32 %v671, %v1832
      %v1840 = vmul.f32 %v672, %v1832
      %v1841 = vmul.f32 %v673, %v1832
      %v1842 = vadd.f32 %v1818, %v1834
      %v1843 = vadd.f32 %v1819, %v1835
      %v1844 = vadd.f32 %v1820, %v1836
      %v1845 = vadd.f32 %v1821, %v1837
      %v1846 = vadd.f32 %v1822, %v1838
      %v1847 = vadd.f32 %v1823, %v1839
      %v1848 = vadd.f32 %v1824, %v1840
      %v1849 = vadd.f32 %v1825, %v1841
      %v1850 = vlaneseq
      %v1851 = vshrl.u32 %v1850, 7
      %v1852 = vsub.s32 3, %v1851
      %v1853 = vrot.slane %v439, %v1852
      %1855 = vrot.lane.b32.xlu0 %v1853, 32
      %v1856 = vpop.permute.xlu0 %1855
      %v1858 = vmul.f32 %v667, %v1856
      %v1859 = vmul.f32 %v668, %v1856
      %v1860 = vmul.f32 %v669, %v1856
      %v1861 = vmul.f32 %v670, %v1856
      %v1862 = vmul.f32 %v671, %v1856
      %v1863 = vmul.f32 %v672, %v1856
      %v1864 = vmul.f32 %v673, %v1856
      %v1865 = vmul.f32 %v674, %v1856
      %v1866 = vadd.f32 %v1842, %v1858
      %v1867 = vadd.f32 %v1843, %v1859
      %v1868 = vadd.f32 %v1844, %v1860
      %v1869 = vadd.f32 %v1845, %v1861
      %v1870 = vadd.f32 %v1846, %v1862
      %v1871 = vadd.f32 %v1847, %v1863
      %v1872 = vadd.f32 %v1848, %v1864
      %v1873 = vadd.f32 %v1849, %v1865
      %v1874 = vlaneseq
      %v1875 = vshrl.u32 %v1874, 7
      %v1876 = vsub.s32 4, %v1875
      %v1877 = vrot.slane %v439, %v1876
      %1879 = vrot.lane.b32.xlu0 %v1877, 32
      %v1880 = vpop.permute.xlu0 %1879
      %v1882 = vmul.f32 %v668, %v1880
      %v1883 = vmul.f32 %v669, %v1880
      %v1884 = vmul.f32 %v670, %v1880
      %v1885 = vmul.f32 %v671, %v1880
      %v1886 = vmul.f32 %v672, %v1880
      %v1887 = vmul.f32 %v673, %v1880
      %v1888 = vmul.f32 %v674, %v1880
      %v1889 = vmul.f32 %v675, %v1880
      %v1890 = vadd.f32 %v1866, %v1882
      %v1891 = vadd.f32 %v1867, %v1883
      %v1892 = vadd.f32 %v1868, %v1884
      %v1893 = vadd.f32 %v1869, %v1885
      %v1894 = vadd.f32 %v1870, %v1886
      %v1895 = vadd.f32 %v1871, %v1887
      %v1896 = vadd.f32 %v1872, %v1888
      %v1897 = vadd.f32 %v1873, %v1889
      %v1898 = vlaneseq
      %v1899 = vshrl.u32 %v1898, 7
      %v1900 = vsub.s32 5, %v1899
      %v1901 = vrot.slane %v439, %v1900
      %1903 = vrot.lane.b32.xlu0 %v1901, 32
      %v1904 = vpop.permute.xlu0 %1903
      %v1906 = vmul.f32 %v669, %v1904
      %v1907 = vmul.f32 %v670, %v1904
      %v1908 = vmul.f32 %v671, %v1904
      %v1909 = vmul.f32 %v672, %v1904
      %v1910 = vmul.f32 %v673, %v1904
      %v1911 = vmul.f32 %v674, %v1904
      %v1912 = vmul.f32 %v675, %v1904
      %v1913 = vmul.f32 %v676, %v1904
      %v1914 = vadd.f32 %v1890, %v1906
      %v1915 = vadd.f32 %v1891, %v1907
      %v1916 = vadd.f32 %v1892, %v1908
      %v1917 = vadd.f32 %v1893, %v1909
      %v1918 = vadd.f32 %v1894, %v1910
      %v1919 = vadd.f32 %v1895, %v1911
      %v1920 = vadd.f32 %v1896, %v1912
      %v1921 = vadd.f32 %v1897, %v1913
      %v1922 = vlaneseq
      %v1923 = vshrl.u32 %v1922, 7
      %v1924 = vsub.s32 6, %v1923
      %v1925 = vrot.slane %v439, %v1924
      %1927 = vrot.lane.b32.xlu0 %v1925, 32
      %v1928 = vpop.permute.xlu0 %1927
      %v1930 = vmul.f32 %v670, %v1928
      %v1931 = vmul.f32 %v671, %v1928
      %v1932 = vmul.f32 %v672, %v1928
      %v1933 = vmul.f32 %v673, %v1928
      %v1934 = vmul.f32 %v674, %v1928
      %v1935 = vmul.f32 %v675, %v1928
      %v1936 = vmul.f32 %v676, %v1928
      %v1937 = vmul.f32 %v677, %v1928
      %v1938 = vadd.f32 %v1914, %v1930
      %v1939 = vadd.f32 %v1915, %v1931
      %v1940 = vadd.f32 %v1916, %v1932
      %v1941 = vadd.f32 %v1917, %v1933
      %v1942 = vadd.f32 %v1918, %v1934
      %v1943 = vadd.f32 %v1919, %v1935
      %v1944 = vadd.f32 %v1920, %v1936
      %v1945 = vadd.f32 %v1921, %v1937
      %v1946 = vlaneseq
      %v1947 = vshrl.u32 %v1946, 7
      %v1948 = vsub.s32 7, %v1947
      %v1949 = vrot.slane %v439, %v1948
      %1951 = vrot.lane.b32.xlu0 %v1949, 32
      %v1952 = vpop.permute.xlu0 %1951
      %v1954 = vmul.f32 %v778, %v1952
      %v1955 = vmul.f32 %v779, %v1952
      %v1956 = vmul.f32 %v780, %v1952
      %v1957 = vmul.f32 %v781, %v1952
      %v1958 = vmul.f32 %v782, %v1952
      %v1959 = vmul.f32 %v783, %v1952
      %v1960 = vmul.f32 %v784, %v1952
      %v1961 = vmul.f32 %v785, %v1952
      %v1962 = vadd.f32 %v1938, %v1954
      %v1963 = vadd.f32 %v1939, %v1955
      %v1964 = vadd.f32 %v1940, %v1956
      %v1965 = vadd.f32 %v1941, %v1957
      %v1966 = vadd.f32 %v1942, %v1958
      %v1967 = vadd.f32 %v1943, %v1959
      %v1968 = vadd.f32 %v1944, %v1960
      %v1969 = vadd.f32 %v1945, %v1961
      %v1970 = vlaneseq
      %v1971 = vshrl.u32 %v1970, 7
      %v1972 = vsub.s32 0, %v1971
      %v1973 = vrot.slane %v440, %v1972
      %1975 = vrot.lane.b32.xlu0 %v1973, 32
      %v1976 = vpop.permute.xlu0 %1975
      %v1978 = vmul.f32 %v779, %v1976
      %v1979 = vmul.f32 %v780, %v1976
      %v1980 = vmul.f32 %v781, %v1976
      %v1981 = vmul.f32 %v782, %v1976
      %v1982 = vmul.f32 %v783, %v1976
      %v1983 = vmul.f32 %v784, %v1976
      %v1984 = vmul.f32 %v785, %v1976
      %v1985 = vmul.f32 %v786, %v1976
      %v1986 = vadd.f32 %v1962, %v1978
      %v1987 = vadd.f32 %v1963, %v1979
      %v1988 = vadd.f32 %v1964, %v1980
      %v1989 = vadd.f32 %v1965, %v1981
      %v1990 = vadd.f32 %v1966, %v1982
      %v1991 = vadd.f32 %v1967, %v1983
      %v1992 = vadd.f32 %v1968, %v1984
      %v1993 = vadd.f32 %v1969, %v1985
      %v1994 = vlaneseq
      %v1995 = vshrl.u32 %v1994, 7
      %v1996 = vsub.s32 1, %v1995
      %v1997 = vrot.slane %v440, %v1996
      %1999 = vrot.lane.b32.xlu0 %v1997, 32
      %v2000 = vpop.permute.xlu0 %1999
      %v2002 = vmul.f32 %v780, %v2000
      %v2003 = vmul.f32 %v781, %v2000
      %v2004 = vmul.f32 %v782, %v2000
      %v2005 = vmul.f32 %v783, %v2000
      %v2006 = vmul.f32 %v784, %v2000
      %v2007 = vmul.f32 %v785, %v2000
      %v2008 = vmul.f32 %v786, %v2000
      %v2009 = vmul.f32 %v787, %v2000
      %v2010 = vadd.f32 %v1986, %v2002
      %v2011 = vadd.f32 %v1987, %v2003
      %v2012 = vadd.f32 %v1988, %v2004
      %v2013 = vadd.f32 %v1989, %v2005
      %v2014 = vadd.f32 %v1990, %v2006
      %v2015 = vadd.f32 %v1991, %v2007
      %v2016 = vadd.f32 %v1992, %v2008
      %v2017 = vadd.f32 %v1993, %v2009
      %v2018 = vlaneseq
      %v2019 = vshrl.u32 %v2018, 7
      %v2020 = vsub.s32 2, %v2019
      %v2021 = vrot.slane %v440, %v2020
      %2023 = vrot.lane.b32.xlu0 %v2021, 32
      %v2024 = vpop.permute.xlu0 %2023
      %v2026 = vmul.f32 %v781, %v2024
      %v2027 = vmul.f32 %v782, %v2024
      %v2028 = vmul.f32 %v783, %v2024
      %v2029 = vmul.f32 %v784, %v2024
      %v2030 = vmul.f32 %v785, %v2024
      %v2031 = vmul.f32 %v786, %v2024
      %v2032 = vmul.f32 %v787, %v2024
      %v2033 = vmul.f32 %v788, %v2024
      %v2034 = vadd.f32 %v2010, %v2026
      %v2035 = vadd.f32 %v2011, %v2027
      %v2036 = vadd.f32 %v2012, %v2028
      %v2037 = vadd.f32 %v2013, %v2029
      %v2038 = vadd.f32 %v2014, %v2030
      %v2039 = vadd.f32 %v2015, %v2031
      %v2040 = vadd.f32 %v2016, %v2032
      %v2041 = vadd.f32 %v2017, %v2033
      %v2042 = vlaneseq
      %v2043 = vshrl.u32 %v2042, 7
      %v2044 = vsub.s32 3, %v2043
      %v2045 = vrot.slane %v440, %v2044
      %2047 = vrot.lane.b32.xlu0 %v2045, 32
      %v2048 = vpop.permute.xlu0 %2047
      %v2050 = vmul.f32 %v782, %v2048
      %v2051 = vmul.f32 %v783, %v2048
      %v2052 = vmul.f32 %v784, %v2048
      %v2053 = vmul.f32 %v785, %v2048
      %v2054 = vmul.f32 %v786, %v2048
      %v2055 = vmul.f32 %v787, %v2048
      %v2056 = vmul.f32 %v788, %v2048
      %v2057 = vmul.f32 %v789, %v2048
      %v2058 = vadd.f32 %v2034, %v2050
      %v2059 = vadd.f32 %v2035, %v2051
      %v2060 = vadd.f32 %v2036, %v2052
      %v2061 = vadd.f32 %v2037, %v2053
      %v2062 = vadd.f32 %v2038, %v2054
      %v2063 = vadd.f32 %v2039, %v2055
      %v2064 = vadd.f32 %v2040, %v2056
      %v2065 = vadd.f32 %v2041, %v2057
      %v2066 = vlaneseq
      %v2067 = vshrl.u32 %v2066, 7
      %v2068 = vsub.s32 4, %v2067
      %v2069 = vrot.slane %v440, %v2068
      %2071 = vrot.lane.b32.xlu0 %v2069, 32
      %v2072 = vpop.permute.xlu0 %2071
      %v2074 = vmul.f32 %v890, %v2072
      %v2075 = vmul.f32 %v891, %v2072
      %v2076 = vmul.f32 %v892, %v2072
      %v2077 = vmul.f32 %v893, %v2072
      %v2078 = vmul.f32 %v894, %v2072
      %v2079 = vmul.f32 %v895, %v2072
      %v2080 = vmul.f32 %v896, %v2072
      %v2081 = vmul.f32 %v897, %v2072
      %v2082 = vadd.f32 %v2058, %v2074
      %v2083 = vadd.f32 %v2059, %v2075
      %v2084 = vadd.f32 %v2060, %v2076
      %v2085 = vadd.f32 %v2061, %v2077
      %v2086 = vadd.f32 %v2062, %v2078
      %v2087 = vadd.f32 %v2063, %v2079
      %v2088 = vadd.f32 %v2064, %v2080
      %v2089 = vadd.f32 %v2065, %v2081
      %v2090 = vlaneseq
      %v2091 = vshrl.u32 %v2090, 7
      %v2092 = vsub.s32 5, %v2091
      %v2093 = vrot.slane %v440, %v2092
      %2095 = vrot.lane.b32.xlu0 %v2093, 32
      %v2096 = vpop.permute.xlu0 %2095
      %v2098 = vmul.f32 %v891, %v2096
      %v2099 = vmul.f32 %v892, %v2096
      %v2100 = vmul.f32 %v893, %v2096
      %v2101 = vmul.f32 %v894, %v2096
      %v2102 = vmul.f32 %v895, %v2096
      %v2103 = vmul.f32 %v896, %v2096
      %v2104 = vmul.f32 %v897, %v2096
      %v2105 = vmul.f32 %v898, %v2096
      %v2106 = vadd.f32 %v2082, %v2098
      %v2107 = vadd.f32 %v2083, %v2099
      %v2108 = vadd.f32 %v2084, %v2100
      %v2109 = vadd.f32 %v2085, %v2101
      %v2110 = vadd.f32 %v2086, %v2102
      %v2111 = vadd.f32 %v2087, %v2103
      %v2112 = vadd.f32 %v2088, %v2104
      %v2113 = vadd.f32 %v2089, %v2105
      %v2114 = vlaneseq
      %v2115 = vshrl.u32 %v2114, 7
      %v2116 = vsub.s32 6, %v2115
      %v2117 = vrot.slane %v440, %v2116
      %2119 = vrot.lane.b32.xlu0 %v2117, 32
      %v2120 = vpop.permute.xlu0 %2119
      %v2122 = vmul.f32 %v892, %v2120
      %v2123 = vmul.f32 %v893, %v2120
      %v2124 = vmul.f32 %v894, %v2120
      %v2125 = vmul.f32 %v895, %v2120
      %v2126 = vmul.f32 %v896, %v2120
      %v2127 = vmul.f32 %v897, %v2120
      %v2128 = vmul.f32 %v898, %v2120
      %v2129 = vmul.f32 %v899, %v2120
      %v2130 = vadd.f32 %v2106, %v2122
      %v2131 = vadd.f32 %v2107, %v2123
      %v2132 = vadd.f32 %v2108, %v2124
      %v2133 = vadd.f32 %v2109, %v2125
      %v2134 = vadd.f32 %v2110, %v2126
      %v2135 = vadd.f32 %v2111, %v2127
      %v2136 = vadd.f32 %v2112, %v2128
      %v2137 = vadd.f32 %v2113, %v2129
      %v2138 = vlaneseq
      %v2139 = vshrl.u32 %v2138, 7
      %v2140 = vsub.s32 7, %v2139
      %v2141 = vrot.slane %v440, %v2140
      %2143 = vrot.lane.b32.xlu0 %v2141, 32
      %v2144 = vpop.permute.xlu0 %2143
      %v2146 = vmul.f32 %v893, %v2144
      %v2147 = vmul.f32 %v894, %v2144
      %v2148 = vmul.f32 %v895, %v2144
      %v2149 = vmul.f32 %v896, %v2144
      %v2150 = vmul.f32 %v897, %v2144
      %v2151 = vmul.f32 %v898, %v2144
      %v2152 = vmul.f32 %v899, %v2144
      %v2153 = vmul.f32 %v900, %v2144
      %v2154 = vadd.f32 %v2130, %v2146
      %v2155 = vadd.f32 %v2131, %v2147
      %v2156 = vadd.f32 %v2132, %v2148
      %v2157 = vadd.f32 %v2133, %v2149
      %v2158 = vadd.f32 %v2134, %v2150
      %v2159 = vadd.f32 %v2135, %v2151
      %v2160 = vadd.f32 %v2136, %v2152
      %v2161 = vadd.f32 %v2137, %v2153
      %v2162 = vlaneseq
      %v2163 = vshrl.u32 %v2162, 7
      %v2164 = vsub.s32 0, %v2163
      %v2165 = vrot.slane %v441, %v2164
      %2167 = vrot.lane.b32.xlu0 %v2165, 32
      %v2168 = vpop.permute.xlu0 %2167
      %v2170 = vmul.f32 %v894, %v2168
      %v2171 = vmul.f32 %v895, %v2168
      %v2172 = vmul.f32 %v896, %v2168
      %v2173 = vmul.f32 %v897, %v2168
      %v2174 = vmul.f32 %v898, %v2168
      %v2175 = vmul.f32 %v899, %v2168
      %v2176 = vmul.f32 %v900, %v2168
      %v2177 = vmul.f32 %v901, %v2168
      %v2178 = vadd.f32 %v2154, %v2170
      %v2179 = vadd.f32 %v2155, %v2171
      %v2180 = vadd.f32 %v2156, %v2172
      %v2181 = vadd.f32 %v2157, %v2173
      %v2182 = vadd.f32 %v2158, %v2174
      %v2183 = vadd.f32 %v2159, %v2175
      %v2184 = vadd.f32 %v2160, %v2176
      %v2185 = vadd.f32 %v2161, %v2177
      %v2186 = vlaneseq
      %v2187 = vshrl.u32 %v2186, 7
      %v2188 = vsub.s32 0, %v2187
      %v2189 = vrot.slane %v442, %v2188
      %2191 = vrot.lane.b32.xlu0 %v2189, 48
      %v2192 = vpop.permute.xlu0 %2191
      %v2194 = vmul.f32 %v450, %v2192
      %v2195 = vmul.f32 %v451, %v2192
      %v2196 = vmul.f32 %v452, %v2192
      %v2197 = vmul.f32 %v453, %v2192
      %v2198 = vmul.f32 %v454, %v2192
      %v2199 = vmul.f32 %v455, %v2192
      %v2200 = vmul.f32 %v456, %v2192
      %v2201 = vmul.f32 %v457, %v2192
      %v2202 = vlaneseq
      %v2203 = vshrl.u32 %v2202, 7
      %v2204 = vsub.s32 1, %v2203
      %v2205 = vrot.slane %v442, %v2204
      %2207 = vrot.lane.b32.xlu0 %v2205, 48
      %v2208 = vpop.permute.xlu0 %2207
      %v2210 = vmul.f32 %v451, %v2208
      %v2211 = vmul.f32 %v452, %v2208
      %v2212 = vmul.f32 %v453, %v2208
      %v2213 = vmul.f32 %v454, %v2208
      %v2214 = vmul.f32 %v455, %v2208
      %v2215 = vmul.f32 %v456, %v2208
      %v2216 = vmul.f32 %v457, %v2208
      %v2217 = vmul.f32 %v458, %v2208
      %v2218 = vadd.f32 %v2194, %v2210
      %v2219 = vadd.f32 %v2195, %v2211
      %v2220 = vadd.f32 %v2196, %v2212
      %v2221 = vadd.f32 %v2197, %v2213
      %v2222 = vadd.f32 %v2198, %v2214
      %v2223 = vadd.f32 %v2199, %v2215
      %v2224 = vadd.f32 %v2200, %v2216
      %v2225 = vadd.f32 %v2201, %v2217
      %v2226 = vlaneseq
      %v2227 = vshrl.u32 %v2226, 7
      %v2228 = vsub.s32 2, %v2227
      %v2229 = vrot.slane %v442, %v2228
      %2231 = vrot.lane.b32.xlu0 %v2229, 48
      %v2232 = vpop.permute.xlu0 %2231
      %v2234 = vmul.f32 %v452, %v2232
      %v2235 = vmul.f32 %v453, %v2232
      %v2236 = vmul.f32 %v454, %v2232
      %v2237 = vmul.f32 %v455, %v2232
      %v2238 = vmul.f32 %v456, %v2232
      %v2239 = vmul.f32 %v457, %v2232
      %v2240 = vmul.f32 %v458, %v2232
      %v2241 = vmul.f32 %v459, %v2232
      %v2242 = vadd.f32 %v2218, %v2234
      %v2243 = vadd.f32 %v2219, %v2235
      %v2244 = vadd.f32 %v2220, %v2236
      %v2245 = vadd.f32 %v2221, %v2237
      %v2246 = vadd.f32 %v2222, %v2238
      %v2247 = vadd.f32 %v2223, %v2239
      %v2248 = vadd.f32 %v2224, %v2240
      %v2249 = vadd.f32 %v2225, %v2241
      %v2250 = vlaneseq
      %v2251 = vshrl.u32 %v2250, 7
      %v2252 = vsub.s32 3, %v2251
      %v2253 = vrot.slane %v442, %v2252
      %2255 = vrot.lane.b32.xlu0 %v2253, 48
      %v2256 = vpop.permute.xlu0 %2255
      %v2258 = vmul.f32 %v453, %v2256
      %v2259 = vmul.f32 %v454, %v2256
      %v2260 = vmul.f32 %v455, %v2256
      %v2261 = vmul.f32 %v456, %v2256
      %v2262 = vmul.f32 %v457, %v2256
      %v2263 = vmul.f32 %v458, %v2256
      %v2264 = vmul.f32 %v459, %v2256
      %v2265 = vmul.f32 %v460, %v2256
      %v2266 = vadd.f32 %v2242, %v2258
      %v2267 = vadd.f32 %v2243, %v2259
      %v2268 = vadd.f32 %v2244, %v2260
      %v2269 = vadd.f32 %v2245, %v2261
      %v2270 = vadd.f32 %v2246, %v2262
      %v2271 = vadd.f32 %v2247, %v2263
      %v2272 = vadd.f32 %v2248, %v2264
      %v2273 = vadd.f32 %v2249, %v2265
      %v2274 = vlaneseq
      %v2275 = vshrl.u32 %v2274, 7
      %v2276 = vsub.s32 4, %v2275
      %v2277 = vrot.slane %v442, %v2276
      %2279 = vrot.lane.b32.xlu0 %v2277, 48
      %v2280 = vpop.permute.xlu0 %2279
      %v2282 = vmul.f32 %v454, %v2280
      %v2283 = vmul.f32 %v455, %v2280
      %v2284 = vmul.f32 %v456, %v2280
      %v2285 = vmul.f32 %v457, %v2280
      %v2286 = vmul.f32 %v458, %v2280
      %v2287 = vmul.f32 %v459, %v2280
      %v2288 = vmul.f32 %v460, %v2280
      %v2289 = vmul.f32 %v461, %v2280
      %v2290 = vadd.f32 %v2266, %v2282
      %v2291 = vadd.f32 %v2267, %v2283
      %v2292 = vadd.f32 %v2268, %v2284
      %v2293 = vadd.f32 %v2269, %v2285
      %v2294 = vadd.f32 %v2270, %v2286
      %v2295 = vadd.f32 %v2271, %v2287
      %v2296 = vadd.f32 %v2272, %v2288
      %v2297 = vadd.f32 %v2273, %v2289
      %v2298 = vlaneseq
      %v2299 = vshrl.u32 %v2298, 7
      %v2300 = vsub.s32 5, %v2299
      %v2301 = vrot.slane %v442, %v2300
      %2303 = vrot.lane.b32.xlu0 %v2301, 48
      %v2304 = vpop.permute.xlu0 %2303
      %v2306 = vmul.f32 %v554, %v2304
      %v2307 = vmul.f32 %v555, %v2304
      %v2308 = vmul.f32 %v556, %v2304
      %v2309 = vmul.f32 %v557, %v2304
      %v2310 = vmul.f32 %v558, %v2304
      %v2311 = vmul.f32 %v559, %v2304
      %v2312 = vmul.f32 %v560, %v2304
      %v2313 = vmul.f32 %v561, %v2304
      %v2314 = vadd.f32 %v2290, %v2306
      %v2315 = vadd.f32 %v2291, %v2307
      %v2316 = vadd.f32 %v2292, %v2308
      %v2317 = vadd.f32 %v2293, %v2309
      %v2318 = vadd.f32 %v2294, %v2310
      %v2319 = vadd.f32 %v2295, %v2311
      %v2320 = vadd.f32 %v2296, %v2312
      %v2321 = vadd.f32 %v2297, %v2313
      %v2322 = vlaneseq
      %v2323 = vshrl.u32 %v2322, 7
      %v2324 = vsub.s32 6, %v2323
      %v2325 = vrot.slane %v442, %v2324
      %2327 = vrot.lane.b32.xlu0 %v2325, 48
      %v2328 = vpop.permute.xlu0 %2327
      %v2330 = vmul.f32 %v555, %v2328
      %v2331 = vmul.f32 %v556, %v2328
      %v2332 = vmul.f32 %v557, %v2328
      %v2333 = vmul.f32 %v558, %v2328
      %v2334 = vmul.f32 %v559, %v2328
      %v2335 = vmul.f32 %v560, %v2328
      %v2336 = vmul.f32 %v561, %v2328
      %v2337 = vmul.f32 %v562, %v2328
      %v2338 = vadd.f32 %v2314, %v2330
      %v2339 = vadd.f32 %v2315, %v2331
      %v2340 = vadd.f32 %v2316, %v2332
      %v2341 = vadd.f32 %v2317, %v2333
      %v2342 = vadd.f32 %v2318, %v2334
      %v2343 = vadd.f32 %v2319, %v2335
      %v2344 = vadd.f32 %v2320, %v2336
      %v2345 = vadd.f32 %v2321, %v2337
      %v2346 = vlaneseq
      %v2347 = vshrl.u32 %v2346, 7
      %v2348 = vsub.s32 7, %v2347
      %v2349 = vrot.slane %v442, %v2348
      %2351 = vrot.lane.b32.xlu0 %v2349, 48
      %v2352 = vpop.permute.xlu0 %2351
      %v2354 = vmul.f32 %v556, %v2352
      %v2355 = vmul.f32 %v557, %v2352
      %v2356 = vmul.f32 %v558, %v2352
      %v2357 = vmul.f32 %v559, %v2352
      %v2358 = vmul.f32 %v560, %v2352
      %v2359 = vmul.f32 %v561, %v2352
      %v2360 = vmul.f32 %v562, %v2352
      %v2361 = vmul.f32 %v563, %v2352
      %v2362 = vadd.f32 %v2338, %v2354
      %v2363 = vadd.f32 %v2339, %v2355
      %v2364 = vadd.f32 %v2340, %v2356
      %v2365 = vadd.f32 %v2341, %v2357
      %v2366 = vadd.f32 %v2342, %v2358
      %v2367 = vadd.f32 %v2343, %v2359
      %v2368 = vadd.f32 %v2344, %v2360
      %v2369 = vadd.f32 %v2345, %v2361
      %v2370 = vlaneseq
      %v2371 = vshrl.u32 %v2370, 7
      %v2372 = vsub.s32 0, %v2371
      %v2373 = vrot.slane %v443, %v2372
      %2375 = vrot.lane.b32.xlu0 %v2373, 48
      %v2376 = vpop.permute.xlu0 %2375
      %v2378 = vmul.f32 %v557, %v2376
      %v2379 = vmul.f32 %v558, %v2376
      %v2380 = vmul.f32 %v559, %v2376
      %v2381 = vmul.f32 %v560, %v2376
      %v2382 = vmul.f32 %v561, %v2376
      %v2383 = vmul.f32 %v562, %v2376
      %v2384 = vmul.f32 %v563, %v2376
      %v2385 = vmul.f32 %v564, %v2376
      %v2386 = vadd.f32 %v2362, %v2378
      %v2387 = vadd.f32 %v2363, %v2379
      %v2388 = vadd.f32 %v2364, %v2380
      %v2389 = vadd.f32 %v2365, %v2381
      %v2390 = vadd.f32 %v2366, %v2382
      %v2391 = vadd.f32 %v2367, %v2383
      %v2392 = vadd.f32 %v2368, %v2384
      %v2393 = vadd.f32 %v2369, %v2385
      %v2394 = vlaneseq
      %v2395 = vshrl.u32 %v2394, 7
      %v2396 = vsub.s32 1, %v2395
      %v2397 = vrot.slane %v443, %v2396
      %2399 = vrot.lane.b32.xlu0 %v2397, 48
      %v2400 = vpop.permute.xlu0 %2399
      %v2402 = vmul.f32 %v558, %v2400
      %v2403 = vmul.f32 %v559, %v2400
      %v2404 = vmul.f32 %v560, %v2400
      %v2405 = vmul.f32 %v561, %v2400
      %v2406 = vmul.f32 %v562, %v2400
      %v2407 = vmul.f32 %v563, %v2400
      %v2408 = vmul.f32 %v564, %v2400
      %v2409 = vmul.f32 %v565, %v2400
      %v2410 = vadd.f32 %v2386, %v2402
      %v2411 = vadd.f32 %v2387, %v2403
      %v2412 = vadd.f32 %v2388, %v2404
      %v2413 = vadd.f32 %v2389, %v2405
      %v2414 = vadd.f32 %v2390, %v2406
      %v2415 = vadd.f32 %v2391, %v2407
      %v2416 = vadd.f32 %v2392, %v2408
      %v2417 = vadd.f32 %v2393, %v2409
      %v2418 = vlaneseq
      %v2419 = vshrl.u32 %v2418, 7
      %v2420 = vsub.s32 2, %v2419
      %v2421 = vrot.slane %v443, %v2420
      %2423 = vrot.lane.b32.xlu0 %v2421, 48
      %v2424 = vpop.permute.xlu0 %2423
      %v2426 = vmul.f32 %v666, %v2424
      %v2427 = vmul.f32 %v667, %v2424
      %v2428 = vmul.f32 %v668, %v2424
      %v2429 = vmul.f32 %v669, %v2424
      %v2430 = vmul.f32 %v670, %v2424
      %v2431 = vmul.f32 %v671, %v2424
      %v2432 = vmul.f32 %v672, %v2424
      %v2433 = vmul.f32 %v673, %v2424
      %v2434 = vadd.f32 %v2410, %v2426
      %v2435 = vadd.f32 %v2411, %v2427
      %v2436 = vadd.f32 %v2412, %v2428
      %v2437 = vadd.f32 %v2413, %v2429
      %v2438 = vadd.f32 %v2414, %v2430
      %v2439 = vadd.f32 %v2415, %v2431
      %v2440 = vadd.f32 %v2416, %v2432
      %v2441 = vadd.f32 %v2417, %v2433
      %v2442 = vlaneseq
      %v2443 = vshrl.u32 %v2442, 7
      %v2444 = vsub.s32 3, %v2443
      %v2445 = vrot.slane %v443, %v2444
      %2447 = vrot.lane.b32.xlu0 %v2445, 48
      %v2448 = vpop.permute.xlu0 %2447
      %v2450 = vmul.f32 %v667, %v2448
      %v2451 = vmul.f32 %v668, %v2448
      %v2452 = vmul.f32 %v669, %v2448
      %v2453 = vmul.f32 %v670, %v2448
      %v2454 = vmul.f32 %v671, %v2448
      %v2455 = vmul.f32 %v672, %v2448
      %v2456 = vmul.f32 %v673, %v2448
      %v2457 = vmul.f32 %v674, %v2448
      %v2458 = vadd.f32 %v2434, %v2450
      %v2459 = vadd.f32 %v2435, %v2451
      %v2460 = vadd.f32 %v2436, %v2452
      %v2461 = vadd.f32 %v2437, %v2453
      %v2462 = vadd.f32 %v2438, %v2454
      %v2463 = vadd.f32 %v2439, %v2455
      %v2464 = vadd.f32 %v2440, %v2456
      %v2465 = vadd.f32 %v2441, %v2457
      %v2466 = vlaneseq
      %v2467 = vshrl.u32 %v2466, 7
      %v2468 = vsub.s32 4, %v2467
      %v2469 = vrot.slane %v443, %v2468
      %2471 = vrot.lane.b32.xlu0 %v2469, 48
      %v2472 = vpop.permute.xlu0 %2471
      %v2474 = vmul.f32 %v668, %v2472
      %v2475 = vmul.f32 %v669, %v2472
      %v2476 = vmul.f32 %v670, %v2472
      %v2477 = vmul.f32 %v671, %v2472
      %v2478 = vmul.f32 %v672, %v2472
      %v2479 = vmul.f32 %v673, %v2472
      %v2480 = vmul.f32 %v674, %v2472
      %v2481 = vmul.f32 %v675, %v2472
      %v2482 = vadd.f32 %v2458, %v2474
      %v2483 = vadd.f32 %v2459, %v2475
      %v2484 = vadd.f32 %v2460, %v2476
      %v2485 = vadd.f32 %v2461, %v2477
      %v2486 = vadd.f32 %v2462, %v2478
      %v2487 = vadd.f32 %v2463, %v2479
      %v2488 = vadd.f32 %v2464, %v2480
      %v2489 = vadd.f32 %v2465, %v2481
      %v2490 = vlaneseq
      %v2491 = vshrl.u32 %v2490, 7
      %v2492 = vsub.s32 5, %v2491
      %v2493 = vrot.slane %v443, %v2492
      %2495 = vrot.lane.b32.xlu0 %v2493, 48
      %v2496 = vpop.permute.xlu0 %2495
      %v2498 = vmul.f32 %v669, %v2496
      %v2499 = vmul.f32 %v670, %v2496
      %v2500 = vmul.f32 %v671, %v2496
      %v2501 = vmul.f32 %v672, %v2496
      %v2502 = vmul.f32 %v673, %v2496
      %v2503 = vmul.f32 %v674, %v2496
      %v2504 = vmul.f32 %v675, %v2496
      %v2505 = vmul.f32 %v676, %v2496
      %v2506 = vadd.f32 %v2482, %v2498
      %v2507 = vadd.f32 %v2483, %v2499
      %v2508 = vadd.f32 %v2484, %v2500
      %v2509 = vadd.f32 %v2485, %v2501
      %v2510 = vadd.f32 %v2486, %v2502
      %v2511 = vadd.f32 %v2487, %v2503
      %v2512 = vadd.f32 %v2488, %v2504
      %v2513 = vadd.f32 %v2489, %v2505
      %v2514 = vlaneseq
      %v2515 = vshrl.u32 %v2514, 7
      %v2516 = vsub.s32 6, %v2515
      %v2517 = vrot.slane %v443, %v2516
      %2519 = vrot.lane.b32.xlu0 %v2517, 48
      %v2520 = vpop.permute.xlu0 %2519
      %v2522 = vmul.f32 %v670, %v2520
      %v2523 = vmul.f32 %v671, %v2520
      %v2524 = vmul.f32 %v672, %v2520
      %v2525 = vmul.f32 %v673, %v2520
      %v2526 = vmul.f32 %v674, %v2520
      %v2527 = vmul.f32 %v675, %v2520
      %v2528 = vmul.f32 %v676, %v2520
      %v2529 = vmul.f32 %v677, %v2520
      %v2530 = vadd.f32 %v2506, %v2522
      %v2531 = vadd.f32 %v2507, %v2523
      %v2532 = vadd.f32 %v2508, %v2524
      %v2533 = vadd.f32 %v2509, %v2525
      %v2534 = vadd.f32 %v2510, %v2526
      %v2535 = vadd.f32 %v2511, %v2527
      %v2536 = vadd.f32 %v2512, %v2528
      %v2537 = vadd.f32 %v2513, %v2529
      %v2538 = vlaneseq
      %v2539 = vshrl.u32 %v2538, 7
      %v2540 = vsub.s32 7, %v2539
      %v2541 = vrot.slane %v443, %v2540
      %2543 = vrot.lane.b32.xlu0 %v2541, 48
      %v2544 = vpop.permute.xlu0 %2543
      %v2546 = vmul.f32 %v778, %v2544
      %v2547 = vmul.f32 %v779, %v2544
      %v2548 = vmul.f32 %v780, %v2544
      %v2549 = vmul.f32 %v781, %v2544
      %v2550 = vmul.f32 %v782, %v2544
      %v2551 = vmul.f32 %v783, %v2544
      %v2552 = vmul.f32 %v784, %v2544
      %v2553 = vmul.f32 %v785, %v2544
      %v2554 = vadd.f32 %v2530, %v2546
      %v2555 = vadd.f32 %v2531, %v2547
      %v2556 = vadd.f32 %v2532, %v2548
      %v2557 = vadd.f32 %v2533, %v2549
      %v2558 = vadd.f32 %v2534, %v2550
      %v2559 = vadd.f32 %v2535, %v2551
      %v2560 = vadd.f32 %v2536, %v2552
      %v2561 = vadd.f32 %v2537, %v2553
      %v2562 = vlaneseq
      %v2563 = vshrl.u32 %v2562, 7
      %v2564 = vsub.s32 0, %v2563
      %v2565 = vrot.slane %v444, %v2564
      %2567 = vrot.lane.b32.xlu0 %v2565, 48
      %v2568 = vpop.permute.xlu0 %2567
      %v2570 = vmul.f32 %v779, %v2568
      %v2571 = vmul.f32 %v780, %v2568
      %v2572 = vmul.f32 %v781, %v2568
      %v2573 = vmul.f32 %v782, %v2568
      %v2574 = vmul.f32 %v783, %v2568
      %v2575 = vmul.f32 %v784, %v2568
      %v2576 = vmul.f32 %v785, %v2568
      %v2577 = vmul.f32 %v786, %v2568
      %v2578 = vadd.f32 %v2554, %v2570
      %v2579 = vadd.f32 %v2555, %v2571
      %v2580 = vadd.f32 %v2556, %v2572
      %v2581 = vadd.f32 %v2557, %v2573
      %v2582 = vadd.f32 %v2558, %v2574
      %v2583 = vadd.f32 %v2559, %v2575
      %v2584 = vadd.f32 %v2560, %v2576
      %v2585 = vadd.f32 %v2561, %v2577
      %v2586 = vlaneseq
      %v2587 = vshrl.u32 %v2586, 7
      %v2588 = vsub.s32 1, %v2587
      %v2589 = vrot.slane %v444, %v2588
      %2591 = vrot.lane.b32.xlu0 %v2589, 48
      %v2592 = vpop.permute.xlu0 %2591
      %v2594 = vmul.f32 %v780, %v2592
      %v2595 = vmul.f32 %v781, %v2592
      %v2596 = vmul.f32 %v782, %v2592
      %v2597 = vmul.f32 %v783, %v2592
      %v2598 = vmul.f32 %v784, %v2592
      %v2599 = vmul.f32 %v785, %v2592
      %v2600 = vmul.f32 %v786, %v2592
      %v2601 = vmul.f32 %v787, %v2592
      %v2602 = vadd.f32 %v2578, %v2594
      %v2603 = vadd.f32 %v2579, %v2595
      %v2604 = vadd.f32 %v2580, %v2596
      %v2605 = vadd.f32 %v2581, %v2597
      %v2606 = vadd.f32 %v2582, %v2598
      %v2607 = vadd.f32 %v2583, %v2599
      %v2608 = vadd.f32 %v2584, %v2600
      %v2609 = vadd.f32 %v2585, %v2601
      %v2610 = vlaneseq
      %v2611 = vshrl.u32 %v2610, 7
      %v2612 = vsub.s32 2, %v2611
      %v2613 = vrot.slane %v444, %v2612
      %2615 = vrot.lane.b32.xlu0 %v2613, 48
      %v2616 = vpop.permute.xlu0 %2615
      %v2618 = vmul.f32 %v781, %v2616
      %v2619 = vmul.f32 %v782, %v2616
      %v2620 = vmul.f32 %v783, %v2616
      %v2621 = vmul.f32 %v784, %v2616
      %v2622 = vmul.f32 %v785, %v2616
      %v2623 = vmul.f32 %v786, %v2616
      %v2624 = vmul.f32 %v787, %v2616
      %v2625 = vmul.f32 %v788, %v2616
      %v2626 = vadd.f32 %v2602, %v2618
      %v2627 = vadd.f32 %v2603, %v2619
      %v2628 = vadd.f32 %v2604, %v2620
      %v2629 = vadd.f32 %v2605, %v2621
      %v2630 = vadd.f32 %v2606, %v2622
      %v2631 = vadd.f32 %v2607, %v2623
      %v2632 = vadd.f32 %v2608, %v2624
      %v2633 = vadd.f32 %v2609, %v2625
      %v2634 = vlaneseq
      %v2635 = vshrl.u32 %v2634, 7
      %v2636 = vsub.s32 3, %v2635
      %v2637 = vrot.slane %v444, %v2636
      %2639 = vrot.lane.b32.xlu0 %v2637, 48
      %v2640 = vpop.permute.xlu0 %2639
      %v2642 = vmul.f32 %v782, %v2640
      %v2643 = vmul.f32 %v783, %v2640
      %v2644 = vmul.f32 %v784, %v2640
      %v2645 = vmul.f32 %v785, %v2640
      %v2646 = vmul.f32 %v786, %v2640
      %v2647 = vmul.f32 %v787, %v2640
      %v2648 = vmul.f32 %v788, %v2640
      %v2649 = vmul.f32 %v789, %v2640
      %v2650 = vadd.f32 %v2626, %v2642
      %v2651 = vadd.f32 %v2627, %v2643
      %v2652 = vadd.f32 %v2628, %v2644
      %v2653 = vadd.f32 %v2629, %v2645
      %v2654 = vadd.f32 %v2630, %v2646
      %v2655 = vadd.f32 %v2631, %v2647
      %v2656 = vadd.f32 %v2632, %v2648
      %v2657 = vadd.f32 %v2633, %v2649
      %v2658 = vlaneseq
      %v2659 = vshrl.u32 %v2658, 7
      %v2660 = vsub.s32 4, %v2659
      %v2661 = vrot.slane %v444, %v2660
      %2663 = vrot.lane.b32.xlu0 %v2661, 48
      %v2664 = vpop.permute.xlu0 %2663
      %v2666 = vmul.f32 %v890, %v2664
      %v2667 = vmul.f32 %v891, %v2664
      %v2668 = vmul.f32 %v892, %v2664
      %v2669 = vmul.f32 %v893, %v2664
      %v2670 = vmul.f32 %v894, %v2664
      %v2671 = vmul.f32 %v895, %v2664
      %v2672 = vmul.f32 %v896, %v2664
      %v2673 = vmul.f32 %v897, %v2664
      %v2674 = vadd.f32 %v2650, %v2666
      %v2675 = vadd.f32 %v2651, %v2667
      %v2676 = vadd.f32 %v2652, %v2668
      %v2677 = vadd.f32 %v2653, %v2669
      %v2678 = vadd.f32 %v2654, %v2670
      %v2679 = vadd.f32 %v2655, %v2671
      %v2680 = vadd.f32 %v2656, %v2672
      %v2681 = vadd.f32 %v2657, %v2673
      %v2682 = vlaneseq
      %v2683 = vshrl.u32 %v2682, 7
      %v2684 = vsub.s32 5, %v2683
      %v2685 = vrot.slane %v444, %v2684
      %2687 = vrot.lane.b32.xlu0 %v2685, 48
      %v2688 = vpop.permute.xlu0 %2687
      %v2690 = vmul.f32 %v891, %v2688
      %v2691 = vmul.f32 %v892, %v2688
      %v2692 = vmul.f32 %v893, %v2688
      %v2693 = vmul.f32 %v894, %v2688
      %v2694 = vmul.f32 %v895, %v2688
      %v2695 = vmul.f32 %v896, %v2688
      %v2696 = vmul.f32 %v897, %v2688
      %v2697 = vmul.f32 %v898, %v2688
      %v2698 = vadd.f32 %v2674, %v2690
      %v2699 = vadd.f32 %v2675, %v2691
      %v2700 = vadd.f32 %v2676, %v2692
      %v2701 = vadd.f32 %v2677, %v2693
      %v2702 = vadd.f32 %v2678, %v2694
      %v2703 = vadd.f32 %v2679, %v2695
      %v2704 = vadd.f32 %v2680, %v2696
      %v2705 = vadd.f32 %v2681, %v2697
      %v2706 = vlaneseq
      %v2707 = vshrl.u32 %v2706, 7
      %v2708 = vsub.s32 6, %v2707
      %v2709 = vrot.slane %v444, %v2708
      %2711 = vrot.lane.b32.xlu0 %v2709, 48
      %v2712 = vpop.permute.xlu0 %2711
      %v2714 = vmul.f32 %v892, %v2712
      %v2715 = vmul.f32 %v893, %v2712
      %v2716 = vmul.f32 %v894, %v2712
      %v2717 = vmul.f32 %v895, %v2712
      %v2718 = vmul.f32 %v896, %v2712
      %v2719 = vmul.f32 %v897, %v2712
      %v2720 = vmul.f32 %v898, %v2712
      %v2721 = vmul.f32 %v899, %v2712
      %v2722 = vadd.f32 %v2698, %v2714
      %v2723 = vadd.f32 %v2699, %v2715
      %v2724 = vadd.f32 %v2700, %v2716
      %v2725 = vadd.f32 %v2701, %v2717
      %v2726 = vadd.f32 %v2702, %v2718
      %v2727 = vadd.f32 %v2703, %v2719
      %v2728 = vadd.f32 %v2704, %v2720
      %v2729 = vadd.f32 %v2705, %v2721
      %v2730 = vlaneseq
      %v2731 = vshrl.u32 %v2730, 7
      %v2732 = vsub.s32 7, %v2731
      %v2733 = vrot.slane %v444, %v2732
      %2735 = vrot.lane.b32.xlu0 %v2733, 48
      %v2736 = vpop.permute.xlu0 %2735
      %v2738 = vmul.f32 %v893, %v2736
      %v2739 = vmul.f32 %v894, %v2736
      %v2740 = vmul.f32 %v895, %v2736
      %v2741 = vmul.f32 %v896, %v2736
      %v2742 = vmul.f32 %v897, %v2736
      %v2743 = vmul.f32 %v898, %v2736
      %v2744 = vmul.f32 %v899, %v2736
      %v2745 = vmul.f32 %v900, %v2736
      %v2746 = vadd.f32 %v2722, %v2738
      %v2747 = vadd.f32 %v2723, %v2739
      %v2748 = vadd.f32 %v2724, %v2740
      %v2749 = vadd.f32 %v2725, %v2741
      %v2750 = vadd.f32 %v2726, %v2742
      %v2751 = vadd.f32 %v2727, %v2743
      %v2752 = vadd.f32 %v2728, %v2744
      %v2753 = vadd.f32 %v2729, %v2745
      %v2754 = vlaneseq
      %v2755 = vshrl.u32 %v2754, 7
      %v2756 = vsub.s32 0, %v2755
      %v2757 = vrot.slane %v445, %v2756
      %2759 = vrot.lane.b32.xlu0 %v2757, 48
      %v2760 = vpop.permute.xlu0 %2759
      %v2762 = vmul.f32 %v894, %v2760
      %v2763 = vmul.f32 %v895, %v2760
      %v2764 = vmul.f32 %v896, %v2760
      %v2765 = vmul.f32 %v897, %v2760
      %v2766 = vmul.f32 %v898, %v2760
      %v2767 = vmul.f32 %v899, %v2760
      %v2768 = vmul.f32 %v900, %v2760
      %v2769 = vmul.f32 %v901, %v2760
      %v2770 = vadd.f32 %v2746, %v2762
      %v2771 = vadd.f32 %v2747, %v2763
      %v2772 = vadd.f32 %v2748, %v2764
      %v2773 = vadd.f32 %v2749, %v2765
      %v2774 = vadd.f32 %v2750, %v2766
      %v2775 = vadd.f32 %v2751, %v2767
      %v2776 = vadd.f32 %v2752, %v2768
      %v2777 = vadd.f32 %v2753, %v2769
      %v2778 = vlaneseq
      %v2779 = vshrl.u32 %v2778, 7
      %v2780 = vsub.s32 0, %v2779
      %v2781 = vrot.slane %v446, %v2780
      %2783 = vrot.lane.b32.xlu0 %v2781, 64
      %v2784 = vpop.permute.xlu0 %2783
      %v2786 = vmul.f32 %v450, %v2784
      %v2787 = vmul.f32 %v451, %v2784
      %v2788 = vmul.f32 %v452, %v2784
      %v2789 = vmul.f32 %v453, %v2784
      %v2790 = vmul.f32 %v454, %v2784
      %v2791 = vmul.f32 %v455, %v2784
      %v2792 = vmul.f32 %v456, %v2784
      %v2793 = vmul.f32 %v457, %v2784
      %v2794 = vlaneseq
      %v2795 = vshrl.u32 %v2794, 7
      %v2796 = vsub.s32 1, %v2795
      %v2797 = vrot.slane %v446, %v2796
      %2799 = vrot.lane.b32.xlu0 %v2797, 64
      %v2800 = vpop.permute.xlu0 %2799
      %v2802 = vmul.f32 %v451, %v2800
      %v2803 = vmul.f32 %v452, %v2800
      %v2804 = vmul.f32 %v453, %v2800
      %v2805 = vmul.f32 %v454, %v2800
      %v2806 = vmul.f32 %v455, %v2800
      %v2807 = vmul.f32 %v456, %v2800
      %v2808 = vmul.f32 %v457, %v2800
      %v2809 = vmul.f32 %v458, %v2800
      %v2810 = vadd.f32 %v2786, %v2802
      %v2811 = vadd.f32 %v2787, %v2803
      %v2812 = vadd.f32 %v2788, %v2804
      %v2813 = vadd.f32 %v2789, %v2805
      %v2814 = vadd.f32 %v2790, %v2806
      %v2815 = vadd.f32 %v2791, %v2807
      %v2816 = vadd.f32 %v2792, %v2808
      %v2817 = vadd.f32 %v2793, %v2809
      %v2818 = vlaneseq
      %v2819 = vshrl.u32 %v2818, 7
      %v2820 = vsub.s32 2, %v2819
      %v2821 = vrot.slane %v446, %v2820
      %2823 = vrot.lane.b32.xlu0 %v2821, 64
      %v2824 = vpop.permute.xlu0 %2823
      %v2826 = vmul.f32 %v452, %v2824
      %v2827 = vmul.f32 %v453, %v2824
      %v2828 = vmul.f32 %v454, %v2824
      %v2829 = vmul.f32 %v455, %v2824
      %v2830 = vmul.f32 %v456, %v2824
      %v2831 = vmul.f32 %v457, %v2824
      %v2832 = vmul.f32 %v458, %v2824
      %v2833 = vmul.f32 %v459, %v2824
      %v2834 = vadd.f32 %v2810, %v2826
      %v2835 = vadd.f32 %v2811, %v2827
      %v2836 = vadd.f32 %v2812, %v2828
      %v2837 = vadd.f32 %v2813, %v2829
      %v2838 = vadd.f32 %v2814, %v2830
      %v2839 = vadd.f32 %v2815, %v2831
      %v2840 = vadd.f32 %v2816, %v2832
      %v2841 = vadd.f32 %v2817, %v2833
      %v2842 = vlaneseq
      %v2843 = vshrl.u32 %v2842, 7
      %v2844 = vsub.s32 3, %v2843
      %v2845 = vrot.slane %v446, %v2844
      %2847 = vrot.lane.b32.xlu0 %v2845, 64
      %v2848 = vpop.permute.xlu0 %2847
      %v2850 = vmul.f32 %v453, %v2848
      %v2851 = vmul.f32 %v454, %v2848
      %v2852 = vmul.f32 %v455, %v2848
      %v2853 = vmul.f32 %v456, %v2848
      %v2854 = vmul.f32 %v457, %v2848
      %v2855 = vmul.f32 %v458, %v2848
      %v2856 = vmul.f32 %v459, %v2848
      %v2857 = vmul.f32 %v460, %v2848
      %v2858 = vadd.f32 %v2834, %v2850
      %v2859 = vadd.f32 %v2835, %v2851
      %v2860 = vadd.f32 %v2836, %v2852
      %v2861 = vadd.f32 %v2837, %v2853
      %v2862 = vadd.f32 %v2838, %v2854
      %v2863 = vadd.f32 %v2839, %v2855
      %v2864 = vadd.f32 %v2840, %v2856
      %v2865 = vadd.f32 %v2841, %v2857
      %v2866 = vlaneseq
      %v2867 = vshrl.u32 %v2866, 7
      %v2868 = vsub.s32 4, %v2867
      %v2869 = vrot.slane %v446, %v2868
      %2871 = vrot.lane.b32.xlu0 %v2869, 64
      %v2872 = vpop.permute.xlu0 %2871
      %v2874 = vmul.f32 %v454, %v2872
      %v2875 = vmul.f32 %v455, %v2872
      %v2876 = vmul.f32 %v456, %v2872
      %v2877 = vmul.f32 %v457, %v2872
      %v2878 = vmul.f32 %v458, %v2872
      %v2879 = vmul.f32 %v459, %v2872
      %v2880 = vmul.f32 %v460, %v2872
      %v2881 = vmul.f32 %v461, %v2872
      %v2882 = vadd.f32 %v2858, %v2874
      %v2883 = vadd.f32 %v2859, %v2875
      %v2884 = vadd.f32 %v2860, %v2876
      %v2885 = vadd.f32 %v2861, %v2877
      %v2886 = vadd.f32 %v2862, %v2878
      %v2887 = vadd.f32 %v2863, %v2879
      %v2888 = vadd.f32 %v2864, %v2880
      %v2889 = vadd.f32 %v2865, %v2881
      %v2890 = vlaneseq
      %v2891 = vshrl.u32 %v2890, 7
      %v2892 = vsub.s32 5, %v2891
      %v2893 = vrot.slane %v446, %v2892
      %2895 = vrot.lane.b32.xlu0 %v2893, 64
      %v2896 = vpop.permute.xlu0 %2895
      %v2898 = vmul.f32 %v554, %v2896
      %v2899 = vmul.f32 %v555, %v2896
      %v2900 = vmul.f32 %v556, %v2896
      %v2901 = vmul.f32 %v557, %v2896
      %v2902 = vmul.f32 %v558, %v2896
      %v2903 = vmul.f32 %v559, %v2896
      %v2904 = vmul.f32 %v560, %v2896
      %v2905 = vmul.f32 %v561, %v2896
      %v2906 = vadd.f32 %v2882, %v2898
      %v2907 = vadd.f32 %v2883, %v2899
      %v2908 = vadd.f32 %v2884, %v2900
      %v2909 = vadd.f32 %v2885, %v2901
      %v2910 = vadd.f32 %v2886, %v2902
      %v2911 = vadd.f32 %v2887, %v2903
      %v2912 = vadd.f32 %v2888, %v2904
      %v2913 = vadd.f32 %v2889, %v2905
      %v2914 = vlaneseq
      %v2915 = vshrl.u32 %v2914, 7
      %v2916 = vsub.s32 6, %v2915
      %v2917 = vrot.slane %v446, %v2916
      %2919 = vrot.lane.b32.xlu0 %v2917, 64
      %v2920 = vpop.permute.xlu0 %2919
      %v2922 = vmul.f32 %v555, %v2920
      %v2923 = vmul.f32 %v556, %v2920
      %v2924 = vmul.f32 %v557, %v2920
      %v2925 = vmul.f32 %v558, %v2920
      %v2926 = vmul.f32 %v559, %v2920
      %v2927 = vmul.f32 %v560, %v2920
      %v2928 = vmul.f32 %v561, %v2920
      %v2929 = vmul.f32 %v562, %v2920
      %v2930 = vadd.f32 %v2906, %v2922
      %v2931 = vadd.f32 %v2907, %v2923
      %v2932 = vadd.f32 %v2908, %v2924
      %v2933 = vadd.f32 %v2909, %v2925
      %v2934 = vadd.f32 %v2910, %v2926
      %v2935 = vadd.f32 %v2911, %v2927
      %v2936 = vadd.f32 %v2912, %v2928
      %v2937 = vadd.f32 %v2913, %v2929
      %v2938 = vlaneseq
      %v2939 = vshrl.u32 %v2938, 7
      %v2940 = vsub.s32 7, %v2939
      %v2941 = vrot.slane %v446, %v2940
      %2943 = vrot.lane.b32.xlu0 %v2941, 64
      %v2944 = vpop.permute.xlu0 %2943
      %v2946 = vmul.f32 %v556, %v2944
      %v2947 = vmul.f32 %v557, %v2944
      %v2948 = vmul.f32 %v558, %v2944
      %v2949 = vmul.f32 %v559, %v2944
      %v2950 = vmul.f32 %v560, %v2944
      %v2951 = vmul.f32 %v561, %v2944
      %v2952 = vmul.f32 %v562, %v2944
      %v2953 = vmul.f32 %v563, %v2944
      %v2954 = vadd.f32 %v2930, %v2946
      %v2955 = vadd.f32 %v2931, %v2947
      %v2956 = vadd.f32 %v2932, %v2948
      %v2957 = vadd.f32 %v2933, %v2949
      %v2958 = vadd.f32 %v2934, %v2950
      %v2959 = vadd.f32 %v2935, %v2951
      %v2960 = vadd.f32 %v2936, %v2952
      %v2961 = vadd.f32 %v2937, %v2953
      %v2962 = vlaneseq
      %v2963 = vshrl.u32 %v2962, 7
      %v2964 = vsub.s32 0, %v2963
      %v2965 = vrot.slane %v447, %v2964
      %2967 = vrot.lane.b32.xlu0 %v2965, 64
      %v2968 = vpop.permute.xlu0 %2967
      %v2970 = vmul.f32 %v557, %v2968
      %v2971 = vmul.f32 %v558, %v2968
      %v2972 = vmul.f32 %v559, %v2968
      %v2973 = vmul.f32 %v560, %v2968
      %v2974 = vmul.f32 %v561, %v2968
      %v2975 = vmul.f32 %v562, %v2968
      %v2976 = vmul.f32 %v563, %v2968
      %v2977 = vmul.f32 %v564, %v2968
      %v2978 = vadd.f32 %v2954, %v2970
      %v2979 = vadd.f32 %v2955, %v2971
      %v2980 = vadd.f32 %v2956, %v2972
      %v2981 = vadd.f32 %v2957, %v2973
      %v2982 = vadd.f32 %v2958, %v2974
      %v2983 = vadd.f32 %v2959, %v2975
      %v2984 = vadd.f32 %v2960, %v2976
      %v2985 = vadd.f32 %v2961, %v2977
      %v2986 = vlaneseq
      %v2987 = vshrl.u32 %v2986, 7
      %v2988 = vsub.s32 1, %v2987
      %v2989 = vrot.slane %v447, %v2988
      %2991 = vrot.lane.b32.xlu0 %v2989, 64
      %v2992 = vpop.permute.xlu0 %2991
      %v2994 = vmul.f32 %v558, %v2992
      %v2995 = vmul.f32 %v559, %v2992
      %v2996 = vmul.f32 %v560, %v2992
      %v2997 = vmul.f32 %v561, %v2992
      %v2998 = vmul.f32 %v562, %v2992
      %v2999 = vmul.f32 %v563, %v2992
      %v3000 = vmul.f32 %v564, %v2992
      %v3001 = vmul.f32 %v565, %v2992
      %v3002 = vadd.f32 %v2978, %v2994
      %v3003 = vadd.f32 %v2979, %v2995
      %v3004 = vadd.f32 %v2980, %v2996
      %v3005 = vadd.f32 %v2981, %v2997
      %v3006 = vadd.f32 %v2982, %v2998
      %v3007 = vadd.f32 %v2983, %v2999
      %v3008 = vadd.f32 %v2984, %v3000
      %v3009 = vadd.f32 %v2985, %v3001
      %v3010 = vlaneseq
      %v3011 = vshrl.u32 %v3010, 7
      %v3012 = vsub.s32 2, %v3011
      %v3013 = vrot.slane %v447, %v3012
      %3015 = vrot.lane.b32.xlu0 %v3013, 64
      %v3016 = vpop.permute.xlu0 %3015
      %v3018 = vmul.f32 %v666, %v3016
      %v3019 = vmul.f32 %v667, %v3016
      %v3020 = vmul.f32 %v668, %v3016
      %v3021 = vmul.f32 %v669, %v3016
      %v3022 = vmul.f32 %v670, %v3016
      %v3023 = vmul.f32 %v671, %v3016
      %v3024 = vmul.f32 %v672, %v3016
      %v3025 = vmul.f32 %v673, %v3016
      %v3026 = vadd.f32 %v3002, %v3018
      %v3027 = vadd.f32 %v3003, %v3019
      %v3028 = vadd.f32 %v3004, %v3020
      %v3029 = vadd.f32 %v3005, %v3021
      %v3030 = vadd.f32 %v3006, %v3022
      %v3031 = vadd.f32 %v3007, %v3023
      %v3032 = vadd.f32 %v3008, %v3024
      %v3033 = vadd.f32 %v3009, %v3025
      %v3034 = vlaneseq
      %v3035 = vshrl.u32 %v3034, 7
      %v3036 = vsub.s32 3, %v3035
      %v3037 = vrot.slane %v447, %v3036
      %3039 = vrot.lane.b32.xlu0 %v3037, 64
      %v3040 = vpop.permute.xlu0 %3039
      %v3042 = vmul.f32 %v667, %v3040
      %v3043 = vmul.f32 %v668, %v3040
      %v3044 = vmul.f32 %v669, %v3040
      %v3045 = vmul.f32 %v670, %v3040
      %v3046 = vmul.f32 %v671, %v3040
      %v3047 = vmul.f32 %v672, %v3040
      %v3048 = vmul.f32 %v673, %v3040
      %v3049 = vmul.f32 %v674, %v3040
      %v3050 = vadd.f32 %v3026, %v3042
      %v3051 = vadd.f32 %v3027, %v3043
      %v3052 = vadd.f32 %v3028, %v3044
      %v3053 = vadd.f32 %v3029, %v3045
      %v3054 = vadd.f32 %v3030, %v3046
      %v3055 = vadd.f32 %v3031, %v3047
      %v3056 = vadd.f32 %v3032, %v3048
      %v3057 = vadd.f32 %v3033, %v3049
      %v3058 = vlaneseq
      %v3059 = vshrl.u32 %v3058, 7
      %v3060 = vsub.s32 4, %v3059
      %v3061 = vrot.slane %v447, %v3060
      %3063 = vrot.lane.b32.xlu0 %v3061, 64
      %v3064 = vpop.permute.xlu0 %3063
      %v3066 = vmul.f32 %v668, %v3064
      %v3067 = vmul.f32 %v669, %v3064
      %v3068 = vmul.f32 %v670, %v3064
      %v3069 = vmul.f32 %v671, %v3064
      %v3070 = vmul.f32 %v672, %v3064
      %v3071 = vmul.f32 %v673, %v3064
      %v3072 = vmul.f32 %v674, %v3064
      %v3073 = vmul.f32 %v675, %v3064
      %v3074 = vadd.f32 %v3050, %v3066
      %v3075 = vadd.f32 %v3051, %v3067
      %v3076 = vadd.f32 %v3052, %v3068
      %v3077 = vadd.f32 %v3053, %v3069
      %v3078 = vadd.f32 %v3054, %v3070
      %v3079 = vadd.f32 %v3055, %v3071
      %v3080 = vadd.f32 %v3056, %v3072
      %v3081 = vadd.f32 %v3057, %v3073
      %v3082 = vlaneseq
      %v3083 = vshrl.u32 %v3082, 7
      %v3084 = vsub.s32 5, %v3083
      %v3085 = vrot.slane %v447, %v3084
      %3087 = vrot.lane.b32.xlu0 %v3085, 64
      %v3088 = vpop.permute.xlu0 %3087
      %v3090 = vmul.f32 %v669, %v3088
      %v3091 = vmul.f32 %v670, %v3088
      %v3092 = vmul.f32 %v671, %v3088
      %v3093 = vmul.f32 %v672, %v3088
      %v3094 = vmul.f32 %v673, %v3088
      %v3095 = vmul.f32 %v674, %v3088
      %v3096 = vmul.f32 %v675, %v3088
      %v3097 = vmul.f32 %v676, %v3088
      %v3098 = vadd.f32 %v3074, %v3090
      %v3099 = vadd.f32 %v3075, %v3091
      %v3100 = vadd.f32 %v3076, %v3092
      %v3101 = vadd.f32 %v3077, %v3093
      %v3102 = vadd.f32 %v3078, %v3094
      %v3103 = vadd.f32 %v3079, %v3095
      %v3104 = vadd.f32 %v3080, %v3096
      %v3105 = vadd.f32 %v3081, %v3097
      %v3106 = vlaneseq
      %v3107 = vshrl.u32 %v3106, 7
      %v3108 = vsub.s32 6, %v3107
      %v3109 = vrot.slane %v447, %v3108
      %3111 = vrot.lane.b32.xlu0 %v3109, 64
      %v3112 = vpop.permute.xlu0 %3111
      %v3114 = vmul.f32 %v670, %v3112
      %v3115 = vmul.f32 %v671, %v3112
      %v3116 = vmul.f32 %v672, %v3112
      %v3117 = vmul.f32 %v673, %v3112
      %v3118 = vmul.f32 %v674, %v3112
      %v3119 = vmul.f32 %v675, %v3112
      %v3120 = vmul.f32 %v676, %v3112
      %v3121 = vmul.f32 %v677, %v3112
      %v3122 = vadd.f32 %v3098, %v3114
      %v3123 = vadd.f32 %v3099, %v3115
      %v3124 = vadd.f32 %v3100, %v3116
      %v3125 = vadd.f32 %v3101, %v3117
      %v3126 = vadd.f32 %v3102, %v3118
      %v3127 = vadd.f32 %v3103, %v3119
      %v3128 = vadd.f32 %v3104, %v3120
      %v3129 = vadd.f32 %v3105, %v3121
      %v3130 = vlaneseq
      %v3131 = vshrl.u32 %v3130, 7
      %v3132 = vsub.s32 7, %v3131
      %v3133 = vrot.slane %v447, %v3132
      %3135 = vrot.lane.b32.xlu0 %v3133, 64
      %v3136 = vpop.permute.xlu0 %3135
      %v3138 = vmul.f32 %v778, %v3136
      %v3139 = vmul.f32 %v779, %v3136
      %v3140 = vmul.f32 %v780, %v3136
      %v3141 = vmul.f32 %v781, %v3136
      %v3142 = vmul.f32 %v782, %v3136
      %v3143 = vmul.f32 %v783, %v3136
      %v3144 = vmul.f32 %v784, %v3136
      %v3145 = vmul.f32 %v785, %v3136
      %v3146 = vadd.f32 %v3122, %v3138
      %v3147 = vadd.f32 %v3123, %v3139
      %v3148 = vadd.f32 %v3124, %v3140
      %v3149 = vadd.f32 %v3125, %v3141
      %v3150 = vadd.f32 %v3126, %v3142
      %v3151 = vadd.f32 %v3127, %v3143
      %v3152 = vadd.f32 %v3128, %v3144
      %v3153 = vadd.f32 %v3129, %v3145
      %v3154 = vlaneseq
      %v3155 = vshrl.u32 %v3154, 7
      %v3156 = vsub.s32 0, %v3155
      %v3157 = vrot.slane %v448, %v3156
      %3159 = vrot.lane.b32.xlu0 %v3157, 64
      %v3160 = vpop.permute.xlu0 %3159
      %v3162 = vmul.f32 %v779, %v3160
      %v3163 = vmul.f32 %v780, %v3160
      %v3164 = vmul.f32 %v781, %v3160
      %v3165 = vmul.f32 %v782, %v3160
      %v3166 = vmul.f32 %v783, %v3160
      %v3167 = vmul.f32 %v784, %v3160
      %v3168 = vmul.f32 %v785, %v3160
      %v3169 = vmul.f32 %v786, %v3160
      %v3170 = vadd.f32 %v3146, %v3162
      %v3171 = vadd.f32 %v3147, %v3163
      %v3172 = vadd.f32 %v3148, %v3164
      %v3173 = vadd.f32 %v3149, %v3165
      %v3174 = vadd.f32 %v3150, %v3166
      %v3175 = vadd.f32 %v3151, %v3167
      %v3176 = vadd.f32 %v3152, %v3168
      %v3177 = vadd.f32 %v3153, %v3169
      %v3178 = vlaneseq
      %v3179 = vshrl.u32 %v3178, 7
      %v3180 = vsub.s32 1, %v3179
      %v3181 = vrot.slane %v448, %v3180
      %3183 = vrot.lane.b32.xlu0 %v3181, 64
      %v3184 = vpop.permute.xlu0 %3183
      %v3186 = vmul.f32 %v780, %v3184
      %v3187 = vmul.f32 %v781, %v3184
      %v3188 = vmul.f32 %v782, %v3184
      %v3189 = vmul.f32 %v783, %v3184
      %v3190 = vmul.f32 %v784, %v3184
      %v3191 = vmul.f32 %v785, %v3184
      %v3192 = vmul.f32 %v786, %v3184
      %v3193 = vmul.f32 %v787, %v3184
      %v3194 = vadd.f32 %v3170, %v3186
      %v3195 = vadd.f32 %v3171, %v3187
      %v3196 = vadd.f32 %v3172, %v3188
      %v3197 = vadd.f32 %v3173, %v3189
      %v3198 = vadd.f32 %v3174, %v3190
      %v3199 = vadd.f32 %v3175, %v3191
      %v3200 = vadd.f32 %v3176, %v3192
      %v3201 = vadd.f32 %v3177, %v3193
      %v3202 = vlaneseq
      %v3203 = vshrl.u32 %v3202, 7
      %v3204 = vsub.s32 2, %v3203
      %v3205 = vrot.slane %v448, %v3204
      %3207 = vrot.lane.b32.xlu0 %v3205, 64
      %v3208 = vpop.permute.xlu0 %3207
      %v3210 = vmul.f32 %v781, %v3208
      %v3211 = vmul.f32 %v782, %v3208
      %v3212 = vmul.f32 %v783, %v3208
      %v3213 = vmul.f32 %v784, %v3208
      %v3214 = vmul.f32 %v785, %v3208
      %v3215 = vmul.f32 %v786, %v3208
      %v3216 = vmul.f32 %v787, %v3208
      %v3217 = vmul.f32 %v788, %v3208
      %v3218 = vadd.f32 %v3194, %v3210
      %v3219 = vadd.f32 %v3195, %v3211
      %v3220 = vadd.f32 %v3196, %v3212
      %v3221 = vadd.f32 %v3197, %v3213
      %v3222 = vadd.f32 %v3198, %v3214
      %v3223 = vadd.f32 %v3199, %v3215
      %v3224 = vadd.f32 %v3200, %v3216
      %v3225 = vadd.f32 %v3201, %v3217
      %v3226 = vlaneseq
      %v3227 = vshrl.u32 %v3226, 7
      %v3228 = vsub.s32 3, %v3227
      %v3229 = vrot.slane %v448, %v3228
      %3231 = vrot.lane.b32.xlu0 %v3229, 64
      %v3232 = vpop.permute.xlu0 %3231
      %v3234 = vmul.f32 %v782, %v3232
      %v3235 = vmul.f32 %v783, %v3232
      %v3236 = vmul.f32 %v784, %v3232
      %v3237 = vmul.f32 %v785, %v3232
      %v3238 = vmul.f32 %v786, %v3232
      %v3239 = vmul.f32 %v787, %v3232
      %v3240 = vmul.f32 %v788, %v3232
      %v3241 = vmul.f32 %v789, %v3232
      %v3242 = vadd.f32 %v3218, %v3234
      %v3243 = vadd.f32 %v3219, %v3235
      %v3244 = vadd.f32 %v3220, %v3236
      %v3245 = vadd.f32 %v3221, %v3237
      %v3246 = vadd.f32 %v3222, %v3238
      %v3247 = vadd.f32 %v3223, %v3239
      %v3248 = vadd.f32 %v3224, %v3240
      %v3249 = vadd.f32 %v3225, %v3241
      %v3250 = vlaneseq
      %v3251 = vshrl.u32 %v3250, 7
      %v3252 = vsub.s32 4, %v3251
      %v3253 = vrot.slane %v448, %v3252
      %3255 = vrot.lane.b32.xlu0 %v3253, 64
      %v3256 = vpop.permute.xlu0 %3255
      %v3258 = vmul.f32 %v890, %v3256
      %v3259 = vmul.f32 %v891, %v3256
      %v3260 = vmul.f32 %v892, %v3256
      %v3261 = vmul.f32 %v893, %v3256
      %v3262 = vmul.f32 %v894, %v3256
      %v3263 = vmul.f32 %v895, %v3256
      %v3264 = vmul.f32 %v896, %v3256
      %v3265 = vmul.f32 %v897, %v3256
      %v3266 = vadd.f32 %v3242, %v3258
      %v3267 = vadd.f32 %v3243, %v3259
      %v3268 = vadd.f32 %v3244, %v3260
      %v3269 = vadd.f32 %v3245, %v3261
      %v3270 = vadd.f32 %v3246, %v3262
      %v3271 = vadd.f32 %v3247, %v3263
      %v3272 = vadd.f32 %v3248, %v3264
      %v3273 = vadd.f32 %v3249, %v3265
      %v3274 = vlaneseq
      %v3275 = vshrl.u32 %v3274, 7
      %v3276 = vsub.s32 5, %v3275
      %v3277 = vrot.slane %v448, %v3276
      %3279 = vrot.lane.b32.xlu0 %v3277, 64
      %v3280 = vpop.permute.xlu0 %3279
      %v3282 = vmul.f32 %v891, %v3280
      %v3283 = vmul.f32 %v892, %v3280
      %v3284 = vmul.f32 %v893, %v3280
      %v3285 = vmul.f32 %v894, %v3280
      %v3286 = vmul.f32 %v895, %v3280
      %v3287 = vmul.f32 %v896, %v3280
      %v3288 = vmul.f32 %v897, %v3280
      %v3289 = vmul.f32 %v898, %v3280
      %v3290 = vadd.f32 %v3266, %v3282
      %v3291 = vadd.f32 %v3267, %v3283
      %v3292 = vadd.f32 %v3268, %v3284
      %v3293 = vadd.f32 %v3269, %v3285
      %v3294 = vadd.f32 %v3270, %v3286
      %v3295 = vadd.f32 %v3271, %v3287
      %v3296 = vadd.f32 %v3272, %v3288
      %v3297 = vadd.f32 %v3273, %v3289
      %v3298 = vlaneseq
      %v3299 = vshrl.u32 %v3298, 7
      %v3300 = vsub.s32 6, %v3299
      %v3301 = vrot.slane %v448, %v3300
      %3303 = vrot.lane.b32.xlu0 %v3301, 64
      %v3304 = vpop.permute.xlu0 %3303
      %v3306 = vmul.f32 %v892, %v3304
      %v3307 = vmul.f32 %v893, %v3304
      %v3308 = vmul.f32 %v894, %v3304
      %v3309 = vmul.f32 %v895, %v3304
      %v3310 = vmul.f32 %v896, %v3304
      %v3311 = vmul.f32 %v897, %v3304
      %v3312 = vmul.f32 %v898, %v3304
      %v3313 = vmul.f32 %v899, %v3304
      %v3314 = vadd.f32 %v3290, %v3306
      %v3315 = vadd.f32 %v3291, %v3307
      %v3316 = vadd.f32 %v3292, %v3308
      %v3317 = vadd.f32 %v3293, %v3309
      %v3318 = vadd.f32 %v3294, %v3310
      %v3319 = vadd.f32 %v3295, %v3311
      %v3320 = vadd.f32 %v3296, %v3312
      %v3321 = vadd.f32 %v3297, %v3313
      %v3322 = vlaneseq
      %v3323 = vshrl.u32 %v3322, 7
      %v3324 = vsub.s32 7, %v3323
      %v3325 = vrot.slane %v448, %v3324
      %3327 = vrot.lane.b32.xlu0 %v3325, 64
      %v3328 = vpop.permute.xlu0 %3327
      %v3330 = vmul.f32 %v893, %v3328
      %v3331 = vmul.f32 %v894, %v3328
      %v3332 = vmul.f32 %v895, %v3328
      %v3333 = vmul.f32 %v896, %v3328
      %v3334 = vmul.f32 %v897, %v3328
      %v3335 = vmul.f32 %v898, %v3328
      %v3336 = vmul.f32 %v899, %v3328
      %v3337 = vmul.f32 %v900, %v3328
      %v3338 = vadd.f32 %v3314, %v3330
      %v3339 = vadd.f32 %v3315, %v3331
      %v3340 = vadd.f32 %v3316, %v3332
      %v3341 = vadd.f32 %v3317, %v3333
      %v3342 = vadd.f32 %v3318, %v3334
      %v3343 = vadd.f32 %v3319, %v3335
      %v3344 = vadd.f32 %v3320, %v3336
      %v3345 = vadd.f32 %v3321, %v3337
      %v3346 = vlaneseq
      %v3347 = vshrl.u32 %v3346, 7
      %v3348 = vsub.s32 0, %v3347
      %v3349 = vrot.slane %v449, %v3348
      %3351 = vrot.lane.b32.xlu0 %v3349, 64
      %v3352 = vpop.permute.xlu0 %3351
      %v3354 = vmul.f32 %v894, %v3352
      %v3355 = vmul.f32 %v895, %v3352
      %v3356 = vmul.f32 %v896, %v3352
      %v3357 = vmul.f32 %v897, %v3352
      %v3358 = vmul.f32 %v898, %v3352
      %v3359 = vmul.f32 %v899, %v3352
      %v3360 = vmul.f32 %v900, %v3352
      %v3361 = vmul.f32 %v901, %v3352
      %v3362 = vadd.f32 %v3338, %v3354
      %v3363 = vadd.f32 %v3339, %v3355
      %v3364 = vadd.f32 %v3340, %v3356
      %v3365 = vadd.f32 %v3341, %v3357
      %v3366 = vadd.f32 %v3342, %v3358
      %v3367 = vadd.f32 %v3343, %v3359
      %v3368 = vadd.f32 %v3344, %v3360
      %v3369 = vadd.f32 %v3345, %v3361
      %3378 = vrot.lane.b32.xlu0 %v1586, 112
      %v3379 = vpop.permute.xlu0 %3378
      %3380 = vrot.lane.b32.xlu0 %v1587, 112
      %v3381 = vpop.permute.xlu0 %3380
      %3382 = vrot.lane.b32.xlu0 %v1588, 112
      %v3383 = vpop.permute.xlu0 %3382
      %3384 = vrot.lane.b32.xlu0 %v1589, 112
      %v3385 = vpop.permute.xlu0 %3384
      %3386 = vrot.lane.b32.xlu0 %v1590, 112
      %v3387 = vpop.permute.xlu0 %3386
      %3388 = vrot.lane.b32.xlu0 %v1591, 112
      %v3389 = vpop.permute.xlu0 %3388
      %3390 = vrot.lane.b32.xlu0 %v1592, 112
      %v3391 = vpop.permute.xlu0 %3390
      %3392 = vrot.lane.b32.xlu0 %v1593, 112
      %v3393 = vpop.permute.xlu0 %3392
      %v3402 = vadd.f32 %v994, %v3379
      %v3403 = vadd.f32 %v995, %v3381
      %v3404 = vadd.f32 %v996, %v3383
      %v3405 = vadd.f32 %v997, %v3385
      %v3406 = vadd.f32 %v998, %v3387
      %v3407 = vadd.f32 %v999, %v3389
      %v3408 = vadd.f32 %v1000, %v3391
      %v3409 = vadd.f32 %v1001, %v3393
      %3418 = vrot.lane.b32.xlu0 %v2770, 112
      %v3419 = vpop.permute.xlu0 %3418
      %3420 = vrot.lane.b32.xlu0 %v2771, 112
      %v3421 = vpop.permute.xlu0 %3420
      %3422 = vrot.lane.b32.xlu0 %v2772, 112
      %v3423 = vpop.permute.xlu0 %3422
      %3424 = vrot.lane.b32.xlu0 %v2773, 112
      %v3425 = vpop.permute.xlu0 %3424
      %3426 = vrot.lane.b32.xlu0 %v2774, 112
      %v3427 = vpop.permute.xlu0 %3426
      %3428 = vrot.lane.b32.xlu0 %v2775, 112
      %v3429 = vpop.permute.xlu0 %3428
      %3430 = vrot.lane.b32.xlu0 %v2776, 112
      %v3431 = vpop.permute.xlu0 %3430
      %3432 = vrot.lane.b32.xlu0 %v2777, 112
      %v3433 = vpop.permute.xlu0 %3432
      %v3442 = vadd.f32 %v2178, %v3419
      %v3443 = vadd.f32 %v2179, %v3421
      %v3444 = vadd.f32 %v2180, %v3423
      %v3445 = vadd.f32 %v2181, %v3425
      %v3446 = vadd.f32 %v2182, %v3427
      %v3447 = vadd.f32 %v2183, %v3429
      %v3448 = vadd.f32 %v2184, %v3431
      %v3449 = vadd.f32 %v2185, %v3433
      %3458 = vrot.lane.b32.xlu0 %v3442, 96
      %v3459 = vpop.permute.xlu0 %3458
      %3460 = vrot.lane.b32.xlu0 %v3443, 96
      %v3461 = vpop.permute.xlu0 %3460
      %3462 = vrot.lane.b32.xlu0 %v3444, 96
      %v3463 = vpop.permute.xlu0 %3462
      %3464 = vrot.lane.b32.xlu0 %v3445, 96
      %v3465 = vpop.permute.xlu0 %3464
      %3466 = vrot.lane.b32.xlu0 %v3446, 96
      %v3467 = vpop.permute.xlu0 %3466
      %3468 = vrot.lane.b32.xlu0 %v3447, 96
      %v3469 = vpop.permute.xlu0 %3468
      %3470 = vrot.lane.b32.xlu0 %v3448, 96
      %v3471 = vpop.permute.xlu0 %3470
      %3472 = vrot.lane.b32.xlu0 %v3449, 96
      %v3473 = vpop.permute.xlu0 %3472
      %v3482 = vadd.f32 %v3402, %v3459
      %v3483 = vadd.f32 %v3403, %v3461
      %v3484 = vadd.f32 %v3404, %v3463
      %v3485 = vadd.f32 %v3405, %v3465
      %v3486 = vadd.f32 %v3406, %v3467
      %v3487 = vadd.f32 %v3407, %v3469
      %v3488 = vadd.f32 %v3408, %v3471
      %v3489 = vadd.f32 %v3409, %v3473
      %3498 = vrot.lane.b32.xlu0 %v3362, 64
      %v3499 = vpop.permute.xlu0 %3498
      %3500 = vrot.lane.b32.xlu0 %v3363, 64
      %v3501 = vpop.permute.xlu0 %3500
      %3502 = vrot.lane.b32.xlu0 %v3364, 64
      %v3503 = vpop.permute.xlu0 %3502
      %3504 = vrot.lane.b32.xlu0 %v3365, 64
      %v3505 = vpop.permute.xlu0 %3504
      %3506 = vrot.lane.b32.xlu0 %v3366, 64
      %v3507 = vpop.permute.xlu0 %3506
      %3508 = vrot.lane.b32.xlu0 %v3367, 64
      %v3509 = vpop.permute.xlu0 %3508
      %3510 = vrot.lane.b32.xlu0 %v3368, 64
      %v3511 = vpop.permute.xlu0 %3510
      %3512 = vrot.lane.b32.xlu0 %v3369, 64
      %v3513 = vpop.permute.xlu0 %3512
      %v3522 = vadd.f32 %v3482, %v3499
      %v3523 = vadd.f32 %v3483, %v3501
      %v3524 = vadd.f32 %v3484, %v3503
      %v3525 = vadd.f32 %v3485, %v3505
      %v3526 = vadd.f32 %v3486, %v3507
      %v3527 = vadd.f32 %v3487, %v3509
      %v3528 = vadd.f32 %v3488, %v3511
      %v3529 = vadd.f32 %v3489, %v3513
      %v3530 = vld [vmem:[%s2] sm:$0x1]
      %v3532 = vlaneseq
      %v3533 = vshrl.u32 %v3532, 7
      %v3534 = vsub.s32 0, %v3533
      %v3535 = vrot.slane %v3530, %v3534
      %v3537 = vadd.f32 %v3522, %v3535
      %v3538 = vadd.f32 %v3523, %v3535
      %v3539 = vadd.f32 %v3524, %v3535
      %v3540 = vadd.f32 %v3525, %v3535
      %v3541 = vadd.f32 %v3526, %v3535
      %v3542 = vadd.f32 %v3527, %v3535
      %v3543 = vadd.f32 %v3528, %v3535
      %v3544 = vadd.f32 %v3529, %v3535
      %v3545 = vmul.f32 %v3537, 0.5
      %v3546 = vmul.f32 %v3538, 0.5
      %v3547 = vmul.f32 %v3539, 0.5
      %v3548 = vmul.f32 %v3540, 0.5
      %v3549 = vmul.f32 %v3541, 0.5
      %v3550 = vmul.f32 %v3542, 0.5
      %v3551 = vmul.f32 %v3543, 0.5
      %v3552 = vmul.f32 %v3544, 0.5
      %v3553 = vmul.f32 %v3537, 0.70710677
      %v3554 = vmul.f32 %v3538, 0.70710677
      %v3555 = vmul.f32 %v3539, 0.70710677
      %v3556 = vmul.f32 %v3540, 0.70710677
      %v3557 = vmul.f32 %v3541, 0.70710677
      %v3558 = vmul.f32 %v3542, 0.70710677
      %v3559 = vmul.f32 %v3543, 0.70710677
      %v3560 = vmul.f32 %v3544, 0.70710677
      %v3561 = vand.u32 2147483647, %v3553
      %v3562 = vand.u32 2147483647, %v3554
      %v3563 = vand.u32 2147483647, %v3555
      %v3564 = vand.u32 2147483647, %v3556
      %v3565 = vand.u32 2147483647, %v3557
      %v3566 = vand.u32 2147483647, %v3558
      %v3567 = vand.u32 2147483647, %v3559
      %v3568 = vand.u32 2147483647, %v3560
      %v3569 = vmul.f32 %v3561, 0.3275911
      %v3570 = vmul.f32 %v3562, 0.3275911
      %v3571 = vmul.f32 %v3563, 0.3275911
      %v3572 = vmul.f32 %v3564, 0.3275911
      %v3573 = vmul.f32 %v3565, 0.3275911
      %v3574 = vmul.f32 %v3566, 0.3275911
      %v3575 = vmul.f32 %v3567, 0.3275911
      %v3576 = vmul.f32 %v3568, 0.3275911
      %v3577 = vadd.f32 %v3569, 1.0
      %v3578 = vadd.f32 %v3570, 1.0
      %v3579 = vadd.f32 %v3571, 1.0
      %v3580 = vadd.f32 %v3572, 1.0
      %v3581 = vadd.f32 %v3573, 1.0
      %v3582 = vadd.f32 %v3574, 1.0
      %v3583 = vadd.f32 %v3575, 1.0
      %v3584 = vadd.f32 %v3576, 1.0
      %v3585 = vrcp.pop %v3577
      %v3586 = vmul.f32 1.0, %v3585
      %v3587 = vrcp.pop %v3578
      %v3588 = vmul.f32 1.0, %v3587
      %v3589 = vrcp.pop %v3579
      %v3590 = vmul.f32 1.0, %v3589
      %v3591 = vrcp.pop %v3580
      %v3592 = vmul.f32 1.0, %v3591
      %v3593 = vrcp.pop %v3581
      %v3594 = vmul.f32 1.0, %v3593
      %v3595 = vrcp.pop %v3582
      %v3596 = vmul.f32 1.0, %v3595
      %v3597 = vrcp.pop %v3583
      %v3598 = vmul.f32 1.0, %v3597
      %v3599 = vrcp.pop %v3584
      %v3600 = vmul.f32 1.0, %v3599
      %v3601 = vmul.f32 %v3586, 1.0614054
      %v3602 = vmul.f32 %v3588, 1.0614054
      %v3603 = vmul.f32 %v3590, 1.0614054
      %v3604 = vmul.f32 %v3592, 1.0614054
      %v3605 = vmul.f32 %v3594, 1.0614054
      %v3606 = vmul.f32 %v3596, 1.0614054
      %v3607 = vmul.f32 %v3598, 1.0614054
      %v3608 = vmul.f32 %v3600, 1.0614054
      %v3609 = vadd.f32 %v3601, -1.4531521
      %v3610 = vadd.f32 %v3602, -1.4531521
      %v3611 = vadd.f32 %v3603, -1.4531521
      %v3612 = vadd.f32 %v3604, -1.4531521
      %v3613 = vadd.f32 %v3605, -1.4531521
      %v3614 = vadd.f32 %v3606, -1.4531521
      %v3615 = vadd.f32 %v3607, -1.4531521
      %v3616 = vadd.f32 %v3608, -1.4531521
      %v3617 = vmul.f32 %v3586, %v3609
      %v3618 = vmul.f32 %v3588, %v3610
      %v3619 = vmul.f32 %v3590, %v3611
      %v3620 = vmul.f32 %v3592, %v3612
      %v3621 = vmul.f32 %v3594, %v3613
      %v3622 = vmul.f32 %v3596, %v3614
      %v3623 = vmul.f32 %v3598, %v3615
      %v3624 = vmul.f32 %v3600, %v3616
      %v3625 = vadd.f32 %v3617, 1.4214138
      %v3626 = vadd.f32 %v3618, 1.4214138
      %v3627 = vadd.f32 %v3619, 1.4214138
      %v3628 = vadd.f32 %v3620, 1.4214138
      %v3629 = vadd.f32 %v3621, 1.4214138
      %v3630 = vadd.f32 %v3622, 1.4214138
      %v3631 = vadd.f32 %v3623, 1.4214138
      %v3632 = vadd.f32 %v3624, 1.4214138
      %v3633 = vmul.f32 %v3586, %v3625
      %v3634 = vmul.f32 %v3588, %v3626
      %v3635 = vmul.f32 %v3590, %v3627
      %v3636 = vmul.f32 %v3592, %v3628
      %v3637 = vmul.f32 %v3594, %v3629
      %v3638 = vmul.f32 %v3596, %v3630
      %v3639 = vmul.f32 %v3598, %v3631
      %v3640 = vmul.f32 %v3600, %v3632
      %v3641 = vadd.f32 %v3633, -0.28449672
      %v3642 = vadd.f32 %v3634, -0.28449672
      %v3643 = vadd.f32 %v3635, -0.28449672
      %v3644 = vadd.f32 %v3636, -0.28449672
      %v3645 = vadd.f32 %v3637, -0.28449672
      %v3646 = vadd.f32 %v3638, -0.28449672
      %v3647 = vadd.f32 %v3639, -0.28449672
      %v3648 = vadd.f32 %v3640, -0.28449672
      %v3649 = vmul.f32 %v3586, %v3641
      %v3650 = vmul.f32 %v3588, %v3642
      %v3651 = vmul.f32 %v3590, %v3643
      %v3652 = vmul.f32 %v3592, %v3644
      %v3653 = vmul.f32 %v3594, %v3645
      %v3654 = vmul.f32 %v3596, %v3646
      %v3655 = vmul.f32 %v3598, %v3647
      %v3656 = vmul.f32 %v3600, %v3648
      %v3657 = vadd.f32 %v3649, 0.2548296
      %v3658 = vadd.f32 %v3650, 0.2548296
      %v3659 = vadd.f32 %v3651, 0.2548296
      %v3660 = vadd.f32 %v3652, 0.2548296
      %v3661 = vadd.f32 %v3653, 0.2548296
      %v3662 = vadd.f32 %v3654, 0.2548296
      %v3663 = vadd.f32 %v3655, 0.2548296
      %v3664 = vadd.f32 %v3656, 0.2548296
      %v3665 = vmul.f32 %v3586, %v3657
      %v3666 = vmul.f32 %v3588, %v3658
      %v3667 = vmul.f32 %v3590, %v3659
      %v3668 = vmul.f32 %v3592, %v3660
      %v3669 = vmul.f32 %v3594, %v3661
      %v3670 = vmul.f32 %v3596, %v3662
      %v3671 = vmul.f32 %v3598, %v3663
      %v3672 = vmul.f32 %v3600, %v3664
      %v3673 = vsub.f32 0.0, %v3561
      %v3674 = vsub.f32 0.0, %v3562
      %v3675 = vsub.f32 0.0, %v3563
      %v3676 = vsub.f32 0.0, %v3564
      %v3677 = vsub.f32 0.0, %v3565
      %v3678 = vsub.f32 0.0, %v3566
      %v3679 = vsub.f32 0.0, %v3567
      %v3680 = vsub.f32 0.0, %v3568
      %v3681 = vmul.f32 %v3673, %v3561
      %v3682 = vmul.f32 %v3674, %v3562
      %v3683 = vmul.f32 %v3675, %v3563
      %v3684 = vmul.f32 %v3676, %v3564
      %v3685 = vmul.f32 %v3677, %v3565
      %v3686 = vmul.f32 %v3678, %v3566
      %v3687 = vmul.f32 %v3679, %v3567
      %v3688 = vmul.f32 %v3680, %v3568
      %v3689 = vmul.f32 %v3681, 1.442695
      %v3690 = vpow.pop %v3689
      %v3691 = vmul.f32 %v3682, 1.442695
      %v3692 = vpow.pop %v3691
      %v3693 = vmul.f32 %v3683, 1.442695
      %v3694 = vpow.pop %v3693
      %v3695 = vmul.f32 %v3684, 1.442695
      %v3696 = vpow.pop %v3695
      %v3697 = vmul.f32 %v3685, 1.442695
      %v3698 = vpow.pop %v3697
      %v3699 = vmul.f32 %v3686, 1.442695
      %v3700 = vpow.pop %v3699
      %v3701 = vmul.f32 %v3687, 1.442695
      %v3702 = vpow.pop %v3701
      %v3703 = vmul.f32 %v3688, 1.442695
      %v3704 = vpow.pop %v3703
      %v3705 = vmul.f32 %v3665, %v3690
      %v3706 = vmul.f32 %v3666, %v3692
      %v3707 = vmul.f32 %v3667, %v3694
      %v3708 = vmul.f32 %v3668, %v3696
      %v3709 = vmul.f32 %v3669, %v3698
      %v3710 = vmul.f32 %v3670, %v3700
      %v3711 = vmul.f32 %v3671, %v3702
      %v3712 = vmul.f32 %v3672, %v3704
      %v3713 = vsub.f32 1.0, %v3705
      %v3714 = vsub.f32 1.0, %v3706
      %v3715 = vsub.f32 1.0, %v3707
      %v3716 = vsub.f32 1.0, %v3708
      %v3717 = vsub.f32 1.0, %v3709
      %v3718 = vsub.f32 1.0, %v3710
      %v3719 = vsub.f32 1.0, %v3711
      %v3720 = vsub.f32 1.0, %v3712
      %vm3721 = vcmp.lt.f32.partialorder %v3553, 0.0
      %vm3722 = vcmp.lt.f32.partialorder %v3554, 0.0
      %vm3723 = vcmp.lt.f32.partialorder %v3555, 0.0
      %vm3724 = vcmp.lt.f32.partialorder %v3556, 0.0
      %vm3725 = vcmp.lt.f32.partialorder %v3557, 0.0
      %vm3726 = vcmp.lt.f32.partialorder %v3558, 0.0
      %vm3727 = vcmp.lt.f32.partialorder %v3559, 0.0
      %vm3728 = vcmp.lt.f32.partialorder %v3560, 0.0
      %v3729 = vsub.f32 0.0, %v3713
      %v3730 = vsub.f32 0.0, %v3714
      %v3731 = vsub.f32 0.0, %v3715
      %v3732 = vsub.f32 0.0, %v3716
      %v3733 = vsub.f32 0.0, %v3717
      %v3734 = vsub.f32 0.0, %v3718
      %v3735 = vsub.f32 0.0, %v3719
      %v3736 = vsub.f32 0.0, %v3720
      %v3737 = vsel %vm3721, %v3729, %v3713
      %v3738 = vsel %vm3722, %v3730, %v3714
      %v3739 = vsel %vm3723, %v3731, %v3715
      %v3740 = vsel %vm3724, %v3732, %v3716
      %v3741 = vsel %vm3725, %v3733, %v3717
      %v3742 = vsel %vm3726, %v3734, %v3718
      %v3743 = vsel %vm3727, %v3735, %v3719
      %v3744 = vsel %vm3728, %v3736, %v3720
      %v3745 = vadd.f32 %v3737, 1.0
      %v3746 = vadd.f32 %v3738, 1.0
      %v3747 = vadd.f32 %v3739, 1.0
      %v3748 = vadd.f32 %v3740, 1.0
      %v3749 = vadd.f32 %v3741, 1.0
      %v3750 = vadd.f32 %v3742, 1.0
      %v3751 = vadd.f32 %v3743, 1.0
      %v3752 = vadd.f32 %v3744, 1.0
      %v3753 = vmul.f32 %v3545, %v3745
      %v3754 = vmul.f32 %v3546, %v3746
      %v3755 = vmul.f32 %v3547, %v3747
      %v3756 = vmul.f32 %v3548, %v3748
      %v3757 = vmul.f32 %v3549, %v3749
      %v3758 = vmul.f32 %v3550, %v3750
      %v3759 = vmul.f32 %v3551, %v3751
      %v3760 = vmul.f32 %v3552, %v3752
      %vm3761 = vcmask 523264
      %3762 = vst.msk [vmem:[%s306] sm:$0xff] %vm3761, %v3753
      %3763 = vst.msk [vmem:[%s306 + $0x8] sm:$0xff] %vm3761, %v3754
      %3764 = vst.msk [vmem:[%s306 + $0x10] sm:$0xff] %vm3761, %v3755
      %3765 = vst.msk [vmem:[%s306 + $0x18] sm:$0xff] %vm3761, %v3756
      %3766 = vst.msk [vmem:[%s306 + $0x20] sm:$0xff] %vm3761, %v3757
      %3767 = vst.msk [vmem:[%s306 + $0x28] sm:$0xff] %vm3761, %v3758
      %3768 = vst.msk [vmem:[%s306 + $0x30] sm:$0xff] %vm3761, %v3759
      %3769 = vst.msk [vmem:[%s306 + $0x38] sm:$0xff] %vm3761, %v3760
      %p3770 = scmp.lt.s32.totalorder %s19, 1
      %s3771 = scalar_select %p3770, %s19, 1
      %s3772 = smul.addr %s3771, 8
      %s3773 = smul.addr %s3772, 8
      %s3774 = scalar_lea.vmem %s6, %s3773
      %p3775 = scmp.lt.s32.totalorder %s19, 1
      %s3776 = scalar_select %p3775, %s19, 1
      %s3777 = smul.addr %s3776, 4
      %s3778 = smul.addr %s3777, 8
      %s3779 = scalar_lea.vmem %s7, %s3778
      // Predicated region
      $region45: #{predictor_forward.2} parent=43 // pred_check
        %p3780 = pneg %p173
      $region46: #{predictor_forward.2} parent=43 // pred_check_branch
        %3782 = sbr.rel (%p3780) target = $region48
      $region47: #{predictor_forward.2} parent=43 // pred_region
        _
      $region48: #{predictor_forward.2} parent=43 // pred_fallthru
        _
      // Predicated region
      $region49: #{predictor_forward.2} parent=43 // pred_check
        %p3783 = pneg %p199
      $region50: #{predictor_forward.2} parent=43 // pred_check_branch
        %3785 = sbr.rel (%p3783) target = $region52
      $region51: #{predictor_forward.2} parent=43 // pred_region
        _
      $region52: #{predictor_forward.2} parent=43 // pred_fallthru
        _
    $region44: #{predictor_forward.2} parent=5 // pred_fallthru
      _
    %p3786 = scmp.le.s32.totalorder 2, %s14
    // Predicated region
    $region53: #{predictor_forward.2} parent=5 // pred_check
      %p3787 = pneg %p3786
    $region54: #{predictor_forward.2} parent=5 // pred_check_branch
      %3789 = sbr.rel (%p3787) target = $region56
    $region55: #{predictor_forward.2} parent=5 // pred_region
      %s3790 = ssub.s32 %s14, 2
      // Predicated region
      $region57: #{predictor_forward.2} parent=55 // pred_check
        %p3791 = pneg %p179
      $region58: #{predictor_forward.2} parent=55 // pred_check_branch
        %3793 = sbr.rel (%p3791) target = $region60
      $region59: #{predictor_forward.2} parent=55 // pred_region
        %p3794 = scmp.lt.s32.totalorder %s20, 1
        %s3795 = scalar_select %p3794, %s20, 1
        %s3796 = smul.addr %s3795, 8
        %s3797 = smul.addr %s3796, 8
        %s3798 = scalar_lea.vmem %s6, %s3797
      $region60: #{predictor_forward.2} parent=55 // pred_fallthru
        _
      // Predicated region
      $region61: #{predictor_forward.2} parent=55 // pred_check
        %p3799 = pneg %p205
      $region62: #{predictor_forward.2} parent=55 // pred_check_branch
        %3801 = sbr.rel (%p3799) target = $region64
      $region63: #{predictor_forward.2} parent=55 // pred_region
        %p3802 = scmp.lt.s32.totalorder %s20, 1
        %s3803 = scalar_select %p3802, %s20, 1
        %s3804 = smul.addr %s3803, 4
        %s3805 = smul.addr %s3804, 8
        %s3806 = scalar_lea.vmem %s7, %s3805
      $region64: #{predictor_forward.2} parent=55 // pred_fallthru
        _
    $region56: #{predictor_forward.2} parent=5 // pred_fallthru
      _
  $region6: #{predictor_forward.2} parent=0 // loop_footer
    %s18 = sadd.s32 1, %s14
  $region7: #{predictor_forward.2} parent=0 // loop_footer_branch
    %13 = sbr.rel target = $region3
  $region8: #{predictor_forward.2} parent=0 // loop_exit
    _

</llo_original>
